<compile_context>
chip_gen: v7x
topology: tpu7x:2x2x1
jax: 0.10.0
libtpu: 0.0.40
codegen_flags: <defaults>
</compile_context>

<pallas_src>
import jax
import jax.numpy as jnp
from jax.experimental import pallas as pl
from jax.experimental.pallas import tpu as pltpu

_FC1_CHUNK = 256          # hidden-dim chunk size for the fc1 -> relu -> fc2 epilogue


def _round_up(x, m):
    return (x + m - 1) // m * m


def _cdiv(a, b):
    return (a + b - 1) // b


def _inception_aux_kernel(xk_ref, cwt_ref, w1_ref, b1_ref, w2_ref, b2_ref,
                          out_ref, flat_ref, acc_ref):
    """One batch tile of fused 1x1conv -> flatten -> fc1 -> relu -> fc2."""
    p_total = xk_ref.shape[0]           # 16 pooled spatial positions
    conv_out = cwt_ref.shape[1]         # 128 conv output channels
    hidden = w1_ref.shape[1]            # 1024
    cdt = w1_ref.dtype                  # compute dtype (bf16 or f32)

    # --- 1x1 conv: one (tile, C) @ (C, 128) matmul per pooled position, each
    # result stored straight into its lane slice of the flat activation scratch
    # (flat index = p*128 + o, matching the fc1 weight permutation done in
    # prepare_params()).  Pure MXU + aligned stores; no big live intermediate.
    for p in range(p_total):
        y_p = jnp.dot(xk_ref[p], cwt_ref[...],
                      preferred_element_type=jnp.float32)
        flat_ref[:, p * conv_out:(p + 1) * conv_out] = y_p.astype(cdt)

    # --- fc1 (+ folded conv bias) -> ReLU -> fc2, chunked over the hidden dim
    # so no (tile, 1024) f32 intermediate round-trips VMEM; each chunk feeds a
    # partial fc2 contraction into a small f32 accumulator.
    acc_ref[...] = jnp.zeros_like(acc_ref)
    for lo in range(0, hidden, _FC1_CHUNK):
        hi = min(lo + _FC1_CHUNK, hidden)
        h_c = (jnp.dot(flat_ref[...], w1_ref[:, lo:hi],
                       preferred_element_type=jnp.float32)
               + b1_ref[:, lo:hi])
        h_c = jnp.maximum(h_c, 0.0).astype(cdt)
        acc_ref[...] += jnp.dot(h_c, w2_ref[lo:hi, :],
                                preferred_element_type=jnp.float32)

    out_ref[...] = (acc_ref[...] + b2_ref[...]).astype(out_ref.dtype)


def _adaptive_avg_pool_4x4(x):
    """torch.nn.AdaptiveAvgPool2d((4, 4)) semantics for any H, W >= 4."""
    _, _, h, w = x.shape
    hs = [(i * h) // 4 for i in range(4)]
    he = [-(-((i + 1) * h) // 4) for i in range(4)]
    ws = [(j * w) // 4 for j in range(4)]
    we = [-(-((j + 1) * w) // 4) for j in range(4)]
    rows = []
    for i in range(4):
        cols = [x[:, :, hs[i]:he[i], ws[j]:we[j]].mean(axis=(2, 3))
                for j in range(4)]
        rows.append(jnp.stack(cols, axis=-1))
    return jnp.stack(rows, axis=-2)      # (N, C, 4, 4)


def prepare_params(params, use_bf16=True):
    """One-time weight re-layout / padding (hoisted out of the per-call path)."""
    conv_w, conv_b, w1, b1, w2, b2 = params
    conv_out, c_in = conv_w.shape[0], conv_w.shape[1]
    num_classes, hidden = w2.shape
    assert w1.shape == (hidden, conv_out * 16)

    f32 = jnp.float32
    wdtype = jnp.bfloat16 if use_bf16 else jnp.float32

    # conv weight (128, C, 1, 1) -> (C_pad, 128); K padded to a lane multiple.
    c_pad = _round_up(c_in, 128)
    cwt = conv_w.reshape(conv_out, c_in).T.astype(f32)
    if c_pad != c_in:
        cwt = jnp.pad(cwt, ((0, c_pad - c_in), (0, 0)))

    # PyTorch fc1 weight is (1024, 2048) indexed [j, o*16 + p]; permute so the
    # kernel's flat activation index is p*128 + o.
    w1_3d = jnp.transpose(w1.astype(f32).reshape(hidden, conv_out, 16),
                          (2, 1, 0))                               # (16, 128, 1024)
    # Fold conv bias through fc1 (linear fold; valid because this module has no
    # nonlinearity between conv and fc1).
    b1_eff = (b1.astype(f32)
              + jnp.einsum('o,poj->j', conv_b.astype(f32), w1_3d)
              ).reshape(1, hidden)
    w1_2d = w1_3d.reshape(16 * conv_out, hidden)                   # (2048, 1024)

    # fc2 weight/bias; output channels padded to a lane multiple.
    ncp = _round_up(num_classes, 128)
    w2p = jnp.zeros((hidden, ncp), f32).at[:, :num_classes].set(w2.astype(f32).T)
    b2p = jnp.zeros((1, ncp), f32).at[:, :num_classes].set(
        b2.astype(f32).reshape(1, num_classes))

    return dict(
        cwt=cwt.astype(wdtype), w1=w1_2d.astype(wdtype), b1=b1_eff,
        w2=w2p.astype(wdtype), b2=b2p,
        num_classes=num_classes, in_channels=c_in, c_pad=c_pad,
        conv_out=conv_out, hidden=hidden, compute_dtype=wdtype)


def inception_aux_forward(x, prepared, tile_n=256):
    """x: (N, C, H, W) float32 (NCHW like PyTorch). Returns (N, num_classes) f32."""
    cwt, w1, b1, w2, b2 = (prepared["cwt"], prepared["w1"], prepared["b1"],
                           prepared["w2"], prepared["b2"])
    num_classes = prepared["num_classes"]
    conv_out = prepared["conv_out"]
    hidden = prepared["hidden"]
    c_pad = prepared["c_pad"]
    cdt = prepared["compute_dtype"]

    N, C, H, W = x.shape
    assert C == prepared["in_channels"]

    xp = _adaptive_avg_pool_4x4(x)                                 # (N, C, 4, 4)
    # position-major, channel-last: the kernel does one conv matmul per position.
    xk = xp.reshape(N, C, 16).transpose(2, 0, 1)                   # (16, N, C)

    # Batch tiling: cap at tile_n, and shrink so the grid has >= 2 blocks when N
    # allows (keeps both v7x TensorCores busy via the "parallel" grid axis).
    tile = min(_round_up(tile_n, 8), _round_up(N, 8))
    if N > 8:
        tile = min(tile, _round_up(_cdiv(N, 2), 8))
    tile = max(tile, 8)
    n_pad = _round_up(N, tile)
    num_blocks = n_pad // tile

    pad_n, pad_c = n_pad - N, c_pad - C
    if pad_n or pad_c:
        xk = jnp.pad(xk, ((0, 0), (0, pad_n), (0, pad_c)))
    xk = xk.astype(cdt)

    ncp = w2.shape[1]
    flops = 2 * n_pad * (16 * c_pad * conv_out + (16 * conv_out) * hidden
                         + hidden * ncp)
    bytes_accessed = (sum(int(a.size) * a.dtype.itemsize
                          for a in (xk, cwt, w1, b1, w2, b2))
                      + n_pad * ncp * jnp.dtype(cdt).itemsize)

    out = pl.pallas_call(
        _inception_aux_kernel,
        out_shape=jax.ShapeDtypeStruct((n_pad, ncp), cdt),
        grid=(num_blocks,),
        in_specs=[
            pl.BlockSpec((16, tile, c_pad), lambda i: (0, i, 0)),  # batch tile
            pl.BlockSpec(cwt.shape, lambda i: (0, 0)),             # resident weights
            pl.BlockSpec(w1.shape, lambda i: (0, 0)),
            pl.BlockSpec(b1.shape, lambda i: (0, 0)),
            pl.BlockSpec(w2.shape, lambda i: (0, 0)),
            pl.BlockSpec(b2.shape, lambda i: (0, 0)),
        ],
        out_specs=pl.BlockSpec((tile, ncp), lambda i: (i, 0)),
        scratch_shapes=[
            pltpu.VMEM((tile, 16 * conv_out), cdt),                # flat activations
            pltpu.VMEM((tile, ncp), jnp.float32),                  # fc2 accumulator
        ],
        compiler_params=pltpu.CompilerParams(
            dimension_semantics=("parallel",),
            vmem_limit_bytes=40 * 1024 * 1024),
        cost_estimate=pl.CostEstimate(
            flops=flops, transcendentals=0, bytes_accessed=bytes_accessed),
    )(xk, cwt, w1, b1, w2, b2)

    return out[:N, :num_classes].astype(jnp.float32)


def inception_aux_reference(x, params):
    """Pure-JAX replica of the PyTorch forward (for verification)."""
    conv_w, conv_b, w1, b1, w2, b2 = params
    N, C, H, W = x.shape
    xp = _adaptive_avg_pool_4x4(x)                                      # pool
    cw2 = conv_w.reshape(conv_w.shape[0], C)
    y = jnp.einsum('oc,nchw->nohw', cw2, xp,
                   precision='highest') + conv_b[None, :, None, None]   # 1x1 conv
    flat = y.reshape(N, -1)                                             # (N, 2048)
    h = jax.nn.relu(jnp.dot(flat, w1.T, precision='highest') + b1)
    return jnp.dot(h, w2.T, precision='highest') + b2


def init_params(key, in_channels, num_classes):
    k = jax.random.split(key, 6)
    conv_w = jax.random.normal(k[0], (128, in_channels, 1, 1), jnp.float32) * 0.1
    conv_b = jax.random.normal(k[1], (128,), jnp.float32) * 0.1
    w1 = jax.random.normal(k[2], (1024, 2048), jnp.float32) * 0.02
    b1 = jax.random.normal(k[3], (1024,), jnp.float32) * 0.02
    w2 = jax.random.normal(k[4], (num_classes, 1024), jnp.float32) * 0.02
    b2 = jax.random.normal(k[5], (num_classes,), jnp.float32) * 0.02
    return (conv_w, conv_b, w1, b1, w2, b2)


if __name__ == "__main__":
    key = jax.random.PRNGKey(0)
    kx, kp, kx2 = jax.random.split(key, 3)

    N, C, num_classes = 2, 4, 10
    params = init_params(kp, C, num_classes)
    prepared = prepare_params(params, use_bf16=True)   # one-time weight re-layout

    # small NCHW input, spatial divisible by 4
    x = jax.random.normal(kx, (N, C, 16, 16), jnp.float32)
    out = jax.block_until_ready(inception_aux_forward(x, prepared))
    ref = inception_aux_reference(x, params)
    assert out.shape == (N, num_classes)
    assert jnp.allclose(out, ref, rtol=1e-2, atol=1e-2), (out, ref)

    # 14x14 spatial (real GoogLeNet aux size) exercises the general adaptive pool
    x2 = jax.random.normal(kx2, (N, C, 14, 14), jnp.float32)
    out2 = jax.block_until_ready(inception_aux_forward(x2, prepared))
    ref2 = inception_aux_reference(x2, params)
    assert jnp.allclose(out2, ref2, rtol=1e-2, atol=1e-2), (out2, ref2)

    print("KERNEL_OK")
</pallas_src>

<mosaic_0001>
module attributes {stable_mosaic.version = 11 : i64} {
  func.func @_inception_aux_kernel(%arg0: i32, %arg1: memref<16x8x128xbf16, #tpu.memory_space<vmem>>, %arg2: memref<128x128xbf16, #tpu.memory_space<vmem>>, %arg3: memref<2048x1024xbf16, #tpu.memory_space<vmem>>, %arg4: memref<1x1024xf32, #tpu.memory_space<vmem>>, %arg5: memref<1024x128xbf16, #tpu.memory_space<vmem>>, %arg6: memref<1x128xf32, #tpu.memory_space<vmem>>, %arg7: memref<8x128xbf16, #tpu.memory_space<vmem>>, %arg8: memref<8x2048xbf16, #tpu.memory_space<vmem>>, %arg9: memref<8x128xf32, #tpu.memory_space<vmem>>) attributes {dimension_semantics = [#tpu.dimension_semantics<parallel>], iteration_bounds = array<i64: 1>, scalar_prefetch = 0 : i64, scratch_operands = 2 : i64, tpu.core_type = #tpu.core_type<tc>, window_params = [{transform_indices = @transform_0, window_bounds = array<i64: 16, 8, 128>}, {pipeline_mode = #tpu.pipeline_mode<synchronous>, transform_indices = @transform_1, window_bounds = array<i64: 128, 128>}, {pipeline_mode = #tpu.pipeline_mode<synchronous>, transform_indices = @transform_2, window_bounds = array<i64: 2048, 1024>}, {pipeline_mode = #tpu.pipeline_mode<synchronous>, transform_indices = @transform_3, window_bounds = array<i64: 1, 1024>}, {pipeline_mode = #tpu.pipeline_mode<synchronous>, transform_indices = @transform_4, window_bounds = array<i64: 1024, 128>}, {pipeline_mode = #tpu.pipeline_mode<synchronous>, transform_indices = @transform_5, window_bounds = array<i64: 1, 128>}, {transform_indices = @transform_6, window_bounds = array<i64: 8, 128>}]} {
    %c0 = arith.constant 0 : index
    %c0_0 = arith.constant 0 : index
    %c0_1 = arith.constant 0 : index
    %0 = vector.load %arg1[%c0, %c0_0, %c0_1] : memref<16x8x128xbf16, #tpu.memory_space<vmem>>, vector<1x8x128xbf16>
    %1 = vector.shape_cast %0 : vector<1x8x128xbf16> to vector<8x128xbf16>
    %c0_2 = arith.constant 0 : index
    %c0_3 = arith.constant 0 : index
    %2 = vector.load %arg2[%c0_2, %c0_3] : memref<128x128xbf16, #tpu.memory_space<vmem>>, vector<128x128xbf16>
    %cst = arith.constant dense<0.000000e+00> : vector<8x128xf32>
    %3 = tpu.matmul %1, %2, %cst {dimension_numbers = #tpu.dot_dimension_numbers<[1], [0], [0], [1], [0, 0, 1, 1], [], []>} : vector<8x128xbf16>, vector<128x128xbf16>, vector<8x128xf32> -> vector<8x128xf32>
    %4 = arith.truncf %3 : vector<8x128xf32> to vector<8x128xbf16>
    %c0_4 = arith.constant 0 : index
    %c0_5 = arith.constant 0 : index
    %5 = vector.load %arg8[%c0_4, %c0_5] : memref<8x2048xbf16, #tpu.memory_space<vmem>>, vector<8x128xbf16>
    tpu.vector_store %arg8[%c0_4, %c0_5], %4 {strides = array<i32>} : memref<8x2048xbf16, #tpu.memory_space<vmem>>, vector<8x128xbf16>,
    %c1 = arith.constant 1 : index
    %c0_6 = arith.constant 0 : index
    %c0_7 = arith.constant 0 : index
    %6 = vector.load %arg1[%c1, %c0_6, %c0_7] : memref<16x8x128xbf16, #tpu.memory_space<vmem>>, vector<1x8x128xbf16>
    %7 = vector.shape_cast %6 : vector<1x8x128xbf16> to vector<8x128xbf16>
    %c0_8 = arith.constant 0 : index
    %c0_9 = arith.constant 0 : index
    %8 = vector.load %arg2[%c0_8, %c0_9] : memref<128x128xbf16, #tpu.memory_space<vmem>>, vector<128x128xbf16>
    %cst_10 = arith.constant dense<0.000000e+00> : vector<8x128xf32>
    %9 = tpu.matmul %7, %8, %cst_10 {dimension_numbers = #tpu.dot_dimension_numbers<[1], [0], [0], [1], [0, 0, 1, 1], [], []>} : vector<8x128xbf16>, vector<128x128xbf16>, vector<8x128xf32> -> vector<8x128xf32>
    %10 = arith.truncf %9 : vector<8x128xf32> to vector<8x128xbf16>
    %c0_11 = arith.constant 0 : index
    %c128 = arith.constant 128 : index
    %11 = vector.load %arg8[%c0_11, %c128] : memref<8x2048xbf16, #tpu.memory_space<vmem>>, vector<8x128xbf16>
    tpu.vector_store %arg8[%c0_11, %c128], %10 {strides = array<i32>} : memref<8x2048xbf16, #tpu.memory_space<vmem>>, vector<8x128xbf16>,
    %c2 = arith.constant 2 : index
    %c0_12 = arith.constant 0 : index
    %c0_13 = arith.constant 0 : index
    %12 = vector.load %arg1[%c2, %c0_12, %c0_13] : memref<16x8x128xbf16, #tpu.memory_space<vmem>>, vector<1x8x128xbf16>
    %13 = vector.shape_cast %12 : vector<1x8x128xbf16> to vector<8x128xbf16>
    %c0_14 = arith.constant 0 : index
    %c0_15 = arith.constant 0 : index
    %14 = vector.load %arg2[%c0_14, %c0_15] : memref<128x128xbf16, #tpu.memory_space<vmem>>, vector<128x128xbf16>
    %cst_16 = arith.constant dense<0.000000e+00> : vector<8x128xf32>
    %15 = tpu.matmul %13, %14, %cst_16 {dimension_numbers = #tpu.dot_dimension_numbers<[1], [0], [0], [1], [0, 0, 1, 1], [], []>} : vector<8x128xbf16>, vector<128x128xbf16>, vector<8x128xf32> -> vector<8x128xf32>
    %16 = arith.truncf %15 : vector<8x128xf32> to vector<8x128xbf16>
    %c0_17 = arith.constant 0 : index
    %c256 = arith.constant 256 : index
    %17 = vector.load %arg8[%c0_17, %c256] : memref<8x2048xbf16, #tpu.memory_space<vmem>>, vector<8x128xbf16>
    tpu.vector_store %arg8[%c0_17, %c256], %16 {strides = array<i32>} : memref<8x2048xbf16, #tpu.memory_space<vmem>>, vector<8x128xbf16>,
    %c3 = arith.constant 3 : index
    %c0_18 = arith.constant 0 : index
    %c0_19 = arith.constant 0 : index
    %18 = vector.load %arg1[%c3, %c0_18, %c0_19] : memref<16x8x128xbf16, #tpu.memory_space<vmem>>, vector<1x8x128xbf16>
    %19 = vector.shape_cast %18 : vector<1x8x128xbf16> to vector<8x128xbf16>
    %c0_20 = arith.constant 0 : index
    %c0_21 = arith.constant 0 : index
    %20 = vector.load %arg2[%c0_20, %c0_21] : memref<128x128xbf16, #tpu.memory_space<vmem>>, vector<128x128xbf16>
    %cst_22 = arith.constant dense<0.000000e+00> : vector<8x128xf32>
    %21 = tpu.matmul %19, %20, %cst_22 {dimension_numbers = #tpu.dot_dimension_numbers<[1], [0], [0], [1], [0, 0, 1, 1], [], []>} : vector<8x128xbf16>, vector<128x128xbf16>, vector<8x128xf32> -> vector<8x128xf32>
    %22 = arith.truncf %21 : vector<8x128xf32> to vector<8x128xbf16>
    %c0_23 = arith.constant 0 : index
    %c384 = arith.constant 384 : index
    %23 = vector.load %arg8[%c0_23, %c384] : memref<8x2048xbf16, #tpu.memory_space<vmem>>, vector<8x128xbf16>
    tpu.vector_store %arg8[%c0_23, %c384], %22 {strides = array<i32>} : memref<8x2048xbf16, #tpu.memory_space<vmem>>, vector<8x128xbf16>,
    %c4 = arith.constant 4 : index
    %c0_24 = arith.constant 0 : index
    %c0_25 = arith.constant 0 : index
    %24 = vector.load %arg1[%c4, %c0_24, %c0_25] : memref<16x8x128xbf16, #tpu.memory_space<vmem>>, vector<1x8x128xbf16>
    %25 = vector.shape_cast %24 : vector<1x8x128xbf16> to vector<8x128xbf16>
    %c0_26 = arith.constant 0 : index
    %c0_27 = arith.constant 0 : index
    %26 = vector.load %arg2[%c0_26, %c0_27] : memref<128x128xbf16, #tpu.memory_space<vmem>>, vector<128x128xbf16>
    %cst_28 = arith.constant dense<0.000000e+00> : vector<8x128xf32>
    %27 = tpu.matmul %25, %26, %cst_28 {dimension_numbers = #tpu.dot_dimension_numbers<[1], [0], [0], [1], [0, 0, 1, 1], [], []>} : vector<8x128xbf16>, vector<128x128xbf16>, vector<8x128xf32> -> vector<8x128xf32>
    %28 = arith.truncf %27 : vector<8x128xf32> to vector<8x128xbf16>
    %c0_29 = arith.constant 0 : index
    %c512 = arith.constant 512 : index
    %29 = vector.load %arg8[%c0_29, %c512] : memref<8x2048xbf16, #tpu.memory_space<vmem>>, vector<8x128xbf16>
    tpu.vector_store %arg8[%c0_29, %c512], %28 {strides = array<i32>} : memref<8x2048xbf16, #tpu.memory_space<vmem>>, vector<8x128xbf16>,
    %c5 = arith.constant 5 : index
    %c0_30 = arith.constant 0 : index
    %c0_31 = arith.constant 0 : index
    %30 = vector.load %arg1[%c5, %c0_30, %c0_31] : memref<16x8x128xbf16, #tpu.memory_space<vmem>>, vector<1x8x128xbf16>
    %31 = vector.shape_cast %30 : vector<1x8x128xbf16> to vector<8x128xbf16>
    %c0_32 = arith.constant 0 : index
    %c0_33 = arith.constant 0 : index
    %32 = vector.load %arg2[%c0_32, %c0_33] : memref<128x128xbf16, #tpu.memory_space<vmem>>, vector<128x128xbf16>
    %cst_34 = arith.constant dense<0.000000e+00> : vector<8x128xf32>
    %33 = tpu.matmul %31, %32, %cst_34 {dimension_numbers = #tpu.dot_dimension_numbers<[1], [0], [0], [1], [0, 0, 1, 1], [], []>} : vector<8x128xbf16>, vector<128x128xbf16>, vector<8x128xf32> -> vector<8x128xf32>
    %34 = arith.truncf %33 : vector<8x128xf32> to vector<8x128xbf16>
    %c0_35 = arith.constant 0 : index
    %c640 = arith.constant 640 : index
    %35 = vector.load %arg8[%c0_35, %c640] : memref<8x2048xbf16, #tpu.memory_space<vmem>>, vector<8x128xbf16>
    tpu.vector_store %arg8[%c0_35, %c640], %34 {strides = array<i32>} : memref<8x2048xbf16, #tpu.memory_space<vmem>>, vector<8x128xbf16>,
    %c6 = arith.constant 6 : index
    %c0_36 = arith.constant 0 : index
    %c0_37 = arith.constant 0 : index
    %36 = vector.load %arg1[%c6, %c0_36, %c0_37] : memref<16x8x128xbf16, #tpu.memory_space<vmem>>, vector<1x8x128xbf16>
    %37 = vector.shape_cast %36 : vector<1x8x128xbf16> to vector<8x128xbf16>
    %c0_38 = arith.constant 0 : index
    %c0_39 = arith.constant 0 : index
    %38 = vector.load %arg2[%c0_38, %c0_39] : memref<128x128xbf16, #tpu.memory_space<vmem>>, vector<128x128xbf16>
    %cst_40 = arith.constant dense<0.000000e+00> : vector<8x128xf32>
    %39 = tpu.matmul %37, %38, %cst_40 {dimension_numbers = #tpu.dot_dimension_numbers<[1], [0], [0], [1], [0, 0, 1, 1], [], []>} : vector<8x128xbf16>, vector<128x128xbf16>, vector<8x128xf32> -> vector<8x128xf32>
    %40 = arith.truncf %39 : vector<8x128xf32> to vector<8x128xbf16>
    %c0_41 = arith.constant 0 : index
    %c768 = arith.constant 768 : index
    %41 = vector.load %arg8[%c0_41, %c768] : memref<8x2048xbf16, #tpu.memory_space<vmem>>, vector<8x128xbf16>
    tpu.vector_store %arg8[%c0_41, %c768], %40 {strides = array<i32>} : memref<8x2048xbf16, #tpu.memory_space<vmem>>, vector<8x128xbf16>,
    %c7 = arith.constant 7 : index
    %c0_42 = arith.constant 0 : index
    %c0_43 = arith.constant 0 : index
    %42 = vector.load %arg1[%c7, %c0_42, %c0_43] : memref<16x8x128xbf16, #tpu.memory_space<vmem>>, vector<1x8x128xbf16>
    %43 = vector.shape_cast %42 : vector<1x8x128xbf16> to vector<8x128xbf16>
    %c0_44 = arith.constant 0 : index
    %c0_45 = arith.constant 0 : index
    %44 = vector.load %arg2[%c0_44, %c0_45] : memref<128x128xbf16, #tpu.memory_space<vmem>>, vector<128x128xbf16>
    %cst_46 = arith.constant dense<0.000000e+00> : vector<8x128xf32>
    %45 = tpu.matmul %43, %44, %cst_46 {dimension_numbers = #tpu.dot_dimension_numbers<[1], [0], [0], [1], [0, 0, 1, 1], [], []>} : vector<8x128xbf16>, vector<128x128xbf16>, vector<8x128xf32> -> vector<8x128xf32>
    %46 = arith.truncf %45 : vector<8x128xf32> to vector<8x128xbf16>
    %c0_47 = arith.constant 0 : index
    %c896 = arith.constant 896 : index
    %47 = vector.load %arg8[%c0_47, %c896] : memref<8x2048xbf16, #tpu.memory_space<vmem>>, vector<8x128xbf16>
    tpu.vector_store %arg8[%c0_47, %c896], %46 {strides = array<i32>} : memref<8x2048xbf16, #tpu.memory_space<vmem>>, vector<8x128xbf16>,
    %c8 = arith.constant 8 : index
    %c0_48 = arith.constant 0 : index
    %c0_49 = arith.constant 0 : index
    %48 = vector.load %arg1[%c8, %c0_48, %c0_49] : memref<16x8x128xbf16, #tpu.memory_space<vmem>>, vector<1x8x128xbf16>
    %49 = vector.shape_cast %48 : vector<1x8x128xbf16> to vector<8x128xbf16>
    %c0_50 = arith.constant 0 : index
    %c0_51 = arith.constant 0 : index
    %50 = vector.load %arg2[%c0_50, %c0_51] : memref<128x128xbf16, #tpu.memory_space<vmem>>, vector<128x128xbf16>
    %cst_52 = arith.constant dense<0.000000e+00> : vector<8x128xf32>
    %51 = tpu.matmul %49, %50, %cst_52 {dimension_numbers = #tpu.dot_dimension_numbers<[1], [0], [0], [1], [0, 0, 1, 1], [], []>} : vector<8x128xbf16>, vector<128x128xbf16>, vector<8x128xf32> -> vector<8x128xf32>
    %52 = arith.truncf %51 : vector<8x128xf32> to vector<8x128xbf16>
    %c0_53 = arith.constant 0 : index
    %c1024 = arith.constant 1024 : index
    %53 = vector.load %arg8[%c0_53, %c1024] : memref<8x2048xbf16, #tpu.memory_space<vmem>>, vector<8x128xbf16>
    tpu.vector_store %arg8[%c0_53, %c1024], %52 {strides = array<i32>} : memref<8x2048xbf16, #tpu.memory_space<vmem>>, vector<8x128xbf16>,
    %c9 = arith.constant 9 : index
    %c0_54 = arith.constant 0 : index
    %c0_55 = arith.constant 0 : index
    %54 = vector.load %arg1[%c9, %c0_54, %c0_55] : memref<16x8x128xbf16, #tpu.memory_space<vmem>>, vector<1x8x128xbf16>
    %55 = vector.shape_cast %54 : vector<1x8x128xbf16> to vector<8x128xbf16>
    %c0_56 = arith.constant 0 : index
    %c0_57 = arith.constant 0 : index
    %56 = vector.load %arg2[%c0_56, %c0_57] : memref<128x128xbf16, #tpu.memory_space<vmem>>, vector<128x128xbf16>
    %cst_58 = arith.constant dense<0.000000e+00> : vector<8x128xf32>
    %57 = tpu.matmul %55, %56, %cst_58 {dimension_numbers = #tpu.dot_dimension_numbers<[1], [0], [0], [1], [0, 0, 1, 1], [], []>} : vector<8x128xbf16>, vector<128x128xbf16>, vector<8x128xf32> -> vector<8x128xf32>
    %58 = arith.truncf %57 : vector<8x128xf32> to vector<8x128xbf16>
    %c0_59 = arith.constant 0 : index
    %c1152 = arith.constant 1152 : index
    %59 = vector.load %arg8[%c0_59, %c1152] : memref<8x2048xbf16, #tpu.memory_space<vmem>>, vector<8x128xbf16>
    tpu.vector_store %arg8[%c0_59, %c1152], %58 {strides = array<i32>} : memref<8x2048xbf16, #tpu.memory_space<vmem>>, vector<8x128xbf16>,
    %c10 = arith.constant 10 : index
    %c0_60 = arith.constant 0 : index
    %c0_61 = arith.constant 0 : index
    %60 = vector.load %arg1[%c10, %c0_60, %c0_61] : memref<16x8x128xbf16, #tpu.memory_space<vmem>>, vector<1x8x128xbf16>
    %61 = vector.shape_cast %60 : vector<1x8x128xbf16> to vector<8x128xbf16>
    %c0_62 = arith.constant 0 : index
    %c0_63 = arith.constant 0 : index
    %62 = vector.load %arg2[%c0_62, %c0_63] : memref<128x128xbf16, #tpu.memory_space<vmem>>, vector<128x128xbf16>
    %cst_64 = arith.constant dense<0.000000e+00> : vector<8x128xf32>
    %63 = tpu.matmul %61, %62, %cst_64 {dimension_numbers = #tpu.dot_dimension_numbers<[1], [0], [0], [1], [0, 0, 1, 1], [], []>} : vector<8x128xbf16>, vector<128x128xbf16>, vector<8x128xf32> -> vector<8x128xf32>
    %64 = arith.truncf %63 : vector<8x128xf32> to vector<8x128xbf16>
    %c0_65 = arith.constant 0 : index
    %c1280 = arith.constant 1280 : index
    %65 = vector.load %arg8[%c0_65, %c1280] : memref<8x2048xbf16, #tpu.memory_space<vmem>>, vector<8x128xbf16>
    tpu.vector_store %arg8[%c0_65, %c1280], %64 {strides = array<i32>} : memref<8x2048xbf16, #tpu.memory_space<vmem>>, vector<8x128xbf16>,
    %c11 = arith.constant 11 : index
    %c0_66 = arith.constant 0 : index
    %c0_67 = arith.constant 0 : index
    %66 = vector.load %arg1[%c11, %c0_66, %c0_67] : memref<16x8x128xbf16, #tpu.memory_space<vmem>>, vector<1x8x128xbf16>
    %67 = vector.shape_cast %66 : vector<1x8x128xbf16> to vector<8x128xbf16>
    %c0_68 = arith.constant 0 : index
    %c0_69 = arith.constant 0 : index
    %68 = vector.load %arg2[%c0_68, %c0_69] : memref<128x128xbf16, #tpu.memory_space<vmem>>, vector<128x128xbf16>
    %cst_70 = arith.constant dense<0.000000e+00> : vector<8x128xf32>
    %69 = tpu.matmul %67, %68, %cst_70 {dimension_numbers = #tpu.dot_dimension_numbers<[1], [0], [0], [1], [0, 0, 1, 1], [], []>} : vector<8x128xbf16>, vector<128x128xbf16>, vector<8x128xf32> -> vector<8x128xf32>
    %70 = arith.truncf %69 : vector<8x128xf32> to vector<8x128xbf16>
    %c0_71 = arith.constant 0 : index
    %c1408 = arith.constant 1408 : index
    %71 = vector.load %arg8[%c0_71, %c1408] : memref<8x2048xbf16, #tpu.memory_space<vmem>>, vector<8x128xbf16>
    tpu.vector_store %arg8[%c0_71, %c1408], %70 {strides = array<i32>} : memref<8x2048xbf16, #tpu.memory_space<vmem>>, vector<8x128xbf16>,
    %c12 = arith.constant 12 : index
    %c0_72 = arith.constant 0 : index
    %c0_73 = arith.constant 0 : index
    %72 = vector.load %arg1[%c12, %c0_72, %c0_73] : memref<16x8x128xbf16, #tpu.memory_space<vmem>>, vector<1x8x128xbf16>
    %73 = vector.shape_cast %72 : vector<1x8x128xbf16> to vector<8x128xbf16>
    %c0_74 = arith.constant 0 : index
    %c0_75 = arith.constant 0 : index
    %74 = vector.load %arg2[%c0_74, %c0_75] : memref<128x128xbf16, #tpu.memory_space<vmem>>, vector<128x128xbf16>
    %cst_76 = arith.constant dense<0.000000e+00> : vector<8x128xf32>
    %75 = tpu.matmul %73, %74, %cst_76 {dimension_numbers = #tpu.dot_dimension_numbers<[1], [0], [0], [1], [0, 0, 1, 1], [], []>} : vector<8x128xbf16>, vector<128x128xbf16>, vector<8x128xf32> -> vector<8x128xf32>
    %76 = arith.truncf %75 : vector<8x128xf32> to vector<8x128xbf16>
    %c0_77 = arith.constant 0 : index
    %c1536 = arith.constant 1536 : index
    %77 = vector.load %arg8[%c0_77, %c1536] : memref<8x2048xbf16, #tpu.memory_space<vmem>>, vector<8x128xbf16>
    tpu.vector_store %arg8[%c0_77, %c1536], %76 {strides = array<i32>} : memref<8x2048xbf16, #tpu.memory_space<vmem>>, vector<8x128xbf16>,
    %c13 = arith.constant 13 : index
    %c0_78 = arith.constant 0 : index
    %c0_79 = arith.constant 0 : index
    %78 = vector.load %arg1[%c13, %c0_78, %c0_79] : memref<16x8x128xbf16, #tpu.memory_space<vmem>>, vector<1x8x128xbf16>
    %79 = vector.shape_cast %78 : vector<1x8x128xbf16> to vector<8x128xbf16>
    %c0_80 = arith.constant 0 : index
    %c0_81 = arith.constant 0 : index
    %80 = vector.load %arg2[%c0_80, %c0_81] : memref<128x128xbf16, #tpu.memory_space<vmem>>, vector<128x128xbf16>
    %cst_82 = arith.constant dense<0.000000e+00> : vector<8x128xf32>
    %81 = tpu.matmul %79, %80, %cst_82 {dimension_numbers = #tpu.dot_dimension_numbers<[1], [0], [0], [1], [0, 0, 1, 1], [], []>} : vector<8x128xbf16>, vector<128x128xbf16>, vector<8x128xf32> -> vector<8x128xf32>
    %82 = arith.truncf %81 : vector<8x128xf32> to vector<8x128xbf16>
    %c0_83 = arith.constant 0 : index
    %c1664 = arith.constant 1664 : index
    %83 = vector.load %arg8[%c0_83, %c1664] : memref<8x2048xbf16, #tpu.memory_space<vmem>>, vector<8x128xbf16>
    tpu.vector_store %arg8[%c0_83, %c1664], %82 {strides = array<i32>} : memref<8x2048xbf16, #tpu.memory_space<vmem>>, vector<8x128xbf16>,
    %c14 = arith.constant 14 : index
    %c0_84 = arith.constant 0 : index
    %c0_85 = arith.constant 0 : index
    %84 = vector.load %arg1[%c14, %c0_84, %c0_85] : memref<16x8x128xbf16, #tpu.memory_space<vmem>>, vector<1x8x128xbf16>
    %85 = vector.shape_cast %84 : vector<1x8x128xbf16> to vector<8x128xbf16>
    %c0_86 = arith.constant 0 : index
    %c0_87 = arith.constant 0 : index
    %86 = vector.load %arg2[%c0_86, %c0_87] : memref<128x128xbf16, #tpu.memory_space<vmem>>, vector<128x128xbf16>
    %cst_88 = arith.constant dense<0.000000e+00> : vector<8x128xf32>
    %87 = tpu.matmul %85, %86, %cst_88 {dimension_numbers = #tpu.dot_dimension_numbers<[1], [0], [0], [1], [0, 0, 1, 1], [], []>} : vector<8x128xbf16>, vector<128x128xbf16>, vector<8x128xf32> -> vector<8x128xf32>
    %88 = arith.truncf %87 : vector<8x128xf32> to vector<8x128xbf16>
    %c0_89 = arith.constant 0 : index
    %c1792 = arith.constant 1792 : index
    %89 = vector.load %arg8[%c0_89, %c1792] : memref<8x2048xbf16, #tpu.memory_space<vmem>>, vector<8x128xbf16>
    tpu.vector_store %arg8[%c0_89, %c1792], %88 {strides = array<i32>} : memref<8x2048xbf16, #tpu.memory_space<vmem>>, vector<8x128xbf16>,
    %c15 = arith.constant 15 : index
    %c0_90 = arith.constant 0 : index
    %c0_91 = arith.constant 0 : index
    %90 = vector.load %arg1[%c15, %c0_90, %c0_91] : memref<16x8x128xbf16, #tpu.memory_space<vmem>>, vector<1x8x128xbf16>
    %91 = vector.shape_cast %90 : vector<1x8x128xbf16> to vector<8x128xbf16>
    %c0_92 = arith.constant 0 : index
    %c0_93 = arith.constant 0 : index
    %92 = vector.load %arg2[%c0_92, %c0_93] : memref<128x128xbf16, #tpu.memory_space<vmem>>, vector<128x128xbf16>
    %cst_94 = arith.constant dense<0.000000e+00> : vector<8x128xf32>
    %93 = tpu.matmul %91, %92, %cst_94 {dimension_numbers = #tpu.dot_dimension_numbers<[1], [0], [0], [1], [0, 0, 1, 1], [], []>} : vector<8x128xbf16>, vector<128x128xbf16>, vector<8x128xf32> -> vector<8x128xf32>
    %94 = arith.truncf %93 : vector<8x128xf32> to vector<8x128xbf16>
    %c0_95 = arith.constant 0 : index
    %c1920 = arith.constant 1920 : index
    %95 = vector.load %arg8[%c0_95, %c1920] : memref<8x2048xbf16, #tpu.memory_space<vmem>>, vector<8x128xbf16>
    tpu.vector_store %arg8[%c0_95, %c1920], %94 {strides = array<i32>} : memref<8x2048xbf16, #tpu.memory_space<vmem>>, vector<8x128xbf16>,
    %cst_96 = arith.constant 0.000000e+00 : f32
    %96 = vector.broadcast %cst_96 : f32 to vector<8x128xf32>
    %c0_97 = arith.constant 0 : index
    %c0_98 = arith.constant 0 : index
    %97 = vector.load %arg9[%c0_97, %c0_98] : memref<8x128xf32, #tpu.memory_space<vmem>>, vector<8x128xf32>
    tpu.vector_store %arg9[%c0_97, %c0_98], %96 {strides = array<i32>} : memref<8x128xf32, #tpu.memory_space<vmem>>, vector<8x128xf32>,
    %c0_99 = arith.constant 0 : index
    %c0_100 = arith.constant 0 : index
    %98 = vector.load %arg8[%c0_99, %c0_100] : memref<8x2048xbf16, #tpu.memory_space<vmem>>, vector<8x2048xbf16>
    %c0_101 = arith.constant 0 : index
    %c0_102 = arith.constant 0 : index
    %99 = vector.load %arg3[%c0_101, %c0_102] : memref<2048x1024xbf16, #tpu.memory_space<vmem>>, vector<2048x256xbf16>
    %cst_103 = arith.constant dense<0.000000e+00> : vector<8x256xf32>
    %100 = tpu.matmul %98, %99, %cst_103 {dimension_numbers = #tpu.dot_dimension_numbers<[1], [0], [0], [1], [0, 0, 1, 1], [], []>} : vector<8x2048xbf16>, vector<2048x256xbf16>, vector<8x256xf32> -> vector<8x256xf32>
    %c0_104 = arith.constant 0 : index
    %c0_105 = arith.constant 0 : index
    %101 = vector.load %arg4[%c0_104, %c0_105] : memref<1x1024xf32, #tpu.memory_space<vmem>>, vector<1x256xf32>
    %102 = vector.broadcast %101 : vector<1x256xf32> to vector<8x256xf32>
    %103 = arith.addf %100, %102 : vector<8x256xf32>
    %cst_106 = arith.constant 0.000000e+00 : f32
    %104 = vector.broadcast %cst_106 : f32 to vector<8x256xf32>
    %105 = arith.maximumf %103, %104 : vector<8x256xf32>
    %106 = arith.truncf %105 : vector<8x256xf32> to vector<8x256xbf16>
    %c0_107 = arith.constant 0 : index
    %c0_108 = arith.constant 0 : index
    %107 = vector.load %arg9[%c0_107, %c0_108] : memref<8x128xf32, #tpu.memory_space<vmem>>, vector<8x128xf32>
    %c0_109 = arith.constant 0 : index
    %c0_110 = arith.constant 0 : index
    %108 = vector.load %arg5[%c0_109, %c0_110] : memref<1024x128xbf16, #tpu.memory_space<vmem>>, vector<256x128xbf16>
    %cst_111 = arith.constant dense<0.000000e+00> : vector<8x128xf32>
    %109 = tpu.matmul %106, %108, %cst_111 {dimension_numbers = #tpu.dot_dimension_numbers<[1], [0], [0], [1], [0, 0, 1, 1], [], []>} : vector<8x256xbf16>, vector<256x128xbf16>, vector<8x128xf32> -> vector<8x128xf32>
    %110 = arith.addf %107, %109 : vector<8x128xf32>
    %c0_112 = arith.constant 0 : index
    %c0_113 = arith.constant 0 : index
    %111 = vector.load %arg9[%c0_112, %c0_113] : memref<8x128xf32, #tpu.memory_space<vmem>>, vector<8x128xf32>
    tpu.vector_store %arg9[%c0_112, %c0_113], %110 {strides = array<i32>} : memref<8x128xf32, #tpu.memory_space<vmem>>, vector<8x128xf32>,
    %c0_114 = arith.constant 0 : index
    %c0_115 = arith.constant 0 : index
    %112 = vector.load %arg8[%c0_114, %c0_115] : memref<8x2048xbf16, #tpu.memory_space<vmem>>, vector<8x2048xbf16>
    %c0_116 = arith.constant 0 : index
    %c256_117 = arith.constant 256 : index
    %113 = vector.load %arg3[%c0_116, %c256_117] : memref<2048x1024xbf16, #tpu.memory_space<vmem>>, vector<2048x256xbf16>
    %cst_118 = arith.constant dense<0.000000e+00> : vector<8x256xf32>
    %114 = tpu.matmul %112, %113, %cst_118 {dimension_numbers = #tpu.dot_dimension_numbers<[1], [0], [0], [1], [0, 0, 1, 1], [], []>} : vector<8x2048xbf16>, vector<2048x256xbf16>, vector<8x256xf32> -> vector<8x256xf32>
    %c0_119 = arith.constant 0 : index
    %c256_120 = arith.constant 256 : index
    %115 = vector.load %arg4[%c0_119, %c256_120] : memref<1x1024xf32, #tpu.memory_space<vmem>>, vector<1x256xf32>
    %116 = vector.broadcast %115 : vector<1x256xf32> to vector<8x256xf32>
    %117 = arith.addf %114, %116 : vector<8x256xf32>
    %cst_121 = arith.constant 0.000000e+00 : f32
    %118 = vector.broadcast %cst_121 : f32 to vector<8x256xf32>
    %119 = arith.maximumf %117, %118 : vector<8x256xf32>
    %120 = arith.truncf %119 : vector<8x256xf32> to vector<8x256xbf16>
    %c0_122 = arith.constant 0 : index
    %c0_123 = arith.constant 0 : index
    %121 = vector.load %arg9[%c0_122, %c0_123] : memref<8x128xf32, #tpu.memory_space<vmem>>, vector<8x128xf32>
    %c256_124 = arith.constant 256 : index
    %c0_125 = arith.constant 0 : index
    %122 = vector.load %arg5[%c256_124, %c0_125] : memref<1024x128xbf16, #tpu.memory_space<vmem>>, vector<256x128xbf16>
    %cst_126 = arith.constant dense<0.000000e+00> : vector<8x128xf32>
    %123 = tpu.matmul %120, %122, %cst_126 {dimension_numbers = #tpu.dot_dimension_numbers<[1], [0], [0], [1], [0, 0, 1, 1], [], []>} : vector<8x256xbf16>, vector<256x128xbf16>, vector<8x128xf32> -> vector<8x128xf32>
    %124 = arith.addf %121, %123 : vector<8x128xf32>
    %c0_127 = arith.constant 0 : index
    %c0_128 = arith.constant 0 : index
    %125 = vector.load %arg9[%c0_127, %c0_128] : memref<8x128xf32, #tpu.memory_space<vmem>>, vector<8x128xf32>
    tpu.vector_store %arg9[%c0_127, %c0_128], %124 {strides = array<i32>} : memref<8x128xf32, #tpu.memory_space<vmem>>, vector<8x128xf32>,
    %c0_129 = arith.constant 0 : index
    %c0_130 = arith.constant 0 : index
    %126 = vector.load %arg8[%c0_129, %c0_130] : memref<8x2048xbf16, #tpu.memory_space<vmem>>, vector<8x2048xbf16>
    %c0_131 = arith.constant 0 : index
    %c512_132 = arith.constant 512 : index
    %127 = vector.load %arg3[%c0_131, %c512_132] : memref<2048x1024xbf16, #tpu.memory_space<vmem>>, vector<2048x256xbf16>
    %cst_133 = arith.constant dense<0.000000e+00> : vector<8x256xf32>
    %128 = tpu.matmul %126, %127, %cst_133 {dimension_numbers = #tpu.dot_dimension_numbers<[1], [0], [0], [1], [0, 0, 1, 1], [], []>} : vector<8x2048xbf16>, vector<2048x256xbf16>, vector<8x256xf32> -> vector<8x256xf32>
    %c0_134 = arith.constant 0 : index
    %c512_135 = arith.constant 512 : index
    %129 = vector.load %arg4[%c0_134, %c512_135] : memref<1x1024xf32, #tpu.memory_space<vmem>>, vector<1x256xf32>
    %130 = vector.broadcast %129 : vector<1x256xf32> to vector<8x256xf32>
    %131 = arith.addf %128, %130 : vector<8x256xf32>
    %cst_136 = arith.constant 0.000000e+00 : f32
    %132 = vector.broadcast %cst_136 : f32 to vector<8x256xf32>
    %133 = arith.maximumf %131, %132 : vector<8x256xf32>
    %134 = arith.truncf %133 : vector<8x256xf32> to vector<8x256xbf16>
    %c0_137 = arith.constant 0 : index
    %c0_138 = arith.constant 0 : index
    %135 = vector.load %arg9[%c0_137, %c0_138] : memref<8x128xf32, #tpu.memory_space<vmem>>, vector<8x128xf32>
    %c512_139 = arith.constant 512 : index
    %c0_140 = arith.constant 0 : index
    %136 = vector.load %arg5[%c512_139, %c0_140] : memref<1024x128xbf16, #tpu.memory_space<vmem>>, vector<256x128xbf16>
    %cst_141 = arith.constant dense<0.000000e+00> : vector<8x128xf32>
    %137 = tpu.matmul %134, %136, %cst_141 {dimension_numbers = #tpu.dot_dimension_numbers<[1], [0], [0], [1], [0, 0, 1, 1], [], []>} : vector<8x256xbf16>, vector<256x128xbf16>, vector<8x128xf32> -> vector<8x128xf32>
    %138 = arith.addf %135, %137 : vector<8x128xf32>
    %c0_142 = arith.constant 0 : index
    %c0_143 = arith.constant 0 : index
    %139 = vector.load %arg9[%c0_142, %c0_143] : memref<8x128xf32, #tpu.memory_space<vmem>>, vector<8x128xf32>
    tpu.vector_store %arg9[%c0_142, %c0_143], %138 {strides = array<i32>} : memref<8x128xf32, #tpu.memory_space<vmem>>, vector<8x128xf32>,
    %c0_144 = arith.constant 0 : index
    %c0_145 = arith.constant 0 : index
    %140 = vector.load %arg8[%c0_144, %c0_145] : memref<8x2048xbf16, #tpu.memory_space<vmem>>, vector<8x2048xbf16>
    %c0_146 = arith.constant 0 : index
    %c768_147 = arith.constant 768 : index
    %141 = vector.load %arg3[%c0_146, %c768_147] : memref<2048x1024xbf16, #tpu.memory_space<vmem>>, vector<2048x256xbf16>
    %cst_148 = arith.constant dense<0.000000e+00> : vector<8x256xf32>
    %142 = tpu.matmul %140, %141, %cst_148 {dimension_numbers = #tpu.dot_dimension_numbers<[1], [0], [0], [1], [0, 0, 1, 1], [], []>} : vector<8x2048xbf16>, vector<2048x256xbf16>, vector<8x256xf32> -> vector<8x256xf32>
    %c0_149 = arith.constant 0 : index
    %c768_150 = arith.constant 768 : index
    %143 = vector.load %arg4[%c0_149, %c768_150] : memref<1x1024xf32, #tpu.memory_space<vmem>>, vector<1x256xf32>
    %144 = vector.broadcast %143 : vector<1x256xf32> to vector<8x256xf32>
    %145 = arith.addf %142, %144 : vector<8x256xf32>
    %cst_151 = arith.constant 0.000000e+00 : f32
    %146 = vector.broadcast %cst_151 : f32 to vector<8x256xf32>
    %147 = arith.maximumf %145, %146 : vector<8x256xf32>
    %148 = arith.truncf %147 : vector<8x256xf32> to vector<8x256xbf16>
    %c0_152 = arith.constant 0 : index
    %c0_153 = arith.constant 0 : index
    %149 = vector.load %arg9[%c0_152, %c0_153] : memref<8x128xf32, #tpu.memory_space<vmem>>, vector<8x128xf32>
    %c768_154 = arith.constant 768 : index
    %c0_155 = arith.constant 0 : index
    %150 = vector.load %arg5[%c768_154, %c0_155] : memref<1024x128xbf16, #tpu.memory_space<vmem>>, vector<256x128xbf16>
    %cst_156 = arith.constant dense<0.000000e+00> : vector<8x128xf32>
    %151 = tpu.matmul %148, %150, %cst_156 {dimension_numbers = #tpu.dot_dimension_numbers<[1], [0], [0], [1], [0, 0, 1, 1], [], []>} : vector<8x256xbf16>, vector<256x128xbf16>, vector<8x128xf32> -> vector<8x128xf32>
    %152 = arith.addf %149, %151 : vector<8x128xf32>
    %c0_157 = arith.constant 0 : index
    %c0_158 = arith.constant 0 : index
    %153 = vector.load %arg9[%c0_157, %c0_158] : memref<8x128xf32, #tpu.memory_space<vmem>>, vector<8x128xf32>
    tpu.vector_store %arg9[%c0_157, %c0_158], %152 {strides = array<i32>} : memref<8x128xf32, #tpu.memory_space<vmem>>, vector<8x128xf32>,
    %c0_159 = arith.constant 0 : index
    %c0_160 = arith.constant 0 : index
    %154 = vector.load %arg9[%c0_159, %c0_160] : memref<8x128xf32, #tpu.memory_space<vmem>>, vector<8x128xf32>
    %c0_161 = arith.constant 0 : index
    %c0_162 = arith.constant 0 : index
    %155 = vector.load %arg6[%c0_161, %c0_162] : memref<1x128xf32, #tpu.memory_space<vmem>>, vector<1x128xf32>
    %156 = vector.broadcast %155 : vector<1x128xf32> to vector<8x128xf32>
    %157 = arith.addf %154, %156 : vector<8x128xf32>
    %158 = arith.truncf %157 : vector<8x128xf32> to vector<8x128xbf16>
    %c0_163 = arith.constant 0 : index
    %c0_164 = arith.constant 0 : index
    %159 = vector.load %arg7[%c0_163, %c0_164] : memref<8x128xbf16, #tpu.memory_space<vmem>>, vector<8x128xbf16>
    tpu.vector_store %arg7[%c0_163, %c0_164], %158 {strides = array<i32>} : memref<8x128xbf16, #tpu.memory_space<vmem>>, vector<8x128xbf16>,
    return
  }
  func.func @transform_0(%arg0: i32) -> (i32, i32, i32) {
    %c0_i32 = arith.constant 0 : i32
    %c0_i32_0 = arith.constant 0 : i32
    %c0_i32_1 = arith.constant 0 : i32
    return %c0_i32, %arg0, %c0_i32_0 : i32, i32, i32
  }
  func.func @transform_1(%arg0: i32) -> (i32, i32) {
    %c0_i32 = arith.constant 0 : i32
    %c0_i32_0 = arith.constant 0 : i32
    %c0_i32_1 = arith.constant 0 : i32
    return %c0_i32, %c0_i32_0 : i32, i32
  }
  func.func @transform_2(%arg0: i32) -> (i32, i32) {
    %c0_i32 = arith.constant 0 : i32
    %c0_i32_0 = arith.constant 0 : i32
    %c0_i32_1 = arith.constant 0 : i32
    return %c0_i32, %c0_i32_0 : i32, i32
  }
  func.func @transform_3(%arg0: i32) -> (i32, i32) {
    %c0_i32 = arith.constant 0 : i32
    %c0_i32_0 = arith.constant 0 : i32
    %c0_i32_1 = arith.constant 0 : i32
    return %c0_i32, %c0_i32_0 : i32, i32
  }
  func.func @transform_4(%arg0: i32) -> (i32, i32) {
    %c0_i32 = arith.constant 0 : i32
    %c0_i32_0 = arith.constant 0 : i32
    %c0_i32_1 = arith.constant 0 : i32
    return %c0_i32, %c0_i32_0 : i32, i32
  }
  func.func @transform_5(%arg0: i32) -> (i32, i32) {
    %c0_i32 = arith.constant 0 : i32
    %c0_i32_0 = arith.constant 0 : i32
    %c0_i32_1 = arith.constant 0 : i32
    return %c0_i32, %c0_i32_0 : i32, i32
  }
  func.func @transform_6(%arg0: i32) -> (i32, i32) {
    %c0_i32 = arith.constant 0 : i32
    %c0_i32_0 = arith.constant 0 : i32
    return %arg0, %c0_i32 : i32, i32
  }
}

</mosaic_0001>

<llo_original>
// kernel: tpu_custom_call.1
$region0: #{tpu_custom_call.1}
  #allocation0 [shape = 'u32[]', space=smem, size = 0x4, offset = 0x4, fixed_abs, tag = 'smem constant byte address 0x4 - core index']
  #allocation1 [shape = 'u32[144,128]{1,0:T(1,128)}', space=vmem, size = 0x12000, scoped, tag = 'internal scratch']
  #allocation2 [shape = 'bf16[8,2048]{1,0:T(8,128)(2,1)}', space=vmem, size = 0x8000, scoped, tag = 'scratch operand']
  #allocation3 [shape = 'f32[8,128]{1,0:T(8,128)}', space=vmem, size = 0x1000, scoped, tag = 'scratch operand']
  %s0 = inlined_call_operand.hbm [shape: bf16[16,8,128], index: 0, kind: input, shape index: {}]
  %s1 = inlined_call_operand.hbm [shape: bf16[128,128], index: 1, kind: input, shape index: {}]
  %s2 = inlined_call_operand.hbm [shape: bf16[2048,1024], index: 2, kind: input, shape index: {}]
  %s3 = inlined_call_operand.hbm [shape: f32[1,1024], index: 3, kind: input, shape index: {}]
  %s4 = inlined_call_operand.hbm [shape: bf16[1024,128], index: 4, kind: input, shape index: {}]
  %s5 = inlined_call_operand.hbm [shape: f32[1,128], index: 5, kind: input, shape index: {}]
  %s6 = inlined_call_operand.hbm [shape: bf16[8,128], index: 6, kind: output, shape index: {}]
  %s7 = sld [smem:[#allocation0]]
  $region58: #{tpu_custom_call.1} parent=0
    _
  %s9 = ssub.s32 1, %s7
  %s10 = scalar_select 0, %s9, %s7
  $region1: #{tpu_custom_call.1} parent=0
    #allocation4 [shape = 'u8[32768]{0}', space=vmem, size = 0x8000, scoped, tag = 'input window, operand 0, single buffered']
    #allocation5 [shape = 's32[1]{0}', space=sflag, size = 0x4, scoped, tag = 'scoped memory for tpu_custom_call.1']
    #allocation6 [shape = 's32[1]{0}', space=sflag, size = 0x4, scoped, tag = 'scoped memory for tpu_custom_call.1']
    #allocation7 [shape = 'u8[32768]{0}', space=vmem, size = 0x8000, scoped, tag = 'input window, operand 1, single buffered']
    #allocation8 [shape = 's32[1]{0}', space=sflag, size = 0x4, scoped, tag = 'scoped memory for tpu_custom_call.1']
    #allocation9 [shape = 'u8[4194304]{0}', space=vmem, size = 0x400000, scoped, tag = 'input window, operand 2, single buffered']
    #allocation10 [shape = 'u8[4096]{0}', space=vmem, size = 0x1000, scoped, tag = 'input window, operand 3, single buffered']
    #allocation11 [shape = 's32[1]{0}', space=sflag, size = 0x4, scoped, tag = 'scoped memory for tpu_custom_call.1']
    #allocation12 [shape = 'u8[262144]{0}', space=vmem, size = 0x40000, scoped, tag = 'input window, operand 4, single buffered']
    #allocation13 [shape = 'u8[512]{0}', space=vmem, size = 0x400, scoped, tag = 'input window, operand 5, single buffered']
    #allocation14 [shape = 's32[1]{0}', space=sflag, size = 0x4, scoped, tag = 'scoped memory for tpu_custom_call.1']
    #allocation15 [shape = 'u8[2048]{0}', space=vmem, size = 0x800, scoped, tag = 'output window, operand 0, single buffered']
    %11 = vsyncpa [#allocation5], 0
    %12 = vsyncpa [#allocation8], 0
    %13 = vsyncpa [#allocation11], 0
    %14 = vsyncpa [#allocation14], 0
    %15 = vsyncpa [#allocation6], 0
    // Predicated region
    $region2: #{tpu_custom_call.1} parent=1 // pred_check
      _
    $region3: #{tpu_custom_call.1} parent=1 // pred_check_branch
      %17 = sbr.rel (0) target = $region5
    $region4: #{tpu_custom_call.1} parent=1 // pred_region
      %s19 = ssub.s32 1024, 1024
      %20 = vsyncadd [#allocation5], %s19
      %s21 = sshll.u32 [#allocation4], 4
      %s22 = int_to_ptr.vmem [resolvable:$true] %s21
      %27 = dma.hbm_to_vmem [thread:$0]  %s0, 1024, %s22, [#allocation5], 64, 64, 4
    $region5: #{tpu_custom_call.1} parent=1 // pred_fallthru
      _
    // Predicated region
    $region6: #{tpu_custom_call.1} parent=1 // pred_check
      _
    $region7: #{tpu_custom_call.1} parent=1 // pred_check_branch
      %29 = sbr.rel (0) target = $region9
    $region8: #{tpu_custom_call.1} parent=1 // pred_region
      %s31 = ssub.s32 1024, 1024
      %32 = vsyncadd [#allocation8], %s31
      %s33 = sshll.u32 [#allocation7], 4
      %s34 = int_to_ptr.vmem [resolvable:$true] %s33
      %39 = dma.hbm_to_vmem [thread:$0]  %s1, 1024, %s34, [#allocation8], 64, 64, 4
    $region9: #{tpu_custom_call.1} parent=1 // pred_fallthru
      _
    // Predicated region
    $region10: #{tpu_custom_call.1} parent=1 // pred_check
      _
    $region11: #{tpu_custom_call.1} parent=1 // pred_check_branch
      %41 = sbr.rel (0) target = $region13
    $region12: #{tpu_custom_call.1} parent=1 // pred_region
      %s43 = ssub.s32 131072, 131072
      %44 = vsyncadd [#allocation8], %s43
      %s45 = sshll.u32 [#allocation9], 4
      %s46 = int_to_ptr.vmem [resolvable:$true] %s45
      %51 = dma.hbm_to_vmem [thread:$0]  %s2, 131072, %s46, [#allocation8], 512, 512, 32
    $region13: #{tpu_custom_call.1} parent=1 // pred_fallthru
      _
    // Predicated region
    $region14: #{tpu_custom_call.1} parent=1 // pred_check
      _
    $region15: #{tpu_custom_call.1} parent=1 // pred_check_branch
      %53 = sbr.rel (0) target = $region17
    $region16: #{tpu_custom_call.1} parent=1 // pred_region
      %s55 = ssub.s32 128, 128
      %56 = vsyncadd [#allocation11], %s55
      %s58 = sshll.u32 [#allocation10], 4
      %s59 = int_to_ptr.vmem [resolvable:$true] %s58
      %61 = dma.hbm_to_vmem [thread:$0]  %s3, 128, %s59, [#allocation11]
    $region17: #{tpu_custom_call.1} parent=1 // pred_fallthru
      _
    // Predicated region
    $region18: #{tpu_custom_call.1} parent=1 // pred_check
      _
    $region19: #{tpu_custom_call.1} parent=1 // pred_check_branch
      %63 = sbr.rel (0) target = $region21
    $region20: #{tpu_custom_call.1} parent=1 // pred_region
      %s65 = ssub.s32 8192, 8192
      %66 = vsyncadd [#allocation11], %s65
      %s67 = sshll.u32 [#allocation12], 4
      %s68 = int_to_ptr.vmem [resolvable:$true] %s67
      %73 = dma.hbm_to_vmem [thread:$0]  %s4, 8192, %s68, [#allocation11], 64, 64, 4
    $region21: #{tpu_custom_call.1} parent=1 // pred_fallthru
      _
    // Predicated region
    $region22: #{tpu_custom_call.1} parent=1 // pred_check
      _
    $region23: #{tpu_custom_call.1} parent=1 // pred_check_branch
      %75 = sbr.rel (0) target = $region25
    $region24: #{tpu_custom_call.1} parent=1 // pred_region
      %s77 = ssub.s32 16, 16
      %78 = vsyncadd [#allocation14], %s77
      %s80 = sshll.u32 [#allocation13], 4
      %s81 = int_to_ptr.vmem [resolvable:$true] %s80
      %83 = dma.hbm_to_vmem [thread:$0]  %s5, 16, %s81, [#allocation14]
    $region25: #{tpu_custom_call.1} parent=1 // pred_fallthru
      _
    // Predicated region
    $region26: #{tpu_custom_call.1} parent=1 // pred_check
      _
    $region27: #{tpu_custom_call.1} parent=1 // pred_check_branch
      %85 = sbr.rel (0) target = $region29
    $region28: #{tpu_custom_call.1} parent=1 // pred_region
      %86 = dma.done [#allocation5], 1024
    $region29: #{tpu_custom_call.1} parent=1 // pred_fallthru
      _
    // Predicated region
    $region30: #{tpu_custom_call.1} parent=1 // pred_check
      _
    $region31: #{tpu_custom_call.1} parent=1 // pred_check_branch
      %88 = sbr.rel (0) target = $region33
    $region32: #{tpu_custom_call.1} parent=1 // pred_region
      %89 = dma.done [#allocation8], 1024
    $region33: #{tpu_custom_call.1} parent=1 // pred_fallthru
      _
    // Predicated region
    $region34: #{tpu_custom_call.1} parent=1 // pred_check
      _
    $region35: #{tpu_custom_call.1} parent=1 // pred_check_branch
      %91 = sbr.rel (0) target = $region37
    $region36: #{tpu_custom_call.1} parent=1 // pred_region
      %92 = dma.done [#allocation8], 131072
    $region37: #{tpu_custom_call.1} parent=1 // pred_fallthru
      _
    // Predicated region
    $region38: #{tpu_custom_call.1} parent=1 // pred_check
      _
    $region39: #{tpu_custom_call.1} parent=1 // pred_check_branch
      %94 = sbr.rel (0) target = $region41
    $region40: #{tpu_custom_call.1} parent=1 // pred_region
      %95 = dma.done [#allocation11], 128
    $region41: #{tpu_custom_call.1} parent=1 // pred_fallthru
      _
    // Predicated region
    $region42: #{tpu_custom_call.1} parent=1 // pred_check
      _
    $region43: #{tpu_custom_call.1} parent=1 // pred_check_branch
      %97 = sbr.rel (0) target = $region45
    $region44: #{tpu_custom_call.1} parent=1 // pred_region
      %98 = dma.done [#allocation11], 8192
    $region45: #{tpu_custom_call.1} parent=1 // pred_fallthru
      _
    // Predicated region
    $region46: #{tpu_custom_call.1} parent=1 // pred_check
      _
    $region47: #{tpu_custom_call.1} parent=1 // pred_check_branch
      %100 = sbr.rel (0) target = $region49
    $region48: #{tpu_custom_call.1} parent=1 // pred_region
      %101 = dma.done [#allocation14], 16
    $region49: #{tpu_custom_call.1} parent=1 // pred_fallthru
      _
    %v103 = vld [vmem:[#allocation4] sm:$0xf]
    %v104 = vld [vmem:[#allocation7] sm:$0xf]
    %v105 = vld [vmem:[#allocation7 + $0x4] sm:$0xf]
    %v106 = vld [vmem:[#allocation7 + $0x8] sm:$0xf]
    %v107 = vld [vmem:[#allocation7 + $0xc] sm:$0xf]
    %v108 = vld [vmem:[#allocation7 + $0x10] sm:$0xf]
    %v109 = vld [vmem:[#allocation7 + $0x14] sm:$0xf]
    %v110 = vld [vmem:[#allocation7 + $0x18] sm:$0xf]
    %v111 = vld [vmem:[#allocation7 + $0x1c] sm:$0xf]
    %v112 = vld [vmem:[#allocation7 + $0x20] sm:$0xf]
    %v113 = vld [vmem:[#allocation7 + $0x24] sm:$0xf]
    %v114 = vld [vmem:[#allocation7 + $0x28] sm:$0xf]
    %v115 = vld [vmem:[#allocation7 + $0x2c] sm:$0xf]
    %v116 = vld [vmem:[#allocation7 + $0x30] sm:$0xf]
    %v117 = vld [vmem:[#allocation7 + $0x34] sm:$0xf]
    %v118 = vld [vmem:[#allocation7 + $0x38] sm:$0xf]
    %v119 = vld [vmem:[#allocation7 + $0x3c] sm:$0xf]
    %v136 = vunpack.c.l.b16 %v104
    %v137 = vunpack.c.l.b16 %v105
    %v138 = vunpack.c.l.b16 %v106
    %v139 = vunpack.c.l.b16 %v107
    %v140 = vunpack.c.l.b16 %v108
    %v141 = vunpack.c.l.b16 %v109
    %v142 = vunpack.c.l.b16 %v110
    %v143 = vunpack.c.l.b16 %v111
    %v144 = vunpack.c.l.b16 %v112
    %v145 = vunpack.c.l.b16 %v113
    %v146 = vunpack.c.l.b16 %v114
    %v147 = vunpack.c.l.b16 %v115
    %v148 = vunpack.c.l.b16 %v116
    %v149 = vunpack.c.l.b16 %v117
    %v150 = vunpack.c.l.b16 %v118
    %v151 = vunpack.c.l.b16 %v119
    %v152 = vpack.c.b16 %v137, %v136
    %v153 = vpack.c.b16 %v139, %v138
    %v154 = vpack.c.b16 %v141, %v140
    %v155 = vpack.c.b16 %v143, %v142
    %v156 = vpack.c.b16 %v145, %v144
    %v157 = vpack.c.b16 %v147, %v146
    %v158 = vpack.c.b16 %v149, %v148
    %v159 = vpack.c.b16 %v151, %v150
    %168 = vmatprep.subr.bf16.mxu0 0
    %169 = vmatpush1.bf16.msra.mxu0 %v152
    %170 = vmatprep.subr.bf16.mxu0 0
    %171 = vmatpush1.bf16.msra.mxu0 %v153
    %172 = vmatprep.subr.bf16.mxu0 0
    %173 = vmatpush1.bf16.msra.mxu0 %v154
    %174 = vmatprep.subr.bf16.mxu0 0
    %175 = vmatpush1.bf16.msra.mxu0 %v155
    %176 = vmatprep.subr.bf16.mxu0 0
    %177 = vmatpush1.bf16.msra.mxu0 %v156
    %178 = vmatprep.subr.bf16.mxu0 0
    %179 = vmatpush1.bf16.msra.mxu0 %v157
    %180 = vmatprep.subr.bf16.mxu0 0
    %181 = vmatpush1.bf16.msra.mxu0 %v158
    %182 = vmatprep.subr.bf16.mxu0 0
    %183 = vmatpush1.bf16.msra.mxu0 %v159
    %184 = vmatprep.subr.bf16.mxu0 0
    %185 = vmatpush1.bf16.msra.mxu0 0
    %186 = vmatprep.subr.bf16.mxu0 0
    %187 = vmatpush1.bf16.msra.mxu0 0
    %188 = vmatprep.subr.bf16.mxu0 0
    %189 = vmatpush1.bf16.msra.mxu0 0
    %190 = vmatprep.subr.bf16.mxu0 0
    %191 = vmatpush1.bf16.msra.mxu0 0
    %192 = vmatprep.subr.bf16.mxu0 0
    %193 = vmatpush1.bf16.msra.mxu0 0
    %194 = vmatprep.subr.bf16.mxu0 0
    %195 = vmatpush1.bf16.msra.mxu0 0
    %196 = vmatprep.subr.bf16.mxu0 0
    %197 = vmatpush1.bf16.msra.mxu0 0
    %198 = vmatprep.subr.bf16.mxu0 0
    %199 = vmatpush1.bf16.msra.mxu0 0
    %200 = vmatprep.mubr.bf16.mxu0 0
    %201 = vmatmul.mubr.bf16.gmra.mrb[0].mxu0 %v103
    %v202 = vpop.f32.mrb[0].mxu0
    %v203 = vadd.f32 0.0, %v202
    %v204 = vpop.f32.mrb[0].mxu0
    %v205 = vpop.f32.mrb[0].mxu0
    %v206 = vpop.f32.mrb[0].mxu0
    %207 = vdwg.mxu0
    %v208 = vpack.c.bf16 %v203, %v203
    %209 = vst [vmem:[#allocation2] sm:$0xf] %v208
    %s210 = scalar_lea.vmem [#allocation4], 4
    %v211 = vld [vmem:[%s210] sm:$0xf]
    %v212 = vld [vmem:[#allocation7] sm:$0xf]
    %v213 = vld [vmem:[#allocation7 + $0x4] sm:$0xf]
    %v214 = vld [vmem:[#allocation7 + $0x8] sm:$0xf]
    %v215 = vld [vmem:[#allocation7 + $0xc] sm:$0xf]
    %v216 = vld [vmem:[#allocation7 + $0x10] sm:$0xf]
    %v217 = vld [vmem:[#allocation7 + $0x14] sm:$0xf]
    %v218 = vld [vmem:[#allocation7 + $0x18] sm:$0xf]
    %v219 = vld [vmem:[#allocation7 + $0x1c] sm:$0xf]
    %v220 = vld [vmem:[#allocation7 + $0x20] sm:$0xf]
    %v221 = vld [vmem:[#allocation7 + $0x24] sm:$0xf]
    %v222 = vld [vmem:[#allocation7 + $0x28] sm:$0xf]
    %v223 = vld [vmem:[#allocation7 + $0x2c] sm:$0xf]
    %v224 = vld [vmem:[#allocation7 + $0x30] sm:$0xf]
    %v225 = vld [vmem:[#allocation7 + $0x34] sm:$0xf]
    %v226 = vld [vmem:[#allocation7 + $0x38] sm:$0xf]
    %v227 = vld [vmem:[#allocation7 + $0x3c] sm:$0xf]
    %v244 = vunpack.c.l.b16 %v212
    %v245 = vunpack.c.l.b16 %v213
    %v246 = vunpack.c.l.b16 %v214
    %v247 = vunpack.c.l.b16 %v215
    %v248 = vunpack.c.l.b16 %v216
    %v249 = vunpack.c.l.b16 %v217
    %v250 = vunpack.c.l.b16 %v218
    %v251 = vunpack.c.l.b16 %v219
    %v252 = vunpack.c.l.b16 %v220
    %v253 = vunpack.c.l.b16 %v221
    %v254 = vunpack.c.l.b16 %v222
    %v255 = vunpack.c.l.b16 %v223
    %v256 = vunpack.c.l.b16 %v224
    %v257 = vunpack.c.l.b16 %v225
    %v258 = vunpack.c.l.b16 %v226
    %v259 = vunpack.c.l.b16 %v227
    %v260 = vpack.c.b16 %v245, %v244
    %v261 = vpack.c.b16 %v247, %v246
    %v262 = vpack.c.b16 %v249, %v248
    %v263 = vpack.c.b16 %v251, %v250
    %v264 = vpack.c.b16 %v253, %v252
    %v265 = vpack.c.b16 %v255, %v254
    %v266 = vpack.c.b16 %v257, %v256
    %v267 = vpack.c.b16 %v259, %v258
    %276 = vmatprep.subr.bf16.mxu0 0
    %277 = vmatpush1.bf16.msra.mxu0 %v260
    %278 = vmatprep.subr.bf16.mxu0 0
    %279 = vmatpush1.bf16.msra.mxu0 %v261
    %280 = vmatprep.subr.bf16.mxu0 0
    %281 = vmatpush1.bf16.msra.mxu0 %v262
    %282 = vmatprep.subr.bf16.mxu0 0
    %283 = vmatpush1.bf16.msra.mxu0 %v263
    %284 = vmatprep.subr.bf16.mxu0 0
    %285 = vmatpush1.bf16.msra.mxu0 %v264
    %286 = vmatprep.subr.bf16.mxu0 0
    %287 = vmatpush1.bf16.msra.mxu0 %v265
    %288 = vmatprep.subr.bf16.mxu0 0
    %289 = vmatpush1.bf16.msra.mxu0 %v266
    %290 = vmatprep.subr.bf16.mxu0 0
    %291 = vmatpush1.bf16.msra.mxu0 %v267
    %292 = vmatprep.subr.bf16.mxu0 0
    %293 = vmatpush1.bf16.msra.mxu0 0
    %294 = vmatprep.subr.bf16.mxu0 0
    %295 = vmatpush1.bf16.msra.mxu0 0
    %296 = vmatprep.subr.bf16.mxu0 0
    %297 = vmatpush1.bf16.msra.mxu0 0
    %298 = vmatprep.subr.bf16.mxu0 0
    %299 = vmatpush1.bf16.msra.mxu0 0
    %300 = vmatprep.subr.bf16.mxu0 0
    %301 = vmatpush1.bf16.msra.mxu0 0
    %302 = vmatprep.subr.bf16.mxu0 0
    %303 = vmatpush1.bf16.msra.mxu0 0
    %304 = vmatprep.subr.bf16.mxu0 0
    %305 = vmatpush1.bf16.msra.mxu0 0
    %306 = vmatprep.subr.bf16.mxu0 0
    %307 = vmatpush1.bf16.msra.mxu0 0
    %308 = vmatprep.mubr.bf16.mxu0 0
    %309 = vmatmul.mubr.bf16.gmra.mrb[0].mxu0 %v211
    %v310 = vpop.f32.mrb[0].mxu0
    %v311 = vadd.f32 0.0, %v310
    %v312 = vpop.f32.mrb[0].mxu0
    %v313 = vpop.f32.mrb[0].mxu0
    %v314 = vpop.f32.mrb[0].mxu0
    %315 = vdwg.mxu0
    %v316 = vpack.c.bf16 %v311, %v311
    %317 = vst [vmem:[#allocation2 + $0x4] sm:$0xf] %v316
    %s318 = scalar_lea.vmem [#allocation4], 8
    %v319 = vld [vmem:[%s318] sm:$0xf]
    %v320 = vld [vmem:[#allocation7] sm:$0xf]
    %v321 = vld [vmem:[#allocation7 + $0x4] sm:$0xf]
    %v322 = vld [vmem:[#allocation7 + $0x8] sm:$0xf]
    %v323 = vld [vmem:[#allocation7 + $0xc] sm:$0xf]
    %v324 = vld [vmem:[#allocation7 + $0x10] sm:$0xf]
    %v325 = vld [vmem:[#allocation7 + $0x14] sm:$0xf]
    %v326 = vld [vmem:[#allocation7 + $0x18] sm:$0xf]
    %v327 = vld [vmem:[#allocation7 + $0x1c] sm:$0xf]
    %v328 = vld [vmem:[#allocation7 + $0x20] sm:$0xf]
    %v329 = vld [vmem:[#allocation7 + $0x24] sm:$0xf]
    %v330 = vld [vmem:[#allocation7 + $0x28] sm:$0xf]
    %v331 = vld [vmem:[#allocation7 + $0x2c] sm:$0xf]
    %v332 = vld [vmem:[#allocation7 + $0x30] sm:$0xf]
    %v333 = vld [vmem:[#allocation7 + $0x34] sm:$0xf]
    %v334 = vld [vmem:[#allocation7 + $0x38] sm:$0xf]
    %v335 = vld [vmem:[#allocation7 + $0x3c] sm:$0xf]
    %v352 = vunpack.c.l.b16 %v320
    %v353 = vunpack.c.l.b16 %v321
    %v354 = vunpack.c.l.b16 %v322
    %v355 = vunpack.c.l.b16 %v323
    %v356 = vunpack.c.l.b16 %v324
    %v357 = vunpack.c.l.b16 %v325
    %v358 = vunpack.c.l.b16 %v326
    %v359 = vunpack.c.l.b16 %v327
    %v360 = vunpack.c.l.b16 %v328
    %v361 = vunpack.c.l.b16 %v329
    %v362 = vunpack.c.l.b16 %v330
    %v363 = vunpack.c.l.b16 %v331
    %v364 = vunpack.c.l.b16 %v332
    %v365 = vunpack.c.l.b16 %v333
    %v366 = vunpack.c.l.b16 %v334
    %v367 = vunpack.c.l.b16 %v335
    %v368 = vpack.c.b16 %v353, %v352
    %v369 = vpack.c.b16 %v355, %v354
    %v370 = vpack.c.b16 %v357, %v356
    %v371 = vpack.c.b16 %v359, %v358
    %v372 = vpack.c.b16 %v361, %v360
    %v373 = vpack.c.b16 %v363, %v362
    %v374 = vpack.c.b16 %v365, %v364
    %v375 = vpack.c.b16 %v367, %v366
    %384 = vmatprep.subr.bf16.mxu0 0
    %385 = vmatpush1.bf16.msra.mxu0 %v368
    %386 = vmatprep.subr.bf16.mxu0 0
    %387 = vmatpush1.bf16.msra.mxu0 %v369
    %388 = vmatprep.subr.bf16.mxu0 0
    %389 = vmatpush1.bf16.msra.mxu0 %v370
    %390 = vmatprep.subr.bf16.mxu0 0
    %391 = vmatpush1.bf16.msra.mxu0 %v371
    %392 = vmatprep.subr.bf16.mxu0 0
    %393 = vmatpush1.bf16.msra.mxu0 %v372
    %394 = vmatprep.subr.bf16.mxu0 0
    %395 = vmatpush1.bf16.msra.mxu0 %v373
    %396 = vmatprep.subr.bf16.mxu0 0
    %397 = vmatpush1.bf16.msra.mxu0 %v374
    %398 = vmatprep.subr.bf16.mxu0 0
    %399 = vmatpush1.bf16.msra.mxu0 %v375
    %400 = vmatprep.subr.bf16.mxu0 0
    %401 = vmatpush1.bf16.msra.mxu0 0
    %402 = vmatprep.subr.bf16.mxu0 0
    %403 = vmatpush1.bf16.msra.mxu0 0
    %404 = vmatprep.subr.bf16.mxu0 0
    %405 = vmatpush1.bf16.msra.mxu0 0
    %406 = vmatprep.subr.bf16.mxu0 0
    %407 = vmatpush1.bf16.msra.mxu0 0
    %408 = vmatprep.subr.bf16.mxu0 0
    %409 = vmatpush1.bf16.msra.mxu0 0
    %410 = vmatprep.subr.bf16.mxu0 0
    %411 = vmatpush1.bf16.msra.mxu0 0
    %412 = vmatprep.subr.bf16.mxu0 0
    %413 = vmatpush1.bf16.msra.mxu0 0
    %414 = vmatprep.subr.bf16.mxu0 0
    %415 = vmatpush1.bf16.msra.mxu0 0
    %416 = vmatprep.mubr.bf16.mxu0 0
    %417 = vmatmul.mubr.bf16.gmra.mrb[0].mxu0 %v319
    %v418 = vpop.f32.mrb[0].mxu0
    %v419 = vadd.f32 0.0, %v418
    %v420 = vpop.f32.mrb[0].mxu0
    %v421 = vpop.f32.mrb[0].mxu0
    %v422 = vpop.f32.mrb[0].mxu0
    %423 = vdwg.mxu0
    %v424 = vpack.c.bf16 %v419, %v419
    %425 = vst [vmem:[#allocation2 + $0x8] sm:$0xf] %v424
    %s426 = scalar_lea.vmem [#allocation4], 12
    %v427 = vld [vmem:[%s426] sm:$0xf]
    %v428 = vld [vmem:[#allocation7] sm:$0xf]
    %v429 = vld [vmem:[#allocation7 + $0x4] sm:$0xf]
    %v430 = vld [vmem:[#allocation7 + $0x8] sm:$0xf]
    %v431 = vld [vmem:[#allocation7 + $0xc] sm:$0xf]
    %v432 = vld [vmem:[#allocation7 + $0x10] sm:$0xf]
    %v433 = vld [vmem:[#allocation7 + $0x14] sm:$0xf]
    %v434 = vld [vmem:[#allocation7 + $0x18] sm:$0xf]
    %v435 = vld [vmem:[#allocation7 + $0x1c] sm:$0xf]
    %v436 = vld [vmem:[#allocation7 + $0x20] sm:$0xf]
    %v437 = vld [vmem:[#allocation7 + $0x24] sm:$0xf]
    %v438 = vld [vmem:[#allocation7 + $0x28] sm:$0xf]
    %v439 = vld [vmem:[#allocation7 + $0x2c] sm:$0xf]
    %v440 = vld [vmem:[#allocation7 + $0x30] sm:$0xf]
    %v441 = vld [vmem:[#allocation7 + $0x34] sm:$0xf]
    %v442 = vld [vmem:[#allocation7 + $0x38] sm:$0xf]
    %v443 = vld [vmem:[#allocation7 + $0x3c] sm:$0xf]
    %v460 = vunpack.c.l.b16 %v428
    %v461 = vunpack.c.l.b16 %v429
    %v462 = vunpack.c.l.b16 %v430
    %v463 = vunpack.c.l.b16 %v431
    %v464 = vunpack.c.l.b16 %v432
    %v465 = vunpack.c.l.b16 %v433
    %v466 = vunpack.c.l.b16 %v434
    %v467 = vunpack.c.l.b16 %v435
    %v468 = vunpack.c.l.b16 %v436
    %v469 = vunpack.c.l.b16 %v437
    %v470 = vunpack.c.l.b16 %v438
    %v471 = vunpack.c.l.b16 %v439
    %v472 = vunpack.c.l.b16 %v440
    %v473 = vunpack.c.l.b16 %v441
    %v474 = vunpack.c.l.b16 %v442
    %v475 = vunpack.c.l.b16 %v443
    %v476 = vpack.c.b16 %v461, %v460
    %v477 = vpack.c.b16 %v463, %v462
    %v478 = vpack.c.b16 %v465, %v464
    %v479 = vpack.c.b16 %v467, %v466
    %v480 = vpack.c.b16 %v469, %v468
    %v481 = vpack.c.b16 %v471, %v470
    %v482 = vpack.c.b16 %v473, %v472
    %v483 = vpack.c.b16 %v475, %v474
    %492 = vmatprep.subr.bf16.mxu0 0
    %493 = vmatpush1.bf16.msra.mxu0 %v476
    %494 = vmatprep.subr.bf16.mxu0 0
    %495 = vmatpush1.bf16.msra.mxu0 %v477
    %496 = vmatprep.subr.bf16.mxu0 0
    %497 = vmatpush1.bf16.msra.mxu0 %v478
    %498 = vmatprep.subr.bf16.mxu0 0
    %499 = vmatpush1.bf16.msra.mxu0 %v479
    %500 = vmatprep.subr.bf16.mxu0 0
    %501 = vmatpush1.bf16.msra.mxu0 %v480
    %502 = vmatprep.subr.bf16.mxu0 0
    %503 = vmatpush1.bf16.msra.mxu0 %v481
    %504 = vmatprep.subr.bf16.mxu0 0
    %505 = vmatpush1.bf16.msra.mxu0 %v482
    %506 = vmatprep.subr.bf16.mxu0 0
    %507 = vmatpush1.bf16.msra.mxu0 %v483
    %508 = vmatprep.subr.bf16.mxu0 0
    %509 = vmatpush1.bf16.msra.mxu0 0
    %510 = vmatprep.subr.bf16.mxu0 0
    %511 = vmatpush1.bf16.msra.mxu0 0
    %512 = vmatprep.subr.bf16.mxu0 0
    %513 = vmatpush1.bf16.msra.mxu0 0
    %514 = vmatprep.subr.bf16.mxu0 0
    %515 = vmatpush1.bf16.msra.mxu0 0
    %516 = vmatprep.subr.bf16.mxu0 0
    %517 = vmatpush1.bf16.msra.mxu0 0
    %518 = vmatprep.subr.bf16.mxu0 0
    %519 = vmatpush1.bf16.msra.mxu0 0
    %520 = vmatprep.subr.bf16.mxu0 0
    %521 = vmatpush1.bf16.msra.mxu0 0
    %522 = vmatprep.subr.bf16.mxu0 0
    %523 = vmatpush1.bf16.msra.mxu0 0
    %524 = vmatprep.mubr.bf16.mxu0 0
    %525 = vmatmul.mubr.bf16.gmra.mrb[0].mxu0 %v427
    %v526 = vpop.f32.mrb[0].mxu0
    %v527 = vadd.f32 0.0, %v526
    %v528 = vpop.f32.mrb[0].mxu0
    %v529 = vpop.f32.mrb[0].mxu0
    %v530 = vpop.f32.mrb[0].mxu0
    %531 = vdwg.mxu0
    %v532 = vpack.c.bf16 %v527, %v527
    %533 = vst [vmem:[#allocation2 + $0xc] sm:$0xf] %v532
    %s534 = scalar_lea.vmem [#allocation4], 16
    %v535 = vld [vmem:[%s534] sm:$0xf]
    %v536 = vld [vmem:[#allocation7] sm:$0xf]
    %v537 = vld [vmem:[#allocation7 + $0x4] sm:$0xf]
    %v538 = vld [vmem:[#allocation7 + $0x8] sm:$0xf]
    %v539 = vld [vmem:[#allocation7 + $0xc] sm:$0xf]
    %v540 = vld [vmem:[#allocation7 + $0x10] sm:$0xf]
    %v541 = vld [vmem:[#allocation7 + $0x14] sm:$0xf]
    %v542 = vld [vmem:[#allocation7 + $0x18] sm:$0xf]
    %v543 = vld [vmem:[#allocation7 + $0x1c] sm:$0xf]
    %v544 = vld [vmem:[#allocation7 + $0x20] sm:$0xf]
    %v545 = vld [vmem:[#allocation7 + $0x24] sm:$0xf]
    %v546 = vld [vmem:[#allocation7 + $0x28] sm:$0xf]
    %v547 = vld [vmem:[#allocation7 + $0x2c] sm:$0xf]
    %v548 = vld [vmem:[#allocation7 + $0x30] sm:$0xf]
    %v549 = vld [vmem:[#allocation7 + $0x34] sm:$0xf]
    %v550 = vld [vmem:[#allocation7 + $0x38] sm:$0xf]
    %v551 = vld [vmem:[#allocation7 + $0x3c] sm:$0xf]
    %v568 = vunpack.c.l.b16 %v536
    %v569 = vunpack.c.l.b16 %v537
    %v570 = vunpack.c.l.b16 %v538
    %v571 = vunpack.c.l.b16 %v539
    %v572 = vunpack.c.l.b16 %v540
    %v573 = vunpack.c.l.b16 %v541
    %v574 = vunpack.c.l.b16 %v542
    %v575 = vunpack.c.l.b16 %v543
    %v576 = vunpack.c.l.b16 %v544
    %v577 = vunpack.c.l.b16 %v545
    %v578 = vunpack.c.l.b16 %v546
    %v579 = vunpack.c.l.b16 %v547
    %v580 = vunpack.c.l.b16 %v548
    %v581 = vunpack.c.l.b16 %v549
    %v582 = vunpack.c.l.b16 %v550
    %v583 = vunpack.c.l.b16 %v551
    %v584 = vpack.c.b16 %v569, %v568
    %v585 = vpack.c.b16 %v571, %v570
    %v586 = vpack.c.b16 %v573, %v572
    %v587 = vpack.c.b16 %v575, %v574
    %v588 = vpack.c.b16 %v577, %v576
    %v589 = vpack.c.b16 %v579, %v578
    %v590 = vpack.c.b16 %v581, %v580
    %v591 = vpack.c.b16 %v583, %v582
    %600 = vmatprep.subr.bf16.mxu0 0
    %601 = vmatpush1.bf16.msra.mxu0 %v584
    %602 = vmatprep.subr.bf16.mxu0 0
    %603 = vmatpush1.bf16.msra.mxu0 %v585
    %604 = vmatprep.subr.bf16.mxu0 0
    %605 = vmatpush1.bf16.msra.mxu0 %v586
    %606 = vmatprep.subr.bf16.mxu0 0
    %607 = vmatpush1.bf16.msra.mxu0 %v587
    %608 = vmatprep.subr.bf16.mxu0 0
    %609 = vmatpush1.bf16.msra.mxu0 %v588
    %610 = vmatprep.subr.bf16.mxu0 0
    %611 = vmatpush1.bf16.msra.mxu0 %v589
    %612 = vmatprep.subr.bf16.mxu0 0
    %613 = vmatpush1.bf16.msra.mxu0 %v590
    %614 = vmatprep.subr.bf16.mxu0 0
    %615 = vmatpush1.bf16.msra.mxu0 %v591
    %616 = vmatprep.subr.bf16.mxu0 0
    %617 = vmatpush1.bf16.msra.mxu0 0
    %618 = vmatprep.subr.bf16.mxu0 0
    %619 = vmatpush1.bf16.msra.mxu0 0
    %620 = vmatprep.subr.bf16.mxu0 0
    %621 = vmatpush1.bf16.msra.mxu0 0
    %622 = vmatprep.subr.bf16.mxu0 0
    %623 = vmatpush1.bf16.msra.mxu0 0
    %624 = vmatprep.subr.bf16.mxu0 0
    %625 = vmatpush1.bf16.msra.mxu0 0
    %626 = vmatprep.subr.bf16.mxu0 0
    %627 = vmatpush1.bf16.msra.mxu0 0
    %628 = vmatprep.subr.bf16.mxu0 0
    %629 = vmatpush1.bf16.msra.mxu0 0
    %630 = vmatprep.subr.bf16.mxu0 0
    %631 = vmatpush1.bf16.msra.mxu0 0
    %632 = vmatprep.mubr.bf16.mxu0 0
    %633 = vmatmul.mubr.bf16.gmra.mrb[0].mxu0 %v535
    %v634 = vpop.f32.mrb[0].mxu0
    %v635 = vadd.f32 0.0, %v634
    %v636 = vpop.f32.mrb[0].mxu0
    %v637 = vpop.f32.mrb[0].mxu0
    %v638 = vpop.f32.mrb[0].mxu0
    %639 = vdwg.mxu0
    %v640 = vpack.c.bf16 %v635, %v635
    %641 = vst [vmem:[#allocation2 + $0x10] sm:$0xf] %v640
    %s642 = scalar_lea.vmem [#allocation4], 20
    %v643 = vld [vmem:[%s642] sm:$0xf]
    %v644 = vld [vmem:[#allocation7] sm:$0xf]
    %v645 = vld [vmem:[#allocation7 + $0x4] sm:$0xf]
    %v646 = vld [vmem:[#allocation7 + $0x8] sm:$0xf]
    %v647 = vld [vmem:[#allocation7 + $0xc] sm:$0xf]
    %v648 = vld [vmem:[#allocation7 + $0x10] sm:$0xf]
    %v649 = vld [vmem:[#allocation7 + $0x14] sm:$0xf]
    %v650 = vld [vmem:[#allocation7 + $0x18] sm:$0xf]
    %v651 = vld [vmem:[#allocation7 + $0x1c] sm:$0xf]
    %v652 = vld [vmem:[#allocation7 + $0x20] sm:$0xf]
    %v653 = vld [vmem:[#allocation7 + $0x24] sm:$0xf]
    %v654 = vld [vmem:[#allocation7 + $0x28] sm:$0xf]
    %v655 = vld [vmem:[#allocation7 + $0x2c] sm:$0xf]
    %v656 = vld [vmem:[#allocation7 + $0x30] sm:$0xf]
    %v657 = vld [vmem:[#allocation7 + $0x34] sm:$0xf]
    %v658 = vld [vmem:[#allocation7 + $0x38] sm:$0xf]
    %v659 = vld [vmem:[#allocation7 + $0x3c] sm:$0xf]
    %v676 = vunpack.c.l.b16 %v644
    %v677 = vunpack.c.l.b16 %v645
    %v678 = vunpack.c.l.b16 %v646
    %v679 = vunpack.c.l.b16 %v647
    %v680 = vunpack.c.l.b16 %v648
    %v681 = vunpack.c.l.b16 %v649
    %v682 = vunpack.c.l.b16 %v650
    %v683 = vunpack.c.l.b16 %v651
    %v684 = vunpack.c.l.b16 %v652
    %v685 = vunpack.c.l.b16 %v653
    %v686 = vunpack.c.l.b16 %v654
    %v687 = vunpack.c.l.b16 %v655
    %v688 = vunpack.c.l.b16 %v656
    %v689 = vunpack.c.l.b16 %v657
    %v690 = vunpack.c.l.b16 %v658
    %v691 = vunpack.c.l.b16 %v659
    %v692 = vpack.c.b16 %v677, %v676
    %v693 = vpack.c.b16 %v679, %v678
    %v694 = vpack.c.b16 %v681, %v680
    %v695 = vpack.c.b16 %v683, %v682
    %v696 = vpack.c.b16 %v685, %v684
    %v697 = vpack.c.b16 %v687, %v686
    %v698 = vpack.c.b16 %v689, %v688
    %v699 = vpack.c.b16 %v691, %v690
    %708 = vmatprep.subr.bf16.mxu0 0
    %709 = vmatpush1.bf16.msra.mxu0 %v692
    %710 = vmatprep.subr.bf16.mxu0 0
    %711 = vmatpush1.bf16.msra.mxu0 %v693
    %712 = vmatprep.subr.bf16.mxu0 0
    %713 = vmatpush1.bf16.msra.mxu0 %v694
    %714 = vmatprep.subr.bf16.mxu0 0
    %715 = vmatpush1.bf16.msra.mxu0 %v695
    %716 = vmatprep.subr.bf16.mxu0 0
    %717 = vmatpush1.bf16.msra.mxu0 %v696
    %718 = vmatprep.subr.bf16.mxu0 0
    %719 = vmatpush1.bf16.msra.mxu0 %v697
    %720 = vmatprep.subr.bf16.mxu0 0
    %721 = vmatpush1.bf16.msra.mxu0 %v698
    %722 = vmatprep.subr.bf16.mxu0 0
    %723 = vmatpush1.bf16.msra.mxu0 %v699
    %724 = vmatprep.subr.bf16.mxu0 0
    %725 = vmatpush1.bf16.msra.mxu0 0
    %726 = vmatprep.subr.bf16.mxu0 0
    %727 = vmatpush1.bf16.msra.mxu0 0
    %728 = vmatprep.subr.bf16.mxu0 0
    %729 = vmatpush1.bf16.msra.mxu0 0
    %730 = vmatprep.subr.bf16.mxu0 0
    %731 = vmatpush1.bf16.msra.mxu0 0
    %732 = vmatprep.subr.bf16.mxu0 0
    %733 = vmatpush1.bf16.msra.mxu0 0
    %734 = vmatprep.subr.bf16.mxu0 0
    %735 = vmatpush1.bf16.msra.mxu0 0
    %736 = vmatprep.subr.bf16.mxu0 0
    %737 = vmatpush1.bf16.msra.mxu0 0
    %738 = vmatprep.subr.bf16.mxu0 0
    %739 = vmatpush1.bf16.msra.mxu0 0
    %740 = vmatprep.mubr.bf16.mxu0 0
    %741 = vmatmul.mubr.bf16.gmra.mrb[0].mxu0 %v643
    %v742 = vpop.f32.mrb[0].mxu0
    %v743 = vadd.f32 0.0, %v742
    %v744 = vpop.f32.mrb[0].mxu0
    %v745 = vpop.f32.mrb[0].mxu0
    %v746 = vpop.f32.mrb[0].mxu0
    %747 = vdwg.mxu0
    %v748 = vpack.c.bf16 %v743, %v743
    %749 = vst [vmem:[#allocation2 + $0x14] sm:$0xf] %v748
    %s750 = scalar_lea.vmem [#allocation4], 24
    %v751 = vld [vmem:[%s750] sm:$0xf]
    %v752 = vld [vmem:[#allocation7] sm:$0xf]
    %v753 = vld [vmem:[#allocation7 + $0x4] sm:$0xf]
    %v754 = vld [vmem:[#allocation7 + $0x8] sm:$0xf]
    %v755 = vld [vmem:[#allocation7 + $0xc] sm:$0xf]
    %v756 = vld [vmem:[#allocation7 + $0x10] sm:$0xf]
    %v757 = vld [vmem:[#allocation7 + $0x14] sm:$0xf]
    %v758 = vld [vmem:[#allocation7 + $0x18] sm:$0xf]
    %v759 = vld [vmem:[#allocation7 + $0x1c] sm:$0xf]
    %v760 = vld [vmem:[#allocation7 + $0x20] sm:$0xf]
    %v761 = vld [vmem:[#allocation7 + $0x24] sm:$0xf]
    %v762 = vld [vmem:[#allocation7 + $0x28] sm:$0xf]
    %v763 = vld [vmem:[#allocation7 + $0x2c] sm:$0xf]
    %v764 = vld [vmem:[#allocation7 + $0x30] sm:$0xf]
    %v765 = vld [vmem:[#allocation7 + $0x34] sm:$0xf]
    %v766 = vld [vmem:[#allocation7 + $0x38] sm:$0xf]
    %v767 = vld [vmem:[#allocation7 + $0x3c] sm:$0xf]
    %v784 = vunpack.c.l.b16 %v752
    %v785 = vunpack.c.l.b16 %v753
    %v786 = vunpack.c.l.b16 %v754
    %v787 = vunpack.c.l.b16 %v755
    %v788 = vunpack.c.l.b16 %v756
    %v789 = vunpack.c.l.b16 %v757
    %v790 = vunpack.c.l.b16 %v758
    %v791 = vunpack.c.l.b16 %v759
    %v792 = vunpack.c.l.b16 %v760
    %v793 = vunpack.c.l.b16 %v761
    %v794 = vunpack.c.l.b16 %v762
    %v795 = vunpack.c.l.b16 %v763
    %v796 = vunpack.c.l.b16 %v764
    %v797 = vunpack.c.l.b16 %v765
    %v798 = vunpack.c.l.b16 %v766
    %v799 = vunpack.c.l.b16 %v767
    %v800 = vpack.c.b16 %v785, %v784
    %v801 = vpack.c.b16 %v787, %v786
    %v802 = vpack.c.b16 %v789, %v788
    %v803 = vpack.c.b16 %v791, %v790
    %v804 = vpack.c.b16 %v793, %v792
    %v805 = vpack.c.b16 %v795, %v794
    %v806 = vpack.c.b16 %v797, %v796
    %v807 = vpack.c.b16 %v799, %v798
    %816 = vmatprep.subr.bf16.mxu0 0
    %817 = vmatpush1.bf16.msra.mxu0 %v800
    %818 = vmatprep.subr.bf16.mxu0 0
    %819 = vmatpush1.bf16.msra.mxu0 %v801
    %820 = vmatprep.subr.bf16.mxu0 0
    %821 = vmatpush1.bf16.msra.mxu0 %v802
    %822 = vmatprep.subr.bf16.mxu0 0
    %823 = vmatpush1.bf16.msra.mxu0 %v803
    %824 = vmatprep.subr.bf16.mxu0 0
    %825 = vmatpush1.bf16.msra.mxu0 %v804
    %826 = vmatprep.subr.bf16.mxu0 0
    %827 = vmatpush1.bf16.msra.mxu0 %v805
    %828 = vmatprep.subr.bf16.mxu0 0
    %829 = vmatpush1.bf16.msra.mxu0 %v806
    %830 = vmatprep.subr.bf16.mxu0 0
    %831 = vmatpush1.bf16.msra.mxu0 %v807
    %832 = vmatprep.subr.bf16.mxu0 0
    %833 = vmatpush1.bf16.msra.mxu0 0
    %834 = vmatprep.subr.bf16.mxu0 0
    %835 = vmatpush1.bf16.msra.mxu0 0
    %836 = vmatprep.subr.bf16.mxu0 0
    %837 = vmatpush1.bf16.msra.mxu0 0
    %838 = vmatprep.subr.bf16.mxu0 0
    %839 = vmatpush1.bf16.msra.mxu0 0
    %840 = vmatprep.subr.bf16.mxu0 0
    %841 = vmatpush1.bf16.msra.mxu0 0
    %842 = vmatprep.subr.bf16.mxu0 0
    %843 = vmatpush1.bf16.msra.mxu0 0
    %844 = vmatprep.subr.bf16.mxu0 0
    %845 = vmatpush1.bf16.msra.mxu0 0
    %846 = vmatprep.subr.bf16.mxu0 0
    %847 = vmatpush1.bf16.msra.mxu0 0
    %848 = vmatprep.mubr.bf16.mxu0 0
    %849 = vmatmul.mubr.bf16.gmra.mrb[0].mxu0 %v751
    %v850 = vpop.f32.mrb[0].mxu0
    %v851 = vadd.f32 0.0, %v850
    %v852 = vpop.f32.mrb[0].mxu0
    %v853 = vpop.f32.mrb[0].mxu0
    %v854 = vpop.f32.mrb[0].mxu0
    %855 = vdwg.mxu0
    %v856 = vpack.c.bf16 %v851, %v851
    %857 = vst [vmem:[#allocation2 + $0x18] sm:$0xf] %v856
    %s858 = scalar_lea.vmem [#allocation4], 28
    %v859 = vld [vmem:[%s858] sm:$0xf]
    %v860 = vld [vmem:[#allocation7] sm:$0xf]
    %v861 = vld [vmem:[#allocation7 + $0x4] sm:$0xf]
    %v862 = vld [vmem:[#allocation7 + $0x8] sm:$0xf]
    %v863 = vld [vmem:[#allocation7 + $0xc] sm:$0xf]
    %v864 = vld [vmem:[#allocation7 + $0x10] sm:$0xf]
    %v865 = vld [vmem:[#allocation7 + $0x14] sm:$0xf]
    %v866 = vld [vmem:[#allocation7 + $0x18] sm:$0xf]
    %v867 = vld [vmem:[#allocation7 + $0x1c] sm:$0xf]
    %v868 = vld [vmem:[#allocation7 + $0x20] sm:$0xf]
    %v869 = vld [vmem:[#allocation7 + $0x24] sm:$0xf]
    %v870 = vld [vmem:[#allocation7 + $0x28] sm:$0xf]
    %v871 = vld [vmem:[#allocation7 + $0x2c] sm:$0xf]
    %v872 = vld [vmem:[#allocation7 + $0x30] sm:$0xf]
    %v873 = vld [vmem:[#allocation7 + $0x34] sm:$0xf]
    %v874 = vld [vmem:[#allocation7 + $0x38] sm:$0xf]
    %v875 = vld [vmem:[#allocation7 + $0x3c] sm:$0xf]
    %v892 = vunpack.c.l.b16 %v860
    %v893 = vunpack.c.l.b16 %v861
    %v894 = vunpack.c.l.b16 %v862
    %v895 = vunpack.c.l.b16 %v863
    %v896 = vunpack.c.l.b16 %v864
    %v897 = vunpack.c.l.b16 %v865
    %v898 = vunpack.c.l.b16 %v866
    %v899 = vunpack.c.l.b16 %v867
    %v900 = vunpack.c.l.b16 %v868
    %v901 = vunpack.c.l.b16 %v869
    %v902 = vunpack.c.l.b16 %v870
    %v903 = vunpack.c.l.b16 %v871
    %v904 = vunpack.c.l.b16 %v872
    %v905 = vunpack.c.l.b16 %v873
    %v906 = vunpack.c.l.b16 %v874
    %v907 = vunpack.c.l.b16 %v875
    %v908 = vpack.c.b16 %v893, %v892
    %v909 = vpack.c.b16 %v895, %v894
    %v910 = vpack.c.b16 %v897, %v896
    %v911 = vpack.c.b16 %v899, %v898
    %v912 = vpack.c.b16 %v901, %v900
    %v913 = vpack.c.b16 %v903, %v902
    %v914 = vpack.c.b16 %v905, %v904
    %v915 = vpack.c.b16 %v907, %v906
    %924 = vmatprep.subr.bf16.mxu0 0
    %925 = vmatpush1.bf16.msra.mxu0 %v908
    %926 = vmatprep.subr.bf16.mxu0 0
    %927 = vmatpush1.bf16.msra.mxu0 %v909
    %928 = vmatprep.subr.bf16.mxu0 0
    %929 = vmatpush1.bf16.msra.mxu0 %v910
    %930 = vmatprep.subr.bf16.mxu0 0
    %931 = vmatpush1.bf16.msra.mxu0 %v911
    %932 = vmatprep.subr.bf16.mxu0 0
    %933 = vmatpush1.bf16.msra.mxu0 %v912
    %934 = vmatprep.subr.bf16.mxu0 0
    %935 = vmatpush1.bf16.msra.mxu0 %v913
    %936 = vmatprep.subr.bf16.mxu0 0
    %937 = vmatpush1.bf16.msra.mxu0 %v914
    %938 = vmatprep.subr.bf16.mxu0 0
    %939 = vmatpush1.bf16.msra.mxu0 %v915
    %940 = vmatprep.subr.bf16.mxu0 0
    %941 = vmatpush1.bf16.msra.mxu0 0
    %942 = vmatprep.subr.bf16.mxu0 0
    %943 = vmatpush1.bf16.msra.mxu0 0
    %944 = vmatprep.subr.bf16.mxu0 0
    %945 = vmatpush1.bf16.msra.mxu0 0
    %946 = vmatprep.subr.bf16.mxu0 0
    %947 = vmatpush1.bf16.msra.mxu0 0
    %948 = vmatprep.subr.bf16.mxu0 0
    %949 = vmatpush1.bf16.msra.mxu0 0
    %950 = vmatprep.subr.bf16.mxu0 0
    %951 = vmatpush1.bf16.msra.mxu0 0
    %952 = vmatprep.subr.bf16.mxu0 0
    %953 = vmatpush1.bf16.msra.mxu0 0
    %954 = vmatprep.subr.bf16.mxu0 0
    %955 = vmatpush1.bf16.msra.mxu0 0
    %956 = vmatprep.mubr.bf16.mxu0 0
    %957 = vmatmul.mubr.bf16.gmra.mrb[0].mxu0 %v859
    %v958 = vpop.f32.mrb[0].mxu0
    %v959 = vadd.f32 0.0, %v958
    %v960 = vpop.f32.mrb[0].mxu0
    %v961 = vpop.f32.mrb[0].mxu0
    %v962 = vpop.f32.mrb[0].mxu0
    %963 = vdwg.mxu0
    %v964 = vpack.c.bf16 %v959, %v959
    %965 = vst [vmem:[#allocation2 + $0x1c] sm:$0xf] %v964
    %s966 = scalar_lea.vmem [#allocation4], 32
    %v967 = vld [vmem:[%s966] sm:$0xf]
    %v968 = vld [vmem:[#allocation7] sm:$0xf]
    %v969 = vld [vmem:[#allocation7 + $0x4] sm:$0xf]
    %v970 = vld [vmem:[#allocation7 + $0x8] sm:$0xf]
    %v971 = vld [vmem:[#allocation7 + $0xc] sm:$0xf]
    %v972 = vld [vmem:[#allocation7 + $0x10] sm:$0xf]
    %v973 = vld [vmem:[#allocation7 + $0x14] sm:$0xf]
    %v974 = vld [vmem:[#allocation7 + $0x18] sm:$0xf]
    %v975 = vld [vmem:[#allocation7 + $0x1c] sm:$0xf]
    %v976 = vld [vmem:[#allocation7 + $0x20] sm:$0xf]
    %v977 = vld [vmem:[#allocation7 + $0x24] sm:$0xf]
    %v978 = vld [vmem:[#allocation7 + $0x28] sm:$0xf]
    %v979 = vld [vmem:[#allocation7 + $0x2c] sm:$0xf]
    %v980 = vld [vmem:[#allocation7 + $0x30] sm:$0xf]
    %v981 = vld [vmem:[#allocation7 + $0x34] sm:$0xf]
    %v982 = vld [vmem:[#allocation7 + $0x38] sm:$0xf]
    %v983 = vld [vmem:[#allocation7 + $0x3c] sm:$0xf]
    %v1000 = vunpack.c.l.b16 %v968
    %v1001 = vunpack.c.l.b16 %v969
    %v1002 = vunpack.c.l.b16 %v970
    %v1003 = vunpack.c.l.b16 %v971
    %v1004 = vunpack.c.l.b16 %v972
    %v1005 = vunpack.c.l.b16 %v973
    %v1006 = vunpack.c.l.b16 %v974
    %v1007 = vunpack.c.l.b16 %v975
    %v1008 = vunpack.c.l.b16 %v976
    %v1009 = vunpack.c.l.b16 %v977
    %v1010 = vunpack.c.l.b16 %v978
    %v1011 = vunpack.c.l.b16 %v979
    %v1012 = vunpack.c.l.b16 %v980
    %v1013 = vunpack.c.l.b16 %v981
    %v1014 = vunpack.c.l.b16 %v982
    %v1015 = vunpack.c.l.b16 %v983
    %v1016 = vpack.c.b16 %v1001, %v1000
    %v1017 = vpack.c.b16 %v1003, %v1002
    %v1018 = vpack.c.b16 %v1005, %v1004
    %v1019 = vpack.c.b16 %v1007, %v1006
    %v1020 = vpack.c.b16 %v1009, %v1008
    %v1021 = vpack.c.b16 %v1011, %v1010
    %v1022 = vpack.c.b16 %v1013, %v1012
    %v1023 = vpack.c.b16 %v1015, %v1014
    %1032 = vmatprep.subr.bf16.mxu0 0
    %1033 = vmatpush1.bf16.msra.mxu0 %v1016
    %1034 = vmatprep.subr.bf16.mxu0 0
    %1035 = vmatpush1.bf16.msra.mxu0 %v1017
    %1036 = vmatprep.subr.bf16.mxu0 0
    %1037 = vmatpush1.bf16.msra.mxu0 %v1018
    %1038 = vmatprep.subr.bf16.mxu0 0
    %1039 = vmatpush1.bf16.msra.mxu0 %v1019
    %1040 = vmatprep.subr.bf16.mxu0 0
    %1041 = vmatpush1.bf16.msra.mxu0 %v1020
    %1042 = vmatprep.subr.bf16.mxu0 0
    %1043 = vmatpush1.bf16.msra.mxu0 %v1021
    %1044 = vmatprep.subr.bf16.mxu0 0
    %1045 = vmatpush1.bf16.msra.mxu0 %v1022
    %1046 = vmatprep.subr.bf16.mxu0 0
    %1047 = vmatpush1.bf16.msra.mxu0 %v1023
    %1048 = vmatprep.subr.bf16.mxu0 0
    %1049 = vmatpush1.bf16.msra.mxu0 0
    %1050 = vmatprep.subr.bf16.mxu0 0
    %1051 = vmatpush1.bf16.msra.mxu0 0
    %1052 = vmatprep.subr.bf16.mxu0 0
    %1053 = vmatpush1.bf16.msra.mxu0 0
    %1054 = vmatprep.subr.bf16.mxu0 0
    %1055 = vmatpush1.bf16.msra.mxu0 0
    %1056 = vmatprep.subr.bf16.mxu0 0
    %1057 = vmatpush1.bf16.msra.mxu0 0
    %1058 = vmatprep.subr.bf16.mxu0 0
    %1059 = vmatpush1.bf16.msra.mxu0 0
    %1060 = vmatprep.subr.bf16.mxu0 0
    %1061 = vmatpush1.bf16.msra.mxu0 0
    %1062 = vmatprep.subr.bf16.mxu0 0
    %1063 = vmatpush1.bf16.msra.mxu0 0
    %1064 = vmatprep.mubr.bf16.mxu0 0
    %1065 = vmatmul.mubr.bf16.gmra.mrb[0].mxu0 %v967
    %v1066 = vpop.f32.mrb[0].mxu0
    %v1067 = vadd.f32 0.0, %v1066
    %v1068 = vpop.f32.mrb[0].mxu0
    %v1069 = vpop.f32.mrb[0].mxu0
    %v1070 = vpop.f32.mrb[0].mxu0
    %1071 = vdwg.mxu0
    %v1072 = vpack.c.bf16 %v1067, %v1067
    %1073 = vst [vmem:[#allocation2 + $0x20] sm:$0xf] %v1072
    %s1074 = scalar_lea.vmem [#allocation4], 36
    %v1075 = vld [vmem:[%s1074] sm:$0xf]
    %v1076 = vld [vmem:[#allocation7] sm:$0xf]
    %v1077 = vld [vmem:[#allocation7 + $0x4] sm:$0xf]
    %v1078 = vld [vmem:[#allocation7 + $0x8] sm:$0xf]
    %v1079 = vld [vmem:[#allocation7 + $0xc] sm:$0xf]
    %v1080 = vld [vmem:[#allocation7 + $0x10] sm:$0xf]
    %v1081 = vld [vmem:[#allocation7 + $0x14] sm:$0xf]
    %v1082 = vld [vmem:[#allocation7 + $0x18] sm:$0xf]
    %v1083 = vld [vmem:[#allocation7 + $0x1c] sm:$0xf]
    %v1084 = vld [vmem:[#allocation7 + $0x20] sm:$0xf]
    %v1085 = vld [vmem:[#allocation7 + $0x24] sm:$0xf]
    %v1086 = vld [vmem:[#allocation7 + $0x28] sm:$0xf]
    %v1087 = vld [vmem:[#allocation7 + $0x2c] sm:$0xf]
    %v1088 = vld [vmem:[#allocation7 + $0x30] sm:$0xf]
    %v1089 = vld [vmem:[#allocation7 + $0x34] sm:$0xf]
    %v1090 = vld [vmem:[#allocation7 + $0x38] sm:$0xf]
    %v1091 = vld [vmem:[#allocation7 + $0x3c] sm:$0xf]
    %v1108 = vunpack.c.l.b16 %v1076
    %v1109 = vunpack.c.l.b16 %v1077
    %v1110 = vunpack.c.l.b16 %v1078
    %v1111 = vunpack.c.l.b16 %v1079
    %v1112 = vunpack.c.l.b16 %v1080
    %v1113 = vunpack.c.l.b16 %v1081
    %v1114 = vunpack.c.l.b16 %v1082
    %v1115 = vunpack.c.l.b16 %v1083
    %v1116 = vunpack.c.l.b16 %v1084
    %v1117 = vunpack.c.l.b16 %v1085
    %v1118 = vunpack.c.l.b16 %v1086
    %v1119 = vunpack.c.l.b16 %v1087
    %v1120 = vunpack.c.l.b16 %v1088
    %v1121 = vunpack.c.l.b16 %v1089
    %v1122 = vunpack.c.l.b16 %v1090
    %v1123 = vunpack.c.l.b16 %v1091
    %v1124 = vpack.c.b16 %v1109, %v1108
    %v1125 = vpack.c.b16 %v1111, %v1110
    %v1126 = vpack.c.b16 %v1113, %v1112
    %v1127 = vpack.c.b16 %v1115, %v1114
    %v1128 = vpack.c.b16 %v1117, %v1116
    %v1129 = vpack.c.b16 %v1119, %v1118
    %v1130 = vpack.c.b16 %v1121, %v1120
    %v1131 = vpack.c.b16 %v1123, %v1122
    %1140 = vmatprep.subr.bf16.mxu0 0
    %1141 = vmatpush1.bf16.msra.mxu0 %v1124
    %1142 = vmatprep.subr.bf16.mxu0 0
    %1143 = vmatpush1.bf16.msra.mxu0 %v1125
    %1144 = vmatprep.subr.bf16.mxu0 0
    %1145 = vmatpush1.bf16.msra.mxu0 %v1126
    %1146 = vmatprep.subr.bf16.mxu0 0
    %1147 = vmatpush1.bf16.msra.mxu0 %v1127
    %1148 = vmatprep.subr.bf16.mxu0 0
    %1149 = vmatpush1.bf16.msra.mxu0 %v1128
    %1150 = vmatprep.subr.bf16.mxu0 0
    %1151 = vmatpush1.bf16.msra.mxu0 %v1129
    %1152 = vmatprep.subr.bf16.mxu0 0
    %1153 = vmatpush1.bf16.msra.mxu0 %v1130
    %1154 = vmatprep.subr.bf16.mxu0 0
    %1155 = vmatpush1.bf16.msra.mxu0 %v1131
    %1156 = vmatprep.subr.bf16.mxu0 0
    %1157 = vmatpush1.bf16.msra.mxu0 0
    %1158 = vmatprep.subr.bf16.mxu0 0
    %1159 = vmatpush1.bf16.msra.mxu0 0
    %1160 = vmatprep.subr.bf16.mxu0 0
    %1161 = vmatpush1.bf16.msra.mxu0 0
    %1162 = vmatprep.subr.bf16.mxu0 0
    %1163 = vmatpush1.bf16.msra.mxu0 0
    %1164 = vmatprep.subr.bf16.mxu0 0
    %1165 = vmatpush1.bf16.msra.mxu0 0
    %1166 = vmatprep.subr.bf16.mxu0 0
    %1167 = vmatpush1.bf16.msra.mxu0 0
    %1168 = vmatprep.subr.bf16.mxu0 0
    %1169 = vmatpush1.bf16.msra.mxu0 0
    %1170 = vmatprep.subr.bf16.mxu0 0
    %1171 = vmatpush1.bf16.msra.mxu0 0
    %1172 = vmatprep.mubr.bf16.mxu0 0
    %1173 = vmatmul.mubr.bf16.gmra.mrb[0].mxu0 %v1075
    %v1174 = vpop.f32.mrb[0].mxu0
    %v1175 = vadd.f32 0.0, %v1174
    %v1176 = vpop.f32.mrb[0].mxu0
    %v1177 = vpop.f32.mrb[0].mxu0
    %v1178 = vpop.f32.mrb[0].mxu0
    %1179 = vdwg.mxu0
    %v1180 = vpack.c.bf16 %v1175, %v1175
    %1181 = vst [vmem:[#allocation2 + $0x24] sm:$0xf] %v1180
    %s1182 = scalar_lea.vmem [#allocation4], 40
    %v1183 = vld [vmem:[%s1182] sm:$0xf]
    %v1184 = vld [vmem:[#allocation7] sm:$0xf]
    %v1185 = vld [vmem:[#allocation7 + $0x4] sm:$0xf]
    %v1186 = vld [vmem:[#allocation7 + $0x8] sm:$0xf]
    %v1187 = vld [vmem:[#allocation7 + $0xc] sm:$0xf]
    %v1188 = vld [vmem:[#allocation7 + $0x10] sm:$0xf]
    %v1189 = vld [vmem:[#allocation7 + $0x14] sm:$0xf]
    %v1190 = vld [vmem:[#allocation7 + $0x18] sm:$0xf]
    %v1191 = vld [vmem:[#allocation7 + $0x1c] sm:$0xf]
    %v1192 = vld [vmem:[#allocation7 + $0x20] sm:$0xf]
    %v1193 = vld [vmem:[#allocation7 + $0x24] sm:$0xf]
    %v1194 = vld [vmem:[#allocation7 + $0x28] sm:$0xf]
    %v1195 = vld [vmem:[#allocation7 + $0x2c] sm:$0xf]
    %v1196 = vld [vmem:[#allocation7 + $0x30] sm:$0xf]
    %v1197 = vld [vmem:[#allocation7 + $0x34] sm:$0xf]
    %v1198 = vld [vmem:[#allocation7 + $0x38] sm:$0xf]
    %v1199 = vld [vmem:[#allocation7 + $0x3c] sm:$0xf]
    %v1216 = vunpack.c.l.b16 %v1184
    %v1217 = vunpack.c.l.b16 %v1185
    %v1218 = vunpack.c.l.b16 %v1186
    %v1219 = vunpack.c.l.b16 %v1187
    %v1220 = vunpack.c.l.b16 %v1188
    %v1221 = vunpack.c.l.b16 %v1189
    %v1222 = vunpack.c.l.b16 %v1190
    %v1223 = vunpack.c.l.b16 %v1191
    %v1224 = vunpack.c.l.b16 %v1192
    %v1225 = vunpack.c.l.b16 %v1193
    %v1226 = vunpack.c.l.b16 %v1194
    %v1227 = vunpack.c.l.b16 %v1195
    %v1228 = vunpack.c.l.b16 %v1196
    %v1229 = vunpack.c.l.b16 %v1197
    %v1230 = vunpack.c.l.b16 %v1198
    %v1231 = vunpack.c.l.b16 %v1199
    %v1232 = vpack.c.b16 %v1217, %v1216
    %v1233 = vpack.c.b16 %v1219, %v1218
    %v1234 = vpack.c.b16 %v1221, %v1220
    %v1235 = vpack.c.b16 %v1223, %v1222
    %v1236 = vpack.c.b16 %v1225, %v1224
    %v1237 = vpack.c.b16 %v1227, %v1226
    %v1238 = vpack.c.b16 %v1229, %v1228
    %v1239 = vpack.c.b16 %v1231, %v1230
    %1248 = vmatprep.subr.bf16.mxu0 0
    %1249 = vmatpush1.bf16.msra.mxu0 %v1232
    %1250 = vmatprep.subr.bf16.mxu0 0
    %1251 = vmatpush1.bf16.msra.mxu0 %v1233
    %1252 = vmatprep.subr.bf16.mxu0 0
    %1253 = vmatpush1.bf16.msra.mxu0 %v1234
    %1254 = vmatprep.subr.bf16.mxu0 0
    %1255 = vmatpush1.bf16.msra.mxu0 %v1235
    %1256 = vmatprep.subr.bf16.mxu0 0
    %1257 = vmatpush1.bf16.msra.mxu0 %v1236
    %1258 = vmatprep.subr.bf16.mxu0 0
    %1259 = vmatpush1.bf16.msra.mxu0 %v1237
    %1260 = vmatprep.subr.bf16.mxu0 0
    %1261 = vmatpush1.bf16.msra.mxu0 %v1238
    %1262 = vmatprep.subr.bf16.mxu0 0
    %1263 = vmatpush1.bf16.msra.mxu0 %v1239
    %1264 = vmatprep.subr.bf16.mxu0 0
    %1265 = vmatpush1.bf16.msra.mxu0 0
    %1266 = vmatprep.subr.bf16.mxu0 0
    %1267 = vmatpush1.bf16.msra.mxu0 0
    %1268 = vmatprep.subr.bf16.mxu0 0
    %1269 = vmatpush1.bf16.msra.mxu0 0
    %1270 = vmatprep.subr.bf16.mxu0 0
    %1271 = vmatpush1.bf16.msra.mxu0 0
    %1272 = vmatprep.subr.bf16.mxu0 0
    %1273 = vmatpush1.bf16.msra.mxu0 0
    %1274 = vmatprep.subr.bf16.mxu0 0
    %1275 = vmatpush1.bf16.msra.mxu0 0
    %1276 = vmatprep.subr.bf16.mxu0 0
    %1277 = vmatpush1.bf16.msra.mxu0 0
    %1278 = vmatprep.subr.bf16.mxu0 0
    %1279 = vmatpush1.bf16.msra.mxu0 0
    %1280 = vmatprep.mubr.bf16.mxu0 0
    %1281 = vmatmul.mubr.bf16.gmra.mrb[0].mxu0 %v1183
    %v1282 = vpop.f32.mrb[0].mxu0
    %v1283 = vadd.f32 0.0, %v1282
    %v1284 = vpop.f32.mrb[0].mxu0
    %v1285 = vpop.f32.mrb[0].mxu0
    %v1286 = vpop.f32.mrb[0].mxu0
    %1287 = vdwg.mxu0
    %v1288 = vpack.c.bf16 %v1283, %v1283
    %1289 = vst [vmem:[#allocation2 + $0x28] sm:$0xf] %v1288
    %s1290 = scalar_lea.vmem [#allocation4], 44
    %v1291 = vld [vmem:[%s1290] sm:$0xf]
    %v1292 = vld [vmem:[#allocation7] sm:$0xf]
    %v1293 = vld [vmem:[#allocation7 + $0x4] sm:$0xf]
    %v1294 = vld [vmem:[#allocation7 + $0x8] sm:$0xf]
    %v1295 = vld [vmem:[#allocation7 + $0xc] sm:$0xf]
    %v1296 = vld [vmem:[#allocation7 + $0x10] sm:$0xf]
    %v1297 = vld [vmem:[#allocation7 + $0x14] sm:$0xf]
    %v1298 = vld [vmem:[#allocation7 + $0x18] sm:$0xf]
    %v1299 = vld [vmem:[#allocation7 + $0x1c] sm:$0xf]
    %v1300 = vld [vmem:[#allocation7 + $0x20] sm:$0xf]
    %v1301 = vld [vmem:[#allocation7 + $0x24] sm:$0xf]
    %v1302 = vld [vmem:[#allocation7 + $0x28] sm:$0xf]
    %v1303 = vld [vmem:[#allocation7 + $0x2c] sm:$0xf]
    %v1304 = vld [vmem:[#allocation7 + $0x30] sm:$0xf]
    %v1305 = vld [vmem:[#allocation7 + $0x34] sm:$0xf]
    %v1306 = vld [vmem:[#allocation7 + $0x38] sm:$0xf]
    %v1307 = vld [vmem:[#allocation7 + $0x3c] sm:$0xf]
    %v1324 = vunpack.c.l.b16 %v1292
    %v1325 = vunpack.c.l.b16 %v1293
    %v1326 = vunpack.c.l.b16 %v1294
    %v1327 = vunpack.c.l.b16 %v1295
    %v1328 = vunpack.c.l.b16 %v1296
    %v1329 = vunpack.c.l.b16 %v1297
    %v1330 = vunpack.c.l.b16 %v1298
    %v1331 = vunpack.c.l.b16 %v1299
    %v1332 = vunpack.c.l.b16 %v1300
    %v1333 = vunpack.c.l.b16 %v1301
    %v1334 = vunpack.c.l.b16 %v1302
    %v1335 = vunpack.c.l.b16 %v1303
    %v1336 = vunpack.c.l.b16 %v1304
    %v1337 = vunpack.c.l.b16 %v1305
    %v1338 = vunpack.c.l.b16 %v1306
    %v1339 = vunpack.c.l.b16 %v1307
    %v1340 = vpack.c.b16 %v1325, %v1324
    %v1341 = vpack.c.b16 %v1327, %v1326
    %v1342 = vpack.c.b16 %v1329, %v1328
    %v1343 = vpack.c.b16 %v1331, %v1330
    %v1344 = vpack.c.b16 %v1333, %v1332
    %v1345 = vpack.c.b16 %v1335, %v1334
    %v1346 = vpack.c.b16 %v1337, %v1336
    %v1347 = vpack.c.b16 %v1339, %v1338
    %1356 = vmatprep.subr.bf16.mxu0 0
    %1357 = vmatpush1.bf16.msra.mxu0 %v1340
    %1358 = vmatprep.subr.bf16.mxu0 0
    %1359 = vmatpush1.bf16.msra.mxu0 %v1341
    %1360 = vmatprep.subr.bf16.mxu0 0
    %1361 = vmatpush1.bf16.msra.mxu0 %v1342
    %1362 = vmatprep.subr.bf16.mxu0 0
    %1363 = vmatpush1.bf16.msra.mxu0 %v1343
    %1364 = vmatprep.subr.bf16.mxu0 0
    %1365 = vmatpush1.bf16.msra.mxu0 %v1344
    %1366 = vmatprep.subr.bf16.mxu0 0
    %1367 = vmatpush1.bf16.msra.mxu0 %v1345
    %1368 = vmatprep.subr.bf16.mxu0 0
    %1369 = vmatpush1.bf16.msra.mxu0 %v1346
    %1370 = vmatprep.subr.bf16.mxu0 0
    %1371 = vmatpush1.bf16.msra.mxu0 %v1347
    %1372 = vmatprep.subr.bf16.mxu0 0
    %1373 = vmatpush1.bf16.msra.mxu0 0
    %1374 = vmatprep.subr.bf16.mxu0 0
    %1375 = vmatpush1.bf16.msra.mxu0 0
    %1376 = vmatprep.subr.bf16.mxu0 0
    %1377 = vmatpush1.bf16.msra.mxu0 0
    %1378 = vmatprep.subr.bf16.mxu0 0
    %1379 = vmatpush1.bf16.msra.mxu0 0
    %1380 = vmatprep.subr.bf16.mxu0 0
    %1381 = vmatpush1.bf16.msra.mxu0 0
    %1382 = vmatprep.subr.bf16.mxu0 0
    %1383 = vmatpush1.bf16.msra.mxu0 0
    %1384 = vmatprep.subr.bf16.mxu0 0
    %1385 = vmatpush1.bf16.msra.mxu0 0
    %1386 = vmatprep.subr.bf16.mxu0 0
    %1387 = vmatpush1.bf16.msra.mxu0 0
    %1388 = vmatprep.mubr.bf16.mxu0 0
    %1389 = vmatmul.mubr.bf16.gmra.mrb[0].mxu0 %v1291
    %v1390 = vpop.f32.mrb[0].mxu0
    %v1391 = vadd.f32 0.0, %v1390
    %v1392 = vpop.f32.mrb[0].mxu0
    %v1393 = vpop.f32.mrb[0].mxu0
    %v1394 = vpop.f32.mrb[0].mxu0
    %1395 = vdwg.mxu0
    %v1396 = vpack.c.bf16 %v1391, %v1391
    %1397 = vst [vmem:[#allocation2 + $0x2c] sm:$0xf] %v1396
    %s1398 = scalar_lea.vmem [#allocation4], 48
    %v1399 = vld [vmem:[%s1398] sm:$0xf]
    %v1400 = vld [vmem:[#allocation7] sm:$0xf]
    %v1401 = vld [vmem:[#allocation7 + $0x4] sm:$0xf]
    %v1402 = vld [vmem:[#allocation7 + $0x8] sm:$0xf]
    %v1403 = vld [vmem:[#allocation7 + $0xc] sm:$0xf]
    %v1404 = vld [vmem:[#allocation7 + $0x10] sm:$0xf]
    %v1405 = vld [vmem:[#allocation7 + $0x14] sm:$0xf]
    %v1406 = vld [vmem:[#allocation7 + $0x18] sm:$0xf]
    %v1407 = vld [vmem:[#allocation7 + $0x1c] sm:$0xf]
    %v1408 = vld [vmem:[#allocation7 + $0x20] sm:$0xf]
    %v1409 = vld [vmem:[#allocation7 + $0x24] sm:$0xf]
    %v1410 = vld [vmem:[#allocation7 + $0x28] sm:$0xf]
    %v1411 = vld [vmem:[#allocation7 + $0x2c] sm:$0xf]
    %v1412 = vld [vmem:[#allocation7 + $0x30] sm:$0xf]
    %v1413 = vld [vmem:[#allocation7 + $0x34] sm:$0xf]
    %v1414 = vld [vmem:[#allocation7 + $0x38] sm:$0xf]
    %v1415 = vld [vmem:[#allocation7 + $0x3c] sm:$0xf]
    %v1432 = vunpack.c.l.b16 %v1400
    %v1433 = vunpack.c.l.b16 %v1401
    %v1434 = vunpack.c.l.b16 %v1402
    %v1435 = vunpack.c.l.b16 %v1403
    %v1436 = vunpack.c.l.b16 %v1404
    %v1437 = vunpack.c.l.b16 %v1405
    %v1438 = vunpack.c.l.b16 %v1406
    %v1439 = vunpack.c.l.b16 %v1407
    %v1440 = vunpack.c.l.b16 %v1408
    %v1441 = vunpack.c.l.b16 %v1409
    %v1442 = vunpack.c.l.b16 %v1410
    %v1443 = vunpack.c.l.b16 %v1411
    %v1444 = vunpack.c.l.b16 %v1412
    %v1445 = vunpack.c.l.b16 %v1413
    %v1446 = vunpack.c.l.b16 %v1414
    %v1447 = vunpack.c.l.b16 %v1415
    %v1448 = vpack.c.b16 %v1433, %v1432
    %v1449 = vpack.c.b16 %v1435, %v1434
    %v1450 = vpack.c.b16 %v1437, %v1436
    %v1451 = vpack.c.b16 %v1439, %v1438
    %v1452 = vpack.c.b16 %v1441, %v1440
    %v1453 = vpack.c.b16 %v1443, %v1442
    %v1454 = vpack.c.b16 %v1445, %v1444
    %v1455 = vpack.c.b16 %v1447, %v1446
    %1464 = vmatprep.subr.bf16.mxu0 0
    %1465 = vmatpush1.bf16.msra.mxu0 %v1448
    %1466 = vmatprep.subr.bf16.mxu0 0
    %1467 = vmatpush1.bf16.msra.mxu0 %v1449
    %1468 = vmatprep.subr.bf16.mxu0 0
    %1469 = vmatpush1.bf16.msra.mxu0 %v1450
    %1470 = vmatprep.subr.bf16.mxu0 0
    %1471 = vmatpush1.bf16.msra.mxu0 %v1451
    %1472 = vmatprep.subr.bf16.mxu0 0
    %1473 = vmatpush1.bf16.msra.mxu0 %v1452
    %1474 = vmatprep.subr.bf16.mxu0 0
    %1475 = vmatpush1.bf16.msra.mxu0 %v1453
    %1476 = vmatprep.subr.bf16.mxu0 0
    %1477 = vmatpush1.bf16.msra.mxu0 %v1454
    %1478 = vmatprep.subr.bf16.mxu0 0
    %1479 = vmatpush1.bf16.msra.mxu0 %v1455
    %1480 = vmatprep.subr.bf16.mxu0 0
    %1481 = vmatpush1.bf16.msra.mxu0 0
    %1482 = vmatprep.subr.bf16.mxu0 0
    %1483 = vmatpush1.bf16.msra.mxu0 0
    %1484 = vmatprep.subr.bf16.mxu0 0
    %1485 = vmatpush1.bf16.msra.mxu0 0
    %1486 = vmatprep.subr.bf16.mxu0 0
    %1487 = vmatpush1.bf16.msra.mxu0 0
    %1488 = vmatprep.subr.bf16.mxu0 0
    %1489 = vmatpush1.bf16.msra.mxu0 0
    %1490 = vmatprep.subr.bf16.mxu0 0
    %1491 = vmatpush1.bf16.msra.mxu0 0
    %1492 = vmatprep.subr.bf16.mxu0 0
    %1493 = vmatpush1.bf16.msra.mxu0 0
    %1494 = vmatprep.subr.bf16.mxu0 0
    %1495 = vmatpush1.bf16.msra.mxu0 0
    %1496 = vmatprep.mubr.bf16.mxu0 0
    %1497 = vmatmul.mubr.bf16.gmra.mrb[0].mxu0 %v1399
    %v1498 = vpop.f32.mrb[0].mxu0
    %v1499 = vadd.f32 0.0, %v1498
    %v1500 = vpop.f32.mrb[0].mxu0
    %v1501 = vpop.f32.mrb[0].mxu0
    %v1502 = vpop.f32.mrb[0].mxu0
    %1503 = vdwg.mxu0
    %v1504 = vpack.c.bf16 %v1499, %v1499
    %1505 = vst [vmem:[#allocation2 + $0x30] sm:$0xf] %v1504
    %s1506 = scalar_lea.vmem [#allocation4], 52
    %v1507 = vld [vmem:[%s1506] sm:$0xf]
    %v1508 = vld [vmem:[#allocation7] sm:$0xf]
    %v1509 = vld [vmem:[#allocation7 + $0x4] sm:$0xf]
    %v1510 = vld [vmem:[#allocation7 + $0x8] sm:$0xf]
    %v1511 = vld [vmem:[#allocation7 + $0xc] sm:$0xf]
    %v1512 = vld [vmem:[#allocation7 + $0x10] sm:$0xf]
    %v1513 = vld [vmem:[#allocation7 + $0x14] sm:$0xf]
    %v1514 = vld [vmem:[#allocation7 + $0x18] sm:$0xf]
    %v1515 = vld [vmem:[#allocation7 + $0x1c] sm:$0xf]
    %v1516 = vld [vmem:[#allocation7 + $0x20] sm:$0xf]
    %v1517 = vld [vmem:[#allocation7 + $0x24] sm:$0xf]
    %v1518 = vld [vmem:[#allocation7 + $0x28] sm:$0xf]
    %v1519 = vld [vmem:[#allocation7 + $0x2c] sm:$0xf]
    %v1520 = vld [vmem:[#allocation7 + $0x30] sm:$0xf]
    %v1521 = vld [vmem:[#allocation7 + $0x34] sm:$0xf]
    %v1522 = vld [vmem:[#allocation7 + $0x38] sm:$0xf]
    %v1523 = vld [vmem:[#allocation7 + $0x3c] sm:$0xf]
    %v1540 = vunpack.c.l.b16 %v1508
    %v1541 = vunpack.c.l.b16 %v1509
    %v1542 = vunpack.c.l.b16 %v1510
    %v1543 = vunpack.c.l.b16 %v1511
    %v1544 = vunpack.c.l.b16 %v1512
    %v1545 = vunpack.c.l.b16 %v1513
    %v1546 = vunpack.c.l.b16 %v1514
    %v1547 = vunpack.c.l.b16 %v1515
    %v1548 = vunpack.c.l.b16 %v1516
    %v1549 = vunpack.c.l.b16 %v1517
    %v1550 = vunpack.c.l.b16 %v1518
    %v1551 = vunpack.c.l.b16 %v1519
    %v1552 = vunpack.c.l.b16 %v1520
    %v1553 = vunpack.c.l.b16 %v1521
    %v1554 = vunpack.c.l.b16 %v1522
    %v1555 = vunpack.c.l.b16 %v1523
    %v1556 = vpack.c.b16 %v1541, %v1540
    %v1557 = vpack.c.b16 %v1543, %v1542
    %v1558 = vpack.c.b16 %v1545, %v1544
    %v1559 = vpack.c.b16 %v1547, %v1546
    %v1560 = vpack.c.b16 %v1549, %v1548
    %v1561 = vpack.c.b16 %v1551, %v1550
    %v1562 = vpack.c.b16 %v1553, %v1552
    %v1563 = vpack.c.b16 %v1555, %v1554
    %1572 = vmatprep.subr.bf16.mxu0 0
    %1573 = vmatpush1.bf16.msra.mxu0 %v1556
    %1574 = vmatprep.subr.bf16.mxu0 0
    %1575 = vmatpush1.bf16.msra.mxu0 %v1557
    %1576 = vmatprep.subr.bf16.mxu0 0
    %1577 = vmatpush1.bf16.msra.mxu0 %v1558
    %1578 = vmatprep.subr.bf16.mxu0 0
    %1579 = vmatpush1.bf16.msra.mxu0 %v1559
    %1580 = vmatprep.subr.bf16.mxu0 0
    %1581 = vmatpush1.bf16.msra.mxu0 %v1560
    %1582 = vmatprep.subr.bf16.mxu0 0
    %1583 = vmatpush1.bf16.msra.mxu0 %v1561
    %1584 = vmatprep.subr.bf16.mxu0 0
    %1585 = vmatpush1.bf16.msra.mxu0 %v1562
    %1586 = vmatprep.subr.bf16.mxu0 0
    %1587 = vmatpush1.bf16.msra.mxu0 %v1563
    %1588 = vmatprep.subr.bf16.mxu0 0
    %1589 = vmatpush1.bf16.msra.mxu0 0
    %1590 = vmatprep.subr.bf16.mxu0 0
    %1591 = vmatpush1.bf16.msra.mxu0 0
    %1592 = vmatprep.subr.bf16.mxu0 0
    %1593 = vmatpush1.bf16.msra.mxu0 0
    %1594 = vmatprep.subr.bf16.mxu0 0
    %1595 = vmatpush1.bf16.msra.mxu0 0
    %1596 = vmatprep.subr.bf16.mxu0 0
    %1597 = vmatpush1.bf16.msra.mxu0 0
    %1598 = vmatprep.subr.bf16.mxu0 0
    %1599 = vmatpush1.bf16.msra.mxu0 0
    %1600 = vmatprep.subr.bf16.mxu0 0
    %1601 = vmatpush1.bf16.msra.mxu0 0
    %1602 = vmatprep.subr.bf16.mxu0 0
    %1603 = vmatpush1.bf16.msra.mxu0 0
    %1604 = vmatprep.mubr.bf16.mxu0 0
    %1605 = vmatmul.mubr.bf16.gmra.mrb[0].mxu0 %v1507
    %v1606 = vpop.f32.mrb[0].mxu0
    %v1607 = vadd.f32 0.0, %v1606
    %v1608 = vpop.f32.mrb[0].mxu0
    %v1609 = vpop.f32.mrb[0].mxu0
    %v1610 = vpop.f32.mrb[0].mxu0
    %1611 = vdwg.mxu0
    %v1612 = vpack.c.bf16 %v1607, %v1607
    %1613 = vst [vmem:[#allocation2 + $0x34] sm:$0xf] %v1612
    %s1614 = scalar_lea.vmem [#allocation4], 56
    %v1615 = vld [vmem:[%s1614] sm:$0xf]
    %v1616 = vld [vmem:[#allocation7] sm:$0xf]
    %v1617 = vld [vmem:[#allocation7 + $0x4] sm:$0xf]
    %v1618 = vld [vmem:[#allocation7 + $0x8] sm:$0xf]
    %v1619 = vld [vmem:[#allocation7 + $0xc] sm:$0xf]
    %v1620 = vld [vmem:[#allocation7 + $0x10] sm:$0xf]
    %v1621 = vld [vmem:[#allocation7 + $0x14] sm:$0xf]
    %v1622 = vld [vmem:[#allocation7 + $0x18] sm:$0xf]
    %v1623 = vld [vmem:[#allocation7 + $0x1c] sm:$0xf]
    %v1624 = vld [vmem:[#allocation7 + $0x20] sm:$0xf]
    %v1625 = vld [vmem:[#allocation7 + $0x24] sm:$0xf]
    %v1626 = vld [vmem:[#allocation7 + $0x28] sm:$0xf]
    %v1627 = vld [vmem:[#allocation7 + $0x2c] sm:$0xf]
    %v1628 = vld [vmem:[#allocation7 + $0x30] sm:$0xf]
    %v1629 = vld [vmem:[#allocation7 + $0x34] sm:$0xf]
    %v1630 = vld [vmem:[#allocation7 + $0x38] sm:$0xf]
    %v1631 = vld [vmem:[#allocation7 + $0x3c] sm:$0xf]
    %v1648 = vunpack.c.l.b16 %v1616
    %v1649 = vunpack.c.l.b16 %v1617
    %v1650 = vunpack.c.l.b16 %v1618
    %v1651 = vunpack.c.l.b16 %v1619
    %v1652 = vunpack.c.l.b16 %v1620
    %v1653 = vunpack.c.l.b16 %v1621
    %v1654 = vunpack.c.l.b16 %v1622
    %v1655 = vunpack.c.l.b16 %v1623
    %v1656 = vunpack.c.l.b16 %v1624
    %v1657 = vunpack.c.l.b16 %v1625
    %v1658 = vunpack.c.l.b16 %v1626
    %v1659 = vunpack.c.l.b16 %v1627
    %v1660 = vunpack.c.l.b16 %v1628
    %v1661 = vunpack.c.l.b16 %v1629
    %v1662 = vunpack.c.l.b16 %v1630
    %v1663 = vunpack.c.l.b16 %v1631
    %v1664 = vpack.c.b16 %v1649, %v1648
    %v1665 = vpack.c.b16 %v1651, %v1650
    %v1666 = vpack.c.b16 %v1653, %v1652
    %v1667 = vpack.c.b16 %v1655, %v1654
    %v1668 = vpack.c.b16 %v1657, %v1656
    %v1669 = vpack.c.b16 %v1659, %v1658
    %v1670 = vpack.c.b16 %v1661, %v1660
    %v1671 = vpack.c.b16 %v1663, %v1662
    %1680 = vmatprep.subr.bf16.mxu0 0
    %1681 = vmatpush1.bf16.msra.mxu0 %v1664
    %1682 = vmatprep.subr.bf16.mxu0 0
    %1683 = vmatpush1.bf16.msra.mxu0 %v1665
    %1684 = vmatprep.subr.bf16.mxu0 0
    %1685 = vmatpush1.bf16.msra.mxu0 %v1666
    %1686 = vmatprep.subr.bf16.mxu0 0
    %1687 = vmatpush1.bf16.msra.mxu0 %v1667
    %1688 = vmatprep.subr.bf16.mxu0 0
    %1689 = vmatpush1.bf16.msra.mxu0 %v1668
    %1690 = vmatprep.subr.bf16.mxu0 0
    %1691 = vmatpush1.bf16.msra.mxu0 %v1669
    %1692 = vmatprep.subr.bf16.mxu0 0
    %1693 = vmatpush1.bf16.msra.mxu0 %v1670
    %1694 = vmatprep.subr.bf16.mxu0 0
    %1695 = vmatpush1.bf16.msra.mxu0 %v1671
    %1696 = vmatprep.subr.bf16.mxu0 0
    %1697 = vmatpush1.bf16.msra.mxu0 0
    %1698 = vmatprep.subr.bf16.mxu0 0
    %1699 = vmatpush1.bf16.msra.mxu0 0
    %1700 = vmatprep.subr.bf16.mxu0 0
    %1701 = vmatpush1.bf16.msra.mxu0 0
    %1702 = vmatprep.subr.bf16.mxu0 0
    %1703 = vmatpush1.bf16.msra.mxu0 0
    %1704 = vmatprep.subr.bf16.mxu0 0
    %1705 = vmatpush1.bf16.msra.mxu0 0
    %1706 = vmatprep.subr.bf16.mxu0 0
    %1707 = vmatpush1.bf16.msra.mxu0 0
    %1708 = vmatprep.subr.bf16.mxu0 0
    %1709 = vmatpush1.bf16.msra.mxu0 0
    %1710 = vmatprep.subr.bf16.mxu0 0
    %1711 = vmatpush1.bf16.msra.mxu0 0
    %1712 = vmatprep.mubr.bf16.mxu0 0
    %1713 = vmatmul.mubr.bf16.gmra.mrb[0].mxu0 %v1615
    %v1714 = vpop.f32.mrb[0].mxu0
    %v1715 = vadd.f32 0.0, %v1714
    %v1716 = vpop.f32.mrb[0].mxu0
    %v1717 = vpop.f32.mrb[0].mxu0
    %v1718 = vpop.f32.mrb[0].mxu0
    %1719 = vdwg.mxu0
    %v1720 = vpack.c.bf16 %v1715, %v1715
    %1721 = vst [vmem:[#allocation2 + $0x38] sm:$0xf] %v1720
    %s1722 = scalar_lea.vmem [#allocation4], 60
    %v1723 = vld [vmem:[%s1722] sm:$0xf]
    %v1724 = vld [vmem:[#allocation7] sm:$0xf]
    %v1725 = vld [vmem:[#allocation7 + $0x4] sm:$0xf]
    %v1726 = vld [vmem:[#allocation7 + $0x8] sm:$0xf]
    %v1727 = vld [vmem:[#allocation7 + $0xc] sm:$0xf]
    %v1728 = vld [vmem:[#allocation7 + $0x10] sm:$0xf]
    %v1729 = vld [vmem:[#allocation7 + $0x14] sm:$0xf]
    %v1730 = vld [vmem:[#allocation7 + $0x18] sm:$0xf]
    %v1731 = vld [vmem:[#allocation7 + $0x1c] sm:$0xf]
    %v1732 = vld [vmem:[#allocation7 + $0x20] sm:$0xf]
    %v1733 = vld [vmem:[#allocation7 + $0x24] sm:$0xf]
    %v1734 = vld [vmem:[#allocation7 + $0x28] sm:$0xf]
    %v1735 = vld [vmem:[#allocation7 + $0x2c] sm:$0xf]
    %v1736 = vld [vmem:[#allocation7 + $0x30] sm:$0xf]
    %v1737 = vld [vmem:[#allocation7 + $0x34] sm:$0xf]
    %v1738 = vld [vmem:[#allocation7 + $0x38] sm:$0xf]
    %v1739 = vld [vmem:[#allocation7 + $0x3c] sm:$0xf]
    %v1756 = vunpack.c.l.b16 %v1724
    %v1757 = vunpack.c.l.b16 %v1725
    %v1758 = vunpack.c.l.b16 %v1726
    %v1759 = vunpack.c.l.b16 %v1727
    %v1760 = vunpack.c.l.b16 %v1728
    %v1761 = vunpack.c.l.b16 %v1729
    %v1762 = vunpack.c.l.b16 %v1730
    %v1763 = vunpack.c.l.b16 %v1731
    %v1764 = vunpack.c.l.b16 %v1732
    %v1765 = vunpack.c.l.b16 %v1733
    %v1766 = vunpack.c.l.b16 %v1734
    %v1767 = vunpack.c.l.b16 %v1735
    %v1768 = vunpack.c.l.b16 %v1736
    %v1769 = vunpack.c.l.b16 %v1737
    %v1770 = vunpack.c.l.b16 %v1738
    %v1771 = vunpack.c.l.b16 %v1739
    %v1772 = vpack.c.b16 %v1757, %v1756
    %v1773 = vpack.c.b16 %v1759, %v1758
    %v1774 = vpack.c.b16 %v1761, %v1760
    %v1775 = vpack.c.b16 %v1763, %v1762
    %v1776 = vpack.c.b16 %v1765, %v1764
    %v1777 = vpack.c.b16 %v1767, %v1766
    %v1778 = vpack.c.b16 %v1769, %v1768
    %v1779 = vpack.c.b16 %v1771, %v1770
    %1788 = vmatprep.subr.bf16.mxu0 0
    %1789 = vmatpush1.bf16.msra.mxu0 %v1772
    %1790 = vmatprep.subr.bf16.mxu0 0
    %1791 = vmatpush1.bf16.msra.mxu0 %v1773
    %1792 = vmatprep.subr.bf16.mxu0 0
    %1793 = vmatpush1.bf16.msra.mxu0 %v1774
    %1794 = vmatprep.subr.bf16.mxu0 0
    %1795 = vmatpush1.bf16.msra.mxu0 %v1775
    %1796 = vmatprep.subr.bf16.mxu0 0
    %1797 = vmatpush1.bf16.msra.mxu0 %v1776
    %1798 = vmatprep.subr.bf16.mxu0 0
    %1799 = vmatpush1.bf16.msra.mxu0 %v1777
    %1800 = vmatprep.subr.bf16.mxu0 0
    %1801 = vmatpush1.bf16.msra.mxu0 %v1778
    %1802 = vmatprep.subr.bf16.mxu0 0
    %1803 = vmatpush1.bf16.msra.mxu0 %v1779
    %1804 = vmatprep.subr.bf16.mxu0 0
    %1805 = vmatpush1.bf16.msra.mxu0 0
    %1806 = vmatprep.subr.bf16.mxu0 0
    %1807 = vmatpush1.bf16.msra.mxu0 0
    %1808 = vmatprep.subr.bf16.mxu0 0
    %1809 = vmatpush1.bf16.msra.mxu0 0
    %1810 = vmatprep.subr.bf16.mxu0 0
    %1811 = vmatpush1.bf16.msra.mxu0 0
    %1812 = vmatprep.subr.bf16.mxu0 0
    %1813 = vmatpush1.bf16.msra.mxu0 0
    %1814 = vmatprep.subr.bf16.mxu0 0
    %1815 = vmatpush1.bf16.msra.mxu0 0
    %1816 = vmatprep.subr.bf16.mxu0 0
    %1817 = vmatpush1.bf16.msra.mxu0 0
    %1818 = vmatprep.subr.bf16.mxu0 0
    %1819 = vmatpush1.bf16.msra.mxu0 0
    %1820 = vmatprep.mubr.bf16.mxu0 0
    %1821 = vmatmul.mubr.bf16.gmra.mrb[0].mxu0 %v1723
    %v1822 = vpop.f32.mrb[0].mxu0
    %v1823 = vadd.f32 0.0, %v1822
    %v1824 = vpop.f32.mrb[0].mxu0
    %v1825 = vpop.f32.mrb[0].mxu0
    %v1826 = vpop.f32.mrb[0].mxu0
    %1827 = vdwg.mxu0
    %v1828 = vpack.c.bf16 %v1823, %v1823
    %1829 = vst [vmem:[#allocation2 + $0x3c] sm:$0xf] %v1828
    %1830 = vst [vmem:[#allocation3] sm:$0xff] 0.0
    %v1831 = vld [vmem:[#allocation2] sm:$0xff]
    %v1832 = vld [vmem:[#allocation2 + $0x8] sm:$0xff]
    %v1833 = vld [vmem:[#allocation2 + $0x10] sm:$0xff]
    %v1834 = vld [vmem:[#allocation2 + $0x18] sm:$0xff]
    %v1835 = vld [vmem:[#allocation2 + $0x20] sm:$0xff]
    %v1836 = vld [vmem:[#allocation2 + $0x28] sm:$0xff]
    %v1837 = vld [vmem:[#allocation2 + $0x30] sm:$0xff]
    %v1838 = vld [vmem:[#allocation2 + $0x38] sm:$0xff]
    %v1839 = vld [vmem:[#allocation9] sm:$0xff]
    %v1840 = vld [vmem:[#allocation9 + $0x20] sm:$0xff]
    %v1841 = vld [vmem:[#allocation9 + $0x40] sm:$0xff]
    %v1842 = vld [vmem:[#allocation9 + $0x60] sm:$0xff]
    %v1843 = vld [vmem:[#allocation9 + $0x80] sm:$0xff]
    %v1844 = vld [vmem:[#allocation9 + $0xa0] sm:$0xff]
    %v1845 = vld [vmem:[#allocation9 + $0xc0] sm:$0xff]
    %v1846 = vld [vmem:[#allocation9 + $0xe0] sm:$0xff]
    %v1847 = vld [vmem:[#allocation9 + $0x100] sm:$0xff]
    %v1848 = vld [vmem:[#allocation9 + $0x120] sm:$0xff]
    %v1849 = vld [vmem:[#allocation9 + $0x140] sm:$0xff]
    %v1850 = vld [vmem:[#allocation9 + $0x160] sm:$0xff]
    %v1851 = vld [vmem:[#allocation9 + $0x180] sm:$0xff]
    %v1852 = vld [vmem:[#allocation9 + $0x1a0] sm:$0xff]
    %v1853 = vld [vmem:[#allocation9 + $0x1c0] sm:$0xff]
    %v1854 = vld [vmem:[#allocation9 + $0x1e0] sm:$0xff]
    %v1855 = vld [vmem:[#allocation9 + $0x200] sm:$0xff]
    %v1856 = vld [vmem:[#allocation9 + $0x220] sm:$0xff]
    %v1857 = vld [vmem:[#allocation9 + $0x240] sm:$0xff]
    %v1858 = vld [vmem:[#allocation9 + $0x260] sm:$0xff]
    %v1859 = vld [vmem:[#allocation9 + $0x280] sm:$0xff]
    %v1860 = vld [vmem:[#allocation9 + $0x2a0] sm:$0xff]
    %v1861 = vld [vmem:[#allocation9 + $0x2c0] sm:$0xff]
    %v1862 = vld [vmem:[#allocation9 + $0x2e0] sm:$0xff]
    %v1863 = vld [vmem:[#allocation9 + $0x300] sm:$0xff]
    %v1864 = vld [vmem:[#allocation9 + $0x320] sm:$0xff]
    %v1865 = vld [vmem:[#allocation9 + $0x340] sm:$0xff]
    %v1866 = vld [vmem:[#allocation9 + $0x360] sm:$0xff]
    %v1867 = vld [vmem:[#allocation9 + $0x380] sm:$0xff]
    %v1868 = vld [vmem:[#allocation9 + $0x3a0] sm:$0xff]
    %v1869 = vld [vmem:[#allocation9 + $0x3c0] sm:$0xff]
    %v1870 = vld [vmem:[#allocation9 + $0x3e0] sm:$0xff]
    %v1871 = vld [vmem:[#allocation9 + $0x400] sm:$0xff]
    %v1872 = vld [vmem:[#allocation9 + $0x420] sm:$0xff]
    %v1873 = vld [vmem:[#allocation9 + $0x440] sm:$0xff]
    %v1874 = vld [vmem:[#allocation9 + $0x460] sm:$0xff]
    %v1875 = vld [vmem:[#allocation9 + $0x480] sm:$0xff]
    %v1876 = vld [vmem:[#allocation9 + $0x4a0] sm:$0xff]
    %v1877 = vld [vmem:[#allocation9 + $0x4c0] sm:$0xff]
    %v1878 = vld [vmem:[#allocation9 + $0x4e0] sm:$0xff]
    %v1879 = vld [vmem:[#allocation9 + $0x500] sm:$0xff]
    %v1880 = vld [vmem:[#allocation9 + $0x520] sm:$0xff]
    %v1881 = vld [vmem:[#allocation9 + $0x540] sm:$0xff]
    %v1882 = vld [vmem:[#allocation9 + $0x560] sm:$0xff]
    %v1883 = vld [vmem:[#allocation9 + $0x580] sm:$0xff]
    %v1884 = vld [vmem:[#allocation9 + $0x5a0] sm:$0xff]
    %v1885 = vld [vmem:[#allocation9 + $0x5c0] sm:$0xff]
    %v1886 = vld [vmem:[#allocation9 + $0x5e0] sm:$0xff]
    %v1887 = vld [vmem:[#allocation9 + $0x600] sm:$0xff]
    %v1888 = vld [vmem:[#allocation9 + $0x620] sm:$0xff]
    %v1889 = vld [vmem:[#allocation9 + $0x640] sm:$0xff]
    %v1890 = vld [vmem:[#allocation9 + $0x660] sm:$0xff]
    %v1891 = vld [vmem:[#allocation9 + $0x680] sm:$0xff]
    %v1892 = vld [vmem:[#allocation9 + $0x6a0] sm:$0xff]
    %v1893 = vld [vmem:[#allocation9 + $0x6c0] sm:$0xff]
    %v1894 = vld [vmem:[#allocation9 + $0x6e0] sm:$0xff]
    %v1895 = vld [vmem:[#allocation9 + $0x700] sm:$0xff]
    %v1896 = vld [vmem:[#allocation9 + $0x720] sm:$0xff]
    %v1897 = vld [vmem:[#allocation9 + $0x740] sm:$0xff]
    %v1898 = vld [vmem:[#allocation9 + $0x760] sm:$0xff]
    %v1899 = vld [vmem:[#allocation9 + $0x780] sm:$0xff]
    %v1900 = vld [vmem:[#allocation9 + $0x7a0] sm:$0xff]
    %v1901 = vld [vmem:[#allocation9 + $0x7c0] sm:$0xff]
    %v1902 = vld [vmem:[#allocation9 + $0x7e0] sm:$0xff]
    %v1903 = vld [vmem:[#allocation9 + $0x800] sm:$0xff]
    %v1904 = vld [vmem:[#allocation9 + $0x820] sm:$0xff]
    %v1905 = vld [vmem:[#allocation9 + $0x840] sm:$0xff]
    %v1906 = vld [vmem:[#allocation9 + $0x860] sm:$0xff]
    %v1907 = vld [vmem:[#allocation9 + $0x880] sm:$0xff]
    %v1908 = vld [vmem:[#allocation9 + $0x8a0] sm:$0xff]
    %v1909 = vld [vmem:[#allocation9 + $0x8c0] sm:$0xff]
    %v1910 = vld [vmem:[#allocation9 + $0x8e0] sm:$0xff]
    %v1911 = vld [vmem:[#allocation9 + $0x900] sm:$0xff]
    %v1912 = vld [vmem:[#allocation9 + $0x920] sm:$0xff]
    %v1913 = vld [vmem:[#allocation9 + $0x940] sm:$0xff]
    %v1914 = vld [vmem:[#allocation9 + $0x960] sm:$0xff]
    %v1915 = vld [vmem:[#allocation9 + $0x980] sm:$0xff]
    %v1916 = vld [vmem:[#allocation9 + $0x9a0] sm:$0xff]
    %v1917 = vld [vmem:[#allocation9 + $0x9c0] sm:$0xff]
    %v1918 = vld [vmem:[#allocation9 + $0x9e0] sm:$0xff]
    %v1919 = vld [vmem:[#allocation9 + $0xa00] sm:$0xff]
    %v1920 = vld [vmem:[#allocation9 + $0xa20] sm:$0xff]
    %v1921 = vld [vmem:[#allocation9 + $0xa40] sm:$0xff]
    %v1922 = vld [vmem:[#allocation9 + $0xa60] sm:$0xff]
    %v1923 = vld [vmem:[#allocation9 + $0xa80] sm:$0xff]
    %v1924 = vld [vmem:[#allocation9 + $0xaa0] sm:$0xff]
    %v1925 = vld [vmem:[#allocation9 + $0xac0] sm:$0xff]
    %v1926 = vld [vmem:[#allocation9 + $0xae0] sm:$0xff]
    %v1927 = vld [vmem:[#allocation9 + $0xb00] sm:$0xff]
    %v1928 = vld [vmem:[#allocation9 + $0xb20] sm:$0xff]
    %v1929 = vld [vmem:[#allocation9 + $0xb40] sm:$0xff]
    %v1930 = vld [vmem:[#allocation9 + $0xb60] sm:$0xff]
    %v1931 = vld [vmem:[#allocation9 + $0xb80] sm:$0xff]
    %v1932 = vld [vmem:[#allocation9 + $0xba0] sm:$0xff]
    %v1933 = vld [vmem:[#allocation9 + $0xbc0] sm:$0xff]
    %v1934 = vld [vmem:[#allocation9 + $0xbe0] sm:$0xff]
    %v1935 = vld [vmem:[#allocation9 + $0xc00] sm:$0xff]
    %v1936 = vld [vmem:[#allocation9 + $0xc20] sm:$0xff]
    %v1937 = vld [vmem:[#allocation9 + $0xc40] sm:$0xff]
    %v1938 = vld [vmem:[#allocation9 + $0xc60] sm:$0xff]
    %v1939 = vld [vmem:[#allocation9 + $0xc80] sm:$0xff]
    %v1940 = vld [vmem:[#allocation9 + $0xca0] sm:$0xff]
    %v1941 = vld [vmem:[#allocation9 + $0xcc0] sm:$0xff]
    %v1942 = vld [vmem:[#allocation9 + $0xce0] sm:$0xff]
    %v1943 = vld [vmem:[#allocation9 + $0xd00] sm:$0xff]
    %v1944 = vld [vmem:[#allocation9 + $0xd20] sm:$0xff]
    %v1945 = vld [vmem:[#allocation9 + $0xd40] sm:$0xff]
    %v1946 = vld [vmem:[#allocation9 + $0xd60] sm:$0xff]
    %v1947 = vld [vmem:[#allocation9 + $0xd80] sm:$0xff]
    %v1948 = vld [vmem:[#allocation9 + $0xda0] sm:$0xff]
    %v1949 = vld [vmem:[#allocation9 + $0xdc0] sm:$0xff]
    %v1950 = vld [vmem:[#allocation9 + $0xde0] sm:$0xff]
    %v1951 = vld [vmem:[#allocation9 + $0xe00] sm:$0xff]
    %v1952 = vld [vmem:[#allocation9 + $0xe20] sm:$0xff]
    %v1953 = vld [vmem:[#allocation9 + $0xe40] sm:$0xff]
    %v1954 = vld [vmem:[#allocation9 + $0xe60] sm:$0xff]
    %v1955 = vld [vmem:[#allocation9 + $0xe80] sm:$0xff]
    %v1956 = vld [vmem:[#allocation9 + $0xea0] sm:$0xff]
    %v1957 = vld [vmem:[#allocation9 + $0xec0] sm:$0xff]
    %v1958 = vld [vmem:[#allocation9 + $0xee0] sm:$0xff]
    %v1959 = vld [vmem:[#allocation9 + $0xf00] sm:$0xff]
    %v1960 = vld [vmem:[#allocation9 + $0xf20] sm:$0xff]
    %v1961 = vld [vmem:[#allocation9 + $0xf40] sm:$0xff]
    %v1962 = vld [vmem:[#allocation9 + $0xf60] sm:$0xff]
    %v1963 = vld [vmem:[#allocation9 + $0xf80] sm:$0xff]
    %v1964 = vld [vmem:[#allocation9 + $0xfa0] sm:$0xff]
    %v1965 = vld [vmem:[#allocation9 + $0xfc0] sm:$0xff]
    %v1966 = vld [vmem:[#allocation9 + $0xfe0] sm:$0xff]
    %v1967 = vld [vmem:[#allocation9 + $0x1000] sm:$0xff]
    %v1968 = vld [vmem:[#allocation9 + $0x1020] sm:$0xff]
    %v1969 = vld [vmem:[#allocation9 + $0x1040] sm:$0xff]
    %v1970 = vld [vmem:[#allocation9 + $0x1060] sm:$0xff]
    %v1971 = vld [vmem:[#allocation9 + $0x1080] sm:$0xff]
    %v1972 = vld [vmem:[#allocation9 + $0x10a0] sm:$0xff]
    %v1973 = vld [vmem:[#allocation9 + $0x10c0] sm:$0xff]
    %v1974 = vld [vmem:[#allocation9 + $0x10e0] sm:$0xff]
    %v1975 = vld [vmem:[#allocation9 + $0x1100] sm:$0xff]
    %v1976 = vld [vmem:[#allocation9 + $0x1120] sm:$0xff]
    %v1977 = vld [vmem:[#allocation9 + $0x1140] sm:$0xff]
    %v1978 = vld [vmem:[#allocation9 + $0x1160] sm:$0xff]
    %v1979 = vld [vmem:[#allocation9 + $0x1180] sm:$0xff]
    %v1980 = vld [vmem:[#allocation9 + $0x11a0] sm:$0xff]
    %v1981 = vld [vmem:[#allocation9 + $0x11c0] sm:$0xff]
    %v1982 = vld [vmem:[#allocation9 + $0x11e0] sm:$0xff]
    %v1983 = vld [vmem:[#allocation9 + $0x1200] sm:$0xff]
    %v1984 = vld [vmem:[#allocation9 + $0x1220] sm:$0xff]
    %v1985 = vld [vmem:[#allocation9 + $0x1240] sm:$0xff]
    %v1986 = vld [vmem:[#allocation9 + $0x1260] sm:$0xff]
    %v1987 = vld [vmem:[#allocation9 + $0x1280] sm:$0xff]
    %v1988 = vld [vmem:[#allocation9 + $0x12a0] sm:$0xff]
    %v1989 = vld [vmem:[#allocation9 + $0x12c0] sm:$0xff]
    %v1990 = vld [vmem:[#allocation9 + $0x12e0] sm:$0xff]
    %v1991 = vld [vmem:[#allocation9 + $0x1300] sm:$0xff]
    %v1992 = vld [vmem:[#allocation9 + $0x1320] sm:$0xff]
    %v1993 = vld [vmem:[#allocation9 + $0x1340] sm:$0xff]
    %v1994 = vld [vmem:[#allocation9 + $0x1360] sm:$0xff]
    %v1995 = vld [vmem:[#allocation9 + $0x1380] sm:$0xff]
    %v1996 = vld [vmem:[#allocation9 + $0x13a0] sm:$0xff]
    %v1997 = vld [vmem:[#allocation9 + $0x13c0] sm:$0xff]
    %v1998 = vld [vmem:[#allocation9 + $0x13e0] sm:$0xff]
    %v1999 = vld [vmem:[#allocation9 + $0x1400] sm:$0xff]
    %v2000 = vld [vmem:[#allocation9 + $0x1420] sm:$0xff]
    %v2001 = vld [vmem:[#allocation9 + $0x1440] sm:$0xff]
    %v2002 = vld [vmem:[#allocation9 + $0x1460] sm:$0xff]
    %v2003 = vld [vmem:[#allocation9 + $0x1480] sm:$0xff]
    %v2004 = vld [vmem:[#allocation9 + $0x14a0] sm:$0xff]
    %v2005 = vld [vmem:[#allocation9 + $0x14c0] sm:$0xff]
    %v2006 = vld [vmem:[#allocation9 + $0x14e0] sm:$0xff]
    %v2007 = vld [vmem:[#allocation9 + $0x1500] sm:$0xff]
    %v2008 = vld [vmem:[#allocation9 + $0x1520] sm:$0xff]
    %v2009 = vld [vmem:[#allocation9 + $0x1540] sm:$0xff]
    %v2010 = vld [vmem:[#allocation9 + $0x1560] sm:$0xff]
    %v2011 = vld [vmem:[#allocation9 + $0x1580] sm:$0xff]
    %v2012 = vld [vmem:[#allocation9 + $0x15a0] sm:$0xff]
    %v2013 = vld [vmem:[#allocation9 + $0x15c0] sm:$0xff]
    %v2014 = vld [vmem:[#allocation9 + $0x15e0] sm:$0xff]
    %v2015 = vld [vmem:[#allocation9 + $0x1600] sm:$0xff]
    %v2016 = vld [vmem:[#allocation9 + $0x1620] sm:$0xff]
    %v2017 = vld [vmem:[#allocation9 + $0x1640] sm:$0xff]
    %v2018 = vld [vmem:[#allocation9 + $0x1660] sm:$0xff]
    %v2019 = vld [vmem:[#allocation9 + $0x1680] sm:$0xff]
    %v2020 = vld [vmem:[#allocation9 + $0x16a0] sm:$0xff]
    %v2021 = vld [vmem:[#allocation9 + $0x16c0] sm:$0xff]
    %v2022 = vld [vmem:[#allocation9 + $0x16e0] sm:$0xff]
    %v2023 = vld [vmem:[#allocation9 + $0x1700] sm:$0xff]
    %v2024 = vld [vmem:[#allocation9 + $0x1720] sm:$0xff]
    %v2025 = vld [vmem:[#allocation9 + $0x1740] sm:$0xff]
    %v2026 = vld [vmem:[#allocation9 + $0x1760] sm:$0xff]
    %v2027 = vld [vmem:[#allocation9 + $0x1780] sm:$0xff]
    %v2028 = vld [vmem:[#allocation9 + $0x17a0] sm:$0xff]
    %v2029 = vld [vmem:[#allocation9 + $0x17c0] sm:$0xff]
    %v2030 = vld [vmem:[#allocation9 + $0x17e0] sm:$0xff]
    %v2031 = vld [vmem:[#allocation9 + $0x1800] sm:$0xff]
    %v2032 = vld [vmem:[#allocation9 + $0x1820] sm:$0xff]
    %v2033 = vld [vmem:[#allocation9 + $0x1840] sm:$0xff]
    %v2034 = vld [vmem:[#allocation9 + $0x1860] sm:$0xff]
    %v2035 = vld [vmem:[#allocation9 + $0x1880] sm:$0xff]
    %v2036 = vld [vmem:[#allocation9 + $0x18a0] sm:$0xff]
    %v2037 = vld [vmem:[#allocation9 + $0x18c0] sm:$0xff]
    %v2038 = vld [vmem:[#allocation9 + $0x18e0] sm:$0xff]
    %v2039 = vld [vmem:[#allocation9 + $0x1900] sm:$0xff]
    %v2040 = vld [vmem:[#allocation9 + $0x1920] sm:$0xff]
    %v2041 = vld [vmem:[#allocation9 + $0x1940] sm:$0xff]
    %v2042 = vld [vmem:[#allocation9 + $0x1960] sm:$0xff]
    %v2043 = vld [vmem:[#allocation9 + $0x1980] sm:$0xff]
    %v2044 = vld [vmem:[#allocation9 + $0x19a0] sm:$0xff]
    %v2045 = vld [vmem:[#allocation9 + $0x19c0] sm:$0xff]
    %v2046 = vld [vmem:[#allocation9 + $0x19e0] sm:$0xff]
    %v2047 = vld [vmem:[#allocation9 + $0x1a00] sm:$0xff]
    %v2048 = vld [vmem:[#allocation9 + $0x1a20] sm:$0xff]
    %v2049 = vld [vmem:[#allocation9 + $0x1a40] sm:$0xff]
    %v2050 = vld [vmem:[#allocation9 + $0x1a60] sm:$0xff]
    %v2051 = vld [vmem:[#allocation9 + $0x1a80] sm:$0xff]
    %v2052 = vld [vmem:[#allocation9 + $0x1aa0] sm:$0xff]
    %v2053 = vld [vmem:[#allocation9 + $0x1ac0] sm:$0xff]
    %v2054 = vld [vmem:[#allocation9 + $0x1ae0] sm:$0xff]
    %v2055 = vld [vmem:[#allocation9 + $0x1b00] sm:$0xff]
    %v2056 = vld [vmem:[#allocation9 + $0x1b20] sm:$0xff]
    %v2057 = vld [vmem:[#allocation9 + $0x1b40] sm:$0xff]
    %v2058 = vld [vmem:[#allocation9 + $0x1b60] sm:$0xff]
    %v2059 = vld [vmem:[#allocation9 + $0x1b80] sm:$0xff]
    %v2060 = vld [vmem:[#allocation9 + $0x1ba0] sm:$0xff]
    %v2061 = vld [vmem:[#allocation9 + $0x1bc0] sm:$0xff]
    %v2062 = vld [vmem:[#allocation9 + $0x1be0] sm:$0xff]
    %v2063 = vld [vmem:[#allocation9 + $0x1c00] sm:$0xff]
    %v2064 = vld [vmem:[#allocation9 + $0x1c20] sm:$0xff]
    %v2065 = vld [vmem:[#allocation9 + $0x1c40] sm:$0xff]
    %v2066 = vld [vmem:[#allocation9 + $0x1c60] sm:$0xff]
    %v2067 = vld [vmem:[#allocation9 + $0x1c80] sm:$0xff]
    %v2068 = vld [vmem:[#allocation9 + $0x1ca0] sm:$0xff]
    %v2069 = vld [vmem:[#allocation9 + $0x1cc0] sm:$0xff]
    %v2070 = vld [vmem:[#allocation9 + $0x1ce0] sm:$0xff]
    %v2071 = vld [vmem:[#allocation9 + $0x1d00] sm:$0xff]
    %v2072 = vld [vmem:[#allocation9 + $0x1d20] sm:$0xff]
    %v2073 = vld [vmem:[#allocation9 + $0x1d40] sm:$0xff]
    %v2074 = vld [vmem:[#allocation9 + $0x1d60] sm:$0xff]
    %v2075 = vld [vmem:[#allocation9 + $0x1d80] sm:$0xff]
    %v2076 = vld [vmem:[#allocation9 + $0x1da0] sm:$0xff]
    %v2077 = vld [vmem:[#allocation9 + $0x1dc0] sm:$0xff]
    %v2078 = vld [vmem:[#allocation9 + $0x1de0] sm:$0xff]
    %v2079 = vld [vmem:[#allocation9 + $0x1e00] sm:$0xff]
    %v2080 = vld [vmem:[#allocation9 + $0x1e20] sm:$0xff]
    %v2081 = vld [vmem:[#allocation9 + $0x1e40] sm:$0xff]
    %v2082 = vld [vmem:[#allocation9 + $0x1e60] sm:$0xff]
    %v2083 = vld [vmem:[#allocation9 + $0x1e80] sm:$0xff]
    %v2084 = vld [vmem:[#allocation9 + $0x1ea0] sm:$0xff]
    %v2085 = vld [vmem:[#allocation9 + $0x1ec0] sm:$0xff]
    %v2086 = vld [vmem:[#allocation9 + $0x1ee0] sm:$0xff]
    %v2087 = vld [vmem:[#allocation9 + $0x1f00] sm:$0xff]
    %v2088 = vld [vmem:[#allocation9 + $0x1f20] sm:$0xff]
    %v2089 = vld [vmem:[#allocation9 + $0x1f40] sm:$0xff]
    %v2090 = vld [vmem:[#allocation9 + $0x1f60] sm:$0xff]
    %v2091 = vld [vmem:[#allocation9 + $0x1f80] sm:$0xff]
    %v2092 = vld [vmem:[#allocation9 + $0x1fa0] sm:$0xff]
    %v2093 = vld [vmem:[#allocation9 + $0x1fc0] sm:$0xff]
    %v2094 = vld [vmem:[#allocation9 + $0x1fe0] sm:$0xff]
    %v2095 = vld [vmem:[#allocation10] sm:$0x3]
    %v2097 = vlaneseq
    %v2098 = vshrl.u32 %v2097, 7
    %v2099 = vsub.s32 0, %v2098
    %v2100 = vrot.slane %v2095, %v2099
    %v2101 = vlaneseq
    %v2102 = vshrl.u32 %v2101, 7
    %v2103 = vsub.s32 1, %v2102
    %v2104 = vrot.slane %v2095, %v2103
    %v2115 = vunpack.c.l.b16 %v1831
    %v2116 = vunpack.c.h.b16 %v1831
    %v2117 = vunpack.c.l.b16 %v1832
    %v2118 = vunpack.c.h.b16 %v1832
    %v2119 = vunpack.c.l.b16 %v1833
    %v2120 = vunpack.c.h.b16 %v1833
    %v2121 = vunpack.c.l.b16 %v1834
    %v2122 = vunpack.c.h.b16 %v1834
    %v2123 = vunpack.c.l.b16 %v1835
    %v2124 = vunpack.c.h.b16 %v1835
    %v2125 = vunpack.c.l.b16 %v1836
    %v2126 = vunpack.c.h.b16 %v1836
    %v2127 = vunpack.c.l.b16 %v1837
    %v2128 = vunpack.c.h.b16 %v1837
    %v2129 = vunpack.c.l.b16 %v1838
    %v2130 = vunpack.c.h.b16 %v1838
    %v2131 = vpack.c.b16 %v2115, %v2115
    %v2132 = vpack.c.b16 %v2116, %v2116
    %v2133 = vpack.c.b16 %v2117, %v2117
    %v2134 = vpack.c.b16 %v2118, %v2118
    %v2135 = vpack.c.b16 %v2119, %v2119
    %v2136 = vpack.c.b16 %v2120, %v2120
    %v2137 = vpack.c.b16 %v2121, %v2121
    %v2138 = vpack.c.b16 %v2122, %v2122
    %v2139 = vpack.c.b16 %v2123, %v2123
    %v2140 = vpack.c.b16 %v2124, %v2124
    %v2141 = vpack.c.b16 %v2125, %v2125
    %v2142 = vpack.c.b16 %v2126, %v2126
    %v2143 = vpack.c.b16 %v2127, %v2127
    %v2144 = vpack.c.b16 %v2128, %v2128
    %v2145 = vpack.c.b16 %v2129, %v2129
    %v2146 = vpack.c.b16 %v2130, %v2130
    %v2419 = vunpack.c.l.b16 %v1839
    %v2420 = vunpack.c.h.b16 %v1839
    %v2421 = vunpack.c.l.b16 %v1840
    %v2422 = vunpack.c.h.b16 %v1840
    %v2423 = vunpack.c.l.b16 %v1841
    %v2424 = vunpack.c.h.b16 %v1841
    %v2425 = vunpack.c.l.b16 %v1842
    %v2426 = vunpack.c.h.b16 %v1842
    %v2427 = vunpack.c.l.b16 %v1843
    %v2428 = vunpack.c.h.b16 %v1843
    %v2429 = vunpack.c.l.b16 %v1844
    %v2430 = vunpack.c.h.b16 %v1844
    %v2431 = vunpack.c.l.b16 %v1845
    %v2432 = vunpack.c.h.b16 %v1845
    %v2433 = vunpack.c.l.b16 %v1846
    %v2434 = vunpack.c.h.b16 %v1846
    %v2435 = vunpack.c.l.b16 %v1847
    %v2436 = vunpack.c.h.b16 %v1847
    %v2437 = vunpack.c.l.b16 %v1848
    %v2438 = vunpack.c.h.b16 %v1848
    %v2439 = vunpack.c.l.b16 %v1849
    %v2440 = vunpack.c.h.b16 %v1849
    %v2441 = vunpack.c.l.b16 %v1850
    %v2442 = vunpack.c.h.b16 %v1850
    %v2443 = vunpack.c.l.b16 %v1851
    %v2444 = vunpack.c.h.b16 %v1851
    %v2445 = vunpack.c.l.b16 %v1852
    %v2446 = vunpack.c.h.b16 %v1852
    %v2447 = vunpack.c.l.b16 %v1853
    %v2448 = vunpack.c.h.b16 %v1853
    %v2449 = vunpack.c.l.b16 %v1854
    %v2450 = vunpack.c.h.b16 %v1854
    %v2451 = vunpack.c.l.b16 %v1855
    %v2452 = vunpack.c.h.b16 %v1855
    %v2453 = vunpack.c.l.b16 %v1856
    %v2454 = vunpack.c.h.b16 %v1856
    %v2455 = vunpack.c.l.b16 %v1857
    %v2456 = vunpack.c.h.b16 %v1857
    %v2457 = vunpack.c.l.b16 %v1858
    %v2458 = vunpack.c.h.b16 %v1858
    %v2459 = vunpack.c.l.b16 %v1859
    %v2460 = vunpack.c.h.b16 %v1859
    %v2461 = vunpack.c.l.b16 %v1860
    %v2462 = vunpack.c.h.b16 %v1860
    %v2463 = vunpack.c.l.b16 %v1861
    %v2464 = vunpack.c.h.b16 %v1861
    %v2465 = vunpack.c.l.b16 %v1862
    %v2466 = vunpack.c.h.b16 %v1862
    %v2467 = vunpack.c.l.b16 %v1863
    %v2468 = vunpack.c.h.b16 %v1863
    %v2469 = vunpack.c.l.b16 %v1864
    %v2470 = vunpack.c.h.b16 %v1864
    %v2471 = vunpack.c.l.b16 %v1865
    %v2472 = vunpack.c.h.b16 %v1865
    %v2473 = vunpack.c.l.b16 %v1866
    %v2474 = vunpack.c.h.b16 %v1866
    %v2475 = vunpack.c.l.b16 %v1867
    %v2476 = vunpack.c.h.b16 %v1867
    %v2477 = vunpack.c.l.b16 %v1868
    %v2478 = vunpack.c.h.b16 %v1868
    %v2479 = vunpack.c.l.b16 %v1869
    %v2480 = vunpack.c.h.b16 %v1869
    %v2481 = vunpack.c.l.b16 %v1870
    %v2482 = vunpack.c.h.b16 %v1870
    %v2483 = vunpack.c.l.b16 %v1871
    %v2484 = vunpack.c.h.b16 %v1871
    %v2485 = vunpack.c.l.b16 %v1872
    %v2486 = vunpack.c.h.b16 %v1872
    %v2487 = vunpack.c.l.b16 %v1873
    %v2488 = vunpack.c.h.b16 %v1873
    %v2489 = vunpack.c.l.b16 %v1874
    %v2490 = vunpack.c.h.b16 %v1874
    %v2491 = vunpack.c.l.b16 %v1875
    %v2492 = vunpack.c.h.b16 %v1875
    %v2493 = vunpack.c.l.b16 %v1876
    %v2494 = vunpack.c.h.b16 %v1876
    %v2495 = vunpack.c.l.b16 %v1877
    %v2496 = vunpack.c.h.b16 %v1877
    %v2497 = vunpack.c.l.b16 %v1878
    %v2498 = vunpack.c.h.b16 %v1878
    %v2499 = vunpack.c.l.b16 %v1879
    %v2500 = vunpack.c.h.b16 %v1879
    %v2501 = vunpack.c.l.b16 %v1880
    %v2502 = vunpack.c.h.b16 %v1880
    %v2503 = vunpack.c.l.b16 %v1881
    %v2504 = vunpack.c.h.b16 %v1881
    %v2505 = vunpack.c.l.b16 %v1882
    %v2506 = vunpack.c.h.b16 %v1882
    %v2507 = vunpack.c.l.b16 %v1883
    %v2508 = vunpack.c.h.b16 %v1883
    %v2509 = vunpack.c.l.b16 %v1884
    %v2510 = vunpack.c.h.b16 %v1884
    %v2511 = vunpack.c.l.b16 %v1885
    %v2512 = vunpack.c.h.b16 %v1885
    %v2513 = vunpack.c.l.b16 %v1886
    %v2514 = vunpack.c.h.b16 %v1886
    %v2515 = vunpack.c.l.b16 %v1887
    %v2516 = vunpack.c.h.b16 %v1887
    %v2517 = vunpack.c.l.b16 %v1888
    %v2518 = vunpack.c.h.b16 %v1888
    %v2519 = vunpack.c.l.b16 %v1889
    %v2520 = vunpack.c.h.b16 %v1889
    %v2521 = vunpack.c.l.b16 %v1890
    %v2522 = vunpack.c.h.b16 %v1890
    %v2523 = vunpack.c.l.b16 %v1891
    %v2524 = vunpack.c.h.b16 %v1891
    %v2525 = vunpack.c.l.b16 %v1892
    %v2526 = vunpack.c.h.b16 %v1892
    %v2527 = vunpack.c.l.b16 %v1893
    %v2528 = vunpack.c.h.b16 %v1893
    %v2529 = vunpack.c.l.b16 %v1894
    %v2530 = vunpack.c.h.b16 %v1894
    %v2531 = vunpack.c.l.b16 %v1895
    %v2532 = vunpack.c.h.b16 %v1895
    %v2533 = vunpack.c.l.b16 %v1896
    %v2534 = vunpack.c.h.b16 %v1896
    %v2535 = vunpack.c.l.b16 %v1897
    %v2536 = vunpack.c.h.b16 %v1897
    %v2537 = vunpack.c.l.b16 %v1898
    %v2538 = vunpack.c.h.b16 %v1898
    %v2539 = vunpack.c.l.b16 %v1899
    %v2540 = vunpack.c.h.b16 %v1899
    %v2541 = vunpack.c.l.b16 %v1900
    %v2542 = vunpack.c.h.b16 %v1900
    %v2543 = vunpack.c.l.b16 %v1901
    %v2544 = vunpack.c.h.b16 %v1901
    %v2545 = vunpack.c.l.b16 %v1902
    %v2546 = vunpack.c.h.b16 %v1902
    %v2547 = vunpack.c.l.b16 %v1903
    %v2548 = vunpack.c.h.b16 %v1903
    %v2549 = vunpack.c.l.b16 %v1904
    %v2550 = vunpack.c.h.b16 %v1904
    %v2551 = vunpack.c.l.b16 %v1905
    %v2552 = vunpack.c.h.b16 %v1905
    %v2553 = vunpack.c.l.b16 %v1906
    %v2554 = vunpack.c.h.b16 %v1906
    %v2555 = vunpack.c.l.b16 %v1907
    %v2556 = vunpack.c.h.b16 %v1907
    %v2557 = vunpack.c.l.b16 %v1908
    %v2558 = vunpack.c.h.b16 %v1908
    %v2559 = vunpack.c.l.b16 %v1909
    %v2560 = vunpack.c.h.b16 %v1909
    %v2561 = vunpack.c.l.b16 %v1910
    %v2562 = vunpack.c.h.b16 %v1910
    %v2563 = vunpack.c.l.b16 %v1911
    %v2564 = vunpack.c.h.b16 %v1911
    %v2565 = vunpack.c.l.b16 %v1912
    %v2566 = vunpack.c.h.b16 %v1912
    %v2567 = vunpack.c.l.b16 %v1913
    %v2568 = vunpack.c.h.b16 %v1913
    %v2569 = vunpack.c.l.b16 %v1914
    %v2570 = vunpack.c.h.b16 %v1914
    %v2571 = vunpack.c.l.b16 %v1915
    %v2572 = vunpack.c.h.b16 %v1915
    %v2573 = vunpack.c.l.b16 %v1916
    %v2574 = vunpack.c.h.b16 %v1916
    %v2575 = vunpack.c.l.b16 %v1917
    %v2576 = vunpack.c.h.b16 %v1917
    %v2577 = vunpack.c.l.b16 %v1918
    %v2578 = vunpack.c.h.b16 %v1918
    %v2579 = vunpack.c.l.b16 %v1919
    %v2580 = vunpack.c.h.b16 %v1919
    %v2581 = vunpack.c.l.b16 %v1920
    %v2582 = vunpack.c.h.b16 %v1920
    %v2583 = vunpack.c.l.b16 %v1921
    %v2584 = vunpack.c.h.b16 %v1921
    %v2585 = vunpack.c.l.b16 %v1922
    %v2586 = vunpack.c.h.b16 %v1922
    %v2587 = vunpack.c.l.b16 %v1923
    %v2588 = vunpack.c.h.b16 %v1923
    %v2589 = vunpack.c.l.b16 %v1924
    %v2590 = vunpack.c.h.b16 %v1924
    %v2591 = vunpack.c.l.b16 %v1925
    %v2592 = vunpack.c.h.b16 %v1925
    %v2593 = vunpack.c.l.b16 %v1926
    %v2594 = vunpack.c.h.b16 %v1926
    %v2595 = vunpack.c.l.b16 %v1927
    %v2596 = vunpack.c.h.b16 %v1927
    %v2597 = vunpack.c.l.b16 %v1928
    %v2598 = vunpack.c.h.b16 %v1928
    %v2599 = vunpack.c.l.b16 %v1929
    %v2600 = vunpack.c.h.b16 %v1929
    %v2601 = vunpack.c.l.b16 %v1930
    %v2602 = vunpack.c.h.b16 %v1930
    %v2603 = vunpack.c.l.b16 %v1931
    %v2604 = vunpack.c.h.b16 %v1931
    %v2605 = vunpack.c.l.b16 %v1932
    %v2606 = vunpack.c.h.b16 %v1932
    %v2607 = vunpack.c.l.b16 %v1933
    %v2608 = vunpack.c.h.b16 %v1933
    %v2609 = vunpack.c.l.b16 %v1934
    %v2610 = vunpack.c.h.b16 %v1934
    %v2611 = vunpack.c.l.b16 %v1935
    %v2612 = vunpack.c.h.b16 %v1935
    %v2613 = vunpack.c.l.b16 %v1936
    %v2614 = vunpack.c.h.b16 %v1936
    %v2615 = vunpack.c.l.b16 %v1937
    %v2616 = vunpack.c.h.b16 %v1937
    %v2617 = vunpack.c.l.b16 %v1938
    %v2618 = vunpack.c.h.b16 %v1938
    %v2619 = vunpack.c.l.b16 %v1939
    %v2620 = vunpack.c.h.b16 %v1939
    %v2621 = vunpack.c.l.b16 %v1940
    %v2622 = vunpack.c.h.b16 %v1940
    %v2623 = vunpack.c.l.b16 %v1941
    %v2624 = vunpack.c.h.b16 %v1941
    %v2625 = vunpack.c.l.b16 %v1942
    %v2626 = vunpack.c.h.b16 %v1942
    %v2627 = vunpack.c.l.b16 %v1943
    %v2628 = vunpack.c.h.b16 %v1943
    %v2629 = vunpack.c.l.b16 %v1944
    %v2630 = vunpack.c.h.b16 %v1944
    %v2631 = vunpack.c.l.b16 %v1945
    %v2632 = vunpack.c.h.b16 %v1945
    %v2633 = vunpack.c.l.b16 %v1946
    %v2634 = vunpack.c.h.b16 %v1946
    %v2635 = vunpack.c.l.b16 %v1947
    %v2636 = vunpack.c.h.b16 %v1947
    %v2637 = vunpack.c.l.b16 %v1948
    %v2638 = vunpack.c.h.b16 %v1948
    %v2639 = vunpack.c.l.b16 %v1949
    %v2640 = vunpack.c.h.b16 %v1949
    %v2641 = vunpack.c.l.b16 %v1950
    %v2642 = vunpack.c.h.b16 %v1950
    %v2643 = vunpack.c.l.b16 %v1951
    %v2644 = vunpack.c.h.b16 %v1951
    %v2645 = vunpack.c.l.b16 %v1952
    %v2646 = vunpack.c.h.b16 %v1952
    %v2647 = vunpack.c.l.b16 %v1953
    %v2648 = vunpack.c.h.b16 %v1953
    %v2649 = vunpack.c.l.b16 %v1954
    %v2650 = vunpack.c.h.b16 %v1954
    %v2651 = vunpack.c.l.b16 %v1955
    %v2652 = vunpack.c.h.b16 %v1955
    %v2653 = vunpack.c.l.b16 %v1956
    %v2654 = vunpack.c.h.b16 %v1956
    %v2655 = vunpack.c.l.b16 %v1957
    %v2656 = vunpack.c.h.b16 %v1957
    %v2657 = vunpack.c.l.b16 %v1958
    %v2658 = vunpack.c.h.b16 %v1958
    %v2659 = vunpack.c.l.b16 %v1959
    %v2660 = vunpack.c.h.b16 %v1959
    %v2661 = vunpack.c.l.b16 %v1960
    %v2662 = vunpack.c.h.b16 %v1960
    %v2663 = vunpack.c.l.b16 %v1961
    %v2664 = vunpack.c.h.b16 %v1961
    %v2665 = vunpack.c.l.b16 %v1962
    %v2666 = vunpack.c.h.b16 %v1962
    %v2667 = vunpack.c.l.b16 %v1963
    %v2668 = vunpack.c.h.b16 %v1963
    %v2669 = vunpack.c.l.b16 %v1964
    %v2670 = vunpack.c.h.b16 %v1964
    %v2671 = vunpack.c.l.b16 %v1965
    %v2672 = vunpack.c.h.b16 %v1965
    %v2673 = vunpack.c.l.b16 %v1966
    %v2674 = vunpack.c.h.b16 %v1966
    %v2675 = vunpack.c.l.b16 %v1967
    %v2676 = vunpack.c.h.b16 %v1967
    %v2677 = vunpack.c.l.b16 %v1968
    %v2678 = vunpack.c.h.b16 %v1968
    %v2679 = vunpack.c.l.b16 %v1969
    %v2680 = vunpack.c.h.b16 %v1969
    %v2681 = vunpack.c.l.b16 %v1970
    %v2682 = vunpack.c.h.b16 %v1970
    %v2683 = vunpack.c.l.b16 %v1971
    %v2684 = vunpack.c.h.b16 %v1971
    %v2685 = vunpack.c.l.b16 %v1972
    %v2686 = vunpack.c.h.b16 %v1972
    %v2687 = vunpack.c.l.b16 %v1973
    %v2688 = vunpack.c.h.b16 %v1973
    %v2689 = vunpack.c.l.b16 %v1974
    %v2690 = vunpack.c.h.b16 %v1974
    %v2691 = vunpack.c.l.b16 %v1975
    %v2692 = vunpack.c.h.b16 %v1975
    %v2693 = vunpack.c.l.b16 %v1976
    %v2694 = vunpack.c.h.b16 %v1976
    %v2695 = vunpack.c.l.b16 %v1977
    %v2696 = vunpack.c.h.b16 %v1977
    %v2697 = vunpack.c.l.b16 %v1978
    %v2698 = vunpack.c.h.b16 %v1978
    %v2699 = vunpack.c.l.b16 %v1979
    %v2700 = vunpack.c.h.b16 %v1979
    %v2701 = vunpack.c.l.b16 %v1980
    %v2702 = vunpack.c.h.b16 %v1980
    %v2703 = vunpack.c.l.b16 %v1981
    %v2704 = vunpack.c.h.b16 %v1981
    %v2705 = vunpack.c.l.b16 %v1982
    %v2706 = vunpack.c.h.b16 %v1982
    %v2707 = vunpack.c.l.b16 %v1983
    %v2708 = vunpack.c.h.b16 %v1983
    %v2709 = vunpack.c.l.b16 %v1984
    %v2710 = vunpack.c.h.b16 %v1984
    %v2711 = vunpack.c.l.b16 %v1985
    %v2712 = vunpack.c.h.b16 %v1985
    %v2713 = vunpack.c.l.b16 %v1986
    %v2714 = vunpack.c.h.b16 %v1986
    %v2715 = vunpack.c.l.b16 %v1987
    %v2716 = vunpack.c.h.b16 %v1987
    %v2717 = vunpack.c.l.b16 %v1988
    %v2718 = vunpack.c.h.b16 %v1988
    %v2719 = vunpack.c.l.b16 %v1989
    %v2720 = vunpack.c.h.b16 %v1989
    %v2721 = vunpack.c.l.b16 %v1990
    %v2722 = vunpack.c.h.b16 %v1990
    %v2723 = vunpack.c.l.b16 %v1991
    %v2724 = vunpack.c.h.b16 %v1991
    %v2725 = vunpack.c.l.b16 %v1992
    %v2726 = vunpack.c.h.b16 %v1992
    %v2727 = vunpack.c.l.b16 %v1993
    %v2728 = vunpack.c.h.b16 %v1993
    %v2729 = vunpack.c.l.b16 %v1994
    %v2730 = vunpack.c.h.b16 %v1994
    %v2731 = vunpack.c.l.b16 %v1995
    %v2732 = vunpack.c.h.b16 %v1995
    %v2733 = vunpack.c.l.b16 %v1996
    %v2734 = vunpack.c.h.b16 %v1996
    %v2735 = vunpack.c.l.b16 %v1997
    %v2736 = vunpack.c.h.b16 %v1997
    %v2737 = vunpack.c.l.b16 %v1998
    %v2738 = vunpack.c.h.b16 %v1998
    %v2739 = vunpack.c.l.b16 %v1999
    %v2740 = vunpack.c.h.b16 %v1999
    %v2741 = vunpack.c.l.b16 %v2000
    %v2742 = vunpack.c.h.b16 %v2000
    %v2743 = vunpack.c.l.b16 %v2001
    %v2744 = vunpack.c.h.b16 %v2001
    %v2745 = vunpack.c.l.b16 %v2002
    %v2746 = vunpack.c.h.b16 %v2002
    %v2747 = vunpack.c.l.b16 %v2003
    %v2748 = vunpack.c.h.b16 %v2003
    %v2749 = vunpack.c.l.b16 %v2004
    %v2750 = vunpack.c.h.b16 %v2004
    %v2751 = vunpack.c.l.b16 %v2005
    %v2752 = vunpack.c.h.b16 %v2005
    %v2753 = vunpack.c.l.b16 %v2006
    %v2754 = vunpack.c.h.b16 %v2006
    %v2755 = vunpack.c.l.b16 %v2007
    %v2756 = vunpack.c.h.b16 %v2007
    %v2757 = vunpack.c.l.b16 %v2008
    %v2758 = vunpack.c.h.b16 %v2008
    %v2759 = vunpack.c.l.b16 %v2009
    %v2760 = vunpack.c.h.b16 %v2009
    %v2761 = vunpack.c.l.b16 %v2010
    %v2762 = vunpack.c.h.b16 %v2010
    %v2763 = vunpack.c.l.b16 %v2011
    %v2764 = vunpack.c.h.b16 %v2011
    %v2765 = vunpack.c.l.b16 %v2012
    %v2766 = vunpack.c.h.b16 %v2012
    %v2767 = vunpack.c.l.b16 %v2013
    %v2768 = vunpack.c.h.b16 %v2013
    %v2769 = vunpack.c.l.b16 %v2014
    %v2770 = vunpack.c.h.b16 %v2014
    %v2771 = vunpack.c.l.b16 %v2015
    %v2772 = vunpack.c.h.b16 %v2015
    %v2773 = vunpack.c.l.b16 %v2016
    %v2774 = vunpack.c.h.b16 %v2016
    %v2775 = vunpack.c.l.b16 %v2017
    %v2776 = vunpack.c.h.b16 %v2017
    %v2777 = vunpack.c.l.b16 %v2018
    %v2778 = vunpack.c.h.b16 %v2018
    %v2779 = vunpack.c.l.b16 %v2019
    %v2780 = vunpack.c.h.b16 %v2019
    %v2781 = vunpack.c.l.b16 %v2020
    %v2782 = vunpack.c.h.b16 %v2020
    %v2783 = vunpack.c.l.b16 %v2021
    %v2784 = vunpack.c.h.b16 %v2021
    %v2785 = vunpack.c.l.b16 %v2022
    %v2786 = vunpack.c.h.b16 %v2022
    %v2787 = vunpack.c.l.b16 %v2023
    %v2788 = vunpack.c.h.b16 %v2023
    %v2789 = vunpack.c.l.b16 %v2024
    %v2790 = vunpack.c.h.b16 %v2024
    %v2791 = vunpack.c.l.b16 %v2025
    %v2792 = vunpack.c.h.b16 %v2025
    %v2793 = vunpack.c.l.b16 %v2026
    %v2794 = vunpack.c.h.b16 %v2026
    %v2795 = vunpack.c.l.b16 %v2027
    %v2796 = vunpack.c.h.b16 %v2027
    %v2797 = vunpack.c.l.b16 %v2028
    %v2798 = vunpack.c.h.b16 %v2028
    %v2799 = vunpack.c.l.b16 %v2029
    %v2800 = vunpack.c.h.b16 %v2029
    %v2801 = vunpack.c.l.b16 %v2030
    %v2802 = vunpack.c.h.b16 %v2030
    %v2803 = vunpack.c.l.b16 %v2031
    %v2804 = vunpack.c.h.b16 %v2031
    %v2805 = vunpack.c.l.b16 %v2032
    %v2806 = vunpack.c.h.b16 %v2032
    %v2807 = vunpack.c.l.b16 %v2033
    %v2808 = vunpack.c.h.b16 %v2033
    %v2809 = vunpack.c.l.b16 %v2034
    %v2810 = vunpack.c.h.b16 %v2034
    %v2811 = vunpack.c.l.b16 %v2035
    %v2812 = vunpack.c.h.b16 %v2035
    %v2813 = vunpack.c.l.b16 %v2036
    %v2814 = vunpack.c.h.b16 %v2036
    %v2815 = vunpack.c.l.b16 %v2037
    %v2816 = vunpack.c.h.b16 %v2037
    %v2817 = vunpack.c.l.b16 %v2038
    %v2818 = vunpack.c.h.b16 %v2038
    %v2819 = vunpack.c.l.b16 %v2039
    %v2820 = vunpack.c.h.b16 %v2039
    %v2821 = vunpack.c.l.b16 %v2040
    %v2822 = vunpack.c.h.b16 %v2040
    %v2823 = vunpack.c.l.b16 %v2041
    %v2824 = vunpack.c.h.b16 %v2041
    %v2825 = vunpack.c.l.b16 %v2042
    %v2826 = vunpack.c.h.b16 %v2042
    %v2827 = vunpack.c.l.b16 %v2043
    %v2828 = vunpack.c.h.b16 %v2043
    %v2829 = vunpack.c.l.b16 %v2044
    %v2830 = vunpack.c.h.b16 %v2044
    %v2831 = vunpack.c.l.b16 %v2045
    %v2832 = vunpack.c.h.b16 %v2045
    %v2833 = vunpack.c.l.b16 %v2046
    %v2834 = vunpack.c.h.b16 %v2046
    %v2835 = vunpack.c.l.b16 %v2047
    %v2836 = vunpack.c.h.b16 %v2047
    %v2837 = vunpack.c.l.b16 %v2048
    %v2838 = vunpack.c.h.b16 %v2048
    %v2839 = vunpack.c.l.b16 %v2049
    %v2840 = vunpack.c.h.b16 %v2049
    %v2841 = vunpack.c.l.b16 %v2050
    %v2842 = vunpack.c.h.b16 %v2050
    %v2843 = vunpack.c.l.b16 %v2051
    %v2844 = vunpack.c.h.b16 %v2051
    %v2845 = vunpack.c.l.b16 %v2052
    %v2846 = vunpack.c.h.b16 %v2052
    %v2847 = vunpack.c.l.b16 %v2053
    %v2848 = vunpack.c.h.b16 %v2053
    %v2849 = vunpack.c.l.b16 %v2054
    %v2850 = vunpack.c.h.b16 %v2054
    %v2851 = vunpack.c.l.b16 %v2055
    %v2852 = vunpack.c.h.b16 %v2055
    %v2853 = vunpack.c.l.b16 %v2056
    %v2854 = vunpack.c.h.b16 %v2056
    %v2855 = vunpack.c.l.b16 %v2057
    %v2856 = vunpack.c.h.b16 %v2057
    %v2857 = vunpack.c.l.b16 %v2058
    %v2858 = vunpack.c.h.b16 %v2058
    %v2859 = vunpack.c.l.b16 %v2059
    %v2860 = vunpack.c.h.b16 %v2059
    %v2861 = vunpack.c.l.b16 %v2060
    %v2862 = vunpack.c.h.b16 %v2060
    %v2863 = vunpack.c.l.b16 %v2061
    %v2864 = vunpack.c.h.b16 %v2061
    %v2865 = vunpack.c.l.b16 %v2062
    %v2866 = vunpack.c.h.b16 %v2062
    %v2867 = vunpack.c.l.b16 %v2063
    %v2868 = vunpack.c.h.b16 %v2063
    %v2869 = vunpack.c.l.b16 %v2064
    %v2870 = vunpack.c.h.b16 %v2064
    %v2871 = vunpack.c.l.b16 %v2065
    %v2872 = vunpack.c.h.b16 %v2065
    %v2873 = vunpack.c.l.b16 %v2066
    %v2874 = vunpack.c.h.b16 %v2066
    %v2875 = vunpack.c.l.b16 %v2067
    %v2876 = vunpack.c.h.b16 %v2067
    %v2877 = vunpack.c.l.b16 %v2068
    %v2878 = vunpack.c.h.b16 %v2068
    %v2879 = vunpack.c.l.b16 %v2069
    %v2880 = vunpack.c.h.b16 %v2069
    %v2881 = vunpack.c.l.b16 %v2070
    %v2882 = vunpack.c.h.b16 %v2070
    %v2883 = vunpack.c.l.b16 %v2071
    %v2884 = vunpack.c.h.b16 %v2071
    %v2885 = vunpack.c.l.b16 %v2072
    %v2886 = vunpack.c.h.b16 %v2072
    %v2887 = vunpack.c.l.b16 %v2073
    %v2888 = vunpack.c.h.b16 %v2073
    %v2889 = vunpack.c.l.b16 %v2074
    %v2890 = vunpack.c.h.b16 %v2074
    %v2891 = vunpack.c.l.b16 %v2075
    %v2892 = vunpack.c.h.b16 %v2075
    %v2893 = vunpack.c.l.b16 %v2076
    %v2894 = vunpack.c.h.b16 %v2076
    %v2895 = vunpack.c.l.b16 %v2077
    %v2896 = vunpack.c.h.b16 %v2077
    %v2897 = vunpack.c.l.b16 %v2078
    %v2898 = vunpack.c.h.b16 %v2078
    %v2899 = vunpack.c.l.b16 %v2079
    %v2900 = vunpack.c.h.b16 %v2079
    %v2901 = vunpack.c.l.b16 %v2080
    %v2902 = vunpack.c.h.b16 %v2080
    %v2903 = vunpack.c.l.b16 %v2081
    %v2904 = vunpack.c.h.b16 %v2081
    %v2905 = vunpack.c.l.b16 %v2082
    %v2906 = vunpack.c.h.b16 %v2082
    %v2907 = vunpack.c.l.b16 %v2083
    %v2908 = vunpack.c.h.b16 %v2083
    %v2909 = vunpack.c.l.b16 %v2084
    %v2910 = vunpack.c.h.b16 %v2084
    %v2911 = vunpack.c.l.b16 %v2085
    %v2912 = vunpack.c.h.b16 %v2085
    %v2913 = vunpack.c.l.b16 %v2086
    %v2914 = vunpack.c.h.b16 %v2086
    %v2915 = vunpack.c.l.b16 %v2087
    %v2916 = vunpack.c.h.b16 %v2087
    %v2917 = vunpack.c.l.b16 %v2088
    %v2918 = vunpack.c.h.b16 %v2088
    %v2919 = vunpack.c.l.b16 %v2089
    %v2920 = vunpack.c.h.b16 %v2089
    %v2921 = vunpack.c.l.b16 %v2090
    %v2922 = vunpack.c.h.b16 %v2090
    %v2923 = vunpack.c.l.b16 %v2091
    %v2924 = vunpack.c.h.b16 %v2091
    %v2925 = vunpack.c.l.b16 %v2092
    %v2926 = vunpack.c.h.b16 %v2092
    %v2927 = vunpack.c.l.b16 %v2093
    %v2928 = vunpack.c.h.b16 %v2093
    %v2929 = vunpack.c.l.b16 %v2094
    %v2930 = vunpack.c.h.b16 %v2094
    %v2931 = vpack.c.b16 %v2421, %v2419
    %v2932 = vpack.c.b16 %v2422, %v2420
    %v2933 = vpack.c.b16 %v2425, %v2423
    %v2934 = vpack.c.b16 %v2426, %v2424
    %v2935 = vpack.c.b16 %v2429, %v2427
    %v2936 = vpack.c.b16 %v2430, %v2428
    %v2937 = vpack.c.b16 %v2433, %v2431
    %v2938 = vpack.c.b16 %v2434, %v2432
    %v2939 = vpack.c.b16 %v2437, %v2435
    %v2940 = vpack.c.b16 %v2438, %v2436
    %v2941 = vpack.c.b16 %v2441, %v2439
    %v2942 = vpack.c.b16 %v2442, %v2440
    %v2943 = vpack.c.b16 %v2445, %v2443
    %v2944 = vpack.c.b16 %v2446, %v2444
    %v2945 = vpack.c.b16 %v2449, %v2447
    %v2946 = vpack.c.b16 %v2450, %v2448
    %v2947 = vpack.c.b16 %v2453, %v2451
    %v2948 = vpack.c.b16 %v2454, %v2452
    %v2949 = vpack.c.b16 %v2457, %v2455
    %v2950 = vpack.c.b16 %v2458, %v2456
    %v2951 = vpack.c.b16 %v2461, %v2459
    %v2952 = vpack.c.b16 %v2462, %v2460
    %v2953 = vpack.c.b16 %v2465, %v2463
    %v2954 = vpack.c.b16 %v2466, %v2464
    %v2955 = vpack.c.b16 %v2469, %v2467
    %v2956 = vpack.c.b16 %v2470, %v2468
    %v2957 = vpack.c.b16 %v2473, %v2471
    %v2958 = vpack.c.b16 %v2474, %v2472
    %v2959 = vpack.c.b16 %v2477, %v2475
    %v2960 = vpack.c.b16 %v2478, %v2476
    %v2961 = vpack.c.b16 %v2481, %v2479
    %v2962 = vpack.c.b16 %v2482, %v2480
    %v2963 = vpack.c.b16 %v2485, %v2483
    %v2964 = vpack.c.b16 %v2486, %v2484
    %v2965 = vpack.c.b16 %v2489, %v2487
    %v2966 = vpack.c.b16 %v2490, %v2488
    %v2967 = vpack.c.b16 %v2493, %v2491
    %v2968 = vpack.c.b16 %v2494, %v2492
    %v2969 = vpack.c.b16 %v2497, %v2495
    %v2970 = vpack.c.b16 %v2498, %v2496
    %v2971 = vpack.c.b16 %v2501, %v2499
    %v2972 = vpack.c.b16 %v2502, %v2500
    %v2973 = vpack.c.b16 %v2505, %v2503
    %v2974 = vpack.c.b16 %v2506, %v2504
    %v2975 = vpack.c.b16 %v2509, %v2507
    %v2976 = vpack.c.b16 %v2510, %v2508
    %v2977 = vpack.c.b16 %v2513, %v2511
    %v2978 = vpack.c.b16 %v2514, %v2512
    %v2979 = vpack.c.b16 %v2517, %v2515
    %v2980 = vpack.c.b16 %v2518, %v2516
    %v2981 = vpack.c.b16 %v2521, %v2519
    %v2982 = vpack.c.b16 %v2522, %v2520
    %v2983 = vpack.c.b16 %v2525, %v2523
    %v2984 = vpack.c.b16 %v2526, %v2524
    %v2985 = vpack.c.b16 %v2529, %v2527
    %v2986 = vpack.c.b16 %v2530, %v2528
    %v2987 = vpack.c.b16 %v2533, %v2531
    %v2988 = vpack.c.b16 %v2534, %v2532
    %v2989 = vpack.c.b16 %v2537, %v2535
    %v2990 = vpack.c.b16 %v2538, %v2536
    %v2991 = vpack.c.b16 %v2541, %v2539
    %v2992 = vpack.c.b16 %v2542, %v2540
    %v2993 = vpack.c.b16 %v2545, %v2543
    %v2994 = vpack.c.b16 %v2546, %v2544
    %v2995 = vpack.c.b16 %v2549, %v2547
    %v2996 = vpack.c.b16 %v2550, %v2548
    %v2997 = vpack.c.b16 %v2553, %v2551
    %v2998 = vpack.c.b16 %v2554, %v2552
    %v2999 = vpack.c.b16 %v2557, %v2555
    %v3000 = vpack.c.b16 %v2558, %v2556
    %v3001 = vpack.c.b16 %v2561, %v2559
    %v3002 = vpack.c.b16 %v2562, %v2560
    %v3003 = vpack.c.b16 %v2565, %v2563
    %v3004 = vpack.c.b16 %v2566, %v2564
    %v3005 = vpack.c.b16 %v2569, %v2567
    %v3006 = vpack.c.b16 %v2570, %v2568
    %v3007 = vpack.c.b16 %v2573, %v2571
    %v3008 = vpack.c.b16 %v2574, %v2572
    %v3009 = vpack.c.b16 %v2577, %v2575
    %v3010 = vpack.c.b16 %v2578, %v2576
    %v3011 = vpack.c.b16 %v2581, %v2579
    %v3012 = vpack.c.b16 %v2582, %v2580
    %v3013 = vpack.c.b16 %v2585, %v2583
    %v3014 = vpack.c.b16 %v2586, %v2584
    %v3015 = vpack.c.b16 %v2589, %v2587
    %v3016 = vpack.c.b16 %v2590, %v2588
    %v3017 = vpack.c.b16 %v2593, %v2591
    %v3018 = vpack.c.b16 %v2594, %v2592
    %v3019 = vpack.c.b16 %v2597, %v2595
    %v3020 = vpack.c.b16 %v2598, %v2596
    %v3021 = vpack.c.b16 %v2601, %v2599
    %v3022 = vpack.c.b16 %v2602, %v2600
    %v3023 = vpack.c.b16 %v2605, %v2603
    %v3024 = vpack.c.b16 %v2606, %v2604
    %v3025 = vpack.c.b16 %v2609, %v2607
    %v3026 = vpack.c.b16 %v2610, %v2608
    %v3027 = vpack.c.b16 %v2613, %v2611
    %v3028 = vpack.c.b16 %v2614, %v2612
    %v3029 = vpack.c.b16 %v2617, %v2615
    %v3030 = vpack.c.b16 %v2618, %v2616
    %v3031 = vpack.c.b16 %v2621, %v2619
    %v3032 = vpack.c.b16 %v2622, %v2620
    %v3033 = vpack.c.b16 %v2625, %v2623
    %v3034 = vpack.c.b16 %v2626, %v2624
    %v3035 = vpack.c.b16 %v2629, %v2627
    %v3036 = vpack.c.b16 %v2630, %v2628
    %v3037 = vpack.c.b16 %v2633, %v2631
    %v3038 = vpack.c.b16 %v2634, %v2632
    %v3039 = vpack.c.b16 %v2637, %v2635
    %v3040 = vpack.c.b16 %v2638, %v2636
    %v3041 = vpack.c.b16 %v2641, %v2639
    %v3042 = vpack.c.b16 %v2642, %v2640
    %v3043 = vpack.c.b16 %v2645, %v2643
    %v3044 = vpack.c.b16 %v2646, %v2644
    %v3045 = vpack.c.b16 %v2649, %v2647
    %v3046 = vpack.c.b16 %v2650, %v2648
    %v3047 = vpack.c.b16 %v2653, %v2651
    %v3048 = vpack.c.b16 %v2654, %v2652
    %v3049 = vpack.c.b16 %v2657, %v2655
    %v3050 = vpack.c.b16 %v2658, %v2656
    %v3051 = vpack.c.b16 %v2661, %v2659
    %v3052 = vpack.c.b16 %v2662, %v2660
    %v3053 = vpack.c.b16 %v2665, %v2663
    %v3054 = vpack.c.b16 %v2666, %v2664
    %v3055 = vpack.c.b16 %v2669, %v2667
    %v3056 = vpack.c.b16 %v2670, %v2668
    %v3057 = vpack.c.b16 %v2673, %v2671
    %v3058 = vpack.c.b16 %v2674, %v2672
    %v3059 = vpack.c.b16 %v2677, %v2675
    %v3060 = vpack.c.b16 %v2678, %v2676
    %v3061 = vpack.c.b16 %v2681, %v2679
    %v3062 = vpack.c.b16 %v2682, %v2680
    %v3063 = vpack.c.b16 %v2685, %v2683
    %v3064 = vpack.c.b16 %v2686, %v2684
    %v3065 = vpack.c.b16 %v2689, %v2687
    %v3066 = vpack.c.b16 %v2690, %v2688
    %v3067 = vpack.c.b16 %v2693, %v2691
    %v3068 = vpack.c.b16 %v2694, %v2692
    %v3069 = vpack.c.b16 %v2697, %v2695
    %v3070 = vpack.c.b16 %v2698, %v2696
    %v3071 = vpack.c.b16 %v2701, %v2699
    %v3072 = vpack.c.b16 %v2702, %v2700
    %v3073 = vpack.c.b16 %v2705, %v2703
    %v3074 = vpack.c.b16 %v2706, %v2704
    %v3075 = vpack.c.b16 %v2709, %v2707
    %v3076 = vpack.c.b16 %v2710, %v2708
    %v3077 = vpack.c.b16 %v2713, %v2711
    %v3078 = vpack.c.b16 %v2714, %v2712
    %v3079 = vpack.c.b16 %v2717, %v2715
    %v3080 = vpack.c.b16 %v2718, %v2716
    %v3081 = vpack.c.b16 %v2721, %v2719
    %v3082 = vpack.c.b16 %v2722, %v2720
    %v3083 = vpack.c.b16 %v2725, %v2723
    %v3084 = vpack.c.b16 %v2726, %v2724
    %v3085 = vpack.c.b16 %v2729, %v2727
    %v3086 = vpack.c.b16 %v2730, %v2728
    %v3087 = vpack.c.b16 %v2733, %v2731
    %v3088 = vpack.c.b16 %v2734, %v2732
    %v3089 = vpack.c.b16 %v2737, %v2735
    %v3090 = vpack.c.b16 %v2738, %v2736
    %v3091 = vpack.c.b16 %v2741, %v2739
    %v3092 = vpack.c.b16 %v2742, %v2740
    %v3093 = vpack.c.b16 %v2745, %v2743
    %v3094 = vpack.c.b16 %v2746, %v2744
    %v3095 = vpack.c.b16 %v2749, %v2747
    %v3096 = vpack.c.b16 %v2750, %v2748
    %v3097 = vpack.c.b16 %v2753, %v2751
    %v3098 = vpack.c.b16 %v2754, %v2752
    %v3099 = vpack.c.b16 %v2757, %v2755
    %v3100 = vpack.c.b16 %v2758, %v2756
    %v3101 = vpack.c.b16 %v2761, %v2759
    %v3102 = vpack.c.b16 %v2762, %v2760
    %v3103 = vpack.c.b16 %v2765, %v2763
    %v3104 = vpack.c.b16 %v2766, %v2764
    %v3105 = vpack.c.b16 %v2769, %v2767
    %v3106 = vpack.c.b16 %v2770, %v2768
    %v3107 = vpack.c.b16 %v2773, %v2771
    %v3108 = vpack.c.b16 %v2774, %v2772
    %v3109 = vpack.c.b16 %v2777, %v2775
    %v3110 = vpack.c.b16 %v2778, %v2776
    %v3111 = vpack.c.b16 %v2781, %v2779
    %v3112 = vpack.c.b16 %v2782, %v2780
    %v3113 = vpack.c.b16 %v2785, %v2783
    %v3114 = vpack.c.b16 %v2786, %v2784
    %v3115 = vpack.c.b16 %v2789, %v2787
    %v3116 = vpack.c.b16 %v2790, %v2788
    %v3117 = vpack.c.b16 %v2793, %v2791
    %v3118 = vpack.c.b16 %v2794, %v2792
    %v3119 = vpack.c.b16 %v2797, %v2795
    %v3120 = vpack.c.b16 %v2798, %v2796
    %v3121 = vpack.c.b16 %v2801, %v2799
    %v3122 = vpack.c.b16 %v2802, %v2800
    %v3123 = vpack.c.b16 %v2805, %v2803
    %v3124 = vpack.c.b16 %v2806, %v2804
    %v3125 = vpack.c.b16 %v2809, %v2807
    %v3126 = vpack.c.b16 %v2810, %v2808
    %v3127 = vpack.c.b16 %v2813, %v2811
    %v3128 = vpack.c.b16 %v2814, %v2812
    %v3129 = vpack.c.b16 %v2817, %v2815
    %v3130 = vpack.c.b16 %v2818, %v2816
    %v3131 = vpack.c.b16 %v2821, %v2819
    %v3132 = vpack.c.b16 %v2822, %v2820
    %v3133 = vpack.c.b16 %v2825, %v2823
    %v3134 = vpack.c.b16 %v2826, %v2824
    %v3135 = vpack.c.b16 %v2829, %v2827
    %v3136 = vpack.c.b16 %v2830, %v2828
    %v3137 = vpack.c.b16 %v2833, %v2831
    %v3138 = vpack.c.b16 %v2834, %v2832
    %v3139 = vpack.c.b16 %v2837, %v2835
    %v3140 = vpack.c.b16 %v2838, %v2836
    %v3141 = vpack.c.b16 %v2841, %v2839
    %v3142 = vpack.c.b16 %v2842, %v2840
    %v3143 = vpack.c.b16 %v2845, %v2843
    %v3144 = vpack.c.b16 %v2846, %v2844
    %v3145 = vpack.c.b16 %v2849, %v2847
    %v3146 = vpack.c.b16 %v2850, %v2848
    %v3147 = vpack.c.b16 %v2853, %v2851
    %v3148 = vpack.c.b16 %v2854, %v2852
    %v3149 = vpack.c.b16 %v2857, %v2855
    %v3150 = vpack.c.b16 %v2858, %v2856
    %v3151 = vpack.c.b16 %v2861, %v2859
    %v3152 = vpack.c.b16 %v2862, %v2860
    %v3153 = vpack.c.b16 %v2865, %v2863
    %v3154 = vpack.c.b16 %v2866, %v2864
    %v3155 = vpack.c.b16 %v2869, %v2867
    %v3156 = vpack.c.b16 %v2870, %v2868
    %v3157 = vpack.c.b16 %v2873, %v2871
    %v3158 = vpack.c.b16 %v2874, %v2872
    %v3159 = vpack.c.b16 %v2877, %v2875
    %v3160 = vpack.c.b16 %v2878, %v2876
    %v3161 = vpack.c.b16 %v2881, %v2879
    %v3162 = vpack.c.b16 %v2882, %v2880
    %v3163 = vpack.c.b16 %v2885, %v2883
    %v3164 = vpack.c.b16 %v2886, %v2884
    %v3165 = vpack.c.b16 %v2889, %v2887
    %v3166 = vpack.c.b16 %v2890, %v2888
    %v3167 = vpack.c.b16 %v2893, %v2891
    %v3168 = vpack.c.b16 %v2894, %v2892
    %v3169 = vpack.c.b16 %v2897, %v2895
    %v3170 = vpack.c.b16 %v2898, %v2896
    %v3171 = vpack.c.b16 %v2901, %v2899
    %v3172 = vpack.c.b16 %v2902, %v2900
    %v3173 = vpack.c.b16 %v2905, %v2903
    %v3174 = vpack.c.b16 %v2906, %v2904
    %v3175 = vpack.c.b16 %v2909, %v2907
    %v3176 = vpack.c.b16 %v2910, %v2908
    %v3177 = vpack.c.b16 %v2913, %v2911
    %v3178 = vpack.c.b16 %v2914, %v2912
    %v3179 = vpack.c.b16 %v2917, %v2915
    %v3180 = vpack.c.b16 %v2918, %v2916
    %v3181 = vpack.c.b16 %v2921, %v2919
    %v3182 = vpack.c.b16 %v2922, %v2920
    %v3183 = vpack.c.b16 %v2925, %v2923
    %v3184 = vpack.c.b16 %v2926, %v2924
    %v3185 = vpack.c.b16 %v2929, %v2927
    %v3186 = vpack.c.b16 %v2930, %v2928
    %3443 = vmatprep.subr.bf16.mxu0 %v2932
    %3444 = vmatpush1.bf16.msra.mxu0 %v2931
    %3445 = vmatprep.subr.bf16.mxu0 %v2934
    %3446 = vmatpush1.bf16.msra.mxu0 %v2933
    %3447 = vmatprep.subr.bf16.mxu0 %v2936
    %3448 = vmatpush1.bf16.msra.mxu0 %v2935
    %3449 = vmatprep.subr.bf16.mxu0 %v2938
    %3450 = vmatpush1.bf16.msra.mxu0 %v2937
    %3451 = vmatprep.subr.bf16.mxu0 %v2940
    %3452 = vmatpush1.bf16.msra.mxu0 %v2939
    %3453 = vmatprep.subr.bf16.mxu0 %v2942
    %3454 = vmatpush1.bf16.msra.mxu0 %v2941
    %3455 = vmatprep.subr.bf16.mxu0 %v2944
    %3456 = vmatpush1.bf16.msra.mxu0 %v2943
    %3457 = vmatprep.subr.bf16.mxu0 %v2946
    %3458 = vmatpush1.bf16.msra.mxu0 %v2945
    %3459 = vmatprep.subr.bf16.mxu0 %v2948
    %3460 = vmatpush1.bf16.msra.mxu0 %v2947
    %3461 = vmatprep.subr.bf16.mxu0 %v2950
    %3462 = vmatpush1.bf16.msra.mxu0 %v2949
    %3463 = vmatprep.subr.bf16.mxu0 %v2952
    %3464 = vmatpush1.bf16.msra.mxu0 %v2951
    %3465 = vmatprep.subr.bf16.mxu0 %v2954
    %3466 = vmatpush1.bf16.msra.mxu0 %v2953
    %3467 = vmatprep.subr.bf16.mxu0 %v2956
    %3468 = vmatpush1.bf16.msra.mxu0 %v2955
    %3469 = vmatprep.subr.bf16.mxu0 %v2958
    %3470 = vmatpush1.bf16.msra.mxu0 %v2957
    %3471 = vmatprep.subr.bf16.mxu0 %v2960
    %3472 = vmatpush1.bf16.msra.mxu0 %v2959
    %3473 = vmatprep.subr.bf16.mxu0 %v2962
    %3474 = vmatpush1.bf16.msra.mxu0 %v2961
    %3475 = vmatprep.mubr.bf16.mxu0 %v2132
    %3476 = vmatmul.mubr.bf16.gmra.mrb[0].mxu0 %v2131
    %v3477 = vpop.f32.mrb[0].mxu0
    %v3478 = vadd.f32 %v2100, %v3477
    %v3479 = vpop.f32.mrb[0].mxu0
    %v3480 = vadd.f32 %v2104, %v3479
    %v3481 = vpop.f32.mrb[0].mxu0
    %v3482 = vpop.f32.mrb[0].mxu0
    %3483 = vdwg.mxu0
    %3484 = vmatprep.subr.bf16.mxu0 %v2964
    %3485 = vmatpush1.bf16.msra.mxu0 %v2963
    %3486 = vmatprep.subr.bf16.mxu0 %v2966
    %3487 = vmatpush1.bf16.msra.mxu0 %v2965
    %3488 = vmatprep.subr.bf16.mxu0 %v2968
    %3489 = vmatpush1.bf16.msra.mxu0 %v2967
    %3490 = vmatprep.subr.bf16.mxu0 %v2970
    %3491 = vmatpush1.bf16.msra.mxu0 %v2969
    %3492 = vmatprep.subr.bf16.mxu0 %v2972
    %3493 = vmatpush1.bf16.msra.mxu0 %v2971
    %3494 = vmatprep.subr.bf16.mxu0 %v2974
    %3495 = vmatpush1.bf16.msra.mxu0 %v2973
    %3496 = vmatprep.subr.bf16.mxu0 %v2976
    %3497 = vmatpush1.bf16.msra.mxu0 %v2975
    %3498 = vmatprep.subr.bf16.mxu0 %v2978
    %3499 = vmatpush1.bf16.msra.mxu0 %v2977
    %3500 = vmatprep.subr.bf16.mxu0 %v2980
    %3501 = vmatpush1.bf16.msra.mxu0 %v2979
    %3502 = vmatprep.subr.bf16.mxu0 %v2982
    %3503 = vmatpush1.bf16.msra.mxu0 %v2981
    %3504 = vmatprep.subr.bf16.mxu0 %v2984
    %3505 = vmatpush1.bf16.msra.mxu0 %v2983
    %3506 = vmatprep.subr.bf16.mxu0 %v2986
    %3507 = vmatpush1.bf16.msra.mxu0 %v2985
    %3508 = vmatprep.subr.bf16.mxu0 %v2988
    %3509 = vmatpush1.bf16.msra.mxu0 %v2987
    %3510 = vmatprep.subr.bf16.mxu0 %v2990
    %3511 = vmatpush1.bf16.msra.mxu0 %v2989
    %3512 = vmatprep.subr.bf16.mxu0 %v2992
    %3513 = vmatpush1.bf16.msra.mxu0 %v2991
    %3514 = vmatprep.subr.bf16.mxu0 %v2994
    %3515 = vmatpush1.bf16.msra.mxu0 %v2993
    %3516 = vmatprep.mubr.bf16.mxu0 %v2134
    %3517 = vmatmul.mubr.bf16.gmra.mrb[0].mxu0 %v2133
    %v3518 = vpop.f32.mrb[0].mxu0
    %v3519 = vadd.f32 %v3478, %v3518
    %v3520 = vpop.f32.mrb[0].mxu0
    %v3521 = vadd.f32 %v3480, %v3520
    %v3522 = vpop.f32.mrb[0].mxu0
    %v3523 = vpop.f32.mrb[0].mxu0
    %3524 = vdwg.mxu0
    %3525 = vmatprep.subr.bf16.mxu0 %v2996
    %3526 = vmatpush1.bf16.msra.mxu0 %v2995
    %3527 = vmatprep.subr.bf16.mxu0 %v2998
    %3528 = vmatpush1.bf16.msra.mxu0 %v2997
    %3529 = vmatprep.subr.bf16.mxu0 %v3000
    %3530 = vmatpush1.bf16.msra.mxu0 %v2999
    %3531 = vmatprep.subr.bf16.mxu0 %v3002
    %3532 = vmatpush1.bf16.msra.mxu0 %v3001
    %3533 = vmatprep.subr.bf16.mxu0 %v3004
    %3534 = vmatpush1.bf16.msra.mxu0 %v3003
    %3535 = vmatprep.subr.bf16.mxu0 %v3006
    %3536 = vmatpush1.bf16.msra.mxu0 %v3005
    %3537 = vmatprep.subr.bf16.mxu0 %v3008
    %3538 = vmatpush1.bf16.msra.mxu0 %v3007
    %3539 = vmatprep.subr.bf16.mxu0 %v3010
    %3540 = vmatpush1.bf16.msra.mxu0 %v3009
    %3541 = vmatprep.subr.bf16.mxu0 %v3012
    %3542 = vmatpush1.bf16.msra.mxu0 %v3011
    %3543 = vmatprep.subr.bf16.mxu0 %v3014
    %3544 = vmatpush1.bf16.msra.mxu0 %v3013
    %3545 = vmatprep.subr.bf16.mxu0 %v3016
    %3546 = vmatpush1.bf16.msra.mxu0 %v3015
    %3547 = vmatprep.subr.bf16.mxu0 %v3018
    %3548 = vmatpush1.bf16.msra.mxu0 %v3017
    %3549 = vmatprep.subr.bf16.mxu0 %v3020
    %3550 = vmatpush1.bf16.msra.mxu0 %v3019
    %3551 = vmatprep.subr.bf16.mxu0 %v3022
    %3552 = vmatpush1.bf16.msra.mxu0 %v3021
    %3553 = vmatprep.subr.bf16.mxu0 %v3024
    %3554 = vmatpush1.bf16.msra.mxu0 %v3023
    %3555 = vmatprep.subr.bf16.mxu0 %v3026
    %3556 = vmatpush1.bf16.msra.mxu0 %v3025
    %3557 = vmatprep.mubr.bf16.mxu0 %v2136
    %3558 = vmatmul.mubr.bf16.gmra.mrb[0].mxu0 %v2135
    %v3559 = vpop.f32.mrb[0].mxu0
    %v3560 = vadd.f32 %v3519, %v3559
    %v3561 = vpop.f32.mrb[0].mxu0
    %v3562 = vadd.f32 %v3521, %v3561
    %v3563 = vpop.f32.mrb[0].mxu0
    %v3564 = vpop.f32.mrb[0].mxu0
    %3565 = vdwg.mxu0
    %3566 = vmatprep.subr.bf16.mxu0 %v3028
    %3567 = vmatpush1.bf16.msra.mxu0 %v3027
    %3568 = vmatprep.subr.bf16.mxu0 %v3030
    %3569 = vmatpush1.bf16.msra.mxu0 %v3029
    %3570 = vmatprep.subr.bf16.mxu0 %v3032
    %3571 = vmatpush1.bf16.msra.mxu0 %v3031
    %3572 = vmatprep.subr.bf16.mxu0 %v3034
    %3573 = vmatpush1.bf16.msra.mxu0 %v3033
    %3574 = vmatprep.subr.bf16.mxu0 %v3036
    %3575 = vmatpush1.bf16.msra.mxu0 %v3035
    %3576 = vmatprep.subr.bf16.mxu0 %v3038
    %3577 = vmatpush1.bf16.msra.mxu0 %v3037
    %3578 = vmatprep.subr.bf16.mxu0 %v3040
    %3579 = vmatpush1.bf16.msra.mxu0 %v3039
    %3580 = vmatprep.subr.bf16.mxu0 %v3042
    %3581 = vmatpush1.bf16.msra.mxu0 %v3041
    %3582 = vmatprep.subr.bf16.mxu0 %v3044
    %3583 = vmatpush1.bf16.msra.mxu0 %v3043
    %3584 = vmatprep.subr.bf16.mxu0 %v3046
    %3585 = vmatpush1.bf16.msra.mxu0 %v3045
    %3586 = vmatprep.subr.bf16.mxu0 %v3048
    %3587 = vmatpush1.bf16.msra.mxu0 %v3047
    %3588 = vmatprep.subr.bf16.mxu0 %v3050
    %3589 = vmatpush1.bf16.msra.mxu0 %v3049
    %3590 = vmatprep.subr.bf16.mxu0 %v3052
    %3591 = vmatpush1.bf16.msra.mxu0 %v3051
    %3592 = vmatprep.subr.bf16.mxu0 %v3054
    %3593 = vmatpush1.bf16.msra.mxu0 %v3053
    %3594 = vmatprep.subr.bf16.mxu0 %v3056
    %3595 = vmatpush1.bf16.msra.mxu0 %v3055
    %3596 = vmatprep.subr.bf16.mxu0 %v3058
    %3597 = vmatpush1.bf16.msra.mxu0 %v3057
    %3598 = vmatprep.mubr.bf16.mxu0 %v2138
    %3599 = vmatmul.mubr.bf16.gmra.mrb[0].mxu0 %v2137
    %v3600 = vpop.f32.mrb[0].mxu0
    %v3601 = vadd.f32 %v3560, %v3600
    %v3602 = vpop.f32.mrb[0].mxu0
    %v3603 = vadd.f32 %v3562, %v3602
    %v3604 = vpop.f32.mrb[0].mxu0
    %v3605 = vpop.f32.mrb[0].mxu0
    %3606 = vdwg.mxu0
    %3607 = vmatprep.subr.bf16.mxu0 %v3060
    %3608 = vmatpush1.bf16.msra.mxu0 %v3059
    %3609 = vmatprep.subr.bf16.mxu0 %v3062
    %3610 = vmatpush1.bf16.msra.mxu0 %v3061
    %3611 = vmatprep.subr.bf16.mxu0 %v3064
    %3612 = vmatpush1.bf16.msra.mxu0 %v3063
    %3613 = vmatprep.subr.bf16.mxu0 %v3066
    %3614 = vmatpush1.bf16.msra.mxu0 %v3065
    %3615 = vmatprep.subr.bf16.mxu0 %v3068
    %3616 = vmatpush1.bf16.msra.mxu0 %v3067
    %3617 = vmatprep.subr.bf16.mxu0 %v3070
    %3618 = vmatpush1.bf16.msra.mxu0 %v3069
    %3619 = vmatprep.subr.bf16.mxu0 %v3072
    %3620 = vmatpush1.bf16.msra.mxu0 %v3071
    %3621 = vmatprep.subr.bf16.mxu0 %v3074
    %3622 = vmatpush1.bf16.msra.mxu0 %v3073
    %3623 = vmatprep.subr.bf16.mxu0 %v3076
    %3624 = vmatpush1.bf16.msra.mxu0 %v3075
    %3625 = vmatprep.subr.bf16.mxu0 %v3078
    %3626 = vmatpush1.bf16.msra.mxu0 %v3077
    %3627 = vmatprep.subr.bf16.mxu0 %v3080
    %3628 = vmatpush1.bf16.msra.mxu0 %v3079
    %3629 = vmatprep.subr.bf16.mxu0 %v3082
    %3630 = vmatpush1.bf16.msra.mxu0 %v3081
    %3631 = vmatprep.subr.bf16.mxu0 %v3084
    %3632 = vmatpush1.bf16.msra.mxu0 %v3083
    %3633 = vmatprep.subr.bf16.mxu0 %v3086
    %3634 = vmatpush1.bf16.msra.mxu0 %v3085
    %3635 = vmatprep.subr.bf16.mxu0 %v3088
    %3636 = vmatpush1.bf16.msra.mxu0 %v3087
    %3637 = vmatprep.subr.bf16.mxu0 %v3090
    %3638 = vmatpush1.bf16.msra.mxu0 %v3089
    %3639 = vmatprep.mubr.bf16.mxu0 %v2140
    %3640 = vmatmul.mubr.bf16.gmra.mrb[0].mxu0 %v2139
    %v3641 = vpop.f32.mrb[0].mxu0
    %v3642 = vadd.f32 %v3601, %v3641
    %v3643 = vpop.f32.mrb[0].mxu0
    %v3644 = vadd.f32 %v3603, %v3643
    %v3645 = vpop.f32.mrb[0].mxu0
    %v3646 = vpop.f32.mrb[0].mxu0
    %3647 = vdwg.mxu0
    %3648 = vmatprep.subr.bf16.mxu0 %v3092
    %3649 = vmatpush1.bf16.msra.mxu0 %v3091
    %3650 = vmatprep.subr.bf16.mxu0 %v3094
    %3651 = vmatpush1.bf16.msra.mxu0 %v3093
    %3652 = vmatprep.subr.bf16.mxu0 %v3096
    %3653 = vmatpush1.bf16.msra.mxu0 %v3095
    %3654 = vmatprep.subr.bf16.mxu0 %v3098
    %3655 = vmatpush1.bf16.msra.mxu0 %v3097
    %3656 = vmatprep.subr.bf16.mxu0 %v3100
    %3657 = vmatpush1.bf16.msra.mxu0 %v3099
    %3658 = vmatprep.subr.bf16.mxu0 %v3102
    %3659 = vmatpush1.bf16.msra.mxu0 %v3101
    %3660 = vmatprep.subr.bf16.mxu0 %v3104
    %3661 = vmatpush1.bf16.msra.mxu0 %v3103
    %3662 = vmatprep.subr.bf16.mxu0 %v3106
    %3663 = vmatpush1.bf16.msra.mxu0 %v3105
    %3664 = vmatprep.subr.bf16.mxu0 %v3108
    %3665 = vmatpush1.bf16.msra.mxu0 %v3107
    %3666 = vmatprep.subr.bf16.mxu0 %v3110
    %3667 = vmatpush1.bf16.msra.mxu0 %v3109
    %3668 = vmatprep.subr.bf16.mxu0 %v3112
    %3669 = vmatpush1.bf16.msra.mxu0 %v3111
    %3670 = vmatprep.subr.bf16.mxu0 %v3114
    %3671 = vmatpush1.bf16.msra.mxu0 %v3113
    %3672 = vmatprep.subr.bf16.mxu0 %v3116
    %3673 = vmatpush1.bf16.msra.mxu0 %v3115
    %3674 = vmatprep.subr.bf16.mxu0 %v3118
    %3675 = vmatpush1.bf16.msra.mxu0 %v3117
    %3676 = vmatprep.subr.bf16.mxu0 %v3120
    %3677 = vmatpush1.bf16.msra.mxu0 %v3119
    %3678 = vmatprep.subr.bf16.mxu0 %v3122
    %3679 = vmatpush1.bf16.msra.mxu0 %v3121
    %3680 = vmatprep.mubr.bf16.mxu0 %v2142
    %3681 = vmatmul.mubr.bf16.gmra.mrb[0].mxu0 %v2141
    %v3682 = vpop.f32.mrb[0].mxu0
    %v3683 = vadd.f32 %v3642, %v3682
    %v3684 = vpop.f32.mrb[0].mxu0
    %v3685 = vadd.f32 %v3644, %v3684
    %v3686 = vpop.f32.mrb[0].mxu0
    %v3687 = vpop.f32.mrb[0].mxu0
    %3688 = vdwg.mxu0
    %3689 = vmatprep.subr.bf16.mxu0 %v3124
    %3690 = vmatpush1.bf16.msra.mxu0 %v3123
    %3691 = vmatprep.subr.bf16.mxu0 %v3126
    %3692 = vmatpush1.bf16.msra.mxu0 %v3125
    %3693 = vmatprep.subr.bf16.mxu0 %v3128
    %3694 = vmatpush1.bf16.msra.mxu0 %v3127
    %3695 = vmatprep.subr.bf16.mxu0 %v3130
    %3696 = vmatpush1.bf16.msra.mxu0 %v3129
    %3697 = vmatprep.subr.bf16.mxu0 %v3132
    %3698 = vmatpush1.bf16.msra.mxu0 %v3131
    %3699 = vmatprep.subr.bf16.mxu0 %v3134
    %3700 = vmatpush1.bf16.msra.mxu0 %v3133
    %3701 = vmatprep.subr.bf16.mxu0 %v3136
    %3702 = vmatpush1.bf16.msra.mxu0 %v3135
    %3703 = vmatprep.subr.bf16.mxu0 %v3138
    %3704 = vmatpush1.bf16.msra.mxu0 %v3137
    %3705 = vmatprep.subr.bf16.mxu0 %v3140
    %3706 = vmatpush1.bf16.msra.mxu0 %v3139
    %3707 = vmatprep.subr.bf16.mxu0 %v3142
    %3708 = vmatpush1.bf16.msra.mxu0 %v3141
    %3709 = vmatprep.subr.bf16.mxu0 %v3144
    %3710 = vmatpush1.bf16.msra.mxu0 %v3143
    %3711 = vmatprep.subr.bf16.mxu0 %v3146
    %3712 = vmatpush1.bf16.msra.mxu0 %v3145
    %3713 = vmatprep.subr.bf16.mxu0 %v3148
    %3714 = vmatpush1.bf16.msra.mxu0 %v3147
    %3715 = vmatprep.subr.bf16.mxu0 %v3150
    %3716 = vmatpush1.bf16.msra.mxu0 %v3149
    %3717 = vmatprep.subr.bf16.mxu0 %v3152
    %3718 = vmatpush1.bf16.msra.mxu0 %v3151
    %3719 = vmatprep.subr.bf16.mxu0 %v3154
    %3720 = vmatpush1.bf16.msra.mxu0 %v3153
    %3721 = vmatprep.mubr.bf16.mxu0 %v2144
    %3722 = vmatmul.mubr.bf16.gmra.mrb[0].mxu0 %v2143
    %v3723 = vpop.f32.mrb[0].mxu0
    %v3724 = vadd.f32 %v3683, %v3723
    %v3725 = vpop.f32.mrb[0].mxu0
    %v3726 = vadd.f32 %v3685, %v3725
    %v3727 = vpop.f32.mrb[0].mxu0
    %v3728 = vpop.f32.mrb[0].mxu0
    %3729 = vdwg.mxu0
    %3730 = vmatprep.subr.bf16.mxu0 %v3156
    %3731 = vmatpush1.bf16.msra.mxu0 %v3155
    %3732 = vmatprep.subr.bf16.mxu0 %v3158
    %3733 = vmatpush1.bf16.msra.mxu0 %v3157
    %3734 = vmatprep.subr.bf16.mxu0 %v3160
    %3735 = vmatpush1.bf16.msra.mxu0 %v3159
    %3736 = vmatprep.subr.bf16.mxu0 %v3162
    %3737 = vmatpush1.bf16.msra.mxu0 %v3161
    %3738 = vmatprep.subr.bf16.mxu0 %v3164
    %3739 = vmatpush1.bf16.msra.mxu0 %v3163
    %3740 = vmatprep.subr.bf16.mxu0 %v3166
    %3741 = vmatpush1.bf16.msra.mxu0 %v3165
    %3742 = vmatprep.subr.bf16.mxu0 %v3168
    %3743 = vmatpush1.bf16.msra.mxu0 %v3167
    %3744 = vmatprep.subr.bf16.mxu0 %v3170
    %3745 = vmatpush1.bf16.msra.mxu0 %v3169
    %3746 = vmatprep.subr.bf16.mxu0 %v3172
    %3747 = vmatpush1.bf16.msra.mxu0 %v3171
    %3748 = vmatprep.subr.bf16.mxu0 %v3174
    %3749 = vmatpush1.bf16.msra.mxu0 %v3173
    %3750 = vmatprep.subr.bf16.mxu0 %v3176
    %3751 = vmatpush1.bf16.msra.mxu0 %v3175
    %3752 = vmatprep.subr.bf16.mxu0 %v3178
    %3753 = vmatpush1.bf16.msra.mxu0 %v3177
    %3754 = vmatprep.subr.bf16.mxu0 %v3180
    %3755 = vmatpush1.bf16.msra.mxu0 %v3179
    %3756 = vmatprep.subr.bf16.mxu0 %v3182
    %3757 = vmatpush1.bf16.msra.mxu0 %v3181
    %3758 = vmatprep.subr.bf16.mxu0 %v3184
    %3759 = vmatpush1.bf16.msra.mxu0 %v3183
    %3760 = vmatprep.subr.bf16.mxu0 %v3186
    %3761 = vmatpush1.bf16.msra.mxu0 %v3185
    %3762 = vmatprep.mubr.bf16.mxu0 %v2146
    %3763 = vmatmul.mubr.bf16.gmra.mrb[0].mxu0 %v2145
    %v3764 = vpop.f32.mrb[0].mxu0
    %v3765 = vadd.f32 %v3724, %v3764
    %v3766 = vpop.f32.mrb[0].mxu0
    %v3767 = vadd.f32 %v3726, %v3766
    %v3768 = vpop.f32.mrb[0].mxu0
    %v3769 = vpop.f32.mrb[0].mxu0
    %3770 = vdwg.mxu0
    %v3771 = vmax.f32 %v3765, 0.0
    %v3772 = vmax.f32 %v3767, 0.0
    %v3773 = vpack.c.bf16 %v3771, %v3771
    %v3774 = vpack.c.bf16 %v3772, %v3772
    %v3775 = vld [vmem:[#allocation3] sm:$0xff]
    %v3776 = vld [vmem:[#allocation12] sm:$0xf]
    %v3777 = vld [vmem:[#allocation12 + $0x4] sm:$0xf]
    %v3778 = vld [vmem:[#allocation12 + $0x8] sm:$0xf]
    %v3779 = vld [vmem:[#allocation12 + $0xc] sm:$0xf]
    %v3780 = vld [vmem:[#allocation12 + $0x10] sm:$0xf]
    %v3781 = vld [vmem:[#allocation12 + $0x14] sm:$0xf]
    %v3782 = vld [vmem:[#allocation12 + $0x18] sm:$0xf]
    %v3783 = vld [vmem:[#allocation12 + $0x1c] sm:$0xf]
    %v3784 = vld [vmem:[#allocation12 + $0x20] sm:$0xf]
    %v3785 = vld [vmem:[#allocation12 + $0x24] sm:$0xf]
    %v3786 = vld [vmem:[#allocation12 + $0x28] sm:$0xf]
    %v3787 = vld [vmem:[#allocation12 + $0x2c] sm:$0xf]
    %v3788 = vld [vmem:[#allocation12 + $0x30] sm:$0xf]
    %v3789 = vld [vmem:[#allocation12 + $0x34] sm:$0xf]
    %v3790 = vld [vmem:[#allocation12 + $0x38] sm:$0xf]
    %v3791 = vld [vmem:[#allocation12 + $0x3c] sm:$0xf]
    %v3792 = vld [vmem:[#allocation12 + $0x40] sm:$0xf]
    %v3793 = vld [vmem:[#allocation12 + $0x44] sm:$0xf]
    %v3794 = vld [vmem:[#allocation12 + $0x48] sm:$0xf]
    %v3795 = vld [vmem:[#allocation12 + $0x4c] sm:$0xf]
    %v3796 = vld [vmem:[#allocation12 + $0x50] sm:$0xf]
    %v3797 = vld [vmem:[#allocation12 + $0x54] sm:$0xf]
    %v3798 = vld [vmem:[#allocation12 + $0x58] sm:$0xf]
    %v3799 = vld [vmem:[#allocation12 + $0x5c] sm:$0xf]
    %v3800 = vld [vmem:[#allocation12 + $0x60] sm:$0xf]
    %v3801 = vld [vmem:[#allocation12 + $0x64] sm:$0xf]
    %v3802 = vld [vmem:[#allocation12 + $0x68] sm:$0xf]
    %v3803 = vld [vmem:[#allocation12 + $0x6c] sm:$0xf]
    %v3804 = vld [vmem:[#allocation12 + $0x70] sm:$0xf]
    %v3805 = vld [vmem:[#allocation12 + $0x74] sm:$0xf]
    %v3806 = vld [vmem:[#allocation12 + $0x78] sm:$0xf]
    %v3807 = vld [vmem:[#allocation12 + $0x7c] sm:$0xf]
    %v3840 = vunpack.c.l.b16 %v3776
    %v3841 = vunpack.c.l.b16 %v3777
    %v3842 = vunpack.c.l.b16 %v3778
    %v3843 = vunpack.c.l.b16 %v3779
    %v3844 = vunpack.c.l.b16 %v3780
    %v3845 = vunpack.c.l.b16 %v3781
    %v3846 = vunpack.c.l.b16 %v3782
    %v3847 = vunpack.c.l.b16 %v3783
    %v3848 = vunpack.c.l.b16 %v3784
    %v3849 = vunpack.c.l.b16 %v3785
    %v3850 = vunpack.c.l.b16 %v3786
    %v3851 = vunpack.c.l.b16 %v3787
    %v3852 = vunpack.c.l.b16 %v3788
    %v3853 = vunpack.c.l.b16 %v3789
    %v3854 = vunpack.c.l.b16 %v3790
    %v3855 = vunpack.c.l.b16 %v3791
    %v3856 = vunpack.c.l.b16 %v3792
    %v3857 = vunpack.c.l.b16 %v3793
    %v3858 = vunpack.c.l.b16 %v3794
    %v3859 = vunpack.c.l.b16 %v3795
    %v3860 = vunpack.c.l.b16 %v3796
    %v3861 = vunpack.c.l.b16 %v3797
    %v3862 = vunpack.c.l.b16 %v3798
    %v3863 = vunpack.c.l.b16 %v3799
    %v3864 = vunpack.c.l.b16 %v3800
    %v3865 = vunpack.c.l.b16 %v3801
    %v3866 = vunpack.c.l.b16 %v3802
    %v3867 = vunpack.c.l.b16 %v3803
    %v3868 = vunpack.c.l.b16 %v3804
    %v3869 = vunpack.c.l.b16 %v3805
    %v3870 = vunpack.c.l.b16 %v3806
    %v3871 = vunpack.c.l.b16 %v3807
    %v3872 = vpack.c.b16 %v3841, %v3840
    %v3873 = vpack.c.b16 %v3843, %v3842
    %v3874 = vpack.c.b16 %v3845, %v3844
    %v3875 = vpack.c.b16 %v3847, %v3846
    %v3876 = vpack.c.b16 %v3849, %v3848
    %v3877 = vpack.c.b16 %v3851, %v3850
    %v3878 = vpack.c.b16 %v3853, %v3852
    %v3879 = vpack.c.b16 %v3855, %v3854
    %v3880 = vpack.c.b16 %v3857, %v3856
    %v3881 = vpack.c.b16 %v3859, %v3858
    %v3882 = vpack.c.b16 %v3861, %v3860
    %v3883 = vpack.c.b16 %v3863, %v3862
    %v3884 = vpack.c.b16 %v3865, %v3864
    %v3885 = vpack.c.b16 %v3867, %v3866
    %v3886 = vpack.c.b16 %v3869, %v3868
    %v3887 = vpack.c.b16 %v3871, %v3870
    %3904 = vmatprep.subr.bf16.mxu0 0
    %3905 = vmatpush1.bf16.msra.mxu0 %v3872
    %3906 = vmatprep.subr.bf16.mxu0 0
    %3907 = vmatpush1.bf16.msra.mxu0 %v3873
    %3908 = vmatprep.subr.bf16.mxu0 0
    %3909 = vmatpush1.bf16.msra.mxu0 %v3874
    %3910 = vmatprep.subr.bf16.mxu0 0
    %3911 = vmatpush1.bf16.msra.mxu0 %v3875
    %3912 = vmatprep.subr.bf16.mxu0 0
    %3913 = vmatpush1.bf16.msra.mxu0 %v3876
    %3914 = vmatprep.subr.bf16.mxu0 0
    %3915 = vmatpush1.bf16.msra.mxu0 %v3877
    %3916 = vmatprep.subr.bf16.mxu0 0
    %3917 = vmatpush1.bf16.msra.mxu0 %v3878
    %3918 = vmatprep.subr.bf16.mxu0 0
    %3919 = vmatpush1.bf16.msra.mxu0 %v3879
    %3920 = vmatprep.subr.bf16.mxu0 0
    %3921 = vmatpush1.bf16.msra.mxu0 %v3880
    %3922 = vmatprep.subr.bf16.mxu0 0
    %3923 = vmatpush1.bf16.msra.mxu0 %v3881
    %3924 = vmatprep.subr.bf16.mxu0 0
    %3925 = vmatpush1.bf16.msra.mxu0 %v3882
    %3926 = vmatprep.subr.bf16.mxu0 0
    %3927 = vmatpush1.bf16.msra.mxu0 %v3883
    %3928 = vmatprep.subr.bf16.mxu0 0
    %3929 = vmatpush1.bf16.msra.mxu0 %v3884
    %3930 = vmatprep.subr.bf16.mxu0 0
    %3931 = vmatpush1.bf16.msra.mxu0 %v3885
    %3932 = vmatprep.subr.bf16.mxu0 0
    %3933 = vmatpush1.bf16.msra.mxu0 %v3886
    %3934 = vmatprep.subr.bf16.mxu0 0
    %3935 = vmatpush1.bf16.msra.mxu0 %v3887
    %3936 = vmatprep.mubr.bf16.mxu0 %v3774
    %3937 = vmatmul.mubr.bf16.gmra.mrb[0].mxu0 %v3773
    %v3938 = vpop.f32.mrb[0].mxu0
    %v3939 = vadd.f32 0.0, %v3938
    %v3940 = vpop.f32.mrb[0].mxu0
    %v3941 = vpop.f32.mrb[0].mxu0
    %v3942 = vpop.f32.mrb[0].mxu0
    %3943 = vdwg.mxu0
    %v3944 = vadd.f32 %v3775, %v3939
    %3945 = vst [vmem:[#allocation3] sm:$0xff] %v3944
    %v3946 = vld [vmem:[#allocation2] sm:$0xff]
    %v3947 = vld [vmem:[#allocation2 + $0x8] sm:$0xff]
    %v3948 = vld [vmem:[#allocation2 + $0x10] sm:$0xff]
    %v3949 = vld [vmem:[#allocation2 + $0x18] sm:$0xff]
    %v3950 = vld [vmem:[#allocation2 + $0x20] sm:$0xff]
    %v3951 = vld [vmem:[#allocation2 + $0x28] sm:$0xff]
    %v3952 = vld [vmem:[#allocation2 + $0x30] sm:$0xff]
    %v3953 = vld [vmem:[#allocation2 + $0x38] sm:$0xff]
    %v3954 = vld [vmem:[#allocation9 + $0x8] sm:$0xff]
    %v3955 = vld [vmem:[#allocation9 + $0x28] sm:$0xff]
    %v3956 = vld [vmem:[#allocation9 + $0x48] sm:$0xff]
    %v3957 = vld [vmem:[#allocation9 + $0x68] sm:$0xff]
    %v3958 = vld [vmem:[#allocation9 + $0x88] sm:$0xff]
    %v3959 = vld [vmem:[#allocation9 + $0xa8] sm:$0xff]
    %v3960 = vld [vmem:[#allocation9 + $0xc8] sm:$0xff]
    %v3961 = vld [vmem:[#allocation9 + $0xe8] sm:$0xff]
    %v3962 = vld [vmem:[#allocation9 + $0x108] sm:$0xff]
    %v3963 = vld [vmem:[#allocation9 + $0x128] sm:$0xff]
    %v3964 = vld [vmem:[#allocation9 + $0x148] sm:$0xff]
    %v3965 = vld [vmem:[#allocation9 + $0x168] sm:$0xff]
    %v3966 = vld [vmem:[#allocation9 + $0x188] sm:$0xff]
    %v3967 = vld [vmem:[#allocation9 + $0x1a8] sm:$0xff]
    %v3968 = vld [vmem:[#allocation9 + $0x1c8] sm:$0xff]
    %v3969 = vld [vmem:[#allocation9 + $0x1e8] sm:$0xff]
    %v3970 = vld [vmem:[#allocation9 + $0x208] sm:$0xff]
    %v3971 = vld [vmem:[#allocation9 + $0x228] sm:$0xff]
    %v3972 = vld [vmem:[#allocation9 + $0x248] sm:$0xff]
    %v3973 = vld [vmem:[#allocation9 + $0x268] sm:$0xff]
    %v3974 = vld [vmem:[#allocation9 + $0x288] sm:$0xff]
    %v3975 = vld [vmem:[#allocation9 + $0x2a8] sm:$0xff]
    %v3976 = vld [vmem:[#allocation9 + $0x2c8] sm:$0xff]
    %v3977 = vld [vmem:[#allocation9 + $0x2e8] sm:$0xff]
    %v3978 = vld [vmem:[#allocation9 + $0x308] sm:$0xff]
    %v3979 = vld [vmem:[#allocation9 + $0x328] sm:$0xff]
    %v3980 = vld [vmem:[#allocation9 + $0x348] sm:$0xff]
    %v3981 = vld [vmem:[#allocation9 + $0x368] sm:$0xff]
    %v3982 = vld [vmem:[#allocation9 + $0x388] sm:$0xff]
    %v3983 = vld [vmem:[#allocation9 + $0x3a8] sm:$0xff]
    %v3984 = vld [vmem:[#allocation9 + $0x3c8] sm:$0xff]
    %v3985 = vld [vmem:[#allocation9 + $0x3e8] sm:$0xff]
    %v3986 = vld [vmem:[#allocation9 + $0x408] sm:$0xff]
    %v3987 = vld [vmem:[#allocation9 + $0x428] sm:$0xff]
    %v3988 = vld [vmem:[#allocation9 + $0x448] sm:$0xff]
    %v3989 = vld [vmem:[#allocation9 + $0x468] sm:$0xff]
    %v3990 = vld [vmem:[#allocation9 + $0x488] sm:$0xff]
    %v3991 = vld [vmem:[#allocation9 + $0x4a8] sm:$0xff]
    %v3992 = vld [vmem:[#allocation9 + $0x4c8] sm:$0xff]
    %v3993 = vld [vmem:[#allocation9 + $0x4e8] sm:$0xff]
    %v3994 = vld [vmem:[#allocation9 + $0x508] sm:$0xff]
    %v3995 = vld [vmem:[#allocation9 + $0x528] sm:$0xff]
    %v3996 = vld [vmem:[#allocation9 + $0x548] sm:$0xff]
    %v3997 = vld [vmem:[#allocation9 + $0x568] sm:$0xff]
    %v3998 = vld [vmem:[#allocation9 + $0x588] sm:$0xff]
    %v3999 = vld [vmem:[#allocation9 + $0x5a8] sm:$0xff]
    %v4000 = vld [vmem:[#allocation9 + $0x5c8] sm:$0xff]
    %v4001 = vld [vmem:[#allocation9 + $0x5e8] sm:$0xff]
    %v4002 = vld [vmem:[#allocation9 + $0x608] sm:$0xff]
    %v4003 = vld [vmem:[#allocation9 + $0x628] sm:$0xff]
    %v4004 = vld [vmem:[#allocation9 + $0x648] sm:$0xff]
    %v4005 = vld [vmem:[#allocation9 + $0x668] sm:$0xff]
    %v4006 = vld [vmem:[#allocation9 + $0x688] sm:$0xff]
    %v4007 = vld [vmem:[#allocation9 + $0x6a8] sm:$0xff]
    %v4008 = vld [vmem:[#allocation9 + $0x6c8] sm:$0xff]
    %v4009 = vld [vmem:[#allocation9 + $0x6e8] sm:$0xff]
    %v4010 = vld [vmem:[#allocation9 + $0x708] sm:$0xff]
    %v4011 = vld [vmem:[#allocation9 + $0x728] sm:$0xff]
    %v4012 = vld [vmem:[#allocation9 + $0x748] sm:$0xff]
    %v4013 = vld [vmem:[#allocation9 + $0x768] sm:$0xff]
    %v4014 = vld [vmem:[#allocation9 + $0x788] sm:$0xff]
    %v4015 = vld [vmem:[#allocation9 + $0x7a8] sm:$0xff]
    %v4016 = vld [vmem:[#allocation9 + $0x7c8] sm:$0xff]
    %v4017 = vld [vmem:[#allocation9 + $0x7e8] sm:$0xff]
    %v4018 = vld [vmem:[#allocation9 + $0x808] sm:$0xff]
    %v4019 = vld [vmem:[#allocation9 + $0x828] sm:$0xff]
    %v4020 = vld [vmem:[#allocation9 + $0x848] sm:$0xff]
    %v4021 = vld [vmem:[#allocation9 + $0x868] sm:$0xff]
    %v4022 = vld [vmem:[#allocation9 + $0x888] sm:$0xff]
    %v4023 = vld [vmem:[#allocation9 + $0x8a8] sm:$0xff]
    %v4024 = vld [vmem:[#allocation9 + $0x8c8] sm:$0xff]
    %v4025 = vld [vmem:[#allocation9 + $0x8e8] sm:$0xff]
    %v4026 = vld [vmem:[#allocation9 + $0x908] sm:$0xff]
    %v4027 = vld [vmem:[#allocation9 + $0x928] sm:$0xff]
    %v4028 = vld [vmem:[#allocation9 + $0x948] sm:$0xff]
    %v4029 = vld [vmem:[#allocation9 + $0x968] sm:$0xff]
    %v4030 = vld [vmem:[#allocation9 + $0x988] sm:$0xff]
    %v4031 = vld [vmem:[#allocation9 + $0x9a8] sm:$0xff]
    %v4032 = vld [vmem:[#allocation9 + $0x9c8] sm:$0xff]
    %v4033 = vld [vmem:[#allocation9 + $0x9e8] sm:$0xff]
    %v4034 = vld [vmem:[#allocation9 + $0xa08] sm:$0xff]
    %v4035 = vld [vmem:[#allocation9 + $0xa28] sm:$0xff]
    %v4036 = vld [vmem:[#allocation9 + $0xa48] sm:$0xff]
    %v4037 = vld [vmem:[#allocation9 + $0xa68] sm:$0xff]
    %v4038 = vld [vmem:[#allocation9 + $0xa88] sm:$0xff]
    %v4039 = vld [vmem:[#allocation9 + $0xaa8] sm:$0xff]
    %v4040 = vld [vmem:[#allocation9 + $0xac8] sm:$0xff]
    %v4041 = vld [vmem:[#allocation9 + $0xae8] sm:$0xff]
    %v4042 = vld [vmem:[#allocation9 + $0xb08] sm:$0xff]
    %v4043 = vld [vmem:[#allocation9 + $0xb28] sm:$0xff]
    %v4044 = vld [vmem:[#allocation9 + $0xb48] sm:$0xff]
    %v4045 = vld [vmem:[#allocation9 + $0xb68] sm:$0xff]
    %v4046 = vld [vmem:[#allocation9 + $0xb88] sm:$0xff]
    %v4047 = vld [vmem:[#allocation9 + $0xba8] sm:$0xff]
    %v4048 = vld [vmem:[#allocation9 + $0xbc8] sm:$0xff]
    %v4049 = vld [vmem:[#allocation9 + $0xbe8] sm:$0xff]
    %v4050 = vld [vmem:[#allocation9 + $0xc08] sm:$0xff]
    %v4051 = vld [vmem:[#allocation9 + $0xc28] sm:$0xff]
    %v4052 = vld [vmem:[#allocation9 + $0xc48] sm:$0xff]
    %v4053 = vld [vmem:[#allocation9 + $0xc68] sm:$0xff]
    %v4054 = vld [vmem:[#allocation9 + $0xc88] sm:$0xff]
    %v4055 = vld [vmem:[#allocation9 + $0xca8] sm:$0xff]
    %v4056 = vld [vmem:[#allocation9 + $0xcc8] sm:$0xff]
    %v4057 = vld [vmem:[#allocation9 + $0xce8] sm:$0xff]
    %v4058 = vld [vmem:[#allocation9 + $0xd08] sm:$0xff]
    %v4059 = vld [vmem:[#allocation9 + $0xd28] sm:$0xff]
    %v4060 = vld [vmem:[#allocation9 + $0xd48] sm:$0xff]
    %v4061 = vld [vmem:[#allocation9 + $0xd68] sm:$0xff]
    %v4062 = vld [vmem:[#allocation9 + $0xd88] sm:$0xff]
    %v4063 = vld [vmem:[#allocation9 + $0xda8] sm:$0xff]
    %v4064 = vld [vmem:[#allocation9 + $0xdc8] sm:$0xff]
    %v4065 = vld [vmem:[#allocation9 + $0xde8] sm:$0xff]
    %v4066 = vld [vmem:[#allocation9 + $0xe08] sm:$0xff]
    %v4067 = vld [vmem:[#allocation9 + $0xe28] sm:$0xff]
    %v4068 = vld [vmem:[#allocation9 + $0xe48] sm:$0xff]
    %v4069 = vld [vmem:[#allocation9 + $0xe68] sm:$0xff]
    %v4070 = vld [vmem:[#allocation9 + $0xe88] sm:$0xff]
    %v4071 = vld [vmem:[#allocation9 + $0xea8] sm:$0xff]
    %v4072 = vld [vmem:[#allocation9 + $0xec8] sm:$0xff]
    %v4073 = vld [vmem:[#allocation9 + $0xee8] sm:$0xff]
    %v4074 = vld [vmem:[#allocation9 + $0xf08] sm:$0xff]
    %v4075 = vld [vmem:[#allocation9 + $0xf28] sm:$0xff]
    %v4076 = vld [vmem:[#allocation9 + $0xf48] sm:$0xff]
    %v4077 = vld [vmem:[#allocation9 + $0xf68] sm:$0xff]
    %v4078 = vld [vmem:[#allocation9 + $0xf88] sm:$0xff]
    %v4079 = vld [vmem:[#allocation9 + $0xfa8] sm:$0xff]
    %v4080 = vld [vmem:[#allocation9 + $0xfc8] sm:$0xff]
    %v4081 = vld [vmem:[#allocation9 + $0xfe8] sm:$0xff]
    %v4082 = vld [vmem:[#allocation9 + $0x1008] sm:$0xff]
    %v4083 = vld [vmem:[#allocation9 + $0x1028] sm:$0xff]
    %v4084 = vld [vmem:[#allocation9 + $0x1048] sm:$0xff]
    %v4085 = vld [vmem:[#allocation9 + $0x1068] sm:$0xff]
    %v4086 = vld [vmem:[#allocation9 + $0x1088] sm:$0xff]
    %v4087 = vld [vmem:[#allocation9 + $0x10a8] sm:$0xff]
    %v4088 = vld [vmem:[#allocation9 + $0x10c8] sm:$0xff]
    %v4089 = vld [vmem:[#allocation9 + $0x10e8] sm:$0xff]
    %v4090 = vld [vmem:[#allocation9 + $0x1108] sm:$0xff]
    %v4091 = vld [vmem:[#allocation9 + $0x1128] sm:$0xff]
    %v4092 = vld [vmem:[#allocation9 + $0x1148] sm:$0xff]
    %v4093 = vld [vmem:[#allocation9 + $0x1168] sm:$0xff]
    %v4094 = vld [vmem:[#allocation9 + $0x1188] sm:$0xff]
    %v4095 = vld [vmem:[#allocation9 + $0x11a8] sm:$0xff]
    %v4096 = vld [vmem:[#allocation9 + $0x11c8] sm:$0xff]
    %v4097 = vld [vmem:[#allocation9 + $0x11e8] sm:$0xff]
    %v4098 = vld [vmem:[#allocation9 + $0x1208] sm:$0xff]
    %v4099 = vld [vmem:[#allocation9 + $0x1228] sm:$0xff]
    %v4100 = vld [vmem:[#allocation9 + $0x1248] sm:$0xff]
    %v4101 = vld [vmem:[#allocation9 + $0x1268] sm:$0xff]
    %v4102 = vld [vmem:[#allocation9 + $0x1288] sm:$0xff]
    %v4103 = vld [vmem:[#allocation9 + $0x12a8] sm:$0xff]
    %v4104 = vld [vmem:[#allocation9 + $0x12c8] sm:$0xff]
    %v4105 = vld [vmem:[#allocation9 + $0x12e8] sm:$0xff]
    %v4106 = vld [vmem:[#allocation9 + $0x1308] sm:$0xff]
    %v4107 = vld [vmem:[#allocation9 + $0x1328] sm:$0xff]
    %v4108 = vld [vmem:[#allocation9 + $0x1348] sm:$0xff]
    %v4109 = vld [vmem:[#allocation9 + $0x1368] sm:$0xff]
    %v4110 = vld [vmem:[#allocation9 + $0x1388] sm:$0xff]
    %v4111 = vld [vmem:[#allocation9 + $0x13a8] sm:$0xff]
    %v4112 = vld [vmem:[#allocation9 + $0x13c8] sm:$0xff]
    %v4113 = vld [vmem:[#allocation9 + $0x13e8] sm:$0xff]
    %v4114 = vld [vmem:[#allocation9 + $0x1408] sm:$0xff]
    %v4115 = vld [vmem:[#allocation9 + $0x1428] sm:$0xff]
    %v4116 = vld [vmem:[#allocation9 + $0x1448] sm:$0xff]
    %v4117 = vld [vmem:[#allocation9 + $0x1468] sm:$0xff]
    %v4118 = vld [vmem:[#allocation9 + $0x1488] sm:$0xff]
    %v4119 = vld [vmem:[#allocation9 + $0x14a8] sm:$0xff]
    %v4120 = vld [vmem:[#allocation9 + $0x14c8] sm:$0xff]
    %v4121 = vld [vmem:[#allocation9 + $0x14e8] sm:$0xff]
    %v4122 = vld [vmem:[#allocation9 + $0x1508] sm:$0xff]
    %v4123 = vld [vmem:[#allocation9 + $0x1528] sm:$0xff]
    %v4124 = vld [vmem:[#allocation9 + $0x1548] sm:$0xff]
    %v4125 = vld [vmem:[#allocation9 + $0x1568] sm:$0xff]
    %v4126 = vld [vmem:[#allocation9 + $0x1588] sm:$0xff]
    %v4127 = vld [vmem:[#allocation9 + $0x15a8] sm:$0xff]
    %v4128 = vld [vmem:[#allocation9 + $0x15c8] sm:$0xff]
    %v4129 = vld [vmem:[#allocation9 + $0x15e8] sm:$0xff]
    %v4130 = vld [vmem:[#allocation9 + $0x1608] sm:$0xff]
    %v4131 = vld [vmem:[#allocation9 + $0x1628] sm:$0xff]
    %v4132 = vld [vmem:[#allocation9 + $0x1648] sm:$0xff]
    %v4133 = vld [vmem:[#allocation9 + $0x1668] sm:$0xff]
    %v4134 = vld [vmem:[#allocation9 + $0x1688] sm:$0xff]
    %v4135 = vld [vmem:[#allocation9 + $0x16a8] sm:$0xff]
    %v4136 = vld [vmem:[#allocation9 + $0x16c8] sm:$0xff]
    %v4137 = vld [vmem:[#allocation9 + $0x16e8] sm:$0xff]
    %v4138 = vld [vmem:[#allocation9 + $0x1708] sm:$0xff]
    %v4139 = vld [vmem:[#allocation9 + $0x1728] sm:$0xff]
    %v4140 = vld [vmem:[#allocation9 + $0x1748] sm:$0xff]
    %v4141 = vld [vmem:[#allocation9 + $0x1768] sm:$0xff]
    %v4142 = vld [vmem:[#allocation9 + $0x1788] sm:$0xff]
    %v4143 = vld [vmem:[#allocation9 + $0x17a8] sm:$0xff]
    %v4144 = vld [vmem:[#allocation9 + $0x17c8] sm:$0xff]
    %v4145 = vld [vmem:[#allocation9 + $0x17e8] sm:$0xff]
    %v4146 = vld [vmem:[#allocation9 + $0x1808] sm:$0xff]
    %v4147 = vld [vmem:[#allocation9 + $0x1828] sm:$0xff]
    %v4148 = vld [vmem:[#allocation9 + $0x1848] sm:$0xff]
    %v4149 = vld [vmem:[#allocation9 + $0x1868] sm:$0xff]
    %v4150 = vld [vmem:[#allocation9 + $0x1888] sm:$0xff]
    %v4151 = vld [vmem:[#allocation9 + $0x18a8] sm:$0xff]
    %v4152 = vld [vmem:[#allocation9 + $0x18c8] sm:$0xff]
    %v4153 = vld [vmem:[#allocation9 + $0x18e8] sm:$0xff]
    %v4154 = vld [vmem:[#allocation9 + $0x1908] sm:$0xff]
    %v4155 = vld [vmem:[#allocation9 + $0x1928] sm:$0xff]
    %v4156 = vld [vmem:[#allocation9 + $0x1948] sm:$0xff]
    %v4157 = vld [vmem:[#allocation9 + $0x1968] sm:$0xff]
    %v4158 = vld [vmem:[#allocation9 + $0x1988] sm:$0xff]
    %v4159 = vld [vmem:[#allocation9 + $0x19a8] sm:$0xff]
    %v4160 = vld [vmem:[#allocation9 + $0x19c8] sm:$0xff]
    %v4161 = vld [vmem:[#allocation9 + $0x19e8] sm:$0xff]
    %v4162 = vld [vmem:[#allocation9 + $0x1a08] sm:$0xff]
    %v4163 = vld [vmem:[#allocation9 + $0x1a28] sm:$0xff]
    %v4164 = vld [vmem:[#allocation9 + $0x1a48] sm:$0xff]
    %v4165 = vld [vmem:[#allocation9 + $0x1a68] sm:$0xff]
    %v4166 = vld [vmem:[#allocation9 + $0x1a88] sm:$0xff]
    %v4167 = vld [vmem:[#allocation9 + $0x1aa8] sm:$0xff]
    %v4168 = vld [vmem:[#allocation9 + $0x1ac8] sm:$0xff]
    %v4169 = vld [vmem:[#allocation9 + $0x1ae8] sm:$0xff]
    %v4170 = vld [vmem:[#allocation9 + $0x1b08] sm:$0xff]
    %v4171 = vld [vmem:[#allocation9 + $0x1b28] sm:$0xff]
    %v4172 = vld [vmem:[#allocation9 + $0x1b48] sm:$0xff]
    %v4173 = vld [vmem:[#allocation9 + $0x1b68] sm:$0xff]
    %v4174 = vld [vmem:[#allocation9 + $0x1b88] sm:$0xff]
    %v4175 = vld [vmem:[#allocation9 + $0x1ba8] sm:$0xff]
    %v4176 = vld [vmem:[#allocation9 + $0x1bc8] sm:$0xff]
    %v4177 = vld [vmem:[#allocation9 + $0x1be8] sm:$0xff]
    %v4178 = vld [vmem:[#allocation9 + $0x1c08] sm:$0xff]
    %v4179 = vld [vmem:[#allocation9 + $0x1c28] sm:$0xff]
    %v4180 = vld [vmem:[#allocation9 + $0x1c48] sm:$0xff]
    %v4181 = vld [vmem:[#allocation9 + $0x1c68] sm:$0xff]
    %v4182 = vld [vmem:[#allocation9 + $0x1c88] sm:$0xff]
    %v4183 = vld [vmem:[#allocation9 + $0x1ca8] sm:$0xff]
    %v4184 = vld [vmem:[#allocation9 + $0x1cc8] sm:$0xff]
    %v4185 = vld [vmem:[#allocation9 + $0x1ce8] sm:$0xff]
    %v4186 = vld [vmem:[#allocation9 + $0x1d08] sm:$0xff]
    %v4187 = vld [vmem:[#allocation9 + $0x1d28] sm:$0xff]
    %v4188 = vld [vmem:[#allocation9 + $0x1d48] sm:$0xff]
    %v4189 = vld [vmem:[#allocation9 + $0x1d68] sm:$0xff]
    %v4190 = vld [vmem:[#allocation9 + $0x1d88] sm:$0xff]
    %v4191 = vld [vmem:[#allocation9 + $0x1da8] sm:$0xff]
    %v4192 = vld [vmem:[#allocation9 + $0x1dc8] sm:$0xff]
    %v4193 = vld [vmem:[#allocation9 + $0x1de8] sm:$0xff]
    %v4194 = vld [vmem:[#allocation9 + $0x1e08] sm:$0xff]
    %v4195 = vld [vmem:[#allocation9 + $0x1e28] sm:$0xff]
    %v4196 = vld [vmem:[#allocation9 + $0x1e48] sm:$0xff]
    %v4197 = vld [vmem:[#allocation9 + $0x1e68] sm:$0xff]
    %v4198 = vld [vmem:[#allocation9 + $0x1e88] sm:$0xff]
    %v4199 = vld [vmem:[#allocation9 + $0x1ea8] sm:$0xff]
    %v4200 = vld [vmem:[#allocation9 + $0x1ec8] sm:$0xff]
    %v4201 = vld [vmem:[#allocation9 + $0x1ee8] sm:$0xff]
    %v4202 = vld [vmem:[#allocation9 + $0x1f08] sm:$0xff]
    %v4203 = vld [vmem:[#allocation9 + $0x1f28] sm:$0xff]
    %v4204 = vld [vmem:[#allocation9 + $0x1f48] sm:$0xff]
    %v4205 = vld [vmem:[#allocation9 + $0x1f68] sm:$0xff]
    %v4206 = vld [vmem:[#allocation9 + $0x1f88] sm:$0xff]
    %v4207 = vld [vmem:[#allocation9 + $0x1fa8] sm:$0xff]
    %v4208 = vld [vmem:[#allocation9 + $0x1fc8] sm:$0xff]
    %v4209 = vld [vmem:[#allocation9 + $0x1fe8] sm:$0xff]
    %v4210 = vld [vmem:[#allocation10 + $0x2] sm:$0x3]
    %v4212 = vlaneseq
    %v4213 = vshrl.u32 %v4212, 7
    %v4214 = vsub.s32 0, %v4213
    %v4215 = vrot.slane %v4210, %v4214
    %v4216 = vlaneseq
    %v4217 = vshrl.u32 %v4216, 7
    %v4218 = vsub.s32 1, %v4217
    %v4219 = vrot.slane %v4210, %v4218
    %v4230 = vunpack.c.l.b16 %v3946
    %v4231 = vunpack.c.h.b16 %v3946
    %v4232 = vunpack.c.l.b16 %v3947
    %v4233 = vunpack.c.h.b16 %v3947
    %v4234 = vunpack.c.l.b16 %v3948
    %v4235 = vunpack.c.h.b16 %v3948
    %v4236 = vunpack.c.l.b16 %v3949
    %v4237 = vunpack.c.h.b16 %v3949
    %v4238 = vunpack.c.l.b16 %v3950
    %v4239 = vunpack.c.h.b16 %v3950
    %v4240 = vunpack.c.l.b16 %v3951
    %v4241 = vunpack.c.h.b16 %v3951
    %v4242 = vunpack.c.l.b16 %v3952
    %v4243 = vunpack.c.h.b16 %v3952
    %v4244 = vunpack.c.l.b16 %v3953
    %v4245 = vunpack.c.h.b16 %v3953
    %v4246 = vpack.c.b16 %v4230, %v4230
    %v4247 = vpack.c.b16 %v4231, %v4231
    %v4248 = vpack.c.b16 %v4232, %v4232
    %v4249 = vpack.c.b16 %v4233, %v4233
    %v4250 = vpack.c.b16 %v4234, %v4234
    %v4251 = vpack.c.b16 %v4235, %v4235
    %v4252 = vpack.c.b16 %v4236, %v4236
    %v4253 = vpack.c.b16 %v4237, %v4237
    %v4254 = vpack.c.b16 %v4238, %v4238
    %v4255 = vpack.c.b16 %v4239, %v4239
    %v4256 = vpack.c.b16 %v4240, %v4240
    %v4257 = vpack.c.b16 %v4241, %v4241
    %v4258 = vpack.c.b16 %v4242, %v4242
    %v4259 = vpack.c.b16 %v4243, %v4243
    %v4260 = vpack.c.b16 %v4244, %v4244
    %v4261 = vpack.c.b16 %v4245, %v4245
    %v4534 = vunpack.c.l.b16 %v3954
    %v4535 = vunpack.c.h.b16 %v3954
    %v4536 = vunpack.c.l.b16 %v3955
    %v4537 = vunpack.c.h.b16 %v3955
    %v4538 = vunpack.c.l.b16 %v3956
    %v4539 = vunpack.c.h.b16 %v3956
    %v4540 = vunpack.c.l.b16 %v3957
    %v4541 = vunpack.c.h.b16 %v3957
    %v4542 = vunpack.c.l.b16 %v3958
    %v4543 = vunpack.c.h.b16 %v3958
    %v4544 = vunpack.c.l.b16 %v3959
    %v4545 = vunpack.c.h.b16 %v3959
    %v4546 = vunpack.c.l.b16 %v3960
    %v4547 = vunpack.c.h.b16 %v3960
    %v4548 = vunpack.c.l.b16 %v3961
    %v4549 = vunpack.c.h.b16 %v3961
    %v4550 = vunpack.c.l.b16 %v3962
    %v4551 = vunpack.c.h.b16 %v3962
    %v4552 = vunpack.c.l.b16 %v3963
    %v4553 = vunpack.c.h.b16 %v3963
    %v4554 = vunpack.c.l.b16 %v3964
    %v4555 = vunpack.c.h.b16 %v3964
    %v4556 = vunpack.c.l.b16 %v3965
    %v4557 = vunpack.c.h.b16 %v3965
    %v4558 = vunpack.c.l.b16 %v3966
    %v4559 = vunpack.c.h.b16 %v3966
    %v4560 = vunpack.c.l.b16 %v3967
    %v4561 = vunpack.c.h.b16 %v3967
    %v4562 = vunpack.c.l.b16 %v3968
    %v4563 = vunpack.c.h.b16 %v3968
    %v4564 = vunpack.c.l.b16 %v3969
    %v4565 = vunpack.c.h.b16 %v3969
    %v4566 = vunpack.c.l.b16 %v3970
    %v4567 = vunpack.c.h.b16 %v3970
    %v4568 = vunpack.c.l.b16 %v3971
    %v4569 = vunpack.c.h.b16 %v3971
    %v4570 = vunpack.c.l.b16 %v3972
    %v4571 = vunpack.c.h.b16 %v3972
    %v4572 = vunpack.c.l.b16 %v3973
    %v4573 = vunpack.c.h.b16 %v3973
    %v4574 = vunpack.c.l.b16 %v3974
    %v4575 = vunpack.c.h.b16 %v3974
    %v4576 = vunpack.c.l.b16 %v3975
    %v4577 = vunpack.c.h.b16 %v3975
    %v4578 = vunpack.c.l.b16 %v3976
    %v4579 = vunpack.c.h.b16 %v3976
    %v4580 = vunpack.c.l.b16 %v3977
    %v4581 = vunpack.c.h.b16 %v3977
    %v4582 = vunpack.c.l.b16 %v3978
    %v4583 = vunpack.c.h.b16 %v3978
    %v4584 = vunpack.c.l.b16 %v3979
    %v4585 = vunpack.c.h.b16 %v3979
    %v4586 = vunpack.c.l.b16 %v3980
    %v4587 = vunpack.c.h.b16 %v3980
    %v4588 = vunpack.c.l.b16 %v3981
    %v4589 = vunpack.c.h.b16 %v3981
    %v4590 = vunpack.c.l.b16 %v3982
    %v4591 = vunpack.c.h.b16 %v3982
    %v4592 = vunpack.c.l.b16 %v3983
    %v4593 = vunpack.c.h.b16 %v3983
    %v4594 = vunpack.c.l.b16 %v3984
    %v4595 = vunpack.c.h.b16 %v3984
    %v4596 = vunpack.c.l.b16 %v3985
    %v4597 = vunpack.c.h.b16 %v3985
    %v4598 = vunpack.c.l.b16 %v3986
    %v4599 = vunpack.c.h.b16 %v3986
    %v4600 = vunpack.c.l.b16 %v3987
    %v4601 = vunpack.c.h.b16 %v3987
    %v4602 = vunpack.c.l.b16 %v3988
    %v4603 = vunpack.c.h.b16 %v3988
    %v4604 = vunpack.c.l.b16 %v3989
    %v4605 = vunpack.c.h.b16 %v3989
    %v4606 = vunpack.c.l.b16 %v3990
    %v4607 = vunpack.c.h.b16 %v3990
    %v4608 = vunpack.c.l.b16 %v3991
    %v4609 = vunpack.c.h.b16 %v3991
    %v4610 = vunpack.c.l.b16 %v3992
    %v4611 = vunpack.c.h.b16 %v3992
    %v4612 = vunpack.c.l.b16 %v3993
    %v4613 = vunpack.c.h.b16 %v3993
    %v4614 = vunpack.c.l.b16 %v3994
    %v4615 = vunpack.c.h.b16 %v3994
    %v4616 = vunpack.c.l.b16 %v3995
    %v4617 = vunpack.c.h.b16 %v3995
    %v4618 = vunpack.c.l.b16 %v3996
    %v4619 = vunpack.c.h.b16 %v3996
    %v4620 = vunpack.c.l.b16 %v3997
    %v4621 = vunpack.c.h.b16 %v3997
    %v4622 = vunpack.c.l.b16 %v3998
    %v4623 = vunpack.c.h.b16 %v3998
    %v4624 = vunpack.c.l.b16 %v3999
    %v4625 = vunpack.c.h.b16 %v3999
    %v4626 = vunpack.c.l.b16 %v4000
    %v4627 = vunpack.c.h.b16 %v4000
    %v4628 = vunpack.c.l.b16 %v4001
    %v4629 = vunpack.c.h.b16 %v4001
    %v4630 = vunpack.c.l.b16 %v4002
    %v4631 = vunpack.c.h.b16 %v4002
    %v4632 = vunpack.c.l.b16 %v4003
    %v4633 = vunpack.c.h.b16 %v4003
    %v4634 = vunpack.c.l.b16 %v4004
    %v4635 = vunpack.c.h.b16 %v4004
    %v4636 = vunpack.c.l.b16 %v4005
    %v4637 = vunpack.c.h.b16 %v4005
    %v4638 = vunpack.c.l.b16 %v4006
    %v4639 = vunpack.c.h.b16 %v4006
    %v4640 = vunpack.c.l.b16 %v4007
    %v4641 = vunpack.c.h.b16 %v4007
    %v4642 = vunpack.c.l.b16 %v4008
    %v4643 = vunpack.c.h.b16 %v4008
    %v4644 = vunpack.c.l.b16 %v4009
    %v4645 = vunpack.c.h.b16 %v4009
    %v4646 = vunpack.c.l.b16 %v4010
    %v4647 = vunpack.c.h.b16 %v4010
    %v4648 = vunpack.c.l.b16 %v4011
    %v4649 = vunpack.c.h.b16 %v4011
    %v4650 = vunpack.c.l.b16 %v4012
    %v4651 = vunpack.c.h.b16 %v4012
    %v4652 = vunpack.c.l.b16 %v4013
    %v4653 = vunpack.c.h.b16 %v4013
    %v4654 = vunpack.c.l.b16 %v4014
    %v4655 = vunpack.c.h.b16 %v4014
    %v4656 = vunpack.c.l.b16 %v4015
    %v4657 = vunpack.c.h.b16 %v4015
    %v4658 = vunpack.c.l.b16 %v4016
    %v4659 = vunpack.c.h.b16 %v4016
    %v4660 = vunpack.c.l.b16 %v4017
    %v4661 = vunpack.c.h.b16 %v4017
    %v4662 = vunpack.c.l.b16 %v4018
    %v4663 = vunpack.c.h.b16 %v4018
    %v4664 = vunpack.c.l.b16 %v4019
    %v4665 = vunpack.c.h.b16 %v4019
    %v4666 = vunpack.c.l.b16 %v4020
    %v4667 = vunpack.c.h.b16 %v4020
    %v4668 = vunpack.c.l.b16 %v4021
    %v4669 = vunpack.c.h.b16 %v4021
    %v4670 = vunpack.c.l.b16 %v4022
    %v4671 = vunpack.c.h.b16 %v4022
    %v4672 = vunpack.c.l.b16 %v4023
    %v4673 = vunpack.c.h.b16 %v4023
    %v4674 = vunpack.c.l.b16 %v4024
    %v4675 = vunpack.c.h.b16 %v4024
    %v4676 = vunpack.c.l.b16 %v4025
    %v4677 = vunpack.c.h.b16 %v4025
    %v4678 = vunpack.c.l.b16 %v4026
    %v4679 = vunpack.c.h.b16 %v4026
    %v4680 = vunpack.c.l.b16 %v4027
    %v4681 = vunpack.c.h.b16 %v4027
    %v4682 = vunpack.c.l.b16 %v4028
    %v4683 = vunpack.c.h.b16 %v4028
    %v4684 = vunpack.c.l.b16 %v4029
    %v4685 = vunpack.c.h.b16 %v4029
    %v4686 = vunpack.c.l.b16 %v4030
    %v4687 = vunpack.c.h.b16 %v4030
    %v4688 = vunpack.c.l.b16 %v4031
    %v4689 = vunpack.c.h.b16 %v4031
    %v4690 = vunpack.c.l.b16 %v4032
    %v4691 = vunpack.c.h.b16 %v4032
    %v4692 = vunpack.c.l.b16 %v4033
    %v4693 = vunpack.c.h.b16 %v4033
    %v4694 = vunpack.c.l.b16 %v4034
    %v4695 = vunpack.c.h.b16 %v4034
    %v4696 = vunpack.c.l.b16 %v4035
    %v4697 = vunpack.c.h.b16 %v4035
    %v4698 = vunpack.c.l.b16 %v4036
    %v4699 = vunpack.c.h.b16 %v4036
    %v4700 = vunpack.c.l.b16 %v4037
    %v4701 = vunpack.c.h.b16 %v4037
    %v4702 = vunpack.c.l.b16 %v4038
    %v4703 = vunpack.c.h.b16 %v4038
    %v4704 = vunpack.c.l.b16 %v4039
    %v4705 = vunpack.c.h.b16 %v4039
    %v4706 = vunpack.c.l.b16 %v4040
    %v4707 = vunpack.c.h.b16 %v4040
    %v4708 = vunpack.c.l.b16 %v4041
    %v4709 = vunpack.c.h.b16 %v4041
    %v4710 = vunpack.c.l.b16 %v4042
    %v4711 = vunpack.c.h.b16 %v4042
    %v4712 = vunpack.c.l.b16 %v4043
    %v4713 = vunpack.c.h.b16 %v4043
    %v4714 = vunpack.c.l.b16 %v4044
    %v4715 = vunpack.c.h.b16 %v4044
    %v4716 = vunpack.c.l.b16 %v4045
    %v4717 = vunpack.c.h.b16 %v4045
    %v4718 = vunpack.c.l.b16 %v4046
    %v4719 = vunpack.c.h.b16 %v4046
    %v4720 = vunpack.c.l.b16 %v4047
    %v4721 = vunpack.c.h.b16 %v4047
    %v4722 = vunpack.c.l.b16 %v4048
    %v4723 = vunpack.c.h.b16 %v4048
    %v4724 = vunpack.c.l.b16 %v4049
    %v4725 = vunpack.c.h.b16 %v4049
    %v4726 = vunpack.c.l.b16 %v4050
    %v4727 = vunpack.c.h.b16 %v4050
    %v4728 = vunpack.c.l.b16 %v4051
    %v4729 = vunpack.c.h.b16 %v4051
    %v4730 = vunpack.c.l.b16 %v4052
    %v4731 = vunpack.c.h.b16 %v4052
    %v4732 = vunpack.c.l.b16 %v4053
    %v4733 = vunpack.c.h.b16 %v4053
    %v4734 = vunpack.c.l.b16 %v4054
    %v4735 = vunpack.c.h.b16 %v4054
    %v4736 = vunpack.c.l.b16 %v4055
    %v4737 = vunpack.c.h.b16 %v4055
    %v4738 = vunpack.c.l.b16 %v4056
    %v4739 = vunpack.c.h.b16 %v4056
    %v4740 = vunpack.c.l.b16 %v4057
    %v4741 = vunpack.c.h.b16 %v4057
    %v4742 = vunpack.c.l.b16 %v4058
    %v4743 = vunpack.c.h.b16 %v4058
    %v4744 = vunpack.c.l.b16 %v4059
    %v4745 = vunpack.c.h.b16 %v4059
    %v4746 = vunpack.c.l.b16 %v4060
    %v4747 = vunpack.c.h.b16 %v4060
    %v4748 = vunpack.c.l.b16 %v4061
    %v4749 = vunpack.c.h.b16 %v4061
    %v4750 = vunpack.c.l.b16 %v4062
    %v4751 = vunpack.c.h.b16 %v4062
    %v4752 = vunpack.c.l.b16 %v4063
    %v4753 = vunpack.c.h.b16 %v4063
    %v4754 = vunpack.c.l.b16 %v4064
    %v4755 = vunpack.c.h.b16 %v4064
    %v4756 = vunpack.c.l.b16 %v4065
    %v4757 = vunpack.c.h.b16 %v4065
    %v4758 = vunpack.c.l.b16 %v4066
    %v4759 = vunpack.c.h.b16 %v4066
    %v4760 = vunpack.c.l.b16 %v4067
    %v4761 = vunpack.c.h.b16 %v4067
    %v4762 = vunpack.c.l.b16 %v4068
    %v4763 = vunpack.c.h.b16 %v4068
    %v4764 = vunpack.c.l.b16 %v4069
    %v4765 = vunpack.c.h.b16 %v4069
    %v4766 = vunpack.c.l.b16 %v4070
    %v4767 = vunpack.c.h.b16 %v4070
    %v4768 = vunpack.c.l.b16 %v4071
    %v4769 = vunpack.c.h.b16 %v4071
    %v4770 = vunpack.c.l.b16 %v4072
    %v4771 = vunpack.c.h.b16 %v4072
    %v4772 = vunpack.c.l.b16 %v4073
    %v4773 = vunpack.c.h.b16 %v4073
    %v4774 = vunpack.c.l.b16 %v4074
    %v4775 = vunpack.c.h.b16 %v4074
    %v4776 = vunpack.c.l.b16 %v4075
    %v4777 = vunpack.c.h.b16 %v4075
    %v4778 = vunpack.c.l.b16 %v4076
    %v4779 = vunpack.c.h.b16 %v4076
    %v4780 = vunpack.c.l.b16 %v4077
    %v4781 = vunpack.c.h.b16 %v4077
    %v4782 = vunpack.c.l.b16 %v4078
    %v4783 = vunpack.c.h.b16 %v4078
    %v4784 = vunpack.c.l.b16 %v4079
    %v4785 = vunpack.c.h.b16 %v4079
    %v4786 = vunpack.c.l.b16 %v4080
    %v4787 = vunpack.c.h.b16 %v4080
    %v4788 = vunpack.c.l.b16 %v4081
    %v4789 = vunpack.c.h.b16 %v4081
    %v4790 = vunpack.c.l.b16 %v4082
    %v4791 = vunpack.c.h.b16 %v4082
    %v4792 = vunpack.c.l.b16 %v4083
    %v4793 = vunpack.c.h.b16 %v4083
    %v4794 = vunpack.c.l.b16 %v4084
    %v4795 = vunpack.c.h.b16 %v4084
    %v4796 = vunpack.c.l.b16 %v4085
    %v4797 = vunpack.c.h.b16 %v4085
    %v4798 = vunpack.c.l.b16 %v4086
    %v4799 = vunpack.c.h.b16 %v4086
    %v4800 = vunpack.c.l.b16 %v4087
    %v4801 = vunpack.c.h.b16 %v4087
    %v4802 = vunpack.c.l.b16 %v4088
    %v4803 = vunpack.c.h.b16 %v4088
    %v4804 = vunpack.c.l.b16 %v4089
    %v4805 = vunpack.c.h.b16 %v4089
    %v4806 = vunpack.c.l.b16 %v4090
    %v4807 = vunpack.c.h.b16 %v4090
    %v4808 = vunpack.c.l.b16 %v4091
    %v4809 = vunpack.c.h.b16 %v4091
    %v4810 = vunpack.c.l.b16 %v4092
    %v4811 = vunpack.c.h.b16 %v4092
    %v4812 = vunpack.c.l.b16 %v4093
    %v4813 = vunpack.c.h.b16 %v4093
    %v4814 = vunpack.c.l.b16 %v4094
    %v4815 = vunpack.c.h.b16 %v4094
    %v4816 = vunpack.c.l.b16 %v4095
    %v4817 = vunpack.c.h.b16 %v4095
    %v4818 = vunpack.c.l.b16 %v4096
    %v4819 = vunpack.c.h.b16 %v4096
    %v4820 = vunpack.c.l.b16 %v4097
    %v4821 = vunpack.c.h.b16 %v4097
    %v4822 = vunpack.c.l.b16 %v4098
    %v4823 = vunpack.c.h.b16 %v4098
    %v4824 = vunpack.c.l.b16 %v4099
    %v4825 = vunpack.c.h.b16 %v4099
    %v4826 = vunpack.c.l.b16 %v4100
    %v4827 = vunpack.c.h.b16 %v4100
    %v4828 = vunpack.c.l.b16 %v4101
    %v4829 = vunpack.c.h.b16 %v4101
    %v4830 = vunpack.c.l.b16 %v4102
    %v4831 = vunpack.c.h.b16 %v4102
    %v4832 = vunpack.c.l.b16 %v4103
    %v4833 = vunpack.c.h.b16 %v4103
    %v4834 = vunpack.c.l.b16 %v4104
    %v4835 = vunpack.c.h.b16 %v4104
    %v4836 = vunpack.c.l.b16 %v4105
    %v4837 = vunpack.c.h.b16 %v4105
    %v4838 = vunpack.c.l.b16 %v4106
    %v4839 = vunpack.c.h.b16 %v4106
    %v4840 = vunpack.c.l.b16 %v4107
    %v4841 = vunpack.c.h.b16 %v4107
    %v4842 = vunpack.c.l.b16 %v4108
    %v4843 = vunpack.c.h.b16 %v4108
    %v4844 = vunpack.c.l.b16 %v4109
    %v4845 = vunpack.c.h.b16 %v4109
    %v4846 = vunpack.c.l.b16 %v4110
    %v4847 = vunpack.c.h.b16 %v4110
    %v4848 = vunpack.c.l.b16 %v4111
    %v4849 = vunpack.c.h.b16 %v4111
    %v4850 = vunpack.c.l.b16 %v4112
    %v4851 = vunpack.c.h.b16 %v4112
    %v4852 = vunpack.c.l.b16 %v4113
    %v4853 = vunpack.c.h.b16 %v4113
    %v4854 = vunpack.c.l.b16 %v4114
    %v4855 = vunpack.c.h.b16 %v4114
    %v4856 = vunpack.c.l.b16 %v4115
    %v4857 = vunpack.c.h.b16 %v4115
    %v4858 = vunpack.c.l.b16 %v4116
    %v4859 = vunpack.c.h.b16 %v4116
    %v4860 = vunpack.c.l.b16 %v4117
    %v4861 = vunpack.c.h.b16 %v4117
    %v4862 = vunpack.c.l.b16 %v4118
    %v4863 = vunpack.c.h.b16 %v4118
    %v4864 = vunpack.c.l.b16 %v4119
    %v4865 = vunpack.c.h.b16 %v4119
    %v4866 = vunpack.c.l.b16 %v4120
    %v4867 = vunpack.c.h.b16 %v4120
    %v4868 = vunpack.c.l.b16 %v4121
    %v4869 = vunpack.c.h.b16 %v4121
    %v4870 = vunpack.c.l.b16 %v4122
    %v4871 = vunpack.c.h.b16 %v4122
    %v4872 = vunpack.c.l.b16 %v4123
    %v4873 = vunpack.c.h.b16 %v4123
    %v4874 = vunpack.c.l.b16 %v4124
    %v4875 = vunpack.c.h.b16 %v4124
    %v4876 = vunpack.c.l.b16 %v4125
    %v4877 = vunpack.c.h.b16 %v4125
    %v4878 = vunpack.c.l.b16 %v4126
    %v4879 = vunpack.c.h.b16 %v4126
    %v4880 = vunpack.c.l.b16 %v4127
    %v4881 = vunpack.c.h.b16 %v4127
    %v4882 = vunpack.c.l.b16 %v4128
    %v4883 = vunpack.c.h.b16 %v4128
    %v4884 = vunpack.c.l.b16 %v4129
    %v4885 = vunpack.c.h.b16 %v4129
    %v4886 = vunpack.c.l.b16 %v4130
    %v4887 = vunpack.c.h.b16 %v4130
    %v4888 = vunpack.c.l.b16 %v4131
    %v4889 = vunpack.c.h.b16 %v4131
    %v4890 = vunpack.c.l.b16 %v4132
    %v4891 = vunpack.c.h.b16 %v4132
    %v4892 = vunpack.c.l.b16 %v4133
    %v4893 = vunpack.c.h.b16 %v4133
    %v4894 = vunpack.c.l.b16 %v4134
    %v4895 = vunpack.c.h.b16 %v4134
    %v4896 = vunpack.c.l.b16 %v4135
    %v4897 = vunpack.c.h.b16 %v4135
    %v4898 = vunpack.c.l.b16 %v4136
    %v4899 = vunpack.c.h.b16 %v4136
    %v4900 = vunpack.c.l.b16 %v4137
    %v4901 = vunpack.c.h.b16 %v4137
    %v4902 = vunpack.c.l.b16 %v4138
    %v4903 = vunpack.c.h.b16 %v4138
    %v4904 = vunpack.c.l.b16 %v4139
    %v4905 = vunpack.c.h.b16 %v4139
    %v4906 = vunpack.c.l.b16 %v4140
    %v4907 = vunpack.c.h.b16 %v4140
    %v4908 = vunpack.c.l.b16 %v4141
    %v4909 = vunpack.c.h.b16 %v4141
    %v4910 = vunpack.c.l.b16 %v4142
    %v4911 = vunpack.c.h.b16 %v4142
    %v4912 = vunpack.c.l.b16 %v4143
    %v4913 = vunpack.c.h.b16 %v4143
    %v4914 = vunpack.c.l.b16 %v4144
    %v4915 = vunpack.c.h.b16 %v4144
    %v4916 = vunpack.c.l.b16 %v4145
    %v4917 = vunpack.c.h.b16 %v4145
    %v4918 = vunpack.c.l.b16 %v4146
    %v4919 = vunpack.c.h.b16 %v4146
    %v4920 = vunpack.c.l.b16 %v4147
    %v4921 = vunpack.c.h.b16 %v4147
    %v4922 = vunpack.c.l.b16 %v4148
    %v4923 = vunpack.c.h.b16 %v4148
    %v4924 = vunpack.c.l.b16 %v4149
    %v4925 = vunpack.c.h.b16 %v4149
    %v4926 = vunpack.c.l.b16 %v4150
    %v4927 = vunpack.c.h.b16 %v4150
    %v4928 = vunpack.c.l.b16 %v4151
    %v4929 = vunpack.c.h.b16 %v4151
    %v4930 = vunpack.c.l.b16 %v4152
    %v4931 = vunpack.c.h.b16 %v4152
    %v4932 = vunpack.c.l.b16 %v4153
    %v4933 = vunpack.c.h.b16 %v4153
    %v4934 = vunpack.c.l.b16 %v4154
    %v4935 = vunpack.c.h.b16 %v4154
    %v4936 = vunpack.c.l.b16 %v4155
    %v4937 = vunpack.c.h.b16 %v4155
    %v4938 = vunpack.c.l.b16 %v4156
    %v4939 = vunpack.c.h.b16 %v4156
    %v4940 = vunpack.c.l.b16 %v4157
    %v4941 = vunpack.c.h.b16 %v4157
    %v4942 = vunpack.c.l.b16 %v4158
    %v4943 = vunpack.c.h.b16 %v4158
    %v4944 = vunpack.c.l.b16 %v4159
    %v4945 = vunpack.c.h.b16 %v4159
    %v4946 = vunpack.c.l.b16 %v4160
    %v4947 = vunpack.c.h.b16 %v4160
    %v4948 = vunpack.c.l.b16 %v4161
    %v4949 = vunpack.c.h.b16 %v4161
    %v4950 = vunpack.c.l.b16 %v4162
    %v4951 = vunpack.c.h.b16 %v4162
    %v4952 = vunpack.c.l.b16 %v4163
    %v4953 = vunpack.c.h.b16 %v4163
    %v4954 = vunpack.c.l.b16 %v4164
    %v4955 = vunpack.c.h.b16 %v4164
    %v4956 = vunpack.c.l.b16 %v4165
    %v4957 = vunpack.c.h.b16 %v4165
    %v4958 = vunpack.c.l.b16 %v4166
    %v4959 = vunpack.c.h.b16 %v4166
    %v4960 = vunpack.c.l.b16 %v4167
    %v4961 = vunpack.c.h.b16 %v4167
    %v4962 = vunpack.c.l.b16 %v4168
    %v4963 = vunpack.c.h.b16 %v4168
    %v4964 = vunpack.c.l.b16 %v4169
    %v4965 = vunpack.c.h.b16 %v4169
    %v4966 = vunpack.c.l.b16 %v4170
    %v4967 = vunpack.c.h.b16 %v4170
    %v4968 = vunpack.c.l.b16 %v4171
    %v4969 = vunpack.c.h.b16 %v4171
    %v4970 = vunpack.c.l.b16 %v4172
    %v4971 = vunpack.c.h.b16 %v4172
    %v4972 = vunpack.c.l.b16 %v4173
    %v4973 = vunpack.c.h.b16 %v4173
    %v4974 = vunpack.c.l.b16 %v4174
    %v4975 = vunpack.c.h.b16 %v4174
    %v4976 = vunpack.c.l.b16 %v4175
    %v4977 = vunpack.c.h.b16 %v4175
    %v4978 = vunpack.c.l.b16 %v4176
    %v4979 = vunpack.c.h.b16 %v4176
    %v4980 = vunpack.c.l.b16 %v4177
    %v4981 = vunpack.c.h.b16 %v4177
    %v4982 = vunpack.c.l.b16 %v4178
    %v4983 = vunpack.c.h.b16 %v4178
    %v4984 = vunpack.c.l.b16 %v4179
    %v4985 = vunpack.c.h.b16 %v4179
    %v4986 = vunpack.c.l.b16 %v4180
    %v4987 = vunpack.c.h.b16 %v4180
    %v4988 = vunpack.c.l.b16 %v4181
    %v4989 = vunpack.c.h.b16 %v4181
    %v4990 = vunpack.c.l.b16 %v4182
    %v4991 = vunpack.c.h.b16 %v4182
    %v4992 = vunpack.c.l.b16 %v4183
    %v4993 = vunpack.c.h.b16 %v4183
    %v4994 = vunpack.c.l.b16 %v4184
    %v4995 = vunpack.c.h.b16 %v4184
    %v4996 = vunpack.c.l.b16 %v4185
    %v4997 = vunpack.c.h.b16 %v4185
    %v4998 = vunpack.c.l.b16 %v4186
    %v4999 = vunpack.c.h.b16 %v4186
    %v5000 = vunpack.c.l.b16 %v4187
    %v5001 = vunpack.c.h.b16 %v4187
    %v5002 = vunpack.c.l.b16 %v4188
    %v5003 = vunpack.c.h.b16 %v4188
    %v5004 = vunpack.c.l.b16 %v4189
    %v5005 = vunpack.c.h.b16 %v4189
    %v5006 = vunpack.c.l.b16 %v4190
    %v5007 = vunpack.c.h.b16 %v4190
    %v5008 = vunpack.c.l.b16 %v4191
    %v5009 = vunpack.c.h.b16 %v4191
    %v5010 = vunpack.c.l.b16 %v4192
    %v5011 = vunpack.c.h.b16 %v4192
    %v5012 = vunpack.c.l.b16 %v4193
    %v5013 = vunpack.c.h.b16 %v4193
    %v5014 = vunpack.c.l.b16 %v4194
    %v5015 = vunpack.c.h.b16 %v4194
    %v5016 = vunpack.c.l.b16 %v4195
    %v5017 = vunpack.c.h.b16 %v4195
    %v5018 = vunpack.c.l.b16 %v4196
    %v5019 = vunpack.c.h.b16 %v4196
    %v5020 = vunpack.c.l.b16 %v4197
    %v5021 = vunpack.c.h.b16 %v4197
    %v5022 = vunpack.c.l.b16 %v4198
    %v5023 = vunpack.c.h.b16 %v4198
    %v5024 = vunpack.c.l.b16 %v4199
    %v5025 = vunpack.c.h.b16 %v4199
    %v5026 = vunpack.c.l.b16 %v4200
    %v5027 = vunpack.c.h.b16 %v4200
    %v5028 = vunpack.c.l.b16 %v4201
    %v5029 = vunpack.c.h.b16 %v4201
    %v5030 = vunpack.c.l.b16 %v4202
    %v5031 = vunpack.c.h.b16 %v4202
    %v5032 = vunpack.c.l.b16 %v4203
    %v5033 = vunpack.c.h.b16 %v4203
    %v5034 = vunpack.c.l.b16 %v4204
    %v5035 = vunpack.c.h.b16 %v4204
    %v5036 = vunpack.c.l.b16 %v4205
    %v5037 = vunpack.c.h.b16 %v4205
    %v5038 = vunpack.c.l.b16 %v4206
    %v5039 = vunpack.c.h.b16 %v4206
    %v5040 = vunpack.c.l.b16 %v4207
    %v5041 = vunpack.c.h.b16 %v4207
    %v5042 = vunpack.c.l.b16 %v4208
    %v5043 = vunpack.c.h.b16 %v4208
    %v5044 = vunpack.c.l.b16 %v4209
    %v5045 = vunpack.c.h.b16 %v4209
    %v5046 = vpack.c.b16 %v4536, %v4534
    %v5047 = vpack.c.b16 %v4537, %v4535
    %v5048 = vpack.c.b16 %v4540, %v4538
    %v5049 = vpack.c.b16 %v4541, %v4539
    %v5050 = vpack.c.b16 %v4544, %v4542
    %v5051 = vpack.c.b16 %v4545, %v4543
    %v5052 = vpack.c.b16 %v4548, %v4546
    %v5053 = vpack.c.b16 %v4549, %v4547
    %v5054 = vpack.c.b16 %v4552, %v4550
    %v5055 = vpack.c.b16 %v4553, %v4551
    %v5056 = vpack.c.b16 %v4556, %v4554
    %v5057 = vpack.c.b16 %v4557, %v4555
    %v5058 = vpack.c.b16 %v4560, %v4558
    %v5059 = vpack.c.b16 %v4561, %v4559
    %v5060 = vpack.c.b16 %v4564, %v4562
    %v5061 = vpack.c.b16 %v4565, %v4563
    %v5062 = vpack.c.b16 %v4568, %v4566
    %v5063 = vpack.c.b16 %v4569, %v4567
    %v5064 = vpack.c.b16 %v4572, %v4570
    %v5065 = vpack.c.b16 %v4573, %v4571
    %v5066 = vpack.c.b16 %v4576, %v4574
    %v5067 = vpack.c.b16 %v4577, %v4575
    %v5068 = vpack.c.b16 %v4580, %v4578
    %v5069 = vpack.c.b16 %v4581, %v4579
    %v5070 = vpack.c.b16 %v4584, %v4582
    %v5071 = vpack.c.b16 %v4585, %v4583
    %v5072 = vpack.c.b16 %v4588, %v4586
    %v5073 = vpack.c.b16 %v4589, %v4587
    %v5074 = vpack.c.b16 %v4592, %v4590
    %v5075 = vpack.c.b16 %v4593, %v4591
    %v5076 = vpack.c.b16 %v4596, %v4594
    %v5077 = vpack.c.b16 %v4597, %v4595
    %v5078 = vpack.c.b16 %v4600, %v4598
    %v5079 = vpack.c.b16 %v4601, %v4599
    %v5080 = vpack.c.b16 %v4604, %v4602
    %v5081 = vpack.c.b16 %v4605, %v4603
    %v5082 = vpack.c.b16 %v4608, %v4606
    %v5083 = vpack.c.b16 %v4609, %v4607
    %v5084 = vpack.c.b16 %v4612, %v4610
    %v5085 = vpack.c.b16 %v4613, %v4611
    %v5086 = vpack.c.b16 %v4616, %v4614
    %v5087 = vpack.c.b16 %v4617, %v4615
    %v5088 = vpack.c.b16 %v4620, %v4618
    %v5089 = vpack.c.b16 %v4621, %v4619
    %v5090 = vpack.c.b16 %v4624, %v4622
    %v5091 = vpack.c.b16 %v4625, %v4623
    %v5092 = vpack.c.b16 %v4628, %v4626
    %v5093 = vpack.c.b16 %v4629, %v4627
    %v5094 = vpack.c.b16 %v4632, %v4630
    %v5095 = vpack.c.b16 %v4633, %v4631
    %v5096 = vpack.c.b16 %v4636, %v4634
    %v5097 = vpack.c.b16 %v4637, %v4635
    %v5098 = vpack.c.b16 %v4640, %v4638
    %v5099 = vpack.c.b16 %v4641, %v4639
    %v5100 = vpack.c.b16 %v4644, %v4642
    %v5101 = vpack.c.b16 %v4645, %v4643
    %v5102 = vpack.c.b16 %v4648, %v4646
    %v5103 = vpack.c.b16 %v4649, %v4647
    %v5104 = vpack.c.b16 %v4652, %v4650
    %v5105 = vpack.c.b16 %v4653, %v4651
    %v5106 = vpack.c.b16 %v4656, %v4654
    %v5107 = vpack.c.b16 %v4657, %v4655
    %v5108 = vpack.c.b16 %v4660, %v4658
    %v5109 = vpack.c.b16 %v4661, %v4659
    %v5110 = vpack.c.b16 %v4664, %v4662
    %v5111 = vpack.c.b16 %v4665, %v4663
    %v5112 = vpack.c.b16 %v4668, %v4666
    %v5113 = vpack.c.b16 %v4669, %v4667
    %v5114 = vpack.c.b16 %v4672, %v4670
    %v5115 = vpack.c.b16 %v4673, %v4671
    %v5116 = vpack.c.b16 %v4676, %v4674
    %v5117 = vpack.c.b16 %v4677, %v4675
    %v5118 = vpack.c.b16 %v4680, %v4678
    %v5119 = vpack.c.b16 %v4681, %v4679
    %v5120 = vpack.c.b16 %v4684, %v4682
    %v5121 = vpack.c.b16 %v4685, %v4683
    %v5122 = vpack.c.b16 %v4688, %v4686
    %v5123 = vpack.c.b16 %v4689, %v4687
    %v5124 = vpack.c.b16 %v4692, %v4690
    %v5125 = vpack.c.b16 %v4693, %v4691
    %v5126 = vpack.c.b16 %v4696, %v4694
    %v5127 = vpack.c.b16 %v4697, %v4695
    %v5128 = vpack.c.b16 %v4700, %v4698
    %v5129 = vpack.c.b16 %v4701, %v4699
    %v5130 = vpack.c.b16 %v4704, %v4702
    %v5131 = vpack.c.b16 %v4705, %v4703
    %v5132 = vpack.c.b16 %v4708, %v4706
    %v5133 = vpack.c.b16 %v4709, %v4707
    %v5134 = vpack.c.b16 %v4712, %v4710
    %v5135 = vpack.c.b16 %v4713, %v4711
    %v5136 = vpack.c.b16 %v4716, %v4714
    %v5137 = vpack.c.b16 %v4717, %v4715
    %v5138 = vpack.c.b16 %v4720, %v4718
    %v5139 = vpack.c.b16 %v4721, %v4719
    %v5140 = vpack.c.b16 %v4724, %v4722
    %v5141 = vpack.c.b16 %v4725, %v4723
    %v5142 = vpack.c.b16 %v4728, %v4726
    %v5143 = vpack.c.b16 %v4729, %v4727
    %v5144 = vpack.c.b16 %v4732, %v4730
    %v5145 = vpack.c.b16 %v4733, %v4731
    %v5146 = vpack.c.b16 %v4736, %v4734
    %v5147 = vpack.c.b16 %v4737, %v4735
    %v5148 = vpack.c.b16 %v4740, %v4738
    %v5149 = vpack.c.b16 %v4741, %v4739
    %v5150 = vpack.c.b16 %v4744, %v4742
    %v5151 = vpack.c.b16 %v4745, %v4743
    %v5152 = vpack.c.b16 %v4748, %v4746
    %v5153 = vpack.c.b16 %v4749, %v4747
    %v5154 = vpack.c.b16 %v4752, %v4750
    %v5155 = vpack.c.b16 %v4753, %v4751
    %v5156 = vpack.c.b16 %v4756, %v4754
    %v5157 = vpack.c.b16 %v4757, %v4755
    %v5158 = vpack.c.b16 %v4760, %v4758
    %v5159 = vpack.c.b16 %v4761, %v4759
    %v5160 = vpack.c.b16 %v4764, %v4762
    %v5161 = vpack.c.b16 %v4765, %v4763
    %v5162 = vpack.c.b16 %v4768, %v4766
    %v5163 = vpack.c.b16 %v4769, %v4767
    %v5164 = vpack.c.b16 %v4772, %v4770
    %v5165 = vpack.c.b16 %v4773, %v4771
    %v5166 = vpack.c.b16 %v4776, %v4774
    %v5167 = vpack.c.b16 %v4777, %v4775
    %v5168 = vpack.c.b16 %v4780, %v4778
    %v5169 = vpack.c.b16 %v4781, %v4779
    %v5170 = vpack.c.b16 %v4784, %v4782
    %v5171 = vpack.c.b16 %v4785, %v4783
    %v5172 = vpack.c.b16 %v4788, %v4786
    %v5173 = vpack.c.b16 %v4789, %v4787
    %v5174 = vpack.c.b16 %v4792, %v4790
    %v5175 = vpack.c.b16 %v4793, %v4791
    %v5176 = vpack.c.b16 %v4796, %v4794
    %v5177 = vpack.c.b16 %v4797, %v4795
    %v5178 = vpack.c.b16 %v4800, %v4798
    %v5179 = vpack.c.b16 %v4801, %v4799
    %v5180 = vpack.c.b16 %v4804, %v4802
    %v5181 = vpack.c.b16 %v4805, %v4803
    %v5182 = vpack.c.b16 %v4808, %v4806
    %v5183 = vpack.c.b16 %v4809, %v4807
    %v5184 = vpack.c.b16 %v4812, %v4810
    %v5185 = vpack.c.b16 %v4813, %v4811
    %v5186 = vpack.c.b16 %v4816, %v4814
    %v5187 = vpack.c.b16 %v4817, %v4815
    %v5188 = vpack.c.b16 %v4820, %v4818
    %v5189 = vpack.c.b16 %v4821, %v4819
    %v5190 = vpack.c.b16 %v4824, %v4822
    %v5191 = vpack.c.b16 %v4825, %v4823
    %v5192 = vpack.c.b16 %v4828, %v4826
    %v5193 = vpack.c.b16 %v4829, %v4827
    %v5194 = vpack.c.b16 %v4832, %v4830
    %v5195 = vpack.c.b16 %v4833, %v4831
    %v5196 = vpack.c.b16 %v4836, %v4834
    %v5197 = vpack.c.b16 %v4837, %v4835
    %v5198 = vpack.c.b16 %v4840, %v4838
    %v5199 = vpack.c.b16 %v4841, %v4839
    %v5200 = vpack.c.b16 %v4844, %v4842
    %v5201 = vpack.c.b16 %v4845, %v4843
    %v5202 = vpack.c.b16 %v4848, %v4846
    %v5203 = vpack.c.b16 %v4849, %v4847
    %v5204 = vpack.c.b16 %v4852, %v4850
    %v5205 = vpack.c.b16 %v4853, %v4851
    %v5206 = vpack.c.b16 %v4856, %v4854
    %v5207 = vpack.c.b16 %v4857, %v4855
    %v5208 = vpack.c.b16 %v4860, %v4858
    %v5209 = vpack.c.b16 %v4861, %v4859
    %v5210 = vpack.c.b16 %v4864, %v4862
    %v5211 = vpack.c.b16 %v4865, %v4863
    %v5212 = vpack.c.b16 %v4868, %v4866
    %v5213 = vpack.c.b16 %v4869, %v4867
    %v5214 = vpack.c.b16 %v4872, %v4870
    %v5215 = vpack.c.b16 %v4873, %v4871
    %v5216 = vpack.c.b16 %v4876, %v4874
    %v5217 = vpack.c.b16 %v4877, %v4875
    %v5218 = vpack.c.b16 %v4880, %v4878
    %v5219 = vpack.c.b16 %v4881, %v4879
    %v5220 = vpack.c.b16 %v4884, %v4882
    %v5221 = vpack.c.b16 %v4885, %v4883
    %v5222 = vpack.c.b16 %v4888, %v4886
    %v5223 = vpack.c.b16 %v4889, %v4887
    %v5224 = vpack.c.b16 %v4892, %v4890
    %v5225 = vpack.c.b16 %v4893, %v4891
    %v5226 = vpack.c.b16 %v4896, %v4894
    %v5227 = vpack.c.b16 %v4897, %v4895
    %v5228 = vpack.c.b16 %v4900, %v4898
    %v5229 = vpack.c.b16 %v4901, %v4899
    %v5230 = vpack.c.b16 %v4904, %v4902
    %v5231 = vpack.c.b16 %v4905, %v4903
    %v5232 = vpack.c.b16 %v4908, %v4906
    %v5233 = vpack.c.b16 %v4909, %v4907
    %v5234 = vpack.c.b16 %v4912, %v4910
    %v5235 = vpack.c.b16 %v4913, %v4911
    %v5236 = vpack.c.b16 %v4916, %v4914
    %v5237 = vpack.c.b16 %v4917, %v4915
    %v5238 = vpack.c.b16 %v4920, %v4918
    %v5239 = vpack.c.b16 %v4921, %v4919
    %v5240 = vpack.c.b16 %v4924, %v4922
    %v5241 = vpack.c.b16 %v4925, %v4923
    %v5242 = vpack.c.b16 %v4928, %v4926
    %v5243 = vpack.c.b16 %v4929, %v4927
    %v5244 = vpack.c.b16 %v4932, %v4930
    %v5245 = vpack.c.b16 %v4933, %v4931
    %v5246 = vpack.c.b16 %v4936, %v4934
    %v5247 = vpack.c.b16 %v4937, %v4935
    %v5248 = vpack.c.b16 %v4940, %v4938
    %v5249 = vpack.c.b16 %v4941, %v4939
    %v5250 = vpack.c.b16 %v4944, %v4942
    %v5251 = vpack.c.b16 %v4945, %v4943
    %v5252 = vpack.c.b16 %v4948, %v4946
    %v5253 = vpack.c.b16 %v4949, %v4947
    %v5254 = vpack.c.b16 %v4952, %v4950
    %v5255 = vpack.c.b16 %v4953, %v4951
    %v5256 = vpack.c.b16 %v4956, %v4954
    %v5257 = vpack.c.b16 %v4957, %v4955
    %v5258 = vpack.c.b16 %v4960, %v4958
    %v5259 = vpack.c.b16 %v4961, %v4959
    %v5260 = vpack.c.b16 %v4964, %v4962
    %v5261 = vpack.c.b16 %v4965, %v4963
    %v5262 = vpack.c.b16 %v4968, %v4966
    %v5263 = vpack.c.b16 %v4969, %v4967
    %v5264 = vpack.c.b16 %v4972, %v4970
    %v5265 = vpack.c.b16 %v4973, %v4971
    %v5266 = vpack.c.b16 %v4976, %v4974
    %v5267 = vpack.c.b16 %v4977, %v4975
    %v5268 = vpack.c.b16 %v4980, %v4978
    %v5269 = vpack.c.b16 %v4981, %v4979
    %v5270 = vpack.c.b16 %v4984, %v4982
    %v5271 = vpack.c.b16 %v4985, %v4983
    %v5272 = vpack.c.b16 %v4988, %v4986
    %v5273 = vpack.c.b16 %v4989, %v4987
    %v5274 = vpack.c.b16 %v4992, %v4990
    %v5275 = vpack.c.b16 %v4993, %v4991
    %v5276 = vpack.c.b16 %v4996, %v4994
    %v5277 = vpack.c.b16 %v4997, %v4995
    %v5278 = vpack.c.b16 %v5000, %v4998
    %v5279 = vpack.c.b16 %v5001, %v4999
    %v5280 = vpack.c.b16 %v5004, %v5002
    %v5281 = vpack.c.b16 %v5005, %v5003
    %v5282 = vpack.c.b16 %v5008, %v5006
    %v5283 = vpack.c.b16 %v5009, %v5007
    %v5284 = vpack.c.b16 %v5012, %v5010
    %v5285 = vpack.c.b16 %v5013, %v5011
    %v5286 = vpack.c.b16 %v5016, %v5014
    %v5287 = vpack.c.b16 %v5017, %v5015
    %v5288 = vpack.c.b16 %v5020, %v5018
    %v5289 = vpack.c.b16 %v5021, %v5019
    %v5290 = vpack.c.b16 %v5024, %v5022
    %v5291 = vpack.c.b16 %v5025, %v5023
    %v5292 = vpack.c.b16 %v5028, %v5026
    %v5293 = vpack.c.b16 %v5029, %v5027
    %v5294 = vpack.c.b16 %v5032, %v5030
    %v5295 = vpack.c.b16 %v5033, %v5031
    %v5296 = vpack.c.b16 %v5036, %v5034
    %v5297 = vpack.c.b16 %v5037, %v5035
    %v5298 = vpack.c.b16 %v5040, %v5038
    %v5299 = vpack.c.b16 %v5041, %v5039
    %v5300 = vpack.c.b16 %v5044, %v5042
    %v5301 = vpack.c.b16 %v5045, %v5043
    %5558 = vmatprep.subr.bf16.mxu0 %v5047
    %5559 = vmatpush1.bf16.msra.mxu0 %v5046
    %5560 = vmatprep.subr.bf16.mxu0 %v5049
    %5561 = vmatpush1.bf16.msra.mxu0 %v5048
    %5562 = vmatprep.subr.bf16.mxu0 %v5051
    %5563 = vmatpush1.bf16.msra.mxu0 %v5050
    %5564 = vmatprep.subr.bf16.mxu0 %v5053
    %5565 = vmatpush1.bf16.msra.mxu0 %v5052
    %5566 = vmatprep.subr.bf16.mxu0 %v5055
    %5567 = vmatpush1.bf16.msra.mxu0 %v5054
    %5568 = vmatprep.subr.bf16.mxu0 %v5057
    %5569 = vmatpush1.bf16.msra.mxu0 %v5056
    %5570 = vmatprep.subr.bf16.mxu0 %v5059
    %5571 = vmatpush1.bf16.msra.mxu0 %v5058
    %5572 = vmatprep.subr.bf16.mxu0 %v5061
    %5573 = vmatpush1.bf16.msra.mxu0 %v5060
    %5574 = vmatprep.subr.bf16.mxu0 %v5063
    %5575 = vmatpush1.bf16.msra.mxu0 %v5062
    %5576 = vmatprep.subr.bf16.mxu0 %v5065
    %5577 = vmatpush1.bf16.msra.mxu0 %v5064
    %5578 = vmatprep.subr.bf16.mxu0 %v5067
    %5579 = vmatpush1.bf16.msra.mxu0 %v5066
    %5580 = vmatprep.subr.bf16.mxu0 %v5069
    %5581 = vmatpush1.bf16.msra.mxu0 %v5068
    %5582 = vmatprep.subr.bf16.mxu0 %v5071
    %5583 = vmatpush1.bf16.msra.mxu0 %v5070
    %5584 = vmatprep.subr.bf16.mxu0 %v5073
    %5585 = vmatpush1.bf16.msra.mxu0 %v5072
    %5586 = vmatprep.subr.bf16.mxu0 %v5075
    %5587 = vmatpush1.bf16.msra.mxu0 %v5074
    %5588 = vmatprep.subr.bf16.mxu0 %v5077
    %5589 = vmatpush1.bf16.msra.mxu0 %v5076
    %5590 = vmatprep.mubr.bf16.mxu0 %v4247
    %5591 = vmatmul.mubr.bf16.gmra.mrb[0].mxu0 %v4246
    %v5592 = vpop.f32.mrb[0].mxu0
    %v5593 = vadd.f32 %v4215, %v5592
    %v5594 = vpop.f32.mrb[0].mxu0
    %v5595 = vadd.f32 %v4219, %v5594
    %v5596 = vpop.f32.mrb[0].mxu0
    %v5597 = vpop.f32.mrb[0].mxu0
    %5598 = vdwg.mxu0
    %5599 = vmatprep.subr.bf16.mxu0 %v5079
    %5600 = vmatpush1.bf16.msra.mxu0 %v5078
    %5601 = vmatprep.subr.bf16.mxu0 %v5081
    %5602 = vmatpush1.bf16.msra.mxu0 %v5080
    %5603 = vmatprep.subr.bf16.mxu0 %v5083
    %5604 = vmatpush1.bf16.msra.mxu0 %v5082
    %5605 = vmatprep.subr.bf16.mxu0 %v5085
    %5606 = vmatpush1.bf16.msra.mxu0 %v5084
    %5607 = vmatprep.subr.bf16.mxu0 %v5087
    %5608 = vmatpush1.bf16.msra.mxu0 %v5086
    %5609 = vmatprep.subr.bf16.mxu0 %v5089
    %5610 = vmatpush1.bf16.msra.mxu0 %v5088
    %5611 = vmatprep.subr.bf16.mxu0 %v5091
    %5612 = vmatpush1.bf16.msra.mxu0 %v5090
    %5613 = vmatprep.subr.bf16.mxu0 %v5093
    %5614 = vmatpush1.bf16.msra.mxu0 %v5092
    %5615 = vmatprep.subr.bf16.mxu0 %v5095
    %5616 = vmatpush1.bf16.msra.mxu0 %v5094
    %5617 = vmatprep.subr.bf16.mxu0 %v5097
    %5618 = vmatpush1.bf16.msra.mxu0 %v5096
    %5619 = vmatprep.subr.bf16.mxu0 %v5099
    %5620 = vmatpush1.bf16.msra.mxu0 %v5098
    %5621 = vmatprep.subr.bf16.mxu0 %v5101
    %5622 = vmatpush1.bf16.msra.mxu0 %v5100
    %5623 = vmatprep.subr.bf16.mxu0 %v5103
    %5624 = vmatpush1.bf16.msra.mxu0 %v5102
    %5625 = vmatprep.subr.bf16.mxu0 %v5105
    %5626 = vmatpush1.bf16.msra.mxu0 %v5104
    %5627 = vmatprep.subr.bf16.mxu0 %v5107
    %5628 = vmatpush1.bf16.msra.mxu0 %v5106
    %5629 = vmatprep.subr.bf16.mxu0 %v5109
    %5630 = vmatpush1.bf16.msra.mxu0 %v5108
    %5631 = vmatprep.mubr.bf16.mxu0 %v4249
    %5632 = vmatmul.mubr.bf16.gmra.mrb[0].mxu0 %v4248
    %v5633 = vpop.f32.mrb[0].mxu0
    %v5634 = vadd.f32 %v5593, %v5633
    %v5635 = vpop.f32.mrb[0].mxu0
    %v5636 = vadd.f32 %v5595, %v5635
    %v5637 = vpop.f32.mrb[0].mxu0
    %v5638 = vpop.f32.mrb[0].mxu0
    %5639 = vdwg.mxu0
    %5640 = vmatprep.subr.bf16.mxu0 %v5111
    %5641 = vmatpush1.bf16.msra.mxu0 %v5110
    %5642 = vmatprep.subr.bf16.mxu0 %v5113
    %5643 = vmatpush1.bf16.msra.mxu0 %v5112
    %5644 = vmatprep.subr.bf16.mxu0 %v5115
    %5645 = vmatpush1.bf16.msra.mxu0 %v5114
    %5646 = vmatprep.subr.bf16.mxu0 %v5117
    %5647 = vmatpush1.bf16.msra.mxu0 %v5116
    %5648 = vmatprep.subr.bf16.mxu0 %v5119
    %5649 = vmatpush1.bf16.msra.mxu0 %v5118
    %5650 = vmatprep.subr.bf16.mxu0 %v5121
    %5651 = vmatpush1.bf16.msra.mxu0 %v5120
    %5652 = vmatprep.subr.bf16.mxu0 %v5123
    %5653 = vmatpush1.bf16.msra.mxu0 %v5122
    %5654 = vmatprep.subr.bf16.mxu0 %v5125
    %5655 = vmatpush1.bf16.msra.mxu0 %v5124
    %5656 = vmatprep.subr.bf16.mxu0 %v5127
    %5657 = vmatpush1.bf16.msra.mxu0 %v5126
    %5658 = vmatprep.subr.bf16.mxu0 %v5129
    %5659 = vmatpush1.bf16.msra.mxu0 %v5128
    %5660 = vmatprep.subr.bf16.mxu0 %v5131
    %5661 = vmatpush1.bf16.msra.mxu0 %v5130
    %5662 = vmatprep.subr.bf16.mxu0 %v5133
    %5663 = vmatpush1.bf16.msra.mxu0 %v5132
    %5664 = vmatprep.subr.bf16.mxu0 %v5135
    %5665 = vmatpush1.bf16.msra.mxu0 %v5134
    %5666 = vmatprep.subr.bf16.mxu0 %v5137
    %5667 = vmatpush1.bf16.msra.mxu0 %v5136
    %5668 = vmatprep.subr.bf16.mxu0 %v5139
    %5669 = vmatpush1.bf16.msra.mxu0 %v5138
    %5670 = vmatprep.subr.bf16.mxu0 %v5141
    %5671 = vmatpush1.bf16.msra.mxu0 %v5140
    %5672 = vmatprep.mubr.bf16.mxu0 %v4251
    %5673 = vmatmul.mubr.bf16.gmra.mrb[0].mxu0 %v4250
    %v5674 = vpop.f32.mrb[0].mxu0
    %v5675 = vadd.f32 %v5634, %v5674
    %v5676 = vpop.f32.mrb[0].mxu0
    %v5677 = vadd.f32 %v5636, %v5676
    %v5678 = vpop.f32.mrb[0].mxu0
    %v5679 = vpop.f32.mrb[0].mxu0
    %5680 = vdwg.mxu0
    %5681 = vmatprep.subr.bf16.mxu0 %v5143
    %5682 = vmatpush1.bf16.msra.mxu0 %v5142
    %5683 = vmatprep.subr.bf16.mxu0 %v5145
    %5684 = vmatpush1.bf16.msra.mxu0 %v5144
    %5685 = vmatprep.subr.bf16.mxu0 %v5147
    %5686 = vmatpush1.bf16.msra.mxu0 %v5146
    %5687 = vmatprep.subr.bf16.mxu0 %v5149
    %5688 = vmatpush1.bf16.msra.mxu0 %v5148
    %5689 = vmatprep.subr.bf16.mxu0 %v5151
    %5690 = vmatpush1.bf16.msra.mxu0 %v5150
    %5691 = vmatprep.subr.bf16.mxu0 %v5153
    %5692 = vmatpush1.bf16.msra.mxu0 %v5152
    %5693 = vmatprep.subr.bf16.mxu0 %v5155
    %5694 = vmatpush1.bf16.msra.mxu0 %v5154
    %5695 = vmatprep.subr.bf16.mxu0 %v5157
    %5696 = vmatpush1.bf16.msra.mxu0 %v5156
    %5697 = vmatprep.subr.bf16.mxu0 %v5159
    %5698 = vmatpush1.bf16.msra.mxu0 %v5158
    %5699 = vmatprep.subr.bf16.mxu0 %v5161
    %5700 = vmatpush1.bf16.msra.mxu0 %v5160
    %5701 = vmatprep.subr.bf16.mxu0 %v5163
    %5702 = vmatpush1.bf16.msra.mxu0 %v5162
    %5703 = vmatprep.subr.bf16.mxu0 %v5165
    %5704 = vmatpush1.bf16.msra.mxu0 %v5164
    %5705 = vmatprep.subr.bf16.mxu0 %v5167
    %5706 = vmatpush1.bf16.msra.mxu0 %v5166
    %5707 = vmatprep.subr.bf16.mxu0 %v5169
    %5708 = vmatpush1.bf16.msra.mxu0 %v5168
    %5709 = vmatprep.subr.bf16.mxu0 %v5171
    %5710 = vmatpush1.bf16.msra.mxu0 %v5170
    %5711 = vmatprep.subr.bf16.mxu0 %v5173
    %5712 = vmatpush1.bf16.msra.mxu0 %v5172
    %5713 = vmatprep.mubr.bf16.mxu0 %v4253
    %5714 = vmatmul.mubr.bf16.gmra.mrb[0].mxu0 %v4252
    %v5715 = vpop.f32.mrb[0].mxu0
    %v5716 = vadd.f32 %v5675, %v5715
    %v5717 = vpop.f32.mrb[0].mxu0
    %v5718 = vadd.f32 %v5677, %v5717
    %v5719 = vpop.f32.mrb[0].mxu0
    %v5720 = vpop.f32.mrb[0].mxu0
    %5721 = vdwg.mxu0
    %5722 = vmatprep.subr.bf16.mxu0 %v5175
    %5723 = vmatpush1.bf16.msra.mxu0 %v5174
    %5724 = vmatprep.subr.bf16.mxu0 %v5177
    %5725 = vmatpush1.bf16.msra.mxu0 %v5176
    %5726 = vmatprep.subr.bf16.mxu0 %v5179
    %5727 = vmatpush1.bf16.msra.mxu0 %v5178
    %5728 = vmatprep.subr.bf16.mxu0 %v5181
    %5729 = vmatpush1.bf16.msra.mxu0 %v5180
    %5730 = vmatprep.subr.bf16.mxu0 %v5183
    %5731 = vmatpush1.bf16.msra.mxu0 %v5182
    %5732 = vmatprep.subr.bf16.mxu0 %v5185
    %5733 = vmatpush1.bf16.msra.mxu0 %v5184
    %5734 = vmatprep.subr.bf16.mxu0 %v5187
    %5735 = vmatpush1.bf16.msra.mxu0 %v5186
    %5736 = vmatprep.subr.bf16.mxu0 %v5189
    %5737 = vmatpush1.bf16.msra.mxu0 %v5188
    %5738 = vmatprep.subr.bf16.mxu0 %v5191
    %5739 = vmatpush1.bf16.msra.mxu0 %v5190
    %5740 = vmatprep.subr.bf16.mxu0 %v5193
    %5741 = vmatpush1.bf16.msra.mxu0 %v5192
    %5742 = vmatprep.subr.bf16.mxu0 %v5195
    %5743 = vmatpush1.bf16.msra.mxu0 %v5194
    %5744 = vmatprep.subr.bf16.mxu0 %v5197
    %5745 = vmatpush1.bf16.msra.mxu0 %v5196
    %5746 = vmatprep.subr.bf16.mxu0 %v5199
    %5747 = vmatpush1.bf16.msra.mxu0 %v5198
    %5748 = vmatprep.subr.bf16.mxu0 %v5201
    %5749 = vmatpush1.bf16.msra.mxu0 %v5200
    %5750 = vmatprep.subr.bf16.mxu0 %v5203
    %5751 = vmatpush1.bf16.msra.mxu0 %v5202
    %5752 = vmatprep.subr.bf16.mxu0 %v5205
    %5753 = vmatpush1.bf16.msra.mxu0 %v5204
    %5754 = vmatprep.mubr.bf16.mxu0 %v4255
    %5755 = vmatmul.mubr.bf16.gmra.mrb[0].mxu0 %v4254
    %v5756 = vpop.f32.mrb[0].mxu0
    %v5757 = vadd.f32 %v5716, %v5756
    %v5758 = vpop.f32.mrb[0].mxu0
    %v5759 = vadd.f32 %v5718, %v5758
    %v5760 = vpop.f32.mrb[0].mxu0
    %v5761 = vpop.f32.mrb[0].mxu0
    %5762 = vdwg.mxu0
    %5763 = vmatprep.subr.bf16.mxu0 %v5207
    %5764 = vmatpush1.bf16.msra.mxu0 %v5206
    %5765 = vmatprep.subr.bf16.mxu0 %v5209
    %5766 = vmatpush1.bf16.msra.mxu0 %v5208
    %5767 = vmatprep.subr.bf16.mxu0 %v5211
    %5768 = vmatpush1.bf16.msra.mxu0 %v5210
    %5769 = vmatprep.subr.bf16.mxu0 %v5213
    %5770 = vmatpush1.bf16.msra.mxu0 %v5212
    %5771 = vmatprep.subr.bf16.mxu0 %v5215
    %5772 = vmatpush1.bf16.msra.mxu0 %v5214
    %5773 = vmatprep.subr.bf16.mxu0 %v5217
    %5774 = vmatpush1.bf16.msra.mxu0 %v5216
    %5775 = vmatprep.subr.bf16.mxu0 %v5219
    %5776 = vmatpush1.bf16.msra.mxu0 %v5218
    %5777 = vmatprep.subr.bf16.mxu0 %v5221
    %5778 = vmatpush1.bf16.msra.mxu0 %v5220
    %5779 = vmatprep.subr.bf16.mxu0 %v5223
    %5780 = vmatpush1.bf16.msra.mxu0 %v5222
    %5781 = vmatprep.subr.bf16.mxu0 %v5225
    %5782 = vmatpush1.bf16.msra.mxu0 %v5224
    %5783 = vmatprep.subr.bf16.mxu0 %v5227
    %5784 = vmatpush1.bf16.msra.mxu0 %v5226
    %5785 = vmatprep.subr.bf16.mxu0 %v5229
    %5786 = vmatpush1.bf16.msra.mxu0 %v5228
    %5787 = vmatprep.subr.bf16.mxu0 %v5231
    %5788 = vmatpush1.bf16.msra.mxu0 %v5230
    %5789 = vmatprep.subr.bf16.mxu0 %v5233
    %5790 = vmatpush1.bf16.msra.mxu0 %v5232
    %5791 = vmatprep.subr.bf16.mxu0 %v5235
    %5792 = vmatpush1.bf16.msra.mxu0 %v5234
    %5793 = vmatprep.subr.bf16.mxu0 %v5237
    %5794 = vmatpush1.bf16.msra.mxu0 %v5236
    %5795 = vmatprep.mubr.bf16.mxu0 %v4257
    %5796 = vmatmul.mubr.bf16.gmra.mrb[0].mxu0 %v4256
    %v5797 = vpop.f32.mrb[0].mxu0
    %v5798 = vadd.f32 %v5757, %v5797
    %v5799 = vpop.f32.mrb[0].mxu0
    %v5800 = vadd.f32 %v5759, %v5799
    %v5801 = vpop.f32.mrb[0].mxu0
    %v5802 = vpop.f32.mrb[0].mxu0
    %5803 = vdwg.mxu0
    %5804 = vmatprep.subr.bf16.mxu0 %v5239
    %5805 = vmatpush1.bf16.msra.mxu0 %v5238
    %5806 = vmatprep.subr.bf16.mxu0 %v5241
    %5807 = vmatpush1.bf16.msra.mxu0 %v5240
    %5808 = vmatprep.subr.bf16.mxu0 %v5243
    %5809 = vmatpush1.bf16.msra.mxu0 %v5242
    %5810 = vmatprep.subr.bf16.mxu0 %v5245
    %5811 = vmatpush1.bf16.msra.mxu0 %v5244
    %5812 = vmatprep.subr.bf16.mxu0 %v5247
    %5813 = vmatpush1.bf16.msra.mxu0 %v5246
    %5814 = vmatprep.subr.bf16.mxu0 %v5249
    %5815 = vmatpush1.bf16.msra.mxu0 %v5248
    %5816 = vmatprep.subr.bf16.mxu0 %v5251
    %5817 = vmatpush1.bf16.msra.mxu0 %v5250
    %5818 = vmatprep.subr.bf16.mxu0 %v5253
    %5819 = vmatpush1.bf16.msra.mxu0 %v5252
    %5820 = vmatprep.subr.bf16.mxu0 %v5255
    %5821 = vmatpush1.bf16.msra.mxu0 %v5254
    %5822 = vmatprep.subr.bf16.mxu0 %v5257
    %5823 = vmatpush1.bf16.msra.mxu0 %v5256
    %5824 = vmatprep.subr.bf16.mxu0 %v5259
    %5825 = vmatpush1.bf16.msra.mxu0 %v5258
    %5826 = vmatprep.subr.bf16.mxu0 %v5261
    %5827 = vmatpush1.bf16.msra.mxu0 %v5260
    %5828 = vmatprep.subr.bf16.mxu0 %v5263
    %5829 = vmatpush1.bf16.msra.mxu0 %v5262
    %5830 = vmatprep.subr.bf16.mxu0 %v5265
    %5831 = vmatpush1.bf16.msra.mxu0 %v5264
    %5832 = vmatprep.subr.bf16.mxu0 %v5267
    %5833 = vmatpush1.bf16.msra.mxu0 %v5266
    %5834 = vmatprep.subr.bf16.mxu0 %v5269
    %5835 = vmatpush1.bf16.msra.mxu0 %v5268
    %5836 = vmatprep.mubr.bf16.mxu0 %v4259
    %5837 = vmatmul.mubr.bf16.gmra.mrb[0].mxu0 %v4258
    %v5838 = vpop.f32.mrb[0].mxu0
    %v5839 = vadd.f32 %v5798, %v5838
    %v5840 = vpop.f32.mrb[0].mxu0
    %v5841 = vadd.f32 %v5800, %v5840
    %v5842 = vpop.f32.mrb[0].mxu0
    %v5843 = vpop.f32.mrb[0].mxu0
    %5844 = vdwg.mxu0
    %5845 = vmatprep.subr.bf16.mxu0 %v5271
    %5846 = vmatpush1.bf16.msra.mxu0 %v5270
    %5847 = vmatprep.subr.bf16.mxu0 %v5273
    %5848 = vmatpush1.bf16.msra.mxu0 %v5272
    %5849 = vmatprep.subr.bf16.mxu0 %v5275
    %5850 = vmatpush1.bf16.msra.mxu0 %v5274
    %5851 = vmatprep.subr.bf16.mxu0 %v5277
    %5852 = vmatpush1.bf16.msra.mxu0 %v5276
    %5853 = vmatprep.subr.bf16.mxu0 %v5279
    %5854 = vmatpush1.bf16.msra.mxu0 %v5278
    %5855 = vmatprep.subr.bf16.mxu0 %v5281
    %5856 = vmatpush1.bf16.msra.mxu0 %v5280
    %5857 = vmatprep.subr.bf16.mxu0 %v5283
    %5858 = vmatpush1.bf16.msra.mxu0 %v5282
    %5859 = vmatprep.subr.bf16.mxu0 %v5285
    %5860 = vmatpush1.bf16.msra.mxu0 %v5284
    %5861 = vmatprep.subr.bf16.mxu0 %v5287
    %5862 = vmatpush1.bf16.msra.mxu0 %v5286
    %5863 = vmatprep.subr.bf16.mxu0 %v5289
    %5864 = vmatpush1.bf16.msra.mxu0 %v5288
    %5865 = vmatprep.subr.bf16.mxu0 %v5291
    %5866 = vmatpush1.bf16.msra.mxu0 %v5290
    %5867 = vmatprep.subr.bf16.mxu0 %v5293
    %5868 = vmatpush1.bf16.msra.mxu0 %v5292
    %5869 = vmatprep.subr.bf16.mxu0 %v5295
    %5870 = vmatpush1.bf16.msra.mxu0 %v5294
    %5871 = vmatprep.subr.bf16.mxu0 %v5297
    %5872 = vmatpush1.bf16.msra.mxu0 %v5296
    %5873 = vmatprep.subr.bf16.mxu0 %v5299
    %5874 = vmatpush1.bf16.msra.mxu0 %v5298
    %5875 = vmatprep.subr.bf16.mxu0 %v5301
    %5876 = vmatpush1.bf16.msra.mxu0 %v5300
    %5877 = vmatprep.mubr.bf16.mxu0 %v4261
    %5878 = vmatmul.mubr.bf16.gmra.mrb[0].mxu0 %v4260
    %v5879 = vpop.f32.mrb[0].mxu0
    %v5880 = vadd.f32 %v5839, %v5879
    %v5881 = vpop.f32.mrb[0].mxu0
    %v5882 = vadd.f32 %v5841, %v5881
    %v5883 = vpop.f32.mrb[0].mxu0
    %v5884 = vpop.f32.mrb[0].mxu0
    %5885 = vdwg.mxu0
    %v5886 = vmax.f32 %v5880, 0.0
    %v5887 = vmax.f32 %v5882, 0.0
    %v5888 = vpack.c.bf16 %v5886, %v5886
    %v5889 = vpack.c.bf16 %v5887, %v5887
    %v5890 = vld [vmem:[#allocation3] sm:$0xff]
    %v5891 = vld [vmem:[#allocation12 + $0x80] sm:$0xf]
    %v5892 = vld [vmem:[#allocation12 + $0x84] sm:$0xf]
    %v5893 = vld [vmem:[#allocation12 + $0x88] sm:$0xf]
    %v5894 = vld [vmem:[#allocation12 + $0x8c] sm:$0xf]
    %v5895 = vld [vmem:[#allocation12 + $0x90] sm:$0xf]
    %v5896 = vld [vmem:[#allocation12 + $0x94] sm:$0xf]
    %v5897 = vld [vmem:[#allocation12 + $0x98] sm:$0xf]
    %v5898 = vld [vmem:[#allocation12 + $0x9c] sm:$0xf]
    %v5899 = vld [vmem:[#allocation12 + $0xa0] sm:$0xf]
    %v5900 = vld [vmem:[#allocation12 + $0xa4] sm:$0xf]
    %v5901 = vld [vmem:[#allocation12 + $0xa8] sm:$0xf]
    %v5902 = vld [vmem:[#allocation12 + $0xac] sm:$0xf]
    %v5903 = vld [vmem:[#allocation12 + $0xb0] sm:$0xf]
    %v5904 = vld [vmem:[#allocation12 + $0xb4] sm:$0xf]
    %v5905 = vld [vmem:[#allocation12 + $0xb8] sm:$0xf]
    %v5906 = vld [vmem:[#allocation12 + $0xbc] sm:$0xf]
    %v5907 = vld [vmem:[#allocation12 + $0xc0] sm:$0xf]
    %v5908 = vld [vmem:[#allocation12 + $0xc4] sm:$0xf]
    %v5909 = vld [vmem:[#allocation12 + $0xc8] sm:$0xf]
    %v5910 = vld [vmem:[#allocation12 + $0xcc] sm:$0xf]
    %v5911 = vld [vmem:[#allocation12 + $0xd0] sm:$0xf]
    %v5912 = vld [vmem:[#allocation12 + $0xd4] sm:$0xf]
    %v5913 = vld [vmem:[#allocation12 + $0xd8] sm:$0xf]
    %v5914 = vld [vmem:[#allocation12 + $0xdc] sm:$0xf]
    %v5915 = vld [vmem:[#allocation12 + $0xe0] sm:$0xf]
    %v5916 = vld [vmem:[#allocation12 + $0xe4] sm:$0xf]
    %v5917 = vld [vmem:[#allocation12 + $0xe8] sm:$0xf]
    %v5918 = vld [vmem:[#allocation12 + $0xec] sm:$0xf]
    %v5919 = vld [vmem:[#allocation12 + $0xf0] sm:$0xf]
    %v5920 = vld [vmem:[#allocation12 + $0xf4] sm:$0xf]
    %v5921 = vld [vmem:[#allocation12 + $0xf8] sm:$0xf]
    %v5922 = vld [vmem:[#allocation12 + $0xfc] sm:$0xf]
    %v5955 = vunpack.c.l.b16 %v5891
    %v5956 = vunpack.c.l.b16 %v5892
    %v5957 = vunpack.c.l.b16 %v5893
    %v5958 = vunpack.c.l.b16 %v5894
    %v5959 = vunpack.c.l.b16 %v5895
    %v5960 = vunpack.c.l.b16 %v5896
    %v5961 = vunpack.c.l.b16 %v5897
    %v5962 = vunpack.c.l.b16 %v5898
    %v5963 = vunpack.c.l.b16 %v5899
    %v5964 = vunpack.c.l.b16 %v5900
    %v5965 = vunpack.c.l.b16 %v5901
    %v5966 = vunpack.c.l.b16 %v5902
    %v5967 = vunpack.c.l.b16 %v5903
    %v5968 = vunpack.c.l.b16 %v5904
    %v5969 = vunpack.c.l.b16 %v5905
    %v5970 = vunpack.c.l.b16 %v5906
    %v5971 = vunpack.c.l.b16 %v5907
    %v5972 = vunpack.c.l.b16 %v5908
    %v5973 = vunpack.c.l.b16 %v5909
    %v5974 = vunpack.c.l.b16 %v5910
    %v5975 = vunpack.c.l.b16 %v5911
    %v5976 = vunpack.c.l.b16 %v5912
    %v5977 = vunpack.c.l.b16 %v5913
    %v5978 = vunpack.c.l.b16 %v5914
    %v5979 = vunpack.c.l.b16 %v5915
    %v5980 = vunpack.c.l.b16 %v5916
    %v5981 = vunpack.c.l.b16 %v5917
    %v5982 = vunpack.c.l.b16 %v5918
    %v5983 = vunpack.c.l.b16 %v5919
    %v5984 = vunpack.c.l.b16 %v5920
    %v5985 = vunpack.c.l.b16 %v5921
    %v5986 = vunpack.c.l.b16 %v5922
    %v5987 = vpack.c.b16 %v5956, %v5955
    %v5988 = vpack.c.b16 %v5958, %v5957
    %v5989 = vpack.c.b16 %v5960, %v5959
    %v5990 = vpack.c.b16 %v5962, %v5961
    %v5991 = vpack.c.b16 %v5964, %v5963
    %v5992 = vpack.c.b16 %v5966, %v5965
    %v5993 = vpack.c.b16 %v5968, %v5967
    %v5994 = vpack.c.b16 %v5970, %v5969
    %v5995 = vpack.c.b16 %v5972, %v5971
    %v5996 = vpack.c.b16 %v5974, %v5973
    %v5997 = vpack.c.b16 %v5976, %v5975
    %v5998 = vpack.c.b16 %v5978, %v5977
    %v5999 = vpack.c.b16 %v5980, %v5979
    %v6000 = vpack.c.b16 %v5982, %v5981
    %v6001 = vpack.c.b16 %v5984, %v5983
    %v6002 = vpack.c.b16 %v5986, %v5985
    %6019 = vmatprep.subr.bf16.mxu0 0
    %6020 = vmatpush1.bf16.msra.mxu0 %v5987
    %6021 = vmatprep.subr.bf16.mxu0 0
    %6022 = vmatpush1.bf16.msra.mxu0 %v5988
    %6023 = vmatprep.subr.bf16.mxu0 0
    %6024 = vmatpush1.bf16.msra.mxu0 %v5989
    %6025 = vmatprep.subr.bf16.mxu0 0
    %6026 = vmatpush1.bf16.msra.mxu0 %v5990
    %6027 = vmatprep.subr.bf16.mxu0 0
    %6028 = vmatpush1.bf16.msra.mxu0 %v5991
    %6029 = vmatprep.subr.bf16.mxu0 0
    %6030 = vmatpush1.bf16.msra.mxu0 %v5992
    %6031 = vmatprep.subr.bf16.mxu0 0
    %6032 = vmatpush1.bf16.msra.mxu0 %v5993
    %6033 = vmatprep.subr.bf16.mxu0 0
    %6034 = vmatpush1.bf16.msra.mxu0 %v5994
    %6035 = vmatprep.subr.bf16.mxu0 0
    %6036 = vmatpush1.bf16.msra.mxu0 %v5995
    %6037 = vmatprep.subr.bf16.mxu0 0
    %6038 = vmatpush1.bf16.msra.mxu0 %v5996
    %6039 = vmatprep.subr.bf16.mxu0 0
    %6040 = vmatpush1.bf16.msra.mxu0 %v5997
    %6041 = vmatprep.subr.bf16.mxu0 0
    %6042 = vmatpush1.bf16.msra.mxu0 %v5998
    %6043 = vmatprep.subr.bf16.mxu0 0
    %6044 = vmatpush1.bf16.msra.mxu0 %v5999
    %6045 = vmatprep.subr.bf16.mxu0 0
    %6046 = vmatpush1.bf16.msra.mxu0 %v6000
    %6047 = vmatprep.subr.bf16.mxu0 0
    %6048 = vmatpush1.bf16.msra.mxu0 %v6001
    %6049 = vmatprep.subr.bf16.mxu0 0
    %6050 = vmatpush1.bf16.msra.mxu0 %v6002
    %6051 = vmatprep.mubr.bf16.mxu0 %v5889
    %6052 = vmatmul.mubr.bf16.gmra.mrb[0].mxu0 %v5888
    %v6053 = vpop.f32.mrb[0].mxu0
    %v6054 = vadd.f32 0.0, %v6053
    %v6055 = vpop.f32.mrb[0].mxu0
    %v6056 = vpop.f32.mrb[0].mxu0
    %v6057 = vpop.f32.mrb[0].mxu0
    %6058 = vdwg.mxu0
    %v6059 = vadd.f32 %v5890, %v6054
    %6060 = vst [vmem:[#allocation3] sm:$0xff] %v6059
    %v6061 = vld [vmem:[#allocation2] sm:$0xff]
    %v6062 = vld [vmem:[#allocation2 + $0x8] sm:$0xff]
    %v6063 = vld [vmem:[#allocation2 + $0x10] sm:$0xff]
    %v6064 = vld [vmem:[#allocation2 + $0x18] sm:$0xff]
    %v6065 = vld [vmem:[#allocation2 + $0x20] sm:$0xff]
    %v6066 = vld [vmem:[#allocation2 + $0x28] sm:$0xff]
    %v6067 = vld [vmem:[#allocation2 + $0x30] sm:$0xff]
    %v6068 = vld [vmem:[#allocation2 + $0x38] sm:$0xff]
    %v6069 = vld [vmem:[#allocation9 + $0x10] sm:$0xff]
    %v6070 = vld [vmem:[#allocation9 + $0x30] sm:$0xff]
    %v6071 = vld [vmem:[#allocation9 + $0x50] sm:$0xff]
    %v6072 = vld [vmem:[#allocation9 + $0x70] sm:$0xff]
    %v6073 = vld [vmem:[#allocation9 + $0x90] sm:$0xff]
    %v6074 = vld [vmem:[#allocation9 + $0xb0] sm:$0xff]
    %v6075 = vld [vmem:[#allocation9 + $0xd0] sm:$0xff]
    %v6076 = vld [vmem:[#allocation9 + $0xf0] sm:$0xff]
    %v6077 = vld [vmem:[#allocation9 + $0x110] sm:$0xff]
    %v6078 = vld [vmem:[#allocation9 + $0x130] sm:$0xff]
    %v6079 = vld [vmem:[#allocation9 + $0x150] sm:$0xff]
    %v6080 = vld [vmem:[#allocation9 + $0x170] sm:$0xff]
    %v6081 = vld [vmem:[#allocation9 + $0x190] sm:$0xff]
    %v6082 = vld [vmem:[#allocation9 + $0x1b0] sm:$0xff]
    %v6083 = vld [vmem:[#allocation9 + $0x1d0] sm:$0xff]
    %v6084 = vld [vmem:[#allocation9 + $0x1f0] sm:$0xff]
    %v6085 = vld [vmem:[#allocation9 + $0x210] sm:$0xff]
    %v6086 = vld [vmem:[#allocation9 + $0x230] sm:$0xff]
    %v6087 = vld [vmem:[#allocation9 + $0x250] sm:$0xff]
    %v6088 = vld [vmem:[#allocation9 + $0x270] sm:$0xff]
    %v6089 = vld [vmem:[#allocation9 + $0x290] sm:$0xff]
    %v6090 = vld [vmem:[#allocation9 + $0x2b0] sm:$0xff]
    %v6091 = vld [vmem:[#allocation9 + $0x2d0] sm:$0xff]
    %v6092 = vld [vmem:[#allocation9 + $0x2f0] sm:$0xff]
    %v6093 = vld [vmem:[#allocation9 + $0x310] sm:$0xff]
    %v6094 = vld [vmem:[#allocation9 + $0x330] sm:$0xff]
    %v6095 = vld [vmem:[#allocation9 + $0x350] sm:$0xff]
    %v6096 = vld [vmem:[#allocation9 + $0x370] sm:$0xff]
    %v6097 = vld [vmem:[#allocation9 + $0x390] sm:$0xff]
    %v6098 = vld [vmem:[#allocation9 + $0x3b0] sm:$0xff]
    %v6099 = vld [vmem:[#allocation9 + $0x3d0] sm:$0xff]
    %v6100 = vld [vmem:[#allocation9 + $0x3f0] sm:$0xff]
    %v6101 = vld [vmem:[#allocation9 + $0x410] sm:$0xff]
    %v6102 = vld [vmem:[#allocation9 + $0x430] sm:$0xff]
    %v6103 = vld [vmem:[#allocation9 + $0x450] sm:$0xff]
    %v6104 = vld [vmem:[#allocation9 + $0x470] sm:$0xff]
    %v6105 = vld [vmem:[#allocation9 + $0x490] sm:$0xff]
    %v6106 = vld [vmem:[#allocation9 + $0x4b0] sm:$0xff]
    %v6107 = vld [vmem:[#allocation9 + $0x4d0] sm:$0xff]
    %v6108 = vld [vmem:[#allocation9 + $0x4f0] sm:$0xff]
    %v6109 = vld [vmem:[#allocation9 + $0x510] sm:$0xff]
    %v6110 = vld [vmem:[#allocation9 + $0x530] sm:$0xff]
    %v6111 = vld [vmem:[#allocation9 + $0x550] sm:$0xff]
    %v6112 = vld [vmem:[#allocation9 + $0x570] sm:$0xff]
    %v6113 = vld [vmem:[#allocation9 + $0x590] sm:$0xff]
    %v6114 = vld [vmem:[#allocation9 + $0x5b0] sm:$0xff]
    %v6115 = vld [vmem:[#allocation9 + $0x5d0] sm:$0xff]
    %v6116 = vld [vmem:[#allocation9 + $0x5f0] sm:$0xff]
    %v6117 = vld [vmem:[#allocation9 + $0x610] sm:$0xff]
    %v6118 = vld [vmem:[#allocation9 + $0x630] sm:$0xff]
    %v6119 = vld [vmem:[#allocation9 + $0x650] sm:$0xff]
    %v6120 = vld [vmem:[#allocation9 + $0x670] sm:$0xff]
    %v6121 = vld [vmem:[#allocation9 + $0x690] sm:$0xff]
    %v6122 = vld [vmem:[#allocation9 + $0x6b0] sm:$0xff]
    %v6123 = vld [vmem:[#allocation9 + $0x6d0] sm:$0xff]
    %v6124 = vld [vmem:[#allocation9 + $0x6f0] sm:$0xff]
    %v6125 = vld [vmem:[#allocation9 + $0x710] sm:$0xff]
    %v6126 = vld [vmem:[#allocation9 + $0x730] sm:$0xff]
    %v6127 = vld [vmem:[#allocation9 + $0x750] sm:$0xff]
    %v6128 = vld [vmem:[#allocation9 + $0x770] sm:$0xff]
    %v6129 = vld [vmem:[#allocation9 + $0x790] sm:$0xff]
    %v6130 = vld [vmem:[#allocation9 + $0x7b0] sm:$0xff]
    %v6131 = vld [vmem:[#allocation9 + $0x7d0] sm:$0xff]
    %v6132 = vld [vmem:[#allocation9 + $0x7f0] sm:$0xff]
    %v6133 = vld [vmem:[#allocation9 + $0x810] sm:$0xff]
    %v6134 = vld [vmem:[#allocation9 + $0x830] sm:$0xff]
    %v6135 = vld [vmem:[#allocation9 + $0x850] sm:$0xff]
    %v6136 = vld [vmem:[#allocation9 + $0x870] sm:$0xff]
    %v6137 = vld [vmem:[#allocation9 + $0x890] sm:$0xff]
    %v6138 = vld [vmem:[#allocation9 + $0x8b0] sm:$0xff]
    %v6139 = vld [vmem:[#allocation9 + $0x8d0] sm:$0xff]
    %v6140 = vld [vmem:[#allocation9 + $0x8f0] sm:$0xff]
    %v6141 = vld [vmem:[#allocation9 + $0x910] sm:$0xff]
    %v6142 = vld [vmem:[#allocation9 + $0x930] sm:$0xff]
    %v6143 = vld [vmem:[#allocation9 + $0x950] sm:$0xff]
    %v6144 = vld [vmem:[#allocation9 + $0x970] sm:$0xff]
    %v6145 = vld [vmem:[#allocation9 + $0x990] sm:$0xff]
    %v6146 = vld [vmem:[#allocation9 + $0x9b0] sm:$0xff]
    %v6147 = vld [vmem:[#allocation9 + $0x9d0] sm:$0xff]
    %v6148 = vld [vmem:[#allocation9 + $0x9f0] sm:$0xff]
    %v6149 = vld [vmem:[#allocation9 + $0xa10] sm:$0xff]
    %v6150 = vld [vmem:[#allocation9 + $0xa30] sm:$0xff]
    %v6151 = vld [vmem:[#allocation9 + $0xa50] sm:$0xff]
    %v6152 = vld [vmem:[#allocation9 + $0xa70] sm:$0xff]
    %v6153 = vld [vmem:[#allocation9 + $0xa90] sm:$0xff]
    %v6154 = vld [vmem:[#allocation9 + $0xab0] sm:$0xff]
    %v6155 = vld [vmem:[#allocation9 + $0xad0] sm:$0xff]
    %v6156 = vld [vmem:[#allocation9 + $0xaf0] sm:$0xff]
    %v6157 = vld [vmem:[#allocation9 + $0xb10] sm:$0xff]
    %v6158 = vld [vmem:[#allocation9 + $0xb30] sm:$0xff]
    %v6159 = vld [vmem:[#allocation9 + $0xb50] sm:$0xff]
    %v6160 = vld [vmem:[#allocation9 + $0xb70] sm:$0xff]
    %v6161 = vld [vmem:[#allocation9 + $0xb90] sm:$0xff]
    %v6162 = vld [vmem:[#allocation9 + $0xbb0] sm:$0xff]
    %v6163 = vld [vmem:[#allocation9 + $0xbd0] sm:$0xff]
    %v6164 = vld [vmem:[#allocation9 + $0xbf0] sm:$0xff]
    %v6165 = vld [vmem:[#allocation9 + $0xc10] sm:$0xff]
    %v6166 = vld [vmem:[#allocation9 + $0xc30] sm:$0xff]
    %v6167 = vld [vmem:[#allocation9 + $0xc50] sm:$0xff]
    %v6168 = vld [vmem:[#allocation9 + $0xc70] sm:$0xff]
    %v6169 = vld [vmem:[#allocation9 + $0xc90] sm:$0xff]
    %v6170 = vld [vmem:[#allocation9 + $0xcb0] sm:$0xff]
    %v6171 = vld [vmem:[#allocation9 + $0xcd0] sm:$0xff]
    %v6172 = vld [vmem:[#allocation9 + $0xcf0] sm:$0xff]
    %v6173 = vld [vmem:[#allocation9 + $0xd10] sm:$0xff]
    %v6174 = vld [vmem:[#allocation9 + $0xd30] sm:$0xff]
    %v6175 = vld [vmem:[#allocation9 + $0xd50] sm:$0xff]
    %v6176 = vld [vmem:[#allocation9 + $0xd70] sm:$0xff]
    %v6177 = vld [vmem:[#allocation9 + $0xd90] sm:$0xff]
    %v6178 = vld [vmem:[#allocation9 + $0xdb0] sm:$0xff]
    %v6179 = vld [vmem:[#allocation9 + $0xdd0] sm:$0xff]
    %v6180 = vld [vmem:[#allocation9 + $0xdf0] sm:$0xff]
    %v6181 = vld [vmem:[#allocation9 + $0xe10] sm:$0xff]
    %v6182 = vld [vmem:[#allocation9 + $0xe30] sm:$0xff]
    %v6183 = vld [vmem:[#allocation9 + $0xe50] sm:$0xff]
    %v6184 = vld [vmem:[#allocation9 + $0xe70] sm:$0xff]
    %v6185 = vld [vmem:[#allocation9 + $0xe90] sm:$0xff]
    %v6186 = vld [vmem:[#allocation9 + $0xeb0] sm:$0xff]
    %v6187 = vld [vmem:[#allocation9 + $0xed0] sm:$0xff]
    %v6188 = vld [vmem:[#allocation9 + $0xef0] sm:$0xff]
    %v6189 = vld [vmem:[#allocation9 + $0xf10] sm:$0xff]
    %v6190 = vld [vmem:[#allocation9 + $0xf30] sm:$0xff]
    %v6191 = vld [vmem:[#allocation9 + $0xf50] sm:$0xff]
    %v6192 = vld [vmem:[#allocation9 + $0xf70] sm:$0xff]
    %v6193 = vld [vmem:[#allocation9 + $0xf90] sm:$0xff]
    %v6194 = vld [vmem:[#allocation9 + $0xfb0] sm:$0xff]
    %v6195 = vld [vmem:[#allocation9 + $0xfd0] sm:$0xff]
    %v6196 = vld [vmem:[#allocation9 + $0xff0] sm:$0xff]
    %v6197 = vld [vmem:[#allocation9 + $0x1010] sm:$0xff]
    %v6198 = vld [vmem:[#allocation9 + $0x1030] sm:$0xff]
    %v6199 = vld [vmem:[#allocation9 + $0x1050] sm:$0xff]
    %v6200 = vld [vmem:[#allocation9 + $0x1070] sm:$0xff]
    %v6201 = vld [vmem:[#allocation9 + $0x1090] sm:$0xff]
    %v6202 = vld [vmem:[#allocation9 + $0x10b0] sm:$0xff]
    %v6203 = vld [vmem:[#allocation9 + $0x10d0] sm:$0xff]
    %v6204 = vld [vmem:[#allocation9 + $0x10f0] sm:$0xff]
    %v6205 = vld [vmem:[#allocation9 + $0x1110] sm:$0xff]
    %v6206 = vld [vmem:[#allocation9 + $0x1130] sm:$0xff]
    %v6207 = vld [vmem:[#allocation9 + $0x1150] sm:$0xff]
    %v6208 = vld [vmem:[#allocation9 + $0x1170] sm:$0xff]
    %v6209 = vld [vmem:[#allocation9 + $0x1190] sm:$0xff]
    %v6210 = vld [vmem:[#allocation9 + $0x11b0] sm:$0xff]
    %v6211 = vld [vmem:[#allocation9 + $0x11d0] sm:$0xff]
    %v6212 = vld [vmem:[#allocation9 + $0x11f0] sm:$0xff]
    %v6213 = vld [vmem:[#allocation9 + $0x1210] sm:$0xff]
    %v6214 = vld [vmem:[#allocation9 + $0x1230] sm:$0xff]
    %v6215 = vld [vmem:[#allocation9 + $0x1250] sm:$0xff]
    %v6216 = vld [vmem:[#allocation9 + $0x1270] sm:$0xff]
    %v6217 = vld [vmem:[#allocation9 + $0x1290] sm:$0xff]
    %v6218 = vld [vmem:[#allocation9 + $0x12b0] sm:$0xff]
    %v6219 = vld [vmem:[#allocation9 + $0x12d0] sm:$0xff]
    %v6220 = vld [vmem:[#allocation9 + $0x12f0] sm:$0xff]
    %v6221 = vld [vmem:[#allocation9 + $0x1310] sm:$0xff]
    %v6222 = vld [vmem:[#allocation9 + $0x1330] sm:$0xff]
    %v6223 = vld [vmem:[#allocation9 + $0x1350] sm:$0xff]
    %v6224 = vld [vmem:[#allocation9 + $0x1370] sm:$0xff]
    %v6225 = vld [vmem:[#allocation9 + $0x1390] sm:$0xff]
    %v6226 = vld [vmem:[#allocation9 + $0x13b0] sm:$0xff]
    %v6227 = vld [vmem:[#allocation9 + $0x13d0] sm:$0xff]
    %v6228 = vld [vmem:[#allocation9 + $0x13f0] sm:$0xff]
    %v6229 = vld [vmem:[#allocation9 + $0x1410] sm:$0xff]
    %v6230 = vld [vmem:[#allocation9 + $0x1430] sm:$0xff]
    %v6231 = vld [vmem:[#allocation9 + $0x1450] sm:$0xff]
    %v6232 = vld [vmem:[#allocation9 + $0x1470] sm:$0xff]
    %v6233 = vld [vmem:[#allocation9 + $0x1490] sm:$0xff]
    %v6234 = vld [vmem:[#allocation9 + $0x14b0] sm:$0xff]
    %v6235 = vld [vmem:[#allocation9 + $0x14d0] sm:$0xff]
    %v6236 = vld [vmem:[#allocation9 + $0x14f0] sm:$0xff]
    %v6237 = vld [vmem:[#allocation9 + $0x1510] sm:$0xff]
    %v6238 = vld [vmem:[#allocation9 + $0x1530] sm:$0xff]
    %v6239 = vld [vmem:[#allocation9 + $0x1550] sm:$0xff]
    %v6240 = vld [vmem:[#allocation9 + $0x1570] sm:$0xff]
    %v6241 = vld [vmem:[#allocation9 + $0x1590] sm:$0xff]
    %v6242 = vld [vmem:[#allocation9 + $0x15b0] sm:$0xff]
    %v6243 = vld [vmem:[#allocation9 + $0x15d0] sm:$0xff]
    %v6244 = vld [vmem:[#allocation9 + $0x15f0] sm:$0xff]
    %v6245 = vld [vmem:[#allocation9 + $0x1610] sm:$0xff]
    %v6246 = vld [vmem:[#allocation9 + $0x1630] sm:$0xff]
    %v6247 = vld [vmem:[#allocation9 + $0x1650] sm:$0xff]
    %v6248 = vld [vmem:[#allocation9 + $0x1670] sm:$0xff]
    %v6249 = vld [vmem:[#allocation9 + $0x1690] sm:$0xff]
    %v6250 = vld [vmem:[#allocation9 + $0x16b0] sm:$0xff]
    %v6251 = vld [vmem:[#allocation9 + $0x16d0] sm:$0xff]
    %v6252 = vld [vmem:[#allocation9 + $0x16f0] sm:$0xff]
    %v6253 = vld [vmem:[#allocation9 + $0x1710] sm:$0xff]
    %v6254 = vld [vmem:[#allocation9 + $0x1730] sm:$0xff]
    %v6255 = vld [vmem:[#allocation9 + $0x1750] sm:$0xff]
    %v6256 = vld [vmem:[#allocation9 + $0x1770] sm:$0xff]
    %v6257 = vld [vmem:[#allocation9 + $0x1790] sm:$0xff]
    %v6258 = vld [vmem:[#allocation9 + $0x17b0] sm:$0xff]
    %v6259 = vld [vmem:[#allocation9 + $0x17d0] sm:$0xff]
    %v6260 = vld [vmem:[#allocation9 + $0x17f0] sm:$0xff]
    %v6261 = vld [vmem:[#allocation9 + $0x1810] sm:$0xff]
    %v6262 = vld [vmem:[#allocation9 + $0x1830] sm:$0xff]
    %v6263 = vld [vmem:[#allocation9 + $0x1850] sm:$0xff]
    %v6264 = vld [vmem:[#allocation9 + $0x1870] sm:$0xff]
    %v6265 = vld [vmem:[#allocation9 + $0x1890] sm:$0xff]
    %v6266 = vld [vmem:[#allocation9 + $0x18b0] sm:$0xff]
    %v6267 = vld [vmem:[#allocation9 + $0x18d0] sm:$0xff]
    %v6268 = vld [vmem:[#allocation9 + $0x18f0] sm:$0xff]
    %v6269 = vld [vmem:[#allocation9 + $0x1910] sm:$0xff]
    %v6270 = vld [vmem:[#allocation9 + $0x1930] sm:$0xff]
    %v6271 = vld [vmem:[#allocation9 + $0x1950] sm:$0xff]
    %v6272 = vld [vmem:[#allocation9 + $0x1970] sm:$0xff]
    %v6273 = vld [vmem:[#allocation9 + $0x1990] sm:$0xff]
    %v6274 = vld [vmem:[#allocation9 + $0x19b0] sm:$0xff]
    %v6275 = vld [vmem:[#allocation9 + $0x19d0] sm:$0xff]
    %v6276 = vld [vmem:[#allocation9 + $0x19f0] sm:$0xff]
    %v6277 = vld [vmem:[#allocation9 + $0x1a10] sm:$0xff]
    %v6278 = vld [vmem:[#allocation9 + $0x1a30] sm:$0xff]
    %v6279 = vld [vmem:[#allocation9 + $0x1a50] sm:$0xff]
    %v6280 = vld [vmem:[#allocation9 + $0x1a70] sm:$0xff]
    %v6281 = vld [vmem:[#allocation9 + $0x1a90] sm:$0xff]
    %v6282 = vld [vmem:[#allocation9 + $0x1ab0] sm:$0xff]
    %v6283 = vld [vmem:[#allocation9 + $0x1ad0] sm:$0xff]
    %v6284 = vld [vmem:[#allocation9 + $0x1af0] sm:$0xff]
    %v6285 = vld [vmem:[#allocation9 + $0x1b10] sm:$0xff]
    %v6286 = vld [vmem:[#allocation9 + $0x1b30] sm:$0xff]
    %v6287 = vld [vmem:[#allocation9 + $0x1b50] sm:$0xff]
    %v6288 = vld [vmem:[#allocation9 + $0x1b70] sm:$0xff]
    %v6289 = vld [vmem:[#allocation9 + $0x1b90] sm:$0xff]
    %v6290 = vld [vmem:[#allocation9 + $0x1bb0] sm:$0xff]
    %v6291 = vld [vmem:[#allocation9 + $0x1bd0] sm:$0xff]
    %v6292 = vld [vmem:[#allocation9 + $0x1bf0] sm:$0xff]
    %v6293 = vld [vmem:[#allocation9 + $0x1c10] sm:$0xff]
    %v6294 = vld [vmem:[#allocation9 + $0x1c30] sm:$0xff]
    %v6295 = vld [vmem:[#allocation9 + $0x1c50] sm:$0xff]
    %v6296 = vld [vmem:[#allocation9 + $0x1c70] sm:$0xff]
    %v6297 = vld [vmem:[#allocation9 + $0x1c90] sm:$0xff]
    %v6298 = vld [vmem:[#allocation9 + $0x1cb0] sm:$0xff]
    %v6299 = vld [vmem:[#allocation9 + $0x1cd0] sm:$0xff]
    %v6300 = vld [vmem:[#allocation9 + $0x1cf0] sm:$0xff]
    %v6301 = vld [vmem:[#allocation9 + $0x1d10] sm:$0xff]
    %v6302 = vld [vmem:[#allocation9 + $0x1d30] sm:$0xff]
    %v6303 = vld [vmem:[#allocation9 + $0x1d50] sm:$0xff]
    %v6304 = vld [vmem:[#allocation9 + $0x1d70] sm:$0xff]
    %v6305 = vld [vmem:[#allocation9 + $0x1d90] sm:$0xff]
    %v6306 = vld [vmem:[#allocation9 + $0x1db0] sm:$0xff]
    %v6307 = vld [vmem:[#allocation9 + $0x1dd0] sm:$0xff]
    %v6308 = vld [vmem:[#allocation9 + $0x1df0] sm:$0xff]
    %v6309 = vld [vmem:[#allocation9 + $0x1e10] sm:$0xff]
    %v6310 = vld [vmem:[#allocation9 + $0x1e30] sm:$0xff]
    %v6311 = vld [vmem:[#allocation9 + $0x1e50] sm:$0xff]
    %v6312 = vld [vmem:[#allocation9 + $0x1e70] sm:$0xff]
    %v6313 = vld [vmem:[#allocation9 + $0x1e90] sm:$0xff]
    %v6314 = vld [vmem:[#allocation9 + $0x1eb0] sm:$0xff]
    %v6315 = vld [vmem:[#allocation9 + $0x1ed0] sm:$0xff]
    %v6316 = vld [vmem:[#allocation9 + $0x1ef0] sm:$0xff]
    %v6317 = vld [vmem:[#allocation9 + $0x1f10] sm:$0xff]
    %v6318 = vld [vmem:[#allocation9 + $0x1f30] sm:$0xff]
    %v6319 = vld [vmem:[#allocation9 + $0x1f50] sm:$0xff]
    %v6320 = vld [vmem:[#allocation9 + $0x1f70] sm:$0xff]
    %v6321 = vld [vmem:[#allocation9 + $0x1f90] sm:$0xff]
    %v6322 = vld [vmem:[#allocation9 + $0x1fb0] sm:$0xff]
    %v6323 = vld [vmem:[#allocation9 + $0x1fd0] sm:$0xff]
    %v6324 = vld [vmem:[#allocation9 + $0x1ff0] sm:$0xff]
    %v6325 = vld [vmem:[#allocation10 + $0x4] sm:$0x3]
    %v6327 = vlaneseq
    %v6328 = vshrl.u32 %v6327, 7
    %v6329 = vsub.s32 0, %v6328
    %v6330 = vrot.slane %v6325, %v6329
    %v6331 = vlaneseq
    %v6332 = vshrl.u32 %v6331, 7
    %v6333 = vsub.s32 1, %v6332
    %v6334 = vrot.slane %v6325, %v6333
    %v6345 = vunpack.c.l.b16 %v6061
    %v6346 = vunpack.c.h.b16 %v6061
    %v6347 = vunpack.c.l.b16 %v6062
    %v6348 = vunpack.c.h.b16 %v6062
    %v6349 = vunpack.c.l.b16 %v6063
    %v6350 = vunpack.c.h.b16 %v6063
    %v6351 = vunpack.c.l.b16 %v6064
    %v6352 = vunpack.c.h.b16 %v6064
    %v6353 = vunpack.c.l.b16 %v6065
    %v6354 = vunpack.c.h.b16 %v6065
    %v6355 = vunpack.c.l.b16 %v6066
    %v6356 = vunpack.c.h.b16 %v6066
    %v6357 = vunpack.c.l.b16 %v6067
    %v6358 = vunpack.c.h.b16 %v6067
    %v6359 = vunpack.c.l.b16 %v6068
    %v6360 = vunpack.c.h.b16 %v6068
    %v6361 = vpack.c.b16 %v6345, %v6345
    %v6362 = vpack.c.b16 %v6346, %v6346
    %v6363 = vpack.c.b16 %v6347, %v6347
    %v6364 = vpack.c.b16 %v6348, %v6348
    %v6365 = vpack.c.b16 %v6349, %v6349
    %v6366 = vpack.c.b16 %v6350, %v6350
    %v6367 = vpack.c.b16 %v6351, %v6351
    %v6368 = vpack.c.b16 %v6352, %v6352
    %v6369 = vpack.c.b16 %v6353, %v6353
    %v6370 = vpack.c.b16 %v6354, %v6354
    %v6371 = vpack.c.b16 %v6355, %v6355
    %v6372 = vpack.c.b16 %v6356, %v6356
    %v6373 = vpack.c.b16 %v6357, %v6357
    %v6374 = vpack.c.b16 %v6358, %v6358
    %v6375 = vpack.c.b16 %v6359, %v6359
    %v6376 = vpack.c.b16 %v6360, %v6360
    %v6649 = vunpack.c.l.b16 %v6069
    %v6650 = vunpack.c.h.b16 %v6069
    %v6651 = vunpack.c.l.b16 %v6070
    %v6652 = vunpack.c.h.b16 %v6070
    %v6653 = vunpack.c.l.b16 %v6071
    %v6654 = vunpack.c.h.b16 %v6071
    %v6655 = vunpack.c.l.b16 %v6072
    %v6656 = vunpack.c.h.b16 %v6072
    %v6657 = vunpack.c.l.b16 %v6073
    %v6658 = vunpack.c.h.b16 %v6073
    %v6659 = vunpack.c.l.b16 %v6074
    %v6660 = vunpack.c.h.b16 %v6074
    %v6661 = vunpack.c.l.b16 %v6075
    %v6662 = vunpack.c.h.b16 %v6075
    %v6663 = vunpack.c.l.b16 %v6076
    %v6664 = vunpack.c.h.b16 %v6076
    %v6665 = vunpack.c.l.b16 %v6077
    %v6666 = vunpack.c.h.b16 %v6077
    %v6667 = vunpack.c.l.b16 %v6078
    %v6668 = vunpack.c.h.b16 %v6078
    %v6669 = vunpack.c.l.b16 %v6079
    %v6670 = vunpack.c.h.b16 %v6079
    %v6671 = vunpack.c.l.b16 %v6080
    %v6672 = vunpack.c.h.b16 %v6080
    %v6673 = vunpack.c.l.b16 %v6081
    %v6674 = vunpack.c.h.b16 %v6081
    %v6675 = vunpack.c.l.b16 %v6082
    %v6676 = vunpack.c.h.b16 %v6082
    %v6677 = vunpack.c.l.b16 %v6083
    %v6678 = vunpack.c.h.b16 %v6083
    %v6679 = vunpack.c.l.b16 %v6084
    %v6680 = vunpack.c.h.b16 %v6084
    %v6681 = vunpack.c.l.b16 %v6085
    %v6682 = vunpack.c.h.b16 %v6085
    %v6683 = vunpack.c.l.b16 %v6086
    %v6684 = vunpack.c.h.b16 %v6086
    %v6685 = vunpack.c.l.b16 %v6087
    %v6686 = vunpack.c.h.b16 %v6087
    %v6687 = vunpack.c.l.b16 %v6088
    %v6688 = vunpack.c.h.b16 %v6088
    %v6689 = vunpack.c.l.b16 %v6089
    %v6690 = vunpack.c.h.b16 %v6089
    %v6691 = vunpack.c.l.b16 %v6090
    %v6692 = vunpack.c.h.b16 %v6090
    %v6693 = vunpack.c.l.b16 %v6091
    %v6694 = vunpack.c.h.b16 %v6091
    %v6695 = vunpack.c.l.b16 %v6092
    %v6696 = vunpack.c.h.b16 %v6092
    %v6697 = vunpack.c.l.b16 %v6093
    %v6698 = vunpack.c.h.b16 %v6093
    %v6699 = vunpack.c.l.b16 %v6094
    %v6700 = vunpack.c.h.b16 %v6094
    %v6701 = vunpack.c.l.b16 %v6095
    %v6702 = vunpack.c.h.b16 %v6095
    %v6703 = vunpack.c.l.b16 %v6096
    %v6704 = vunpack.c.h.b16 %v6096
    %v6705 = vunpack.c.l.b16 %v6097
    %v6706 = vunpack.c.h.b16 %v6097
    %v6707 = vunpack.c.l.b16 %v6098
    %v6708 = vunpack.c.h.b16 %v6098
    %v6709 = vunpack.c.l.b16 %v6099
    %v6710 = vunpack.c.h.b16 %v6099
    %v6711 = vunpack.c.l.b16 %v6100
    %v6712 = vunpack.c.h.b16 %v6100
    %v6713 = vunpack.c.l.b16 %v6101
    %v6714 = vunpack.c.h.b16 %v6101
    %v6715 = vunpack.c.l.b16 %v6102
    %v6716 = vunpack.c.h.b16 %v6102
    %v6717 = vunpack.c.l.b16 %v6103
    %v6718 = vunpack.c.h.b16 %v6103
    %v6719 = vunpack.c.l.b16 %v6104
    %v6720 = vunpack.c.h.b16 %v6104
    %v6721 = vunpack.c.l.b16 %v6105
    %v6722 = vunpack.c.h.b16 %v6105
    %v6723 = vunpack.c.l.b16 %v6106
    %v6724 = vunpack.c.h.b16 %v6106
    %v6725 = vunpack.c.l.b16 %v6107
    %v6726 = vunpack.c.h.b16 %v6107
    %v6727 = vunpack.c.l.b16 %v6108
    %v6728 = vunpack.c.h.b16 %v6108
    %v6729 = vunpack.c.l.b16 %v6109
    %v6730 = vunpack.c.h.b16 %v6109
    %v6731 = vunpack.c.l.b16 %v6110
    %v6732 = vunpack.c.h.b16 %v6110
    %v6733 = vunpack.c.l.b16 %v6111
    %v6734 = vunpack.c.h.b16 %v6111
    %v6735 = vunpack.c.l.b16 %v6112
    %v6736 = vunpack.c.h.b16 %v6112
    %v6737 = vunpack.c.l.b16 %v6113
    %v6738 = vunpack.c.h.b16 %v6113
    %v6739 = vunpack.c.l.b16 %v6114
    %v6740 = vunpack.c.h.b16 %v6114
    %v6741 = vunpack.c.l.b16 %v6115
    %v6742 = vunpack.c.h.b16 %v6115
    %v6743 = vunpack.c.l.b16 %v6116
    %v6744 = vunpack.c.h.b16 %v6116
    %v6745 = vunpack.c.l.b16 %v6117
    %v6746 = vunpack.c.h.b16 %v6117
    %v6747 = vunpack.c.l.b16 %v6118
    %v6748 = vunpack.c.h.b16 %v6118
    %v6749 = vunpack.c.l.b16 %v6119
    %v6750 = vunpack.c.h.b16 %v6119
    %v6751 = vunpack.c.l.b16 %v6120
    %v6752 = vunpack.c.h.b16 %v6120
    %v6753 = vunpack.c.l.b16 %v6121
    %v6754 = vunpack.c.h.b16 %v6121
    %v6755 = vunpack.c.l.b16 %v6122
    %v6756 = vunpack.c.h.b16 %v6122
    %v6757 = vunpack.c.l.b16 %v6123
    %v6758 = vunpack.c.h.b16 %v6123
    %v6759 = vunpack.c.l.b16 %v6124
    %v6760 = vunpack.c.h.b16 %v6124
    %v6761 = vunpack.c.l.b16 %v6125
    %v6762 = vunpack.c.h.b16 %v6125
    %v6763 = vunpack.c.l.b16 %v6126
    %v6764 = vunpack.c.h.b16 %v6126
    %v6765 = vunpack.c.l.b16 %v6127
    %v6766 = vunpack.c.h.b16 %v6127
    %v6767 = vunpack.c.l.b16 %v6128
    %v6768 = vunpack.c.h.b16 %v6128
    %v6769 = vunpack.c.l.b16 %v6129
    %v6770 = vunpack.c.h.b16 %v6129
    %v6771 = vunpack.c.l.b16 %v6130
    %v6772 = vunpack.c.h.b16 %v6130
    %v6773 = vunpack.c.l.b16 %v6131
    %v6774 = vunpack.c.h.b16 %v6131
    %v6775 = vunpack.c.l.b16 %v6132
    %v6776 = vunpack.c.h.b16 %v6132
    %v6777 = vunpack.c.l.b16 %v6133
    %v6778 = vunpack.c.h.b16 %v6133
    %v6779 = vunpack.c.l.b16 %v6134
    %v6780 = vunpack.c.h.b16 %v6134
    %v6781 = vunpack.c.l.b16 %v6135
    %v6782 = vunpack.c.h.b16 %v6135
    %v6783 = vunpack.c.l.b16 %v6136
    %v6784 = vunpack.c.h.b16 %v6136
    %v6785 = vunpack.c.l.b16 %v6137
    %v6786 = vunpack.c.h.b16 %v6137
    %v6787 = vunpack.c.l.b16 %v6138
    %v6788 = vunpack.c.h.b16 %v6138
    %v6789 = vunpack.c.l.b16 %v6139
    %v6790 = vunpack.c.h.b16 %v6139
    %v6791 = vunpack.c.l.b16 %v6140
    %v6792 = vunpack.c.h.b16 %v6140
    %v6793 = vunpack.c.l.b16 %v6141
    %v6794 = vunpack.c.h.b16 %v6141
    %v6795 = vunpack.c.l.b16 %v6142
    %v6796 = vunpack.c.h.b16 %v6142
    %v6797 = vunpack.c.l.b16 %v6143
    %v6798 = vunpack.c.h.b16 %v6143
    %v6799 = vunpack.c.l.b16 %v6144
    %v6800 = vunpack.c.h.b16 %v6144
    %v6801 = vunpack.c.l.b16 %v6145
    %v6802 = vunpack.c.h.b16 %v6145
    %v6803 = vunpack.c.l.b16 %v6146
    %v6804 = vunpack.c.h.b16 %v6146
    %v6805 = vunpack.c.l.b16 %v6147
    %v6806 = vunpack.c.h.b16 %v6147
    %v6807 = vunpack.c.l.b16 %v6148
    %v6808 = vunpack.c.h.b16 %v6148
    %v6809 = vunpack.c.l.b16 %v6149
    %v6810 = vunpack.c.h.b16 %v6149
    %v6811 = vunpack.c.l.b16 %v6150
    %v6812 = vunpack.c.h.b16 %v6150
    %v6813 = vunpack.c.l.b16 %v6151
    %v6814 = vunpack.c.h.b16 %v6151
    %v6815 = vunpack.c.l.b16 %v6152
    %v6816 = vunpack.c.h.b16 %v6152
    %v6817 = vunpack.c.l.b16 %v6153
    %v6818 = vunpack.c.h.b16 %v6153
    %v6819 = vunpack.c.l.b16 %v6154
    %v6820 = vunpack.c.h.b16 %v6154
    %v6821 = vunpack.c.l.b16 %v6155
    %v6822 = vunpack.c.h.b16 %v6155
    %v6823 = vunpack.c.l.b16 %v6156
    %v6824 = vunpack.c.h.b16 %v6156
    %v6825 = vunpack.c.l.b16 %v6157
    %v6826 = vunpack.c.h.b16 %v6157
    %v6827 = vunpack.c.l.b16 %v6158
    %v6828 = vunpack.c.h.b16 %v6158
    %v6829 = vunpack.c.l.b16 %v6159
    %v6830 = vunpack.c.h.b16 %v6159
    %v6831 = vunpack.c.l.b16 %v6160
    %v6832 = vunpack.c.h.b16 %v6160
    %v6833 = vunpack.c.l.b16 %v6161
    %v6834 = vunpack.c.h.b16 %v6161
    %v6835 = vunpack.c.l.b16 %v6162
    %v6836 = vunpack.c.h.b16 %v6162
    %v6837 = vunpack.c.l.b16 %v6163
    %v6838 = vunpack.c.h.b16 %v6163
    %v6839 = vunpack.c.l.b16 %v6164
    %v6840 = vunpack.c.h.b16 %v6164
    %v6841 = vunpack.c.l.b16 %v6165
    %v6842 = vunpack.c.h.b16 %v6165
    %v6843 = vunpack.c.l.b16 %v6166
    %v6844 = vunpack.c.h.b16 %v6166
    %v6845 = vunpack.c.l.b16 %v6167
    %v6846 = vunpack.c.h.b16 %v6167
    %v6847 = vunpack.c.l.b16 %v6168
    %v6848 = vunpack.c.h.b16 %v6168
    %v6849 = vunpack.c.l.b16 %v6169
    %v6850 = vunpack.c.h.b16 %v6169
    %v6851 = vunpack.c.l.b16 %v6170
    %v6852 = vunpack.c.h.b16 %v6170
    %v6853 = vunpack.c.l.b16 %v6171
    %v6854 = vunpack.c.h.b16 %v6171
    %v6855 = vunpack.c.l.b16 %v6172
    %v6856 = vunpack.c.h.b16 %v6172
    %v6857 = vunpack.c.l.b16 %v6173
    %v6858 = vunpack.c.h.b16 %v6173
    %v6859 = vunpack.c.l.b16 %v6174
    %v6860 = vunpack.c.h.b16 %v6174
    %v6861 = vunpack.c.l.b16 %v6175
    %v6862 = vunpack.c.h.b16 %v6175
    %v6863 = vunpack.c.l.b16 %v6176
    %v6864 = vunpack.c.h.b16 %v6176
    %v6865 = vunpack.c.l.b16 %v6177
    %v6866 = vunpack.c.h.b16 %v6177
    %v6867 = vunpack.c.l.b16 %v6178
    %v6868 = vunpack.c.h.b16 %v6178
    %v6869 = vunpack.c.l.b16 %v6179
    %v6870 = vunpack.c.h.b16 %v6179
    %v6871 = vunpack.c.l.b16 %v6180
    %v6872 = vunpack.c.h.b16 %v6180
    %v6873 = vunpack.c.l.b16 %v6181
    %v6874 = vunpack.c.h.b16 %v6181
    %v6875 = vunpack.c.l.b16 %v6182
    %v6876 = vunpack.c.h.b16 %v6182
    %v6877 = vunpack.c.l.b16 %v6183
    %v6878 = vunpack.c.h.b16 %v6183
    %v6879 = vunpack.c.l.b16 %v6184
    %v6880 = vunpack.c.h.b16 %v6184
    %v6881 = vunpack.c.l.b16 %v6185
    %v6882 = vunpack.c.h.b16 %v6185
    %v6883 = vunpack.c.l.b16 %v6186
    %v6884 = vunpack.c.h.b16 %v6186
    %v6885 = vunpack.c.l.b16 %v6187
    %v6886 = vunpack.c.h.b16 %v6187
    %v6887 = vunpack.c.l.b16 %v6188
    %v6888 = vunpack.c.h.b16 %v6188
    %v6889 = vunpack.c.l.b16 %v6189
    %v6890 = vunpack.c.h.b16 %v6189
    %v6891 = vunpack.c.l.b16 %v6190
    %v6892 = vunpack.c.h.b16 %v6190
    %v6893 = vunpack.c.l.b16 %v6191
    %v6894 = vunpack.c.h.b16 %v6191
    %v6895 = vunpack.c.l.b16 %v6192
    %v6896 = vunpack.c.h.b16 %v6192
    %v6897 = vunpack.c.l.b16 %v6193
    %v6898 = vunpack.c.h.b16 %v6193
    %v6899 = vunpack.c.l.b16 %v6194
    %v6900 = vunpack.c.h.b16 %v6194
    %v6901 = vunpack.c.l.b16 %v6195
    %v6902 = vunpack.c.h.b16 %v6195
    %v6903 = vunpack.c.l.b16 %v6196
    %v6904 = vunpack.c.h.b16 %v6196
    %v6905 = vunpack.c.l.b16 %v6197
    %v6906 = vunpack.c.h.b16 %v6197
    %v6907 = vunpack.c.l.b16 %v6198
    %v6908 = vunpack.c.h.b16 %v6198
    %v6909 = vunpack.c.l.b16 %v6199
    %v6910 = vunpack.c.h.b16 %v6199
    %v6911 = vunpack.c.l.b16 %v6200
    %v6912 = vunpack.c.h.b16 %v6200
    %v6913 = vunpack.c.l.b16 %v6201
    %v6914 = vunpack.c.h.b16 %v6201
    %v6915 = vunpack.c.l.b16 %v6202
    %v6916 = vunpack.c.h.b16 %v6202
    %v6917 = vunpack.c.l.b16 %v6203
    %v6918 = vunpack.c.h.b16 %v6203
    %v6919 = vunpack.c.l.b16 %v6204
    %v6920 = vunpack.c.h.b16 %v6204
    %v6921 = vunpack.c.l.b16 %v6205
    %v6922 = vunpack.c.h.b16 %v6205
    %v6923 = vunpack.c.l.b16 %v6206
    %v6924 = vunpack.c.h.b16 %v6206
    %v6925 = vunpack.c.l.b16 %v6207
    %v6926 = vunpack.c.h.b16 %v6207
    %v6927 = vunpack.c.l.b16 %v6208
    %v6928 = vunpack.c.h.b16 %v6208
    %v6929 = vunpack.c.l.b16 %v6209
    %v6930 = vunpack.c.h.b16 %v6209
    %v6931 = vunpack.c.l.b16 %v6210
    %v6932 = vunpack.c.h.b16 %v6210
    %v6933 = vunpack.c.l.b16 %v6211
    %v6934 = vunpack.c.h.b16 %v6211
    %v6935 = vunpack.c.l.b16 %v6212
    %v6936 = vunpack.c.h.b16 %v6212
    %v6937 = vunpack.c.l.b16 %v6213
    %v6938 = vunpack.c.h.b16 %v6213
    %v6939 = vunpack.c.l.b16 %v6214
    %v6940 = vunpack.c.h.b16 %v6214
    %v6941 = vunpack.c.l.b16 %v6215
    %v6942 = vunpack.c.h.b16 %v6215
    %v6943 = vunpack.c.l.b16 %v6216
    %v6944 = vunpack.c.h.b16 %v6216
    %v6945 = vunpack.c.l.b16 %v6217
    %v6946 = vunpack.c.h.b16 %v6217
    %v6947 = vunpack.c.l.b16 %v6218
    %v6948 = vunpack.c.h.b16 %v6218
    %v6949 = vunpack.c.l.b16 %v6219
    %v6950 = vunpack.c.h.b16 %v6219
    %v6951 = vunpack.c.l.b16 %v6220
    %v6952 = vunpack.c.h.b16 %v6220
    %v6953 = vunpack.c.l.b16 %v6221
    %v6954 = vunpack.c.h.b16 %v6221
    %v6955 = vunpack.c.l.b16 %v6222
    %v6956 = vunpack.c.h.b16 %v6222
    %v6957 = vunpack.c.l.b16 %v6223
    %v6958 = vunpack.c.h.b16 %v6223
    %v6959 = vunpack.c.l.b16 %v6224
    %v6960 = vunpack.c.h.b16 %v6224
    %v6961 = vunpack.c.l.b16 %v6225
    %v6962 = vunpack.c.h.b16 %v6225
    %v6963 = vunpack.c.l.b16 %v6226
    %v6964 = vunpack.c.h.b16 %v6226
    %v6965 = vunpack.c.l.b16 %v6227
    %v6966 = vunpack.c.h.b16 %v6227
    %v6967 = vunpack.c.l.b16 %v6228
    %v6968 = vunpack.c.h.b16 %v6228
    %v6969 = vunpack.c.l.b16 %v6229
    %v6970 = vunpack.c.h.b16 %v6229
    %v6971 = vunpack.c.l.b16 %v6230
    %v6972 = vunpack.c.h.b16 %v6230
    %v6973 = vunpack.c.l.b16 %v6231
    %v6974 = vunpack.c.h.b16 %v6231
    %v6975 = vunpack.c.l.b16 %v6232
    %v6976 = vunpack.c.h.b16 %v6232
    %v6977 = vunpack.c.l.b16 %v6233
    %v6978 = vunpack.c.h.b16 %v6233
    %v6979 = vunpack.c.l.b16 %v6234
    %v6980 = vunpack.c.h.b16 %v6234
    %v6981 = vunpack.c.l.b16 %v6235
    %v6982 = vunpack.c.h.b16 %v6235
    %v6983 = vunpack.c.l.b16 %v6236
    %v6984 = vunpack.c.h.b16 %v6236
    %v6985 = vunpack.c.l.b16 %v6237
    %v6986 = vunpack.c.h.b16 %v6237
    %v6987 = vunpack.c.l.b16 %v6238
    %v6988 = vunpack.c.h.b16 %v6238
    %v6989 = vunpack.c.l.b16 %v6239
    %v6990 = vunpack.c.h.b16 %v6239
    %v6991 = vunpack.c.l.b16 %v6240
    %v6992 = vunpack.c.h.b16 %v6240
    %v6993 = vunpack.c.l.b16 %v6241
    %v6994 = vunpack.c.h.b16 %v6241
    %v6995 = vunpack.c.l.b16 %v6242
    %v6996 = vunpack.c.h.b16 %v6242
    %v6997 = vunpack.c.l.b16 %v6243
    %v6998 = vunpack.c.h.b16 %v6243
    %v6999 = vunpack.c.l.b16 %v6244
    %v7000 = vunpack.c.h.b16 %v6244
    %v7001 = vunpack.c.l.b16 %v6245
    %v7002 = vunpack.c.h.b16 %v6245
    %v7003 = vunpack.c.l.b16 %v6246
    %v7004 = vunpack.c.h.b16 %v6246
    %v7005 = vunpack.c.l.b16 %v6247
    %v7006 = vunpack.c.h.b16 %v6247
    %v7007 = vunpack.c.l.b16 %v6248
    %v7008 = vunpack.c.h.b16 %v6248
    %v7009 = vunpack.c.l.b16 %v6249
    %v7010 = vunpack.c.h.b16 %v6249
    %v7011 = vunpack.c.l.b16 %v6250
    %v7012 = vunpack.c.h.b16 %v6250
    %v7013 = vunpack.c.l.b16 %v6251
    %v7014 = vunpack.c.h.b16 %v6251
    %v7015 = vunpack.c.l.b16 %v6252
    %v7016 = vunpack.c.h.b16 %v6252
    %v7017 = vunpack.c.l.b16 %v6253
    %v7018 = vunpack.c.h.b16 %v6253
    %v7019 = vunpack.c.l.b16 %v6254
    %v7020 = vunpack.c.h.b16 %v6254
    %v7021 = vunpack.c.l.b16 %v6255
    %v7022 = vunpack.c.h.b16 %v6255
    %v7023 = vunpack.c.l.b16 %v6256
    %v7024 = vunpack.c.h.b16 %v6256
    %v7025 = vunpack.c.l.b16 %v6257
    %v7026 = vunpack.c.h.b16 %v6257
    %v7027 = vunpack.c.l.b16 %v6258
    %v7028 = vunpack.c.h.b16 %v6258
    %v7029 = vunpack.c.l.b16 %v6259
    %v7030 = vunpack.c.h.b16 %v6259
    %v7031 = vunpack.c.l.b16 %v6260
    %v7032 = vunpack.c.h.b16 %v6260
    %v7033 = vunpack.c.l.b16 %v6261
    %v7034 = vunpack.c.h.b16 %v6261
    %v7035 = vunpack.c.l.b16 %v6262
    %v7036 = vunpack.c.h.b16 %v6262
    %v7037 = vunpack.c.l.b16 %v6263
    %v7038 = vunpack.c.h.b16 %v6263
    %v7039 = vunpack.c.l.b16 %v6264
    %v7040 = vunpack.c.h.b16 %v6264
    %v7041 = vunpack.c.l.b16 %v6265
    %v7042 = vunpack.c.h.b16 %v6265
    %v7043 = vunpack.c.l.b16 %v6266
    %v7044 = vunpack.c.h.b16 %v6266
    %v7045 = vunpack.c.l.b16 %v6267
    %v7046 = vunpack.c.h.b16 %v6267
    %v7047 = vunpack.c.l.b16 %v6268
    %v7048 = vunpack.c.h.b16 %v6268
    %v7049 = vunpack.c.l.b16 %v6269
    %v7050 = vunpack.c.h.b16 %v6269
    %v7051 = vunpack.c.l.b16 %v6270
    %v7052 = vunpack.c.h.b16 %v6270
    %v7053 = vunpack.c.l.b16 %v6271
    %v7054 = vunpack.c.h.b16 %v6271
    %v7055 = vunpack.c.l.b16 %v6272
    %v7056 = vunpack.c.h.b16 %v6272
    %v7057 = vunpack.c.l.b16 %v6273
    %v7058 = vunpack.c.h.b16 %v6273
    %v7059 = vunpack.c.l.b16 %v6274
    %v7060 = vunpack.c.h.b16 %v6274
    %v7061 = vunpack.c.l.b16 %v6275
    %v7062 = vunpack.c.h.b16 %v6275
    %v7063 = vunpack.c.l.b16 %v6276
    %v7064 = vunpack.c.h.b16 %v6276
    %v7065 = vunpack.c.l.b16 %v6277
    %v7066 = vunpack.c.h.b16 %v6277
    %v7067 = vunpack.c.l.b16 %v6278
    %v7068 = vunpack.c.h.b16 %v6278
    %v7069 = vunpack.c.l.b16 %v6279
    %v7070 = vunpack.c.h.b16 %v6279
    %v7071 = vunpack.c.l.b16 %v6280
    %v7072 = vunpack.c.h.b16 %v6280
    %v7073 = vunpack.c.l.b16 %v6281
    %v7074 = vunpack.c.h.b16 %v6281
    %v7075 = vunpack.c.l.b16 %v6282
    %v7076 = vunpack.c.h.b16 %v6282
    %v7077 = vunpack.c.l.b16 %v6283
    %v7078 = vunpack.c.h.b16 %v6283
    %v7079 = vunpack.c.l.b16 %v6284
    %v7080 = vunpack.c.h.b16 %v6284
    %v7081 = vunpack.c.l.b16 %v6285
    %v7082 = vunpack.c.h.b16 %v6285
    %v7083 = vunpack.c.l.b16 %v6286
    %v7084 = vunpack.c.h.b16 %v6286
    %v7085 = vunpack.c.l.b16 %v6287
    %v7086 = vunpack.c.h.b16 %v6287
    %v7087 = vunpack.c.l.b16 %v6288
    %v7088 = vunpack.c.h.b16 %v6288
    %v7089 = vunpack.c.l.b16 %v6289
    %v7090 = vunpack.c.h.b16 %v6289
    %v7091 = vunpack.c.l.b16 %v6290
    %v7092 = vunpack.c.h.b16 %v6290
    %v7093 = vunpack.c.l.b16 %v6291
    %v7094 = vunpack.c.h.b16 %v6291
    %v7095 = vunpack.c.l.b16 %v6292
    %v7096 = vunpack.c.h.b16 %v6292
    %v7097 = vunpack.c.l.b16 %v6293
    %v7098 = vunpack.c.h.b16 %v6293
    %v7099 = vunpack.c.l.b16 %v6294
    %v7100 = vunpack.c.h.b16 %v6294
    %v7101 = vunpack.c.l.b16 %v6295
    %v7102 = vunpack.c.h.b16 %v6295
    %v7103 = vunpack.c.l.b16 %v6296
    %v7104 = vunpack.c.h.b16 %v6296
    %v7105 = vunpack.c.l.b16 %v6297
    %v7106 = vunpack.c.h.b16 %v6297
    %v7107 = vunpack.c.l.b16 %v6298
    %v7108 = vunpack.c.h.b16 %v6298
    %v7109 = vunpack.c.l.b16 %v6299
    %v7110 = vunpack.c.h.b16 %v6299
    %v7111 = vunpack.c.l.b16 %v6300
    %v7112 = vunpack.c.h.b16 %v6300
    %v7113 = vunpack.c.l.b16 %v6301
    %v7114 = vunpack.c.h.b16 %v6301
    %v7115 = vunpack.c.l.b16 %v6302
    %v7116 = vunpack.c.h.b16 %v6302
    %v7117 = vunpack.c.l.b16 %v6303
    %v7118 = vunpack.c.h.b16 %v6303
    %v7119 = vunpack.c.l.b16 %v6304
    %v7120 = vunpack.c.h.b16 %v6304
    %v7121 = vunpack.c.l.b16 %v6305
    %v7122 = vunpack.c.h.b16 %v6305
    %v7123 = vunpack.c.l.b16 %v6306
    %v7124 = vunpack.c.h.b16 %v6306
    %v7125 = vunpack.c.l.b16 %v6307
    %v7126 = vunpack.c.h.b16 %v6307
    %v7127 = vunpack.c.l.b16 %v6308
    %v7128 = vunpack.c.h.b16 %v6308
    %v7129 = vunpack.c.l.b16 %v6309
    %v7130 = vunpack.c.h.b16 %v6309
    %v7131 = vunpack.c.l.b16 %v6310
    %v7132 = vunpack.c.h.b16 %v6310
    %v7133 = vunpack.c.l.b16 %v6311
    %v7134 = vunpack.c.h.b16 %v6311
    %v7135 = vunpack.c.l.b16 %v6312
    %v7136 = vunpack.c.h.b16 %v6312
    %v7137 = vunpack.c.l.b16 %v6313
    %v7138 = vunpack.c.h.b16 %v6313
    %v7139 = vunpack.c.l.b16 %v6314
    %v7140 = vunpack.c.h.b16 %v6314
    %v7141 = vunpack.c.l.b16 %v6315
    %v7142 = vunpack.c.h.b16 %v6315
    %v7143 = vunpack.c.l.b16 %v6316
    %v7144 = vunpack.c.h.b16 %v6316
    %v7145 = vunpack.c.l.b16 %v6317
    %v7146 = vunpack.c.h.b16 %v6317
    %v7147 = vunpack.c.l.b16 %v6318
    %v7148 = vunpack.c.h.b16 %v6318
    %v7149 = vunpack.c.l.b16 %v6319
    %v7150 = vunpack.c.h.b16 %v6319
    %v7151 = vunpack.c.l.b16 %v6320
    %v7152 = vunpack.c.h.b16 %v6320
    %v7153 = vunpack.c.l.b16 %v6321
    %v7154 = vunpack.c.h.b16 %v6321
    %v7155 = vunpack.c.l.b16 %v6322
    %v7156 = vunpack.c.h.b16 %v6322
    %v7157 = vunpack.c.l.b16 %v6323
    %v7158 = vunpack.c.h.b16 %v6323
    %v7159 = vunpack.c.l.b16 %v6324
    %v7160 = vunpack.c.h.b16 %v6324
    %v7161 = vpack.c.b16 %v6651, %v6649
    %v7162 = vpack.c.b16 %v6652, %v6650
    %v7163 = vpack.c.b16 %v6655, %v6653
    %v7164 = vpack.c.b16 %v6656, %v6654
    %v7165 = vpack.c.b16 %v6659, %v6657
    %v7166 = vpack.c.b16 %v6660, %v6658
    %v7167 = vpack.c.b16 %v6663, %v6661
    %v7168 = vpack.c.b16 %v6664, %v6662
    %v7169 = vpack.c.b16 %v6667, %v6665
    %v7170 = vpack.c.b16 %v6668, %v6666
    %v7171 = vpack.c.b16 %v6671, %v6669
    %v7172 = vpack.c.b16 %v6672, %v6670
    %v7173 = vpack.c.b16 %v6675, %v6673
    %v7174 = vpack.c.b16 %v6676, %v6674
    %v7175 = vpack.c.b16 %v6679, %v6677
    %v7176 = vpack.c.b16 %v6680, %v6678
    %v7177 = vpack.c.b16 %v6683, %v6681
    %v7178 = vpack.c.b16 %v6684, %v6682
    %v7179 = vpack.c.b16 %v6687, %v6685
    %v7180 = vpack.c.b16 %v6688, %v6686
    %v7181 = vpack.c.b16 %v6691, %v6689
    %v7182 = vpack.c.b16 %v6692, %v6690
    %v7183 = vpack.c.b16 %v6695, %v6693
    %v7184 = vpack.c.b16 %v6696, %v6694
    %v7185 = vpack.c.b16 %v6699, %v6697
    %v7186 = vpack.c.b16 %v6700, %v6698
    %v7187 = vpack.c.b16 %v6703, %v6701
    %v7188 = vpack.c.b16 %v6704, %v6702
    %v7189 = vpack.c.b16 %v6707, %v6705
    %v7190 = vpack.c.b16 %v6708, %v6706
    %v7191 = vpack.c.b16 %v6711, %v6709
    %v7192 = vpack.c.b16 %v6712, %v6710
    %v7193 = vpack.c.b16 %v6715, %v6713
    %v7194 = vpack.c.b16 %v6716, %v6714
    %v7195 = vpack.c.b16 %v6719, %v6717
    %v7196 = vpack.c.b16 %v6720, %v6718
    %v7197 = vpack.c.b16 %v6723, %v6721
    %v7198 = vpack.c.b16 %v6724, %v6722
    %v7199 = vpack.c.b16 %v6727, %v6725
    %v7200 = vpack.c.b16 %v6728, %v6726
    %v7201 = vpack.c.b16 %v6731, %v6729
    %v7202 = vpack.c.b16 %v6732, %v6730
    %v7203 = vpack.c.b16 %v6735, %v6733
    %v7204 = vpack.c.b16 %v6736, %v6734
    %v7205 = vpack.c.b16 %v6739, %v6737
    %v7206 = vpack.c.b16 %v6740, %v6738
    %v7207 = vpack.c.b16 %v6743, %v6741
    %v7208 = vpack.c.b16 %v6744, %v6742
    %v7209 = vpack.c.b16 %v6747, %v6745
    %v7210 = vpack.c.b16 %v6748, %v6746
    %v7211 = vpack.c.b16 %v6751, %v6749
    %v7212 = vpack.c.b16 %v6752, %v6750
    %v7213 = vpack.c.b16 %v6755, %v6753
    %v7214 = vpack.c.b16 %v6756, %v6754
    %v7215 = vpack.c.b16 %v6759, %v6757
    %v7216 = vpack.c.b16 %v6760, %v6758
    %v7217 = vpack.c.b16 %v6763, %v6761
    %v7218 = vpack.c.b16 %v6764, %v6762
    %v7219 = vpack.c.b16 %v6767, %v6765
    %v7220 = vpack.c.b16 %v6768, %v6766
    %v7221 = vpack.c.b16 %v6771, %v6769
    %v7222 = vpack.c.b16 %v6772, %v6770
    %v7223 = vpack.c.b16 %v6775, %v6773
    %v7224 = vpack.c.b16 %v6776, %v6774
    %v7225 = vpack.c.b16 %v6779, %v6777
    %v7226 = vpack.c.b16 %v6780, %v6778
    %v7227 = vpack.c.b16 %v6783, %v6781
    %v7228 = vpack.c.b16 %v6784, %v6782
    %v7229 = vpack.c.b16 %v6787, %v6785
    %v7230 = vpack.c.b16 %v6788, %v6786
    %v7231 = vpack.c.b16 %v6791, %v6789
    %v7232 = vpack.c.b16 %v6792, %v6790
    %v7233 = vpack.c.b16 %v6795, %v6793
    %v7234 = vpack.c.b16 %v6796, %v6794
    %v7235 = vpack.c.b16 %v6799, %v6797
    %v7236 = vpack.c.b16 %v6800, %v6798
    %v7237 = vpack.c.b16 %v6803, %v6801
    %v7238 = vpack.c.b16 %v6804, %v6802
    %v7239 = vpack.c.b16 %v6807, %v6805
    %v7240 = vpack.c.b16 %v6808, %v6806
    %v7241 = vpack.c.b16 %v6811, %v6809
    %v7242 = vpack.c.b16 %v6812, %v6810
    %v7243 = vpack.c.b16 %v6815, %v6813
    %v7244 = vpack.c.b16 %v6816, %v6814
    %v7245 = vpack.c.b16 %v6819, %v6817
    %v7246 = vpack.c.b16 %v6820, %v6818
    %v7247 = vpack.c.b16 %v6823, %v6821
    %v7248 = vpack.c.b16 %v6824, %v6822
    %v7249 = vpack.c.b16 %v6827, %v6825
    %v7250 = vpack.c.b16 %v6828, %v6826
    %v7251 = vpack.c.b16 %v6831, %v6829
    %v7252 = vpack.c.b16 %v6832, %v6830
    %v7253 = vpack.c.b16 %v6835, %v6833
    %v7254 = vpack.c.b16 %v6836, %v6834
    %v7255 = vpack.c.b16 %v6839, %v6837
    %v7256 = vpack.c.b16 %v6840, %v6838
    %v7257 = vpack.c.b16 %v6843, %v6841
    %v7258 = vpack.c.b16 %v6844, %v6842
    %v7259 = vpack.c.b16 %v6847, %v6845
    %v7260 = vpack.c.b16 %v6848, %v6846
    %v7261 = vpack.c.b16 %v6851, %v6849
    %v7262 = vpack.c.b16 %v6852, %v6850
    %v7263 = vpack.c.b16 %v6855, %v6853
    %v7264 = vpack.c.b16 %v6856, %v6854
    %v7265 = vpack.c.b16 %v6859, %v6857
    %v7266 = vpack.c.b16 %v6860, %v6858
    %v7267 = vpack.c.b16 %v6863, %v6861
    %v7268 = vpack.c.b16 %v6864, %v6862
    %v7269 = vpack.c.b16 %v6867, %v6865
    %v7270 = vpack.c.b16 %v6868, %v6866
    %v7271 = vpack.c.b16 %v6871, %v6869
    %v7272 = vpack.c.b16 %v6872, %v6870
    %v7273 = vpack.c.b16 %v6875, %v6873
    %v7274 = vpack.c.b16 %v6876, %v6874
    %v7275 = vpack.c.b16 %v6879, %v6877
    %v7276 = vpack.c.b16 %v6880, %v6878
    %v7277 = vpack.c.b16 %v6883, %v6881
    %v7278 = vpack.c.b16 %v6884, %v6882
    %v7279 = vpack.c.b16 %v6887, %v6885
    %v7280 = vpack.c.b16 %v6888, %v6886
    %v7281 = vpack.c.b16 %v6891, %v6889
    %v7282 = vpack.c.b16 %v6892, %v6890
    %v7283 = vpack.c.b16 %v6895, %v6893
    %v7284 = vpack.c.b16 %v6896, %v6894
    %v7285 = vpack.c.b16 %v6899, %v6897
    %v7286 = vpack.c.b16 %v6900, %v6898
    %v7287 = vpack.c.b16 %v6903, %v6901
    %v7288 = vpack.c.b16 %v6904, %v6902
    %v7289 = vpack.c.b16 %v6907, %v6905
    %v7290 = vpack.c.b16 %v6908, %v6906
    %v7291 = vpack.c.b16 %v6911, %v6909
    %v7292 = vpack.c.b16 %v6912, %v6910
    %v7293 = vpack.c.b16 %v6915, %v6913
    %v7294 = vpack.c.b16 %v6916, %v6914
    %v7295 = vpack.c.b16 %v6919, %v6917
    %v7296 = vpack.c.b16 %v6920, %v6918
    %v7297 = vpack.c.b16 %v6923, %v6921
    %v7298 = vpack.c.b16 %v6924, %v6922
    %v7299 = vpack.c.b16 %v6927, %v6925
    %v7300 = vpack.c.b16 %v6928, %v6926
    %v7301 = vpack.c.b16 %v6931, %v6929
    %v7302 = vpack.c.b16 %v6932, %v6930
    %v7303 = vpack.c.b16 %v6935, %v6933
    %v7304 = vpack.c.b16 %v6936, %v6934
    %v7305 = vpack.c.b16 %v6939, %v6937
    %v7306 = vpack.c.b16 %v6940, %v6938
    %v7307 = vpack.c.b16 %v6943, %v6941
    %v7308 = vpack.c.b16 %v6944, %v6942
    %v7309 = vpack.c.b16 %v6947, %v6945
    %v7310 = vpack.c.b16 %v6948, %v6946
    %v7311 = vpack.c.b16 %v6951, %v6949
    %v7312 = vpack.c.b16 %v6952, %v6950
    %v7313 = vpack.c.b16 %v6955, %v6953
    %v7314 = vpack.c.b16 %v6956, %v6954
    %v7315 = vpack.c.b16 %v6959, %v6957
    %v7316 = vpack.c.b16 %v6960, %v6958
    %v7317 = vpack.c.b16 %v6963, %v6961
    %v7318 = vpack.c.b16 %v6964, %v6962
    %v7319 = vpack.c.b16 %v6967, %v6965
    %v7320 = vpack.c.b16 %v6968, %v6966
    %v7321 = vpack.c.b16 %v6971, %v6969
    %v7322 = vpack.c.b16 %v6972, %v6970
    %v7323 = vpack.c.b16 %v6975, %v6973
    %v7324 = vpack.c.b16 %v6976, %v6974
    %v7325 = vpack.c.b16 %v6979, %v6977
    %v7326 = vpack.c.b16 %v6980, %v6978
    %v7327 = vpack.c.b16 %v6983, %v6981
    %v7328 = vpack.c.b16 %v6984, %v6982
    %v7329 = vpack.c.b16 %v6987, %v6985
    %v7330 = vpack.c.b16 %v6988, %v6986
    %v7331 = vpack.c.b16 %v6991, %v6989
    %v7332 = vpack.c.b16 %v6992, %v6990
    %v7333 = vpack.c.b16 %v6995, %v6993
    %v7334 = vpack.c.b16 %v6996, %v6994
    %v7335 = vpack.c.b16 %v6999, %v6997
    %v7336 = vpack.c.b16 %v7000, %v6998
    %v7337 = vpack.c.b16 %v7003, %v7001
    %v7338 = vpack.c.b16 %v7004, %v7002
    %v7339 = vpack.c.b16 %v7007, %v7005
    %v7340 = vpack.c.b16 %v7008, %v7006
    %v7341 = vpack.c.b16 %v7011, %v7009
    %v7342 = vpack.c.b16 %v7012, %v7010
    %v7343 = vpack.c.b16 %v7015, %v7013
    %v7344 = vpack.c.b16 %v7016, %v7014
    %v7345 = vpack.c.b16 %v7019, %v7017
    %v7346 = vpack.c.b16 %v7020, %v7018
    %v7347 = vpack.c.b16 %v7023, %v7021
    %v7348 = vpack.c.b16 %v7024, %v7022
    %v7349 = vpack.c.b16 %v7027, %v7025
    %v7350 = vpack.c.b16 %v7028, %v7026
    %v7351 = vpack.c.b16 %v7031, %v7029
    %v7352 = vpack.c.b16 %v7032, %v7030
    %v7353 = vpack.c.b16 %v7035, %v7033
    %v7354 = vpack.c.b16 %v7036, %v7034
    %v7355 = vpack.c.b16 %v7039, %v7037
    %v7356 = vpack.c.b16 %v7040, %v7038
    %v7357 = vpack.c.b16 %v7043, %v7041
    %v7358 = vpack.c.b16 %v7044, %v7042
    %v7359 = vpack.c.b16 %v7047, %v7045
    %v7360 = vpack.c.b16 %v7048, %v7046
    %v7361 = vpack.c.b16 %v7051, %v7049
    %v7362 = vpack.c.b16 %v7052, %v7050
    %v7363 = vpack.c.b16 %v7055, %v7053
    %v7364 = vpack.c.b16 %v7056, %v7054
    %v7365 = vpack.c.b16 %v7059, %v7057
    %v7366 = vpack.c.b16 %v7060, %v7058
    %v7367 = vpack.c.b16 %v7063, %v7061
    %v7368 = vpack.c.b16 %v7064, %v7062
    %v7369 = vpack.c.b16 %v7067, %v7065
    %v7370 = vpack.c.b16 %v7068, %v7066
    %v7371 = vpack.c.b16 %v7071, %v7069
    %v7372 = vpack.c.b16 %v7072, %v7070
    %v7373 = vpack.c.b16 %v7075, %v7073
    %v7374 = vpack.c.b16 %v7076, %v7074
    %v7375 = vpack.c.b16 %v7079, %v7077
    %v7376 = vpack.c.b16 %v7080, %v7078
    %v7377 = vpack.c.b16 %v7083, %v7081
    %v7378 = vpack.c.b16 %v7084, %v7082
    %v7379 = vpack.c.b16 %v7087, %v7085
    %v7380 = vpack.c.b16 %v7088, %v7086
    %v7381 = vpack.c.b16 %v7091, %v7089
    %v7382 = vpack.c.b16 %v7092, %v7090
    %v7383 = vpack.c.b16 %v7095, %v7093
    %v7384 = vpack.c.b16 %v7096, %v7094
    %v7385 = vpack.c.b16 %v7099, %v7097
    %v7386 = vpack.c.b16 %v7100, %v7098
    %v7387 = vpack.c.b16 %v7103, %v7101
    %v7388 = vpack.c.b16 %v7104, %v7102
    %v7389 = vpack.c.b16 %v7107, %v7105
    %v7390 = vpack.c.b16 %v7108, %v7106
    %v7391 = vpack.c.b16 %v7111, %v7109
    %v7392 = vpack.c.b16 %v7112, %v7110
    %v7393 = vpack.c.b16 %v7115, %v7113
    %v7394 = vpack.c.b16 %v7116, %v7114
    %v7395 = vpack.c.b16 %v7119, %v7117
    %v7396 = vpack.c.b16 %v7120, %v7118
    %v7397 = vpack.c.b16 %v7123, %v7121
    %v7398 = vpack.c.b16 %v7124, %v7122
    %v7399 = vpack.c.b16 %v7127, %v7125
    %v7400 = vpack.c.b16 %v7128, %v7126
    %v7401 = vpack.c.b16 %v7131, %v7129
    %v7402 = vpack.c.b16 %v7132, %v7130
    %v7403 = vpack.c.b16 %v7135, %v7133
    %v7404 = vpack.c.b16 %v7136, %v7134
    %v7405 = vpack.c.b16 %v7139, %v7137
    %v7406 = vpack.c.b16 %v7140, %v7138
    %v7407 = vpack.c.b16 %v7143, %v7141
    %v7408 = vpack.c.b16 %v7144, %v7142
    %v7409 = vpack.c.b16 %v7147, %v7145
    %v7410 = vpack.c.b16 %v7148, %v7146
    %v7411 = vpack.c.b16 %v7151, %v7149
    %v7412 = vpack.c.b16 %v7152, %v7150
    %v7413 = vpack.c.b16 %v7155, %v7153
    %v7414 = vpack.c.b16 %v7156, %v7154
    %v7415 = vpack.c.b16 %v7159, %v7157
    %v7416 = vpack.c.b16 %v7160, %v7158
    %7673 = vmatprep.subr.bf16.mxu0 %v7162
    %7674 = vmatpush1.bf16.msra.mxu0 %v7161
    %7675 = vmatprep.subr.bf16.mxu0 %v7164
    %7676 = vmatpush1.bf16.msra.mxu0 %v7163
    %7677 = vmatprep.subr.bf16.mxu0 %v7166
    %7678 = vmatpush1.bf16.msra.mxu0 %v7165
    %7679 = vmatprep.subr.bf16.mxu0 %v7168
    %7680 = vmatpush1.bf16.msra.mxu0 %v7167
    %7681 = vmatprep.subr.bf16.mxu0 %v7170
    %7682 = vmatpush1.bf16.msra.mxu0 %v7169
    %7683 = vmatprep.subr.bf16.mxu0 %v7172
    %7684 = vmatpush1.bf16.msra.mxu0 %v7171
    %7685 = vmatprep.subr.bf16.mxu0 %v7174
    %7686 = vmatpush1.bf16.msra.mxu0 %v7173
    %7687 = vmatprep.subr.bf16.mxu0 %v7176
    %7688 = vmatpush1.bf16.msra.mxu0 %v7175
    %7689 = vmatprep.subr.bf16.mxu0 %v7178
    %7690 = vmatpush1.bf16.msra.mxu0 %v7177
    %7691 = vmatprep.subr.bf16.mxu0 %v7180
    %7692 = vmatpush1.bf16.msra.mxu0 %v7179
    %7693 = vmatprep.subr.bf16.mxu0 %v7182
    %7694 = vmatpush1.bf16.msra.mxu0 %v7181
    %7695 = vmatprep.subr.bf16.mxu0 %v7184
    %7696 = vmatpush1.bf16.msra.mxu0 %v7183
    %7697 = vmatprep.subr.bf16.mxu0 %v7186
    %7698 = vmatpush1.bf16.msra.mxu0 %v7185
    %7699 = vmatprep.subr.bf16.mxu0 %v7188
    %7700 = vmatpush1.bf16.msra.mxu0 %v7187
    %7701 = vmatprep.subr.bf16.mxu0 %v7190
    %7702 = vmatpush1.bf16.msra.mxu0 %v7189
    %7703 = vmatprep.subr.bf16.mxu0 %v7192
    %7704 = vmatpush1.bf16.msra.mxu0 %v7191
    %7705 = vmatprep.mubr.bf16.mxu0 %v6362
    %7706 = vmatmul.mubr.bf16.gmra.mrb[0].mxu0 %v6361
    %v7707 = vpop.f32.mrb[0].mxu0
    %v7708 = vadd.f32 %v6330, %v7707
    %v7709 = vpop.f32.mrb[0].mxu0
    %v7710 = vadd.f32 %v6334, %v7709
    %v7711 = vpop.f32.mrb[0].mxu0
    %v7712 = vpop.f32.mrb[0].mxu0
    %7713 = vdwg.mxu0
    %7714 = vmatprep.subr.bf16.mxu0 %v7194
    %7715 = vmatpush1.bf16.msra.mxu0 %v7193
    %7716 = vmatprep.subr.bf16.mxu0 %v7196
    %7717 = vmatpush1.bf16.msra.mxu0 %v7195
    %7718 = vmatprep.subr.bf16.mxu0 %v7198
    %7719 = vmatpush1.bf16.msra.mxu0 %v7197
    %7720 = vmatprep.subr.bf16.mxu0 %v7200
    %7721 = vmatpush1.bf16.msra.mxu0 %v7199
    %7722 = vmatprep.subr.bf16.mxu0 %v7202
    %7723 = vmatpush1.bf16.msra.mxu0 %v7201
    %7724 = vmatprep.subr.bf16.mxu0 %v7204
    %7725 = vmatpush1.bf16.msra.mxu0 %v7203
    %7726 = vmatprep.subr.bf16.mxu0 %v7206
    %7727 = vmatpush1.bf16.msra.mxu0 %v7205
    %7728 = vmatprep.subr.bf16.mxu0 %v7208
    %7729 = vmatpush1.bf16.msra.mxu0 %v7207
    %7730 = vmatprep.subr.bf16.mxu0 %v7210
    %7731 = vmatpush1.bf16.msra.mxu0 %v7209
    %7732 = vmatprep.subr.bf16.mxu0 %v7212
    %7733 = vmatpush1.bf16.msra.mxu0 %v7211
    %7734 = vmatprep.subr.bf16.mxu0 %v7214
    %7735 = vmatpush1.bf16.msra.mxu0 %v7213
    %7736 = vmatprep.subr.bf16.mxu0 %v7216
    %7737 = vmatpush1.bf16.msra.mxu0 %v7215
    %7738 = vmatprep.subr.bf16.mxu0 %v7218
    %7739 = vmatpush1.bf16.msra.mxu0 %v7217
    %7740 = vmatprep.subr.bf16.mxu0 %v7220
    %7741 = vmatpush1.bf16.msra.mxu0 %v7219
    %7742 = vmatprep.subr.bf16.mxu0 %v7222
    %7743 = vmatpush1.bf16.msra.mxu0 %v7221
    %7744 = vmatprep.subr.bf16.mxu0 %v7224
    %7745 = vmatpush1.bf16.msra.mxu0 %v7223
    %7746 = vmatprep.mubr.bf16.mxu0 %v6364
    %7747 = vmatmul.mubr.bf16.gmra.mrb[0].mxu0 %v6363
    %v7748 = vpop.f32.mrb[0].mxu0
    %v7749 = vadd.f32 %v7708, %v7748
    %v7750 = vpop.f32.mrb[0].mxu0
    %v7751 = vadd.f32 %v7710, %v7750
    %v7752 = vpop.f32.mrb[0].mxu0
    %v7753 = vpop.f32.mrb[0].mxu0
    %7754 = vdwg.mxu0
    %7755 = vmatprep.subr.bf16.mxu0 %v7226
    %7756 = vmatpush1.bf16.msra.mxu0 %v7225
    %7757 = vmatprep.subr.bf16.mxu0 %v7228
    %7758 = vmatpush1.bf16.msra.mxu0 %v7227
    %7759 = vmatprep.subr.bf16.mxu0 %v7230
    %7760 = vmatpush1.bf16.msra.mxu0 %v7229
    %7761 = vmatprep.subr.bf16.mxu0 %v7232
    %7762 = vmatpush1.bf16.msra.mxu0 %v7231
    %7763 = vmatprep.subr.bf16.mxu0 %v7234
    %7764 = vmatpush1.bf16.msra.mxu0 %v7233
    %7765 = vmatprep.subr.bf16.mxu0 %v7236
    %7766 = vmatpush1.bf16.msra.mxu0 %v7235
    %7767 = vmatprep.subr.bf16.mxu0 %v7238
    %7768 = vmatpush1.bf16.msra.mxu0 %v7237
    %7769 = vmatprep.subr.bf16.mxu0 %v7240
    %7770 = vmatpush1.bf16.msra.mxu0 %v7239
    %7771 = vmatprep.subr.bf16.mxu0 %v7242
    %7772 = vmatpush1.bf16.msra.mxu0 %v7241
    %7773 = vmatprep.subr.bf16.mxu0 %v7244
    %7774 = vmatpush1.bf16.msra.mxu0 %v7243
    %7775 = vmatprep.subr.bf16.mxu0 %v7246
    %7776 = vmatpush1.bf16.msra.mxu0 %v7245
    %7777 = vmatprep.subr.bf16.mxu0 %v7248
    %7778 = vmatpush1.bf16.msra.mxu0 %v7247
    %7779 = vmatprep.subr.bf16.mxu0 %v7250
    %7780 = vmatpush1.bf16.msra.mxu0 %v7249
    %7781 = vmatprep.subr.bf16.mxu0 %v7252
    %7782 = vmatpush1.bf16.msra.mxu0 %v7251
    %7783 = vmatprep.subr.bf16.mxu0 %v7254
    %7784 = vmatpush1.bf16.msra.mxu0 %v7253
    %7785 = vmatprep.subr.bf16.mxu0 %v7256
    %7786 = vmatpush1.bf16.msra.mxu0 %v7255
    %7787 = vmatprep.mubr.bf16.mxu0 %v6366
    %7788 = vmatmul.mubr.bf16.gmra.mrb[0].mxu0 %v6365
    %v7789 = vpop.f32.mrb[0].mxu0
    %v7790 = vadd.f32 %v7749, %v7789
    %v7791 = vpop.f32.mrb[0].mxu0
    %v7792 = vadd.f32 %v7751, %v7791
    %v7793 = vpop.f32.mrb[0].mxu0
    %v7794 = vpop.f32.mrb[0].mxu0
    %7795 = vdwg.mxu0
    %7796 = vmatprep.subr.bf16.mxu0 %v7258
    %7797 = vmatpush1.bf16.msra.mxu0 %v7257
    %7798 = vmatprep.subr.bf16.mxu0 %v7260
    %7799 = vmatpush1.bf16.msra.mxu0 %v7259
    %7800 = vmatprep.subr.bf16.mxu0 %v7262
    %7801 = vmatpush1.bf16.msra.mxu0 %v7261
    %7802 = vmatprep.subr.bf16.mxu0 %v7264
    %7803 = vmatpush1.bf16.msra.mxu0 %v7263
    %7804 = vmatprep.subr.bf16.mxu0 %v7266
    %7805 = vmatpush1.bf16.msra.mxu0 %v7265
    %7806 = vmatprep.subr.bf16.mxu0 %v7268
    %7807 = vmatpush1.bf16.msra.mxu0 %v7267
    %7808 = vmatprep.subr.bf16.mxu0 %v7270
    %7809 = vmatpush1.bf16.msra.mxu0 %v7269
    %7810 = vmatprep.subr.bf16.mxu0 %v7272
    %7811 = vmatpush1.bf16.msra.mxu0 %v7271
    %7812 = vmatprep.subr.bf16.mxu0 %v7274
    %7813 = vmatpush1.bf16.msra.mxu0 %v7273
    %7814 = vmatprep.subr.bf16.mxu0 %v7276
    %7815 = vmatpush1.bf16.msra.mxu0 %v7275
    %7816 = vmatprep.subr.bf16.mxu0 %v7278
    %7817 = vmatpush1.bf16.msra.mxu0 %v7277
    %7818 = vmatprep.subr.bf16.mxu0 %v7280
    %7819 = vmatpush1.bf16.msra.mxu0 %v7279
    %7820 = vmatprep.subr.bf16.mxu0 %v7282
    %7821 = vmatpush1.bf16.msra.mxu0 %v7281
    %7822 = vmatprep.subr.bf16.mxu0 %v7284
    %7823 = vmatpush1.bf16.msra.mxu0 %v7283
    %7824 = vmatprep.subr.bf16.mxu0 %v7286
    %7825 = vmatpush1.bf16.msra.mxu0 %v7285
    %7826 = vmatprep.subr.bf16.mxu0 %v7288
    %7827 = vmatpush1.bf16.msra.mxu0 %v7287
    %7828 = vmatprep.mubr.bf16.mxu0 %v6368
    %7829 = vmatmul.mubr.bf16.gmra.mrb[0].mxu0 %v6367
    %v7830 = vpop.f32.mrb[0].mxu0
    %v7831 = vadd.f32 %v7790, %v7830
    %v7832 = vpop.f32.mrb[0].mxu0
    %v7833 = vadd.f32 %v7792, %v7832
    %v7834 = vpop.f32.mrb[0].mxu0
    %v7835 = vpop.f32.mrb[0].mxu0
    %7836 = vdwg.mxu0
    %7837 = vmatprep.subr.bf16.mxu0 %v7290
    %7838 = vmatpush1.bf16.msra.mxu0 %v7289
    %7839 = vmatprep.subr.bf16.mxu0 %v7292
    %7840 = vmatpush1.bf16.msra.mxu0 %v7291
    %7841 = vmatprep.subr.bf16.mxu0 %v7294
    %7842 = vmatpush1.bf16.msra.mxu0 %v7293
    %7843 = vmatprep.subr.bf16.mxu0 %v7296
    %7844 = vmatpush1.bf16.msra.mxu0 %v7295
    %7845 = vmatprep.subr.bf16.mxu0 %v7298
    %7846 = vmatpush1.bf16.msra.mxu0 %v7297
    %7847 = vmatprep.subr.bf16.mxu0 %v7300
    %7848 = vmatpush1.bf16.msra.mxu0 %v7299
    %7849 = vmatprep.subr.bf16.mxu0 %v7302
    %7850 = vmatpush1.bf16.msra.mxu0 %v7301
    %7851 = vmatprep.subr.bf16.mxu0 %v7304
    %7852 = vmatpush1.bf16.msra.mxu0 %v7303
    %7853 = vmatprep.subr.bf16.mxu0 %v7306
    %7854 = vmatpush1.bf16.msra.mxu0 %v7305
    %7855 = vmatprep.subr.bf16.mxu0 %v7308
    %7856 = vmatpush1.bf16.msra.mxu0 %v7307
    %7857 = vmatprep.subr.bf16.mxu0 %v7310
    %7858 = vmatpush1.bf16.msra.mxu0 %v7309
    %7859 = vmatprep.subr.bf16.mxu0 %v7312
    %7860 = vmatpush1.bf16.msra.mxu0 %v7311
    %7861 = vmatprep.subr.bf16.mxu0 %v7314
    %7862 = vmatpush1.bf16.msra.mxu0 %v7313
    %7863 = vmatprep.subr.bf16.mxu0 %v7316
    %7864 = vmatpush1.bf16.msra.mxu0 %v7315
    %7865 = vmatprep.subr.bf16.mxu0 %v7318
    %7866 = vmatpush1.bf16.msra.mxu0 %v7317
    %7867 = vmatprep.subr.bf16.mxu0 %v7320
    %7868 = vmatpush1.bf16.msra.mxu0 %v7319
    %7869 = vmatprep.mubr.bf16.mxu0 %v6370
    %7870 = vmatmul.mubr.bf16.gmra.mrb[0].mxu0 %v6369
    %v7871 = vpop.f32.mrb[0].mxu0
    %v7872 = vadd.f32 %v7831, %v7871
    %v7873 = vpop.f32.mrb[0].mxu0
    %v7874 = vadd.f32 %v7833, %v7873
    %v7875 = vpop.f32.mrb[0].mxu0
    %v7876 = vpop.f32.mrb[0].mxu0
    %7877 = vdwg.mxu0
    %7878 = vmatprep.subr.bf16.mxu0 %v7322
    %7879 = vmatpush1.bf16.msra.mxu0 %v7321
    %7880 = vmatprep.subr.bf16.mxu0 %v7324
    %7881 = vmatpush1.bf16.msra.mxu0 %v7323
    %7882 = vmatprep.subr.bf16.mxu0 %v7326
    %7883 = vmatpush1.bf16.msra.mxu0 %v7325
    %7884 = vmatprep.subr.bf16.mxu0 %v7328
    %7885 = vmatpush1.bf16.msra.mxu0 %v7327
    %7886 = vmatprep.subr.bf16.mxu0 %v7330
    %7887 = vmatpush1.bf16.msra.mxu0 %v7329
    %7888 = vmatprep.subr.bf16.mxu0 %v7332
    %7889 = vmatpush1.bf16.msra.mxu0 %v7331
    %7890 = vmatprep.subr.bf16.mxu0 %v7334
    %7891 = vmatpush1.bf16.msra.mxu0 %v7333
    %7892 = vmatprep.subr.bf16.mxu0 %v7336
    %7893 = vmatpush1.bf16.msra.mxu0 %v7335
    %7894 = vmatprep.subr.bf16.mxu0 %v7338
    %7895 = vmatpush1.bf16.msra.mxu0 %v7337
    %7896 = vmatprep.subr.bf16.mxu0 %v7340
    %7897 = vmatpush1.bf16.msra.mxu0 %v7339
    %7898 = vmatprep.subr.bf16.mxu0 %v7342
    %7899 = vmatpush1.bf16.msra.mxu0 %v7341
    %7900 = vmatprep.subr.bf16.mxu0 %v7344
    %7901 = vmatpush1.bf16.msra.mxu0 %v7343
    %7902 = vmatprep.subr.bf16.mxu0 %v7346
    %7903 = vmatpush1.bf16.msra.mxu0 %v7345
    %7904 = vmatprep.subr.bf16.mxu0 %v7348
    %7905 = vmatpush1.bf16.msra.mxu0 %v7347
    %7906 = vmatprep.subr.bf16.mxu0 %v7350
    %7907 = vmatpush1.bf16.msra.mxu0 %v7349
    %7908 = vmatprep.subr.bf16.mxu0 %v7352
    %7909 = vmatpush1.bf16.msra.mxu0 %v7351
    %7910 = vmatprep.mubr.bf16.mxu0 %v6372
    %7911 = vmatmul.mubr.bf16.gmra.mrb[0].mxu0 %v6371
    %v7912 = vpop.f32.mrb[0].mxu0
    %v7913 = vadd.f32 %v7872, %v7912
    %v7914 = vpop.f32.mrb[0].mxu0
    %v7915 = vadd.f32 %v7874, %v7914
    %v7916 = vpop.f32.mrb[0].mxu0
    %v7917 = vpop.f32.mrb[0].mxu0
    %7918 = vdwg.mxu0
    %7919 = vmatprep.subr.bf16.mxu0 %v7354
    %7920 = vmatpush1.bf16.msra.mxu0 %v7353
    %7921 = vmatprep.subr.bf16.mxu0 %v7356
    %7922 = vmatpush1.bf16.msra.mxu0 %v7355
    %7923 = vmatprep.subr.bf16.mxu0 %v7358
    %7924 = vmatpush1.bf16.msra.mxu0 %v7357
    %7925 = vmatprep.subr.bf16.mxu0 %v7360
    %7926 = vmatpush1.bf16.msra.mxu0 %v7359
    %7927 = vmatprep.subr.bf16.mxu0 %v7362
    %7928 = vmatpush1.bf16.msra.mxu0 %v7361
    %7929 = vmatprep.subr.bf16.mxu0 %v7364
    %7930 = vmatpush1.bf16.msra.mxu0 %v7363
    %7931 = vmatprep.subr.bf16.mxu0 %v7366
    %7932 = vmatpush1.bf16.msra.mxu0 %v7365
    %7933 = vmatprep.subr.bf16.mxu0 %v7368
    %7934 = vmatpush1.bf16.msra.mxu0 %v7367
    %7935 = vmatprep.subr.bf16.mxu0 %v7370
    %7936 = vmatpush1.bf16.msra.mxu0 %v7369
    %7937 = vmatprep.subr.bf16.mxu0 %v7372
    %7938 = vmatpush1.bf16.msra.mxu0 %v7371
    %7939 = vmatprep.subr.bf16.mxu0 %v7374
    %7940 = vmatpush1.bf16.msra.mxu0 %v7373
    %7941 = vmatprep.subr.bf16.mxu0 %v7376
    %7942 = vmatpush1.bf16.msra.mxu0 %v7375
    %7943 = vmatprep.subr.bf16.mxu0 %v7378
    %7944 = vmatpush1.bf16.msra.mxu0 %v7377
    %7945 = vmatprep.subr.bf16.mxu0 %v7380
    %7946 = vmatpush1.bf16.msra.mxu0 %v7379
    %7947 = vmatprep.subr.bf16.mxu0 %v7382
    %7948 = vmatpush1.bf16.msra.mxu0 %v7381
    %7949 = vmatprep.subr.bf16.mxu0 %v7384
    %7950 = vmatpush1.bf16.msra.mxu0 %v7383
    %7951 = vmatprep.mubr.bf16.mxu0 %v6374
    %7952 = vmatmul.mubr.bf16.gmra.mrb[0].mxu0 %v6373
    %v7953 = vpop.f32.mrb[0].mxu0
    %v7954 = vadd.f32 %v7913, %v7953
    %v7955 = vpop.f32.mrb[0].mxu0
    %v7956 = vadd.f32 %v7915, %v7955
    %v7957 = vpop.f32.mrb[0].mxu0
    %v7958 = vpop.f32.mrb[0].mxu0
    %7959 = vdwg.mxu0
    %7960 = vmatprep.subr.bf16.mxu0 %v7386
    %7961 = vmatpush1.bf16.msra.mxu0 %v7385
    %7962 = vmatprep.subr.bf16.mxu0 %v7388
    %7963 = vmatpush1.bf16.msra.mxu0 %v7387
    %7964 = vmatprep.subr.bf16.mxu0 %v7390
    %7965 = vmatpush1.bf16.msra.mxu0 %v7389
    %7966 = vmatprep.subr.bf16.mxu0 %v7392
    %7967 = vmatpush1.bf16.msra.mxu0 %v7391
    %7968 = vmatprep.subr.bf16.mxu0 %v7394
    %7969 = vmatpush1.bf16.msra.mxu0 %v7393
    %7970 = vmatprep.subr.bf16.mxu0 %v7396
    %7971 = vmatpush1.bf16.msra.mxu0 %v7395
    %7972 = vmatprep.subr.bf16.mxu0 %v7398
    %7973 = vmatpush1.bf16.msra.mxu0 %v7397
    %7974 = vmatprep.subr.bf16.mxu0 %v7400
    %7975 = vmatpush1.bf16.msra.mxu0 %v7399
    %7976 = vmatprep.subr.bf16.mxu0 %v7402
    %7977 = vmatpush1.bf16.msra.mxu0 %v7401
    %7978 = vmatprep.subr.bf16.mxu0 %v7404
    %7979 = vmatpush1.bf16.msra.mxu0 %v7403
    %7980 = vmatprep.subr.bf16.mxu0 %v7406
    %7981 = vmatpush1.bf16.msra.mxu0 %v7405
    %7982 = vmatprep.subr.bf16.mxu0 %v7408
    %7983 = vmatpush1.bf16.msra.mxu0 %v7407
    %7984 = vmatprep.subr.bf16.mxu0 %v7410
    %7985 = vmatpush1.bf16.msra.mxu0 %v7409
    %7986 = vmatprep.subr.bf16.mxu0 %v7412
    %7987 = vmatpush1.bf16.msra.mxu0 %v7411
    %7988 = vmatprep.subr.bf16.mxu0 %v7414
    %7989 = vmatpush1.bf16.msra.mxu0 %v7413
    %7990 = vmatprep.subr.bf16.mxu0 %v7416
    %7991 = vmatpush1.bf16.msra.mxu0 %v7415
    %7992 = vmatprep.mubr.bf16.mxu0 %v6376
    %7993 = vmatmul.mubr.bf16.gmra.mrb[0].mxu0 %v6375
    %v7994 = vpop.f32.mrb[0].mxu0
    %v7995 = vadd.f32 %v7954, %v7994
    %v7996 = vpop.f32.mrb[0].mxu0
    %v7997 = vadd.f32 %v7956, %v7996
    %v7998 = vpop.f32.mrb[0].mxu0
    %v7999 = vpop.f32.mrb[0].mxu0
    %8000 = vdwg.mxu0
    %v8001 = vmax.f32 %v7995, 0.0
    %v8002 = vmax.f32 %v7997, 0.0
    %v8003 = vpack.c.bf16 %v8001, %v8001
    %v8004 = vpack.c.bf16 %v8002, %v8002
    %v8005 = vld [vmem:[#allocation3] sm:$0xff]
    %v8006 = vld [vmem:[#allocation12 + $0x100] sm:$0xf]
    %v8007 = vld [vmem:[#allocation12 + $0x104] sm:$0xf]
    %v8008 = vld [vmem:[#allocation12 + $0x108] sm:$0xf]
    %v8009 = vld [vmem:[#allocation12 + $0x10c] sm:$0xf]
    %v8010 = vld [vmem:[#allocation12 + $0x110] sm:$0xf]
    %v8011 = vld [vmem:[#allocation12 + $0x114] sm:$0xf]
    %v8012 = vld [vmem:[#allocation12 + $0x118] sm:$0xf]
    %v8013 = vld [vmem:[#allocation12 + $0x11c] sm:$0xf]
    %v8014 = vld [vmem:[#allocation12 + $0x120] sm:$0xf]
    %v8015 = vld [vmem:[#allocation12 + $0x124] sm:$0xf]
    %v8016 = vld [vmem:[#allocation12 + $0x128] sm:$0xf]
    %v8017 = vld [vmem:[#allocation12 + $0x12c] sm:$0xf]
    %v8018 = vld [vmem:[#allocation12 + $0x130] sm:$0xf]
    %v8019 = vld [vmem:[#allocation12 + $0x134] sm:$0xf]
    %v8020 = vld [vmem:[#allocation12 + $0x138] sm:$0xf]
    %v8021 = vld [vmem:[#allocation12 + $0x13c] sm:$0xf]
    %v8022 = vld [vmem:[#allocation12 + $0x140] sm:$0xf]
    %v8023 = vld [vmem:[#allocation12 + $0x144] sm:$0xf]
    %v8024 = vld [vmem:[#allocation12 + $0x148] sm:$0xf]
    %v8025 = vld [vmem:[#allocation12 + $0x14c] sm:$0xf]
    %v8026 = vld [vmem:[#allocation12 + $0x150] sm:$0xf]
    %v8027 = vld [vmem:[#allocation12 + $0x154] sm:$0xf]
    %v8028 = vld [vmem:[#allocation12 + $0x158] sm:$0xf]
    %v8029 = vld [vmem:[#allocation12 + $0x15c] sm:$0xf]
    %v8030 = vld [vmem:[#allocation12 + $0x160] sm:$0xf]
    %v8031 = vld [vmem:[#allocation12 + $0x164] sm:$0xf]
    %v8032 = vld [vmem:[#allocation12 + $0x168] sm:$0xf]
    %v8033 = vld [vmem:[#allocation12 + $0x16c] sm:$0xf]
    %v8034 = vld [vmem:[#allocation12 + $0x170] sm:$0xf]
    %v8035 = vld [vmem:[#allocation12 + $0x174] sm:$0xf]
    %v8036 = vld [vmem:[#allocation12 + $0x178] sm:$0xf]
    %v8037 = vld [vmem:[#allocation12 + $0x17c] sm:$0xf]
    %v8070 = vunpack.c.l.b16 %v8006
    %v8071 = vunpack.c.l.b16 %v8007
    %v8072 = vunpack.c.l.b16 %v8008
    %v8073 = vunpack.c.l.b16 %v8009
    %v8074 = vunpack.c.l.b16 %v8010
    %v8075 = vunpack.c.l.b16 %v8011
    %v8076 = vunpack.c.l.b16 %v8012
    %v8077 = vunpack.c.l.b16 %v8013
    %v8078 = vunpack.c.l.b16 %v8014
    %v8079 = vunpack.c.l.b16 %v8015
    %v8080 = vunpack.c.l.b16 %v8016
    %v8081 = vunpack.c.l.b16 %v8017
    %v8082 = vunpack.c.l.b16 %v8018
    %v8083 = vunpack.c.l.b16 %v8019
    %v8084 = vunpack.c.l.b16 %v8020
    %v8085 = vunpack.c.l.b16 %v8021
    %v8086 = vunpack.c.l.b16 %v8022
    %v8087 = vunpack.c.l.b16 %v8023
    %v8088 = vunpack.c.l.b16 %v8024
    %v8089 = vunpack.c.l.b16 %v8025
    %v8090 = vunpack.c.l.b16 %v8026
    %v8091 = vunpack.c.l.b16 %v8027
    %v8092 = vunpack.c.l.b16 %v8028
    %v8093 = vunpack.c.l.b16 %v8029
    %v8094 = vunpack.c.l.b16 %v8030
    %v8095 = vunpack.c.l.b16 %v8031
    %v8096 = vunpack.c.l.b16 %v8032
    %v8097 = vunpack.c.l.b16 %v8033
    %v8098 = vunpack.c.l.b16 %v8034
    %v8099 = vunpack.c.l.b16 %v8035
    %v8100 = vunpack.c.l.b16 %v8036
    %v8101 = vunpack.c.l.b16 %v8037
    %v8102 = vpack.c.b16 %v8071, %v8070
    %v8103 = vpack.c.b16 %v8073, %v8072
    %v8104 = vpack.c.b16 %v8075, %v8074
    %v8105 = vpack.c.b16 %v8077, %v8076
    %v8106 = vpack.c.b16 %v8079, %v8078
    %v8107 = vpack.c.b16 %v8081, %v8080
    %v8108 = vpack.c.b16 %v8083, %v8082
    %v8109 = vpack.c.b16 %v8085, %v8084
    %v8110 = vpack.c.b16 %v8087, %v8086
    %v8111 = vpack.c.b16 %v8089, %v8088
    %v8112 = vpack.c.b16 %v8091, %v8090
    %v8113 = vpack.c.b16 %v8093, %v8092
    %v8114 = vpack.c.b16 %v8095, %v8094
    %v8115 = vpack.c.b16 %v8097, %v8096
    %v8116 = vpack.c.b16 %v8099, %v8098
    %v8117 = vpack.c.b16 %v8101, %v8100
    %8134 = vmatprep.subr.bf16.mxu0 0
    %8135 = vmatpush1.bf16.msra.mxu0 %v8102
    %8136 = vmatprep.subr.bf16.mxu0 0
    %8137 = vmatpush1.bf16.msra.mxu0 %v8103
    %8138 = vmatprep.subr.bf16.mxu0 0
    %8139 = vmatpush1.bf16.msra.mxu0 %v8104
    %8140 = vmatprep.subr.bf16.mxu0 0
    %8141 = vmatpush1.bf16.msra.mxu0 %v8105
    %8142 = vmatprep.subr.bf16.mxu0 0
    %8143 = vmatpush1.bf16.msra.mxu0 %v8106
    %8144 = vmatprep.subr.bf16.mxu0 0
    %8145 = vmatpush1.bf16.msra.mxu0 %v8107
    %8146 = vmatprep.subr.bf16.mxu0 0
    %8147 = vmatpush1.bf16.msra.mxu0 %v8108
    %8148 = vmatprep.subr.bf16.mxu0 0
    %8149 = vmatpush1.bf16.msra.mxu0 %v8109
    %8150 = vmatprep.subr.bf16.mxu0 0
    %8151 = vmatpush1.bf16.msra.mxu0 %v8110
    %8152 = vmatprep.subr.bf16.mxu0 0
    %8153 = vmatpush1.bf16.msra.mxu0 %v8111
    %8154 = vmatprep.subr.bf16.mxu0 0
    %8155 = vmatpush1.bf16.msra.mxu0 %v8112
    %8156 = vmatprep.subr.bf16.mxu0 0
    %8157 = vmatpush1.bf16.msra.mxu0 %v8113
    %8158 = vmatprep.subr.bf16.mxu0 0
    %8159 = vmatpush1.bf16.msra.mxu0 %v8114
    %8160 = vmatprep.subr.bf16.mxu0 0
    %8161 = vmatpush1.bf16.msra.mxu0 %v8115
    %8162 = vmatprep.subr.bf16.mxu0 0
    %8163 = vmatpush1.bf16.msra.mxu0 %v8116
    %8164 = vmatprep.subr.bf16.mxu0 0
    %8165 = vmatpush1.bf16.msra.mxu0 %v8117
    %8166 = vmatprep.mubr.bf16.mxu0 %v8004
    %8167 = vmatmul.mubr.bf16.gmra.mrb[0].mxu0 %v8003
    %v8168 = vpop.f32.mrb[0].mxu0
    %v8169 = vadd.f32 0.0, %v8168
    %v8170 = vpop.f32.mrb[0].mxu0
    %v8171 = vpop.f32.mrb[0].mxu0
    %v8172 = vpop.f32.mrb[0].mxu0
    %8173 = vdwg.mxu0
    %v8174 = vadd.f32 %v8005, %v8169
    %8175 = vst [vmem:[#allocation3] sm:$0xff] %v8174
    %v8176 = vld [vmem:[#allocation2] sm:$0xff]
    %v8177 = vld [vmem:[#allocation2 + $0x8] sm:$0xff]
    %v8178 = vld [vmem:[#allocation2 + $0x10] sm:$0xff]
    %v8179 = vld [vmem:[#allocation2 + $0x18] sm:$0xff]
    %v8180 = vld [vmem:[#allocation2 + $0x20] sm:$0xff]
    %v8181 = vld [vmem:[#allocation2 + $0x28] sm:$0xff]
    %v8182 = vld [vmem:[#allocation2 + $0x30] sm:$0xff]
    %v8183 = vld [vmem:[#allocation2 + $0x38] sm:$0xff]
    %v8184 = vld [vmem:[#allocation9 + $0x18] sm:$0xff]
    %v8185 = vld [vmem:[#allocation9 + $0x38] sm:$0xff]
    %v8186 = vld [vmem:[#allocation9 + $0x58] sm:$0xff]
    %v8187 = vld [vmem:[#allocation9 + $0x78] sm:$0xff]
    %v8188 = vld [vmem:[#allocation9 + $0x98] sm:$0xff]
    %v8189 = vld [vmem:[#allocation9 + $0xb8] sm:$0xff]
    %v8190 = vld [vmem:[#allocation9 + $0xd8] sm:$0xff]
    %v8191 = vld [vmem:[#allocation9 + $0xf8] sm:$0xff]
    %v8192 = vld [vmem:[#allocation9 + $0x118] sm:$0xff]
    %v8193 = vld [vmem:[#allocation9 + $0x138] sm:$0xff]
    %v8194 = vld [vmem:[#allocation9 + $0x158] sm:$0xff]
    %v8195 = vld [vmem:[#allocation9 + $0x178] sm:$0xff]
    %v8196 = vld [vmem:[#allocation9 + $0x198] sm:$0xff]
    %v8197 = vld [vmem:[#allocation9 + $0x1b8] sm:$0xff]
    %v8198 = vld [vmem:[#allocation9 + $0x1d8] sm:$0xff]
    %v8199 = vld [vmem:[#allocation9 + $0x1f8] sm:$0xff]
    %v8200 = vld [vmem:[#allocation9 + $0x218] sm:$0xff]
    %v8201 = vld [vmem:[#allocation9 + $0x238] sm:$0xff]
    %v8202 = vld [vmem:[#allocation9 + $0x258] sm:$0xff]
    %v8203 = vld [vmem:[#allocation9 + $0x278] sm:$0xff]
    %v8204 = vld [vmem:[#allocation9 + $0x298] sm:$0xff]
    %v8205 = vld [vmem:[#allocation9 + $0x2b8] sm:$0xff]
    %v8206 = vld [vmem:[#allocation9 + $0x2d8] sm:$0xff]
    %v8207 = vld [vmem:[#allocation9 + $0x2f8] sm:$0xff]
    %v8208 = vld [vmem:[#allocation9 + $0x318] sm:$0xff]
    %v8209 = vld [vmem:[#allocation9 + $0x338] sm:$0xff]
    %v8210 = vld [vmem:[#allocation9 + $0x358] sm:$0xff]
    %v8211 = vld [vmem:[#allocation9 + $0x378] sm:$0xff]
    %v8212 = vld [vmem:[#allocation9 + $0x398] sm:$0xff]
    %v8213 = vld [vmem:[#allocation9 + $0x3b8] sm:$0xff]
    %v8214 = vld [vmem:[#allocation9 + $0x3d8] sm:$0xff]
    %v8215 = vld [vmem:[#allocation9 + $0x3f8] sm:$0xff]
    %v8216 = vld [vmem:[#allocation9 + $0x418] sm:$0xff]
    %v8217 = vld [vmem:[#allocation9 + $0x438] sm:$0xff]
    %v8218 = vld [vmem:[#allocation9 + $0x458] sm:$0xff]
    %v8219 = vld [vmem:[#allocation9 + $0x478] sm:$0xff]
    %v8220 = vld [vmem:[#allocation9 + $0x498] sm:$0xff]
    %v8221 = vld [vmem:[#allocation9 + $0x4b8] sm:$0xff]
    %v8222 = vld [vmem:[#allocation9 + $0x4d8] sm:$0xff]
    %v8223 = vld [vmem:[#allocation9 + $0x4f8] sm:$0xff]
    %v8224 = vld [vmem:[#allocation9 + $0x518] sm:$0xff]
    %v8225 = vld [vmem:[#allocation9 + $0x538] sm:$0xff]
    %v8226 = vld [vmem:[#allocation9 + $0x558] sm:$0xff]
    %v8227 = vld [vmem:[#allocation9 + $0x578] sm:$0xff]
    %v8228 = vld [vmem:[#allocation9 + $0x598] sm:$0xff]
    %v8229 = vld [vmem:[#allocation9 + $0x5b8] sm:$0xff]
    %v8230 = vld [vmem:[#allocation9 + $0x5d8] sm:$0xff]
    %v8231 = vld [vmem:[#allocation9 + $0x5f8] sm:$0xff]
    %v8232 = vld [vmem:[#allocation9 + $0x618] sm:$0xff]
    %v8233 = vld [vmem:[#allocation9 + $0x638] sm:$0xff]
    %v8234 = vld [vmem:[#allocation9 + $0x658] sm:$0xff]
    %v8235 = vld [vmem:[#allocation9 + $0x678] sm:$0xff]
    %v8236 = vld [vmem:[#allocation9 + $0x698] sm:$0xff]
    %v8237 = vld [vmem:[#allocation9 + $0x6b8] sm:$0xff]
    %v8238 = vld [vmem:[#allocation9 + $0x6d8] sm:$0xff]
    %v8239 = vld [vmem:[#allocation9 + $0x6f8] sm:$0xff]
    %v8240 = vld [vmem:[#allocation9 + $0x718] sm:$0xff]
    %v8241 = vld [vmem:[#allocation9 + $0x738] sm:$0xff]
    %v8242 = vld [vmem:[#allocation9 + $0x758] sm:$0xff]
    %v8243 = vld [vmem:[#allocation9 + $0x778] sm:$0xff]
    %v8244 = vld [vmem:[#allocation9 + $0x798] sm:$0xff]
    %v8245 = vld [vmem:[#allocation9 + $0x7b8] sm:$0xff]
    %v8246 = vld [vmem:[#allocation9 + $0x7d8] sm:$0xff]
    %v8247 = vld [vmem:[#allocation9 + $0x7f8] sm:$0xff]
    %v8248 = vld [vmem:[#allocation9 + $0x818] sm:$0xff]
    %v8249 = vld [vmem:[#allocation9 + $0x838] sm:$0xff]
    %v8250 = vld [vmem:[#allocation9 + $0x858] sm:$0xff]
    %v8251 = vld [vmem:[#allocation9 + $0x878] sm:$0xff]
    %v8252 = vld [vmem:[#allocation9 + $0x898] sm:$0xff]
    %v8253 = vld [vmem:[#allocation9 + $0x8b8] sm:$0xff]
    %v8254 = vld [vmem:[#allocation9 + $0x8d8] sm:$0xff]
    %v8255 = vld [vmem:[#allocation9 + $0x8f8] sm:$0xff]
    %v8256 = vld [vmem:[#allocation9 + $0x918] sm:$0xff]
    %v8257 = vld [vmem:[#allocation9 + $0x938] sm:$0xff]
    %v8258 = vld [vmem:[#allocation9 + $0x958] sm:$0xff]
    %v8259 = vld [vmem:[#allocation9 + $0x978] sm:$0xff]
    %v8260 = vld [vmem:[#allocation9 + $0x998] sm:$0xff]
    %v8261 = vld [vmem:[#allocation9 + $0x9b8] sm:$0xff]
    %v8262 = vld [vmem:[#allocation9 + $0x9d8] sm:$0xff]
    %v8263 = vld [vmem:[#allocation9 + $0x9f8] sm:$0xff]
    %v8264 = vld [vmem:[#allocation9 + $0xa18] sm:$0xff]
    %v8265 = vld [vmem:[#allocation9 + $0xa38] sm:$0xff]
    %v8266 = vld [vmem:[#allocation9 + $0xa58] sm:$0xff]
    %v8267 = vld [vmem:[#allocation9 + $0xa78] sm:$0xff]
    %v8268 = vld [vmem:[#allocation9 + $0xa98] sm:$0xff]
    %v8269 = vld [vmem:[#allocation9 + $0xab8] sm:$0xff]
    %v8270 = vld [vmem:[#allocation9 + $0xad8] sm:$0xff]
    %v8271 = vld [vmem:[#allocation9 + $0xaf8] sm:$0xff]
    %v8272 = vld [vmem:[#allocation9 + $0xb18] sm:$0xff]
    %v8273 = vld [vmem:[#allocation9 + $0xb38] sm:$0xff]
    %v8274 = vld [vmem:[#allocation9 + $0xb58] sm:$0xff]
    %v8275 = vld [vmem:[#allocation9 + $0xb78] sm:$0xff]
    %v8276 = vld [vmem:[#allocation9 + $0xb98] sm:$0xff]
    %v8277 = vld [vmem:[#allocation9 + $0xbb8] sm:$0xff]
    %v8278 = vld [vmem:[#allocation9 + $0xbd8] sm:$0xff]
    %v8279 = vld [vmem:[#allocation9 + $0xbf8] sm:$0xff]
    %v8280 = vld [vmem:[#allocation9 + $0xc18] sm:$0xff]
    %v8281 = vld [vmem:[#allocation9 + $0xc38] sm:$0xff]
    %v8282 = vld [vmem:[#allocation9 + $0xc58] sm:$0xff]
    %v8283 = vld [vmem:[#allocation9 + $0xc78] sm:$0xff]
    %v8284 = vld [vmem:[#allocation9 + $0xc98] sm:$0xff]
    %v8285 = vld [vmem:[#allocation9 + $0xcb8] sm:$0xff]
    %v8286 = vld [vmem:[#allocation9 + $0xcd8] sm:$0xff]
    %v8287 = vld [vmem:[#allocation9 + $0xcf8] sm:$0xff]
    %v8288 = vld [vmem:[#allocation9 + $0xd18] sm:$0xff]
    %v8289 = vld [vmem:[#allocation9 + $0xd38] sm:$0xff]
    %v8290 = vld [vmem:[#allocation9 + $0xd58] sm:$0xff]
    %v8291 = vld [vmem:[#allocation9 + $0xd78] sm:$0xff]
    %v8292 = vld [vmem:[#allocation9 + $0xd98] sm:$0xff]
    %v8293 = vld [vmem:[#allocation9 + $0xdb8] sm:$0xff]
    %v8294 = vld [vmem:[#allocation9 + $0xdd8] sm:$0xff]
    %v8295 = vld [vmem:[#allocation9 + $0xdf8] sm:$0xff]
    %v8296 = vld [vmem:[#allocation9 + $0xe18] sm:$0xff]
    %v8297 = vld [vmem:[#allocation9 + $0xe38] sm:$0xff]
    %v8298 = vld [vmem:[#allocation9 + $0xe58] sm:$0xff]
    %v8299 = vld [vmem:[#allocation9 + $0xe78] sm:$0xff]
    %v8300 = vld [vmem:[#allocation9 + $0xe98] sm:$0xff]
    %v8301 = vld [vmem:[#allocation9 + $0xeb8] sm:$0xff]
    %v8302 = vld [vmem:[#allocation9 + $0xed8] sm:$0xff]
    %v8303 = vld [vmem:[#allocation9 + $0xef8] sm:$0xff]
    %v8304 = vld [vmem:[#allocation9 + $0xf18] sm:$0xff]
    %v8305 = vld [vmem:[#allocation9 + $0xf38] sm:$0xff]
    %v8306 = vld [vmem:[#allocation9 + $0xf58] sm:$0xff]
    %v8307 = vld [vmem:[#allocation9 + $0xf78] sm:$0xff]
    %v8308 = vld [vmem:[#allocation9 + $0xf98] sm:$0xff]
    %v8309 = vld [vmem:[#allocation9 + $0xfb8] sm:$0xff]
    %v8310 = vld [vmem:[#allocation9 + $0xfd8] sm:$0xff]
    %v8311 = vld [vmem:[#allocation9 + $0xff8] sm:$0xff]
    %v8312 = vld [vmem:[#allocation9 + $0x1018] sm:$0xff]
    %v8313 = vld [vmem:[#allocation9 + $0x1038] sm:$0xff]
    %v8314 = vld [vmem:[#allocation9 + $0x1058] sm:$0xff]
    %v8315 = vld [vmem:[#allocation9 + $0x1078] sm:$0xff]
    %v8316 = vld [vmem:[#allocation9 + $0x1098] sm:$0xff]
    %v8317 = vld [vmem:[#allocation9 + $0x10b8] sm:$0xff]
    %v8318 = vld [vmem:[#allocation9 + $0x10d8] sm:$0xff]
    %v8319 = vld [vmem:[#allocation9 + $0x10f8] sm:$0xff]
    %v8320 = vld [vmem:[#allocation9 + $0x1118] sm:$0xff]
    %v8321 = vld [vmem:[#allocation9 + $0x1138] sm:$0xff]
    %v8322 = vld [vmem:[#allocation9 + $0x1158] sm:$0xff]
    %v8323 = vld [vmem:[#allocation9 + $0x1178] sm:$0xff]
    %v8324 = vld [vmem:[#allocation9 + $0x1198] sm:$0xff]
    %v8325 = vld [vmem:[#allocation9 + $0x11b8] sm:$0xff]
    %v8326 = vld [vmem:[#allocation9 + $0x11d8] sm:$0xff]
    %v8327 = vld [vmem:[#allocation9 + $0x11f8] sm:$0xff]
    %v8328 = vld [vmem:[#allocation9 + $0x1218] sm:$0xff]
    %v8329 = vld [vmem:[#allocation9 + $0x1238] sm:$0xff]
    %v8330 = vld [vmem:[#allocation9 + $0x1258] sm:$0xff]
    %v8331 = vld [vmem:[#allocation9 + $0x1278] sm:$0xff]
    %v8332 = vld [vmem:[#allocation9 + $0x1298] sm:$0xff]
    %v8333 = vld [vmem:[#allocation9 + $0x12b8] sm:$0xff]
    %v8334 = vld [vmem:[#allocation9 + $0x12d8] sm:$0xff]
    %v8335 = vld [vmem:[#allocation9 + $0x12f8] sm:$0xff]
    %v8336 = vld [vmem:[#allocation9 + $0x1318] sm:$0xff]
    %v8337 = vld [vmem:[#allocation9 + $0x1338] sm:$0xff]
    %v8338 = vld [vmem:[#allocation9 + $0x1358] sm:$0xff]
    %v8339 = vld [vmem:[#allocation9 + $0x1378] sm:$0xff]
    %v8340 = vld [vmem:[#allocation9 + $0x1398] sm:$0xff]
    %v8341 = vld [vmem:[#allocation9 + $0x13b8] sm:$0xff]
    %v8342 = vld [vmem:[#allocation9 + $0x13d8] sm:$0xff]
    %v8343 = vld [vmem:[#allocation9 + $0x13f8] sm:$0xff]
    %v8344 = vld [vmem:[#allocation9 + $0x1418] sm:$0xff]
    %v8345 = vld [vmem:[#allocation9 + $0x1438] sm:$0xff]
    %v8346 = vld [vmem:[#allocation9 + $0x1458] sm:$0xff]
    %v8347 = vld [vmem:[#allocation9 + $0x1478] sm:$0xff]
    %v8348 = vld [vmem:[#allocation9 + $0x1498] sm:$0xff]
    %v8349 = vld [vmem:[#allocation9 + $0x14b8] sm:$0xff]
    %v8350 = vld [vmem:[#allocation9 + $0x14d8] sm:$0xff]
    %v8351 = vld [vmem:[#allocation9 + $0x14f8] sm:$0xff]
    %v8352 = vld [vmem:[#allocation9 + $0x1518] sm:$0xff]
    %v8353 = vld [vmem:[#allocation9 + $0x1538] sm:$0xff]
    %v8354 = vld [vmem:[#allocation9 + $0x1558] sm:$0xff]
    %v8355 = vld [vmem:[#allocation9 + $0x1578] sm:$0xff]
    %v8356 = vld [vmem:[#allocation9 + $0x1598] sm:$0xff]
    %v8357 = vld [vmem:[#allocation9 + $0x15b8] sm:$0xff]
    %v8358 = vld [vmem:[#allocation9 + $0x15d8] sm:$0xff]
    %v8359 = vld [vmem:[#allocation9 + $0x15f8] sm:$0xff]
    %v8360 = vld [vmem:[#allocation9 + $0x1618] sm:$0xff]
    %v8361 = vld [vmem:[#allocation9 + $0x1638] sm:$0xff]
    %v8362 = vld [vmem:[#allocation9 + $0x1658] sm:$0xff]
    %v8363 = vld [vmem:[#allocation9 + $0x1678] sm:$0xff]
    %v8364 = vld [vmem:[#allocation9 + $0x1698] sm:$0xff]
    %v8365 = vld [vmem:[#allocation9 + $0x16b8] sm:$0xff]
    %v8366 = vld [vmem:[#allocation9 + $0x16d8] sm:$0xff]
    %v8367 = vld [vmem:[#allocation9 + $0x16f8] sm:$0xff]
    %v8368 = vld [vmem:[#allocation9 + $0x1718] sm:$0xff]
    %v8369 = vld [vmem:[#allocation9 + $0x1738] sm:$0xff]
    %v8370 = vld [vmem:[#allocation9 + $0x1758] sm:$0xff]
    %v8371 = vld [vmem:[#allocation9 + $0x1778] sm:$0xff]
    %v8372 = vld [vmem:[#allocation9 + $0x1798] sm:$0xff]
    %v8373 = vld [vmem:[#allocation9 + $0x17b8] sm:$0xff]
    %v8374 = vld [vmem:[#allocation9 + $0x17d8] sm:$0xff]
    %v8375 = vld [vmem:[#allocation9 + $0x17f8] sm:$0xff]
    %v8376 = vld [vmem:[#allocation9 + $0x1818] sm:$0xff]
    %v8377 = vld [vmem:[#allocation9 + $0x1838] sm:$0xff]
    %v8378 = vld [vmem:[#allocation9 + $0x1858] sm:$0xff]
    %v8379 = vld [vmem:[#allocation9 + $0x1878] sm:$0xff]
    %v8380 = vld [vmem:[#allocation9 + $0x1898] sm:$0xff]
    %v8381 = vld [vmem:[#allocation9 + $0x18b8] sm:$0xff]
    %v8382 = vld [vmem:[#allocation9 + $0x18d8] sm:$0xff]
    %v8383 = vld [vmem:[#allocation9 + $0x18f8] sm:$0xff]
    %v8384 = vld [vmem:[#allocation9 + $0x1918] sm:$0xff]
    %v8385 = vld [vmem:[#allocation9 + $0x1938] sm:$0xff]
    %v8386 = vld [vmem:[#allocation9 + $0x1958] sm:$0xff]
    %v8387 = vld [vmem:[#allocation9 + $0x1978] sm:$0xff]
    %v8388 = vld [vmem:[#allocation9 + $0x1998] sm:$0xff]
    %v8389 = vld [vmem:[#allocation9 + $0x19b8] sm:$0xff]
    %v8390 = vld [vmem:[#allocation9 + $0x19d8] sm:$0xff]
    %v8391 = vld [vmem:[#allocation9 + $0x19f8] sm:$0xff]
    %v8392 = vld [vmem:[#allocation9 + $0x1a18] sm:$0xff]
    %v8393 = vld [vmem:[#allocation9 + $0x1a38] sm:$0xff]
    %v8394 = vld [vmem:[#allocation9 + $0x1a58] sm:$0xff]
    %v8395 = vld [vmem:[#allocation9 + $0x1a78] sm:$0xff]
    %v8396 = vld [vmem:[#allocation9 + $0x1a98] sm:$0xff]
    %v8397 = vld [vmem:[#allocation9 + $0x1ab8] sm:$0xff]
    %v8398 = vld [vmem:[#allocation9 + $0x1ad8] sm:$0xff]
    %v8399 = vld [vmem:[#allocation9 + $0x1af8] sm:$0xff]
    %v8400 = vld [vmem:[#allocation9 + $0x1b18] sm:$0xff]
    %v8401 = vld [vmem:[#allocation9 + $0x1b38] sm:$0xff]
    %v8402 = vld [vmem:[#allocation9 + $0x1b58] sm:$0xff]
    %v8403 = vld [vmem:[#allocation9 + $0x1b78] sm:$0xff]
    %v8404 = vld [vmem:[#allocation9 + $0x1b98] sm:$0xff]
    %v8405 = vld [vmem:[#allocation9 + $0x1bb8] sm:$0xff]
    %v8406 = vld [vmem:[#allocation9 + $0x1bd8] sm:$0xff]
    %v8407 = vld [vmem:[#allocation9 + $0x1bf8] sm:$0xff]
    %v8408 = vld [vmem:[#allocation9 + $0x1c18] sm:$0xff]
    %v8409 = vld [vmem:[#allocation9 + $0x1c38] sm:$0xff]
    %v8410 = vld [vmem:[#allocation9 + $0x1c58] sm:$0xff]
    %v8411 = vld [vmem:[#allocation9 + $0x1c78] sm:$0xff]
    %v8412 = vld [vmem:[#allocation9 + $0x1c98] sm:$0xff]
    %v8413 = vld [vmem:[#allocation9 + $0x1cb8] sm:$0xff]
    %v8414 = vld [vmem:[#allocation9 + $0x1cd8] sm:$0xff]
    %v8415 = vld [vmem:[#allocation9 + $0x1cf8] sm:$0xff]
    %v8416 = vld [vmem:[#allocation9 + $0x1d18] sm:$0xff]
    %v8417 = vld [vmem:[#allocation9 + $0x1d38] sm:$0xff]
    %v8418 = vld [vmem:[#allocation9 + $0x1d58] sm:$0xff]
    %v8419 = vld [vmem:[#allocation9 + $0x1d78] sm:$0xff]
    %v8420 = vld [vmem:[#allocation9 + $0x1d98] sm:$0xff]
    %v8421 = vld [vmem:[#allocation9 + $0x1db8] sm:$0xff]
    %v8422 = vld [vmem:[#allocation9 + $0x1dd8] sm:$0xff]
    %v8423 = vld [vmem:[#allocation9 + $0x1df8] sm:$0xff]
    %v8424 = vld [vmem:[#allocation9 + $0x1e18] sm:$0xff]
    %v8425 = vld [vmem:[#allocation9 + $0x1e38] sm:$0xff]
    %v8426 = vld [vmem:[#allocation9 + $0x1e58] sm:$0xff]
    %v8427 = vld [vmem:[#allocation9 + $0x1e78] sm:$0xff]
    %v8428 = vld [vmem:[#allocation9 + $0x1e98] sm:$0xff]
    %v8429 = vld [vmem:[#allocation9 + $0x1eb8] sm:$0xff]
    %v8430 = vld [vmem:[#allocation9 + $0x1ed8] sm:$0xff]
    %v8431 = vld [vmem:[#allocation9 + $0x1ef8] sm:$0xff]
    %v8432 = vld [vmem:[#allocation9 + $0x1f18] sm:$0xff]
    %v8433 = vld [vmem:[#allocation9 + $0x1f38] sm:$0xff]
    %v8434 = vld [vmem:[#allocation9 + $0x1f58] sm:$0xff]
    %v8435 = vld [vmem:[#allocation9 + $0x1f78] sm:$0xff]
    %v8436 = vld [vmem:[#allocation9 + $0x1f98] sm:$0xff]
    %v8437 = vld [vmem:[#allocation9 + $0x1fb8] sm:$0xff]
    %v8438 = vld [vmem:[#allocation9 + $0x1fd8] sm:$0xff]
    %v8439 = vld [vmem:[#allocation9 + $0x1ff8] sm:$0xff]
    %v8440 = vld [vmem:[#allocation10 + $0x6] sm:$0x3]
    %v8442 = vlaneseq
    %v8443 = vshrl.u32 %v8442, 7
    %v8444 = vsub.s32 0, %v8443
    %v8445 = vrot.slane %v8440, %v8444
    %v8446 = vlaneseq
    %v8447 = vshrl.u32 %v8446, 7
    %v8448 = vsub.s32 1, %v8447
    %v8449 = vrot.slane %v8440, %v8448
    %v8460 = vunpack.c.l.b16 %v8176
    %v8461 = vunpack.c.h.b16 %v8176
    %v8462 = vunpack.c.l.b16 %v8177
    %v8463 = vunpack.c.h.b16 %v8177
    %v8464 = vunpack.c.l.b16 %v8178
    %v8465 = vunpack.c.h.b16 %v8178
    %v8466 = vunpack.c.l.b16 %v8179
    %v8467 = vunpack.c.h.b16 %v8179
    %v8468 = vunpack.c.l.b16 %v8180
    %v8469 = vunpack.c.h.b16 %v8180
    %v8470 = vunpack.c.l.b16 %v8181
    %v8471 = vunpack.c.h.b16 %v8181
    %v8472 = vunpack.c.l.b16 %v8182
    %v8473 = vunpack.c.h.b16 %v8182
    %v8474 = vunpack.c.l.b16 %v8183
    %v8475 = vunpack.c.h.b16 %v8183
    %v8476 = vpack.c.b16 %v8460, %v8460
    %v8477 = vpack.c.b16 %v8461, %v8461
    %v8478 = vpack.c.b16 %v8462, %v8462
    %v8479 = vpack.c.b16 %v8463, %v8463
    %v8480 = vpack.c.b16 %v8464, %v8464
    %v8481 = vpack.c.b16 %v8465, %v8465
    %v8482 = vpack.c.b16 %v8466, %v8466
    %v8483 = vpack.c.b16 %v8467, %v8467
    %v8484 = vpack.c.b16 %v8468, %v8468
    %v8485 = vpack.c.b16 %v8469, %v8469
    %v8486 = vpack.c.b16 %v8470, %v8470
    %v8487 = vpack.c.b16 %v8471, %v8471
    %v8488 = vpack.c.b16 %v8472, %v8472
    %v8489 = vpack.c.b16 %v8473, %v8473
    %v8490 = vpack.c.b16 %v8474, %v8474
    %v8491 = vpack.c.b16 %v8475, %v8475
    %v8764 = vunpack.c.l.b16 %v8184
    %v8765 = vunpack.c.h.b16 %v8184
    %v8766 = vunpack.c.l.b16 %v8185
    %v8767 = vunpack.c.h.b16 %v8185
    %v8768 = vunpack.c.l.b16 %v8186
    %v8769 = vunpack.c.h.b16 %v8186
    %v8770 = vunpack.c.l.b16 %v8187
    %v8771 = vunpack.c.h.b16 %v8187
    %v8772 = vunpack.c.l.b16 %v8188
    %v8773 = vunpack.c.h.b16 %v8188
    %v8774 = vunpack.c.l.b16 %v8189
    %v8775 = vunpack.c.h.b16 %v8189
    %v8776 = vunpack.c.l.b16 %v8190
    %v8777 = vunpack.c.h.b16 %v8190
    %v8778 = vunpack.c.l.b16 %v8191
    %v8779 = vunpack.c.h.b16 %v8191
    %v8780 = vunpack.c.l.b16 %v8192
    %v8781 = vunpack.c.h.b16 %v8192
    %v8782 = vunpack.c.l.b16 %v8193
    %v8783 = vunpack.c.h.b16 %v8193
    %v8784 = vunpack.c.l.b16 %v8194
    %v8785 = vunpack.c.h.b16 %v8194
    %v8786 = vunpack.c.l.b16 %v8195
    %v8787 = vunpack.c.h.b16 %v8195
    %v8788 = vunpack.c.l.b16 %v8196
    %v8789 = vunpack.c.h.b16 %v8196
    %v8790 = vunpack.c.l.b16 %v8197
    %v8791 = vunpack.c.h.b16 %v8197
    %v8792 = vunpack.c.l.b16 %v8198
    %v8793 = vunpack.c.h.b16 %v8198
    %v8794 = vunpack.c.l.b16 %v8199
    %v8795 = vunpack.c.h.b16 %v8199
    %v8796 = vunpack.c.l.b16 %v8200
    %v8797 = vunpack.c.h.b16 %v8200
    %v8798 = vunpack.c.l.b16 %v8201
    %v8799 = vunpack.c.h.b16 %v8201
    %v8800 = vunpack.c.l.b16 %v8202
    %v8801 = vunpack.c.h.b16 %v8202
    %v8802 = vunpack.c.l.b16 %v8203
    %v8803 = vunpack.c.h.b16 %v8203
    %v8804 = vunpack.c.l.b16 %v8204
    %v8805 = vunpack.c.h.b16 %v8204
    %v8806 = vunpack.c.l.b16 %v8205
    %v8807 = vunpack.c.h.b16 %v8205
    %v8808 = vunpack.c.l.b16 %v8206
    %v8809 = vunpack.c.h.b16 %v8206
    %v8810 = vunpack.c.l.b16 %v8207
    %v8811 = vunpack.c.h.b16 %v8207
    %v8812 = vunpack.c.l.b16 %v8208
    %v8813 = vunpack.c.h.b16 %v8208
    %v8814 = vunpack.c.l.b16 %v8209
    %v8815 = vunpack.c.h.b16 %v8209
    %v8816 = vunpack.c.l.b16 %v8210
    %v8817 = vunpack.c.h.b16 %v8210
    %v8818 = vunpack.c.l.b16 %v8211
    %v8819 = vunpack.c.h.b16 %v8211
    %v8820 = vunpack.c.l.b16 %v8212
    %v8821 = vunpack.c.h.b16 %v8212
    %v8822 = vunpack.c.l.b16 %v8213
    %v8823 = vunpack.c.h.b16 %v8213
    %v8824 = vunpack.c.l.b16 %v8214
    %v8825 = vunpack.c.h.b16 %v8214
    %v8826 = vunpack.c.l.b16 %v8215
    %v8827 = vunpack.c.h.b16 %v8215
    %v8828 = vunpack.c.l.b16 %v8216
    %v8829 = vunpack.c.h.b16 %v8216
    %v8830 = vunpack.c.l.b16 %v8217
    %v8831 = vunpack.c.h.b16 %v8217
    %v8832 = vunpack.c.l.b16 %v8218
    %v8833 = vunpack.c.h.b16 %v8218
    %v8834 = vunpack.c.l.b16 %v8219
    %v8835 = vunpack.c.h.b16 %v8219
    %v8836 = vunpack.c.l.b16 %v8220
    %v8837 = vunpack.c.h.b16 %v8220
    %v8838 = vunpack.c.l.b16 %v8221
    %v8839 = vunpack.c.h.b16 %v8221
    %v8840 = vunpack.c.l.b16 %v8222
    %v8841 = vunpack.c.h.b16 %v8222
    %v8842 = vunpack.c.l.b16 %v8223
    %v8843 = vunpack.c.h.b16 %v8223
    %v8844 = vunpack.c.l.b16 %v8224
    %v8845 = vunpack.c.h.b16 %v8224
    %v8846 = vunpack.c.l.b16 %v8225
    %v8847 = vunpack.c.h.b16 %v8225
    %v8848 = vunpack.c.l.b16 %v8226
    %v8849 = vunpack.c.h.b16 %v8226
    %v8850 = vunpack.c.l.b16 %v8227
    %v8851 = vunpack.c.h.b16 %v8227
    %v8852 = vunpack.c.l.b16 %v8228
    %v8853 = vunpack.c.h.b16 %v8228
    %v8854 = vunpack.c.l.b16 %v8229
    %v8855 = vunpack.c.h.b16 %v8229
    %v8856 = vunpack.c.l.b16 %v8230
    %v8857 = vunpack.c.h.b16 %v8230
    %v8858 = vunpack.c.l.b16 %v8231
    %v8859 = vunpack.c.h.b16 %v8231
    %v8860 = vunpack.c.l.b16 %v8232
    %v8861 = vunpack.c.h.b16 %v8232
    %v8862 = vunpack.c.l.b16 %v8233
    %v8863 = vunpack.c.h.b16 %v8233
    %v8864 = vunpack.c.l.b16 %v8234
    %v8865 = vunpack.c.h.b16 %v8234
    %v8866 = vunpack.c.l.b16 %v8235
    %v8867 = vunpack.c.h.b16 %v8235
    %v8868 = vunpack.c.l.b16 %v8236
    %v8869 = vunpack.c.h.b16 %v8236
    %v8870 = vunpack.c.l.b16 %v8237
    %v8871 = vunpack.c.h.b16 %v8237
    %v8872 = vunpack.c.l.b16 %v8238
    %v8873 = vunpack.c.h.b16 %v8238
    %v8874 = vunpack.c.l.b16 %v8239
    %v8875 = vunpack.c.h.b16 %v8239
    %v8876 = vunpack.c.l.b16 %v8240
    %v8877 = vunpack.c.h.b16 %v8240
    %v8878 = vunpack.c.l.b16 %v8241
    %v8879 = vunpack.c.h.b16 %v8241
    %v8880 = vunpack.c.l.b16 %v8242
    %v8881 = vunpack.c.h.b16 %v8242
    %v8882 = vunpack.c.l.b16 %v8243
    %v8883 = vunpack.c.h.b16 %v8243
    %v8884 = vunpack.c.l.b16 %v8244
    %v8885 = vunpack.c.h.b16 %v8244
    %v8886 = vunpack.c.l.b16 %v8245
    %v8887 = vunpack.c.h.b16 %v8245
    %v8888 = vunpack.c.l.b16 %v8246
    %v8889 = vunpack.c.h.b16 %v8246
    %v8890 = vunpack.c.l.b16 %v8247
    %v8891 = vunpack.c.h.b16 %v8247
    %v8892 = vunpack.c.l.b16 %v8248
    %v8893 = vunpack.c.h.b16 %v8248
    %v8894 = vunpack.c.l.b16 %v8249
    %v8895 = vunpack.c.h.b16 %v8249
    %v8896 = vunpack.c.l.b16 %v8250
    %v8897 = vunpack.c.h.b16 %v8250
    %v8898 = vunpack.c.l.b16 %v8251
    %v8899 = vunpack.c.h.b16 %v8251
    %v8900 = vunpack.c.l.b16 %v8252
    %v8901 = vunpack.c.h.b16 %v8252
    %v8902 = vunpack.c.l.b16 %v8253
    %v8903 = vunpack.c.h.b16 %v8253
    %v8904 = vunpack.c.l.b16 %v8254
    %v8905 = vunpack.c.h.b16 %v8254
    %v8906 = vunpack.c.l.b16 %v8255
    %v8907 = vunpack.c.h.b16 %v8255
    %v8908 = vunpack.c.l.b16 %v8256
    %v8909 = vunpack.c.h.b16 %v8256
    %v8910 = vunpack.c.l.b16 %v8257
    %v8911 = vunpack.c.h.b16 %v8257
    %v8912 = vunpack.c.l.b16 %v8258
    %v8913 = vunpack.c.h.b16 %v8258
    %v8914 = vunpack.c.l.b16 %v8259
    %v8915 = vunpack.c.h.b16 %v8259
    %v8916 = vunpack.c.l.b16 %v8260
    %v8917 = vunpack.c.h.b16 %v8260
    %v8918 = vunpack.c.l.b16 %v8261
    %v8919 = vunpack.c.h.b16 %v8261
    %v8920 = vunpack.c.l.b16 %v8262
    %v8921 = vunpack.c.h.b16 %v8262
    %v8922 = vunpack.c.l.b16 %v8263
    %v8923 = vunpack.c.h.b16 %v8263
    %v8924 = vunpack.c.l.b16 %v8264
    %v8925 = vunpack.c.h.b16 %v8264
    %v8926 = vunpack.c.l.b16 %v8265
    %v8927 = vunpack.c.h.b16 %v8265
    %v8928 = vunpack.c.l.b16 %v8266
    %v8929 = vunpack.c.h.b16 %v8266
    %v8930 = vunpack.c.l.b16 %v8267
    %v8931 = vunpack.c.h.b16 %v8267
    %v8932 = vunpack.c.l.b16 %v8268
    %v8933 = vunpack.c.h.b16 %v8268
    %v8934 = vunpack.c.l.b16 %v8269
    %v8935 = vunpack.c.h.b16 %v8269
    %v8936 = vunpack.c.l.b16 %v8270
    %v8937 = vunpack.c.h.b16 %v8270
    %v8938 = vunpack.c.l.b16 %v8271
    %v8939 = vunpack.c.h.b16 %v8271
    %v8940 = vunpack.c.l.b16 %v8272
    %v8941 = vunpack.c.h.b16 %v8272
    %v8942 = vunpack.c.l.b16 %v8273
    %v8943 = vunpack.c.h.b16 %v8273
    %v8944 = vunpack.c.l.b16 %v8274
    %v8945 = vunpack.c.h.b16 %v8274
    %v8946 = vunpack.c.l.b16 %v8275
    %v8947 = vunpack.c.h.b16 %v8275
    %v8948 = vunpack.c.l.b16 %v8276
    %v8949 = vunpack.c.h.b16 %v8276
    %v8950 = vunpack.c.l.b16 %v8277
    %v8951 = vunpack.c.h.b16 %v8277
    %v8952 = vunpack.c.l.b16 %v8278
    %v8953 = vunpack.c.h.b16 %v8278
    %v8954 = vunpack.c.l.b16 %v8279
    %v8955 = vunpack.c.h.b16 %v8279
    %v8956 = vunpack.c.l.b16 %v8280
    %v8957 = vunpack.c.h.b16 %v8280
    %v8958 = vunpack.c.l.b16 %v8281
    %v8959 = vunpack.c.h.b16 %v8281
    %v8960 = vunpack.c.l.b16 %v8282
    %v8961 = vunpack.c.h.b16 %v8282
    %v8962 = vunpack.c.l.b16 %v8283
    %v8963 = vunpack.c.h.b16 %v8283
    %v8964 = vunpack.c.l.b16 %v8284
    %v8965 = vunpack.c.h.b16 %v8284
    %v8966 = vunpack.c.l.b16 %v8285
    %v8967 = vunpack.c.h.b16 %v8285
    %v8968 = vunpack.c.l.b16 %v8286
    %v8969 = vunpack.c.h.b16 %v8286
    %v8970 = vunpack.c.l.b16 %v8287
    %v8971 = vunpack.c.h.b16 %v8287
    %v8972 = vunpack.c.l.b16 %v8288
    %v8973 = vunpack.c.h.b16 %v8288
    %v8974 = vunpack.c.l.b16 %v8289
    %v8975 = vunpack.c.h.b16 %v8289
    %v8976 = vunpack.c.l.b16 %v8290
    %v8977 = vunpack.c.h.b16 %v8290
    %v8978 = vunpack.c.l.b16 %v8291
    %v8979 = vunpack.c.h.b16 %v8291
    %v8980 = vunpack.c.l.b16 %v8292
    %v8981 = vunpack.c.h.b16 %v8292
    %v8982 = vunpack.c.l.b16 %v8293
    %v8983 = vunpack.c.h.b16 %v8293
    %v8984 = vunpack.c.l.b16 %v8294
    %v8985 = vunpack.c.h.b16 %v8294
    %v8986 = vunpack.c.l.b16 %v8295
    %v8987 = vunpack.c.h.b16 %v8295
    %v8988 = vunpack.c.l.b16 %v8296
    %v8989 = vunpack.c.h.b16 %v8296
    %v8990 = vunpack.c.l.b16 %v8297
    %v8991 = vunpack.c.h.b16 %v8297
    %v8992 = vunpack.c.l.b16 %v8298
    %v8993 = vunpack.c.h.b16 %v8298
    %v8994 = vunpack.c.l.b16 %v8299
    %v8995 = vunpack.c.h.b16 %v8299
    %v8996 = vunpack.c.l.b16 %v8300
    %v8997 = vunpack.c.h.b16 %v8300
    %v8998 = vunpack.c.l.b16 %v8301
    %v8999 = vunpack.c.h.b16 %v8301
    %v9000 = vunpack.c.l.b16 %v8302
    %v9001 = vunpack.c.h.b16 %v8302
    %v9002 = vunpack.c.l.b16 %v8303
    %v9003 = vunpack.c.h.b16 %v8303
    %v9004 = vunpack.c.l.b16 %v8304
    %v9005 = vunpack.c.h.b16 %v8304
    %v9006 = vunpack.c.l.b16 %v8305
    %v9007 = vunpack.c.h.b16 %v8305
    %v9008 = vunpack.c.l.b16 %v8306
    %v9009 = vunpack.c.h.b16 %v8306
    %v9010 = vunpack.c.l.b16 %v8307
    %v9011 = vunpack.c.h.b16 %v8307
    %v9012 = vunpack.c.l.b16 %v8308
    %v9013 = vunpack.c.h.b16 %v8308
    %v9014 = vunpack.c.l.b16 %v8309
    %v9015 = vunpack.c.h.b16 %v8309
    %v9016 = vunpack.c.l.b16 %v8310
    %v9017 = vunpack.c.h.b16 %v8310
    %v9018 = vunpack.c.l.b16 %v8311
    %v9019 = vunpack.c.h.b16 %v8311
    %v9020 = vunpack.c.l.b16 %v8312
    %v9021 = vunpack.c.h.b16 %v8312
    %v9022 = vunpack.c.l.b16 %v8313
    %v9023 = vunpack.c.h.b16 %v8313
    %v9024 = vunpack.c.l.b16 %v8314
    %v9025 = vunpack.c.h.b16 %v8314
    %v9026 = vunpack.c.l.b16 %v8315
    %v9027 = vunpack.c.h.b16 %v8315
    %v9028 = vunpack.c.l.b16 %v8316
    %v9029 = vunpack.c.h.b16 %v8316
    %v9030 = vunpack.c.l.b16 %v8317
    %v9031 = vunpack.c.h.b16 %v8317
    %v9032 = vunpack.c.l.b16 %v8318
    %v9033 = vunpack.c.h.b16 %v8318
    %v9034 = vunpack.c.l.b16 %v8319
    %v9035 = vunpack.c.h.b16 %v8319
    %v9036 = vunpack.c.l.b16 %v8320
    %v9037 = vunpack.c.h.b16 %v8320
    %v9038 = vunpack.c.l.b16 %v8321
    %v9039 = vunpack.c.h.b16 %v8321
    %v9040 = vunpack.c.l.b16 %v8322
    %v9041 = vunpack.c.h.b16 %v8322
    %v9042 = vunpack.c.l.b16 %v8323
    %v9043 = vunpack.c.h.b16 %v8323
    %v9044 = vunpack.c.l.b16 %v8324
    %v9045 = vunpack.c.h.b16 %v8324
    %v9046 = vunpack.c.l.b16 %v8325
    %v9047 = vunpack.c.h.b16 %v8325
    %v9048 = vunpack.c.l.b16 %v8326
    %v9049 = vunpack.c.h.b16 %v8326
    %v9050 = vunpack.c.l.b16 %v8327
    %v9051 = vunpack.c.h.b16 %v8327
    %v9052 = vunpack.c.l.b16 %v8328
    %v9053 = vunpack.c.h.b16 %v8328
    %v9054 = vunpack.c.l.b16 %v8329
    %v9055 = vunpack.c.h.b16 %v8329
    %v9056 = vunpack.c.l.b16 %v8330
    %v9057 = vunpack.c.h.b16 %v8330
    %v9058 = vunpack.c.l.b16 %v8331
    %v9059 = vunpack.c.h.b16 %v8331
    %v9060 = vunpack.c.l.b16 %v8332
    %v9061 = vunpack.c.h.b16 %v8332
    %v9062 = vunpack.c.l.b16 %v8333
    %v9063 = vunpack.c.h.b16 %v8333
    %v9064 = vunpack.c.l.b16 %v8334
    %v9065 = vunpack.c.h.b16 %v8334
    %v9066 = vunpack.c.l.b16 %v8335
    %v9067 = vunpack.c.h.b16 %v8335
    %v9068 = vunpack.c.l.b16 %v8336
    %v9069 = vunpack.c.h.b16 %v8336
    %v9070 = vunpack.c.l.b16 %v8337
    %v9071 = vunpack.c.h.b16 %v8337
    %v9072 = vunpack.c.l.b16 %v8338
    %v9073 = vunpack.c.h.b16 %v8338
    %v9074 = vunpack.c.l.b16 %v8339
    %v9075 = vunpack.c.h.b16 %v8339
    %v9076 = vunpack.c.l.b16 %v8340
    %v9077 = vunpack.c.h.b16 %v8340
    %v9078 = vunpack.c.l.b16 %v8341
    %v9079 = vunpack.c.h.b16 %v8341
    %v9080 = vunpack.c.l.b16 %v8342
    %v9081 = vunpack.c.h.b16 %v8342
    %v9082 = vunpack.c.l.b16 %v8343
    %v9083 = vunpack.c.h.b16 %v8343
    %v9084 = vunpack.c.l.b16 %v8344
    %v9085 = vunpack.c.h.b16 %v8344
    %v9086 = vunpack.c.l.b16 %v8345
    %v9087 = vunpack.c.h.b16 %v8345
    %v9088 = vunpack.c.l.b16 %v8346
    %v9089 = vunpack.c.h.b16 %v8346
    %v9090 = vunpack.c.l.b16 %v8347
    %v9091 = vunpack.c.h.b16 %v8347
    %v9092 = vunpack.c.l.b16 %v8348
    %v9093 = vunpack.c.h.b16 %v8348
    %v9094 = vunpack.c.l.b16 %v8349
    %v9095 = vunpack.c.h.b16 %v8349
    %v9096 = vunpack.c.l.b16 %v8350
    %v9097 = vunpack.c.h.b16 %v8350
    %v9098 = vunpack.c.l.b16 %v8351
    %v9099 = vunpack.c.h.b16 %v8351
    %v9100 = vunpack.c.l.b16 %v8352
    %v9101 = vunpack.c.h.b16 %v8352
    %v9102 = vunpack.c.l.b16 %v8353
    %v9103 = vunpack.c.h.b16 %v8353
    %v9104 = vunpack.c.l.b16 %v8354
    %v9105 = vunpack.c.h.b16 %v8354
    %v9106 = vunpack.c.l.b16 %v8355
    %v9107 = vunpack.c.h.b16 %v8355
    %v9108 = vunpack.c.l.b16 %v8356
    %v9109 = vunpack.c.h.b16 %v8356
    %v9110 = vunpack.c.l.b16 %v8357
    %v9111 = vunpack.c.h.b16 %v8357
    %v9112 = vunpack.c.l.b16 %v8358
    %v9113 = vunpack.c.h.b16 %v8358
    %v9114 = vunpack.c.l.b16 %v8359
    %v9115 = vunpack.c.h.b16 %v8359
    %v9116 = vunpack.c.l.b16 %v8360
    %v9117 = vunpack.c.h.b16 %v8360
    %v9118 = vunpack.c.l.b16 %v8361
    %v9119 = vunpack.c.h.b16 %v8361
    %v9120 = vunpack.c.l.b16 %v8362
    %v9121 = vunpack.c.h.b16 %v8362
    %v9122 = vunpack.c.l.b16 %v8363
    %v9123 = vunpack.c.h.b16 %v8363
    %v9124 = vunpack.c.l.b16 %v8364
    %v9125 = vunpack.c.h.b16 %v8364
    %v9126 = vunpack.c.l.b16 %v8365
    %v9127 = vunpack.c.h.b16 %v8365
    %v9128 = vunpack.c.l.b16 %v8366
    %v9129 = vunpack.c.h.b16 %v8366
    %v9130 = vunpack.c.l.b16 %v8367
    %v9131 = vunpack.c.h.b16 %v8367
    %v9132 = vunpack.c.l.b16 %v8368
    %v9133 = vunpack.c.h.b16 %v8368
    %v9134 = vunpack.c.l.b16 %v8369
    %v9135 = vunpack.c.h.b16 %v8369
    %v9136 = vunpack.c.l.b16 %v8370
    %v9137 = vunpack.c.h.b16 %v8370
    %v9138 = vunpack.c.l.b16 %v8371
    %v9139 = vunpack.c.h.b16 %v8371
    %v9140 = vunpack.c.l.b16 %v8372
    %v9141 = vunpack.c.h.b16 %v8372
    %v9142 = vunpack.c.l.b16 %v8373
    %v9143 = vunpack.c.h.b16 %v8373
    %v9144 = vunpack.c.l.b16 %v8374
    %v9145 = vunpack.c.h.b16 %v8374
    %v9146 = vunpack.c.l.b16 %v8375
    %v9147 = vunpack.c.h.b16 %v8375
    %v9148 = vunpack.c.l.b16 %v8376
    %v9149 = vunpack.c.h.b16 %v8376
    %v9150 = vunpack.c.l.b16 %v8377
    %v9151 = vunpack.c.h.b16 %v8377
    %v9152 = vunpack.c.l.b16 %v8378
    %v9153 = vunpack.c.h.b16 %v8378
    %v9154 = vunpack.c.l.b16 %v8379
    %v9155 = vunpack.c.h.b16 %v8379
    %v9156 = vunpack.c.l.b16 %v8380
    %v9157 = vunpack.c.h.b16 %v8380
    %v9158 = vunpack.c.l.b16 %v8381
    %v9159 = vunpack.c.h.b16 %v8381
    %v9160 = vunpack.c.l.b16 %v8382
    %v9161 = vunpack.c.h.b16 %v8382
    %v9162 = vunpack.c.l.b16 %v8383
    %v9163 = vunpack.c.h.b16 %v8383
    %v9164 = vunpack.c.l.b16 %v8384
    %v9165 = vunpack.c.h.b16 %v8384
    %v9166 = vunpack.c.l.b16 %v8385
    %v9167 = vunpack.c.h.b16 %v8385
    %v9168 = vunpack.c.l.b16 %v8386
    %v9169 = vunpack.c.h.b16 %v8386
    %v9170 = vunpack.c.l.b16 %v8387
    %v9171 = vunpack.c.h.b16 %v8387
    %v9172 = vunpack.c.l.b16 %v8388
    %v9173 = vunpack.c.h.b16 %v8388
    %v9174 = vunpack.c.l.b16 %v8389
    %v9175 = vunpack.c.h.b16 %v8389
    %v9176 = vunpack.c.l.b16 %v8390
    %v9177 = vunpack.c.h.b16 %v8390
    %v9178 = vunpack.c.l.b16 %v8391
    %v9179 = vunpack.c.h.b16 %v8391
    %v9180 = vunpack.c.l.b16 %v8392
    %v9181 = vunpack.c.h.b16 %v8392
    %v9182 = vunpack.c.l.b16 %v8393
    %v9183 = vunpack.c.h.b16 %v8393
    %v9184 = vunpack.c.l.b16 %v8394
    %v9185 = vunpack.c.h.b16 %v8394
    %v9186 = vunpack.c.l.b16 %v8395
    %v9187 = vunpack.c.h.b16 %v8395
    %v9188 = vunpack.c.l.b16 %v8396
    %v9189 = vunpack.c.h.b16 %v8396
    %v9190 = vunpack.c.l.b16 %v8397
    %v9191 = vunpack.c.h.b16 %v8397
    %v9192 = vunpack.c.l.b16 %v8398
    %v9193 = vunpack.c.h.b16 %v8398
    %v9194 = vunpack.c.l.b16 %v8399
    %v9195 = vunpack.c.h.b16 %v8399
    %v9196 = vunpack.c.l.b16 %v8400
    %v9197 = vunpack.c.h.b16 %v8400
    %v9198 = vunpack.c.l.b16 %v8401
    %v9199 = vunpack.c.h.b16 %v8401
    %v9200 = vunpack.c.l.b16 %v8402
    %v9201 = vunpack.c.h.b16 %v8402
    %v9202 = vunpack.c.l.b16 %v8403
    %v9203 = vunpack.c.h.b16 %v8403
    %v9204 = vunpack.c.l.b16 %v8404
    %v9205 = vunpack.c.h.b16 %v8404
    %v9206 = vunpack.c.l.b16 %v8405
    %v9207 = vunpack.c.h.b16 %v8405
    %v9208 = vunpack.c.l.b16 %v8406
    %v9209 = vunpack.c.h.b16 %v8406
    %v9210 = vunpack.c.l.b16 %v8407
    %v9211 = vunpack.c.h.b16 %v8407
    %v9212 = vunpack.c.l.b16 %v8408
    %v9213 = vunpack.c.h.b16 %v8408
    %v9214 = vunpack.c.l.b16 %v8409
    %v9215 = vunpack.c.h.b16 %v8409
    %v9216 = vunpack.c.l.b16 %v8410
    %v9217 = vunpack.c.h.b16 %v8410
    %v9218 = vunpack.c.l.b16 %v8411
    %v9219 = vunpack.c.h.b16 %v8411
    %v9220 = vunpack.c.l.b16 %v8412
    %v9221 = vunpack.c.h.b16 %v8412
    %v9222 = vunpack.c.l.b16 %v8413
    %v9223 = vunpack.c.h.b16 %v8413
    %v9224 = vunpack.c.l.b16 %v8414
    %v9225 = vunpack.c.h.b16 %v8414
    %v9226 = vunpack.c.l.b16 %v8415
    %v9227 = vunpack.c.h.b16 %v8415
    %v9228 = vunpack.c.l.b16 %v8416
    %v9229 = vunpack.c.h.b16 %v8416
    %v9230 = vunpack.c.l.b16 %v8417
    %v9231 = vunpack.c.h.b16 %v8417
    %v9232 = vunpack.c.l.b16 %v8418
    %v9233 = vunpack.c.h.b16 %v8418
    %v9234 = vunpack.c.l.b16 %v8419
    %v9235 = vunpack.c.h.b16 %v8419
    %v9236 = vunpack.c.l.b16 %v8420
    %v9237 = vunpack.c.h.b16 %v8420
    %v9238 = vunpack.c.l.b16 %v8421
    %v9239 = vunpack.c.h.b16 %v8421
    %v9240 = vunpack.c.l.b16 %v8422
    %v9241 = vunpack.c.h.b16 %v8422
    %v9242 = vunpack.c.l.b16 %v8423
    %v9243 = vunpack.c.h.b16 %v8423
    %v9244 = vunpack.c.l.b16 %v8424
    %v9245 = vunpack.c.h.b16 %v8424
    %v9246 = vunpack.c.l.b16 %v8425
    %v9247 = vunpack.c.h.b16 %v8425
    %v9248 = vunpack.c.l.b16 %v8426
    %v9249 = vunpack.c.h.b16 %v8426
    %v9250 = vunpack.c.l.b16 %v8427
    %v9251 = vunpack.c.h.b16 %v8427
    %v9252 = vunpack.c.l.b16 %v8428
    %v9253 = vunpack.c.h.b16 %v8428
    %v9254 = vunpack.c.l.b16 %v8429
    %v9255 = vunpack.c.h.b16 %v8429
    %v9256 = vunpack.c.l.b16 %v8430
    %v9257 = vunpack.c.h.b16 %v8430
    %v9258 = vunpack.c.l.b16 %v8431
    %v9259 = vunpack.c.h.b16 %v8431
    %v9260 = vunpack.c.l.b16 %v8432
    %v9261 = vunpack.c.h.b16 %v8432
    %v9262 = vunpack.c.l.b16 %v8433
    %v9263 = vunpack.c.h.b16 %v8433
    %v9264 = vunpack.c.l.b16 %v8434
    %v9265 = vunpack.c.h.b16 %v8434
    %v9266 = vunpack.c.l.b16 %v8435
    %v9267 = vunpack.c.h.b16 %v8435
    %v9268 = vunpack.c.l.b16 %v8436
    %v9269 = vunpack.c.h.b16 %v8436
    %v9270 = vunpack.c.l.b16 %v8437
    %v9271 = vunpack.c.h.b16 %v8437
    %v9272 = vunpack.c.l.b16 %v8438
    %v9273 = vunpack.c.h.b16 %v8438
    %v9274 = vunpack.c.l.b16 %v8439
    %v9275 = vunpack.c.h.b16 %v8439
    %v9276 = vpack.c.b16 %v8766, %v8764
    %v9277 = vpack.c.b16 %v8767, %v8765
    %v9278 = vpack.c.b16 %v8770, %v8768
    %v9279 = vpack.c.b16 %v8771, %v8769
    %v9280 = vpack.c.b16 %v8774, %v8772
    %v9281 = vpack.c.b16 %v8775, %v8773
    %v9282 = vpack.c.b16 %v8778, %v8776
    %v9283 = vpack.c.b16 %v8779, %v8777
    %v9284 = vpack.c.b16 %v8782, %v8780
    %v9285 = vpack.c.b16 %v8783, %v8781
    %v9286 = vpack.c.b16 %v8786, %v8784
    %v9287 = vpack.c.b16 %v8787, %v8785
    %v9288 = vpack.c.b16 %v8790, %v8788
    %v9289 = vpack.c.b16 %v8791, %v8789
    %v9290 = vpack.c.b16 %v8794, %v8792
    %v9291 = vpack.c.b16 %v8795, %v8793
    %v9292 = vpack.c.b16 %v8798, %v8796
    %v9293 = vpack.c.b16 %v8799, %v8797
    %v9294 = vpack.c.b16 %v8802, %v8800
    %v9295 = vpack.c.b16 %v8803, %v8801
    %v9296 = vpack.c.b16 %v8806, %v8804
    %v9297 = vpack.c.b16 %v8807, %v8805
    %v9298 = vpack.c.b16 %v8810, %v8808
    %v9299 = vpack.c.b16 %v8811, %v8809
    %v9300 = vpack.c.b16 %v8814, %v8812
    %v9301 = vpack.c.b16 %v8815, %v8813
    %v9302 = vpack.c.b16 %v8818, %v8816
    %v9303 = vpack.c.b16 %v8819, %v8817
    %v9304 = vpack.c.b16 %v8822, %v8820
    %v9305 = vpack.c.b16 %v8823, %v8821
    %v9306 = vpack.c.b16 %v8826, %v8824
    %v9307 = vpack.c.b16 %v8827, %v8825
    %v9308 = vpack.c.b16 %v8830, %v8828
    %v9309 = vpack.c.b16 %v8831, %v8829
    %v9310 = vpack.c.b16 %v8834, %v8832
    %v9311 = vpack.c.b16 %v8835, %v8833
    %v9312 = vpack.c.b16 %v8838, %v8836
    %v9313 = vpack.c.b16 %v8839, %v8837
    %v9314 = vpack.c.b16 %v8842, %v8840
    %v9315 = vpack.c.b16 %v8843, %v8841
    %v9316 = vpack.c.b16 %v8846, %v8844
    %v9317 = vpack.c.b16 %v8847, %v8845
    %v9318 = vpack.c.b16 %v8850, %v8848
    %v9319 = vpack.c.b16 %v8851, %v8849
    %v9320 = vpack.c.b16 %v8854, %v8852
    %v9321 = vpack.c.b16 %v8855, %v8853
    %v9322 = vpack.c.b16 %v8858, %v8856
    %v9323 = vpack.c.b16 %v8859, %v8857
    %v9324 = vpack.c.b16 %v8862, %v8860
    %v9325 = vpack.c.b16 %v8863, %v8861
    %v9326 = vpack.c.b16 %v8866, %v8864
    %v9327 = vpack.c.b16 %v8867, %v8865
    %v9328 = vpack.c.b16 %v8870, %v8868
    %v9329 = vpack.c.b16 %v8871, %v8869
    %v9330 = vpack.c.b16 %v8874, %v8872
    %v9331 = vpack.c.b16 %v8875, %v8873
    %v9332 = vpack.c.b16 %v8878, %v8876
    %v9333 = vpack.c.b16 %v8879, %v8877
    %v9334 = vpack.c.b16 %v8882, %v8880
    %v9335 = vpack.c.b16 %v8883, %v8881
    %v9336 = vpack.c.b16 %v8886, %v8884
    %v9337 = vpack.c.b16 %v8887, %v8885
    %v9338 = vpack.c.b16 %v8890, %v8888
    %v9339 = vpack.c.b16 %v8891, %v8889
    %v9340 = vpack.c.b16 %v8894, %v8892
    %v9341 = vpack.c.b16 %v8895, %v8893
    %v9342 = vpack.c.b16 %v8898, %v8896
    %v9343 = vpack.c.b16 %v8899, %v8897
    %v9344 = vpack.c.b16 %v8902, %v8900
    %v9345 = vpack.c.b16 %v8903, %v8901
    %v9346 = vpack.c.b16 %v8906, %v8904
    %v9347 = vpack.c.b16 %v8907, %v8905
    %v9348 = vpack.c.b16 %v8910, %v8908
    %v9349 = vpack.c.b16 %v8911, %v8909
    %v9350 = vpack.c.b16 %v8914, %v8912
    %v9351 = vpack.c.b16 %v8915, %v8913
    %v9352 = vpack.c.b16 %v8918, %v8916
    %v9353 = vpack.c.b16 %v8919, %v8917
    %v9354 = vpack.c.b16 %v8922, %v8920
    %v9355 = vpack.c.b16 %v8923, %v8921
    %v9356 = vpack.c.b16 %v8926, %v8924
    %v9357 = vpack.c.b16 %v8927, %v8925
    %v9358 = vpack.c.b16 %v8930, %v8928
    %v9359 = vpack.c.b16 %v8931, %v8929
    %v9360 = vpack.c.b16 %v8934, %v8932
    %v9361 = vpack.c.b16 %v8935, %v8933
    %v9362 = vpack.c.b16 %v8938, %v8936
    %v9363 = vpack.c.b16 %v8939, %v8937
    %v9364 = vpack.c.b16 %v8942, %v8940
    %v9365 = vpack.c.b16 %v8943, %v8941
    %v9366 = vpack.c.b16 %v8946, %v8944
    %v9367 = vpack.c.b16 %v8947, %v8945
    %v9368 = vpack.c.b16 %v8950, %v8948
    %v9369 = vpack.c.b16 %v8951, %v8949
    %v9370 = vpack.c.b16 %v8954, %v8952
    %v9371 = vpack.c.b16 %v8955, %v8953
    %v9372 = vpack.c.b16 %v8958, %v8956
    %v9373 = vpack.c.b16 %v8959, %v8957
    %v9374 = vpack.c.b16 %v8962, %v8960
    %v9375 = vpack.c.b16 %v8963, %v8961
    %v9376 = vpack.c.b16 %v8966, %v8964
    %v9377 = vpack.c.b16 %v8967, %v8965
    %v9378 = vpack.c.b16 %v8970, %v8968
    %v9379 = vpack.c.b16 %v8971, %v8969
    %v9380 = vpack.c.b16 %v8974, %v8972
    %v9381 = vpack.c.b16 %v8975, %v8973
    %v9382 = vpack.c.b16 %v8978, %v8976
    %v9383 = vpack.c.b16 %v8979, %v8977
    %v9384 = vpack.c.b16 %v8982, %v8980
    %v9385 = vpack.c.b16 %v8983, %v8981
    %v9386 = vpack.c.b16 %v8986, %v8984
    %v9387 = vpack.c.b16 %v8987, %v8985
    %v9388 = vpack.c.b16 %v8990, %v8988
    %v9389 = vpack.c.b16 %v8991, %v8989
    %v9390 = vpack.c.b16 %v8994, %v8992
    %v9391 = vpack.c.b16 %v8995, %v8993
    %v9392 = vpack.c.b16 %v8998, %v8996
    %v9393 = vpack.c.b16 %v8999, %v8997
    %v9394 = vpack.c.b16 %v9002, %v9000
    %v9395 = vpack.c.b16 %v9003, %v9001
    %v9396 = vpack.c.b16 %v9006, %v9004
    %v9397 = vpack.c.b16 %v9007, %v9005
    %v9398 = vpack.c.b16 %v9010, %v9008
    %v9399 = vpack.c.b16 %v9011, %v9009
    %v9400 = vpack.c.b16 %v9014, %v9012
    %v9401 = vpack.c.b16 %v9015, %v9013
    %v9402 = vpack.c.b16 %v9018, %v9016
    %v9403 = vpack.c.b16 %v9019, %v9017
    %v9404 = vpack.c.b16 %v9022, %v9020
    %v9405 = vpack.c.b16 %v9023, %v9021
    %v9406 = vpack.c.b16 %v9026, %v9024
    %v9407 = vpack.c.b16 %v9027, %v9025
    %v9408 = vpack.c.b16 %v9030, %v9028
    %v9409 = vpack.c.b16 %v9031, %v9029
    %v9410 = vpack.c.b16 %v9034, %v9032
    %v9411 = vpack.c.b16 %v9035, %v9033
    %v9412 = vpack.c.b16 %v9038, %v9036
    %v9413 = vpack.c.b16 %v9039, %v9037
    %v9414 = vpack.c.b16 %v9042, %v9040
    %v9415 = vpack.c.b16 %v9043, %v9041
    %v9416 = vpack.c.b16 %v9046, %v9044
    %v9417 = vpack.c.b16 %v9047, %v9045
    %v9418 = vpack.c.b16 %v9050, %v9048
    %v9419 = vpack.c.b16 %v9051, %v9049
    %v9420 = vpack.c.b16 %v9054, %v9052
    %v9421 = vpack.c.b16 %v9055, %v9053
    %v9422 = vpack.c.b16 %v9058, %v9056
    %v9423 = vpack.c.b16 %v9059, %v9057
    %v9424 = vpack.c.b16 %v9062, %v9060
    %v9425 = vpack.c.b16 %v9063, %v9061
    %v9426 = vpack.c.b16 %v9066, %v9064
    %v9427 = vpack.c.b16 %v9067, %v9065
    %v9428 = vpack.c.b16 %v9070, %v9068
    %v9429 = vpack.c.b16 %v9071, %v9069
    %v9430 = vpack.c.b16 %v9074, %v9072
    %v9431 = vpack.c.b16 %v9075, %v9073
    %v9432 = vpack.c.b16 %v9078, %v9076
    %v9433 = vpack.c.b16 %v9079, %v9077
    %v9434 = vpack.c.b16 %v9082, %v9080
    %v9435 = vpack.c.b16 %v9083, %v9081
    %v9436 = vpack.c.b16 %v9086, %v9084
    %v9437 = vpack.c.b16 %v9087, %v9085
    %v9438 = vpack.c.b16 %v9090, %v9088
    %v9439 = vpack.c.b16 %v9091, %v9089
    %v9440 = vpack.c.b16 %v9094, %v9092
    %v9441 = vpack.c.b16 %v9095, %v9093
    %v9442 = vpack.c.b16 %v9098, %v9096
    %v9443 = vpack.c.b16 %v9099, %v9097
    %v9444 = vpack.c.b16 %v9102, %v9100
    %v9445 = vpack.c.b16 %v9103, %v9101
    %v9446 = vpack.c.b16 %v9106, %v9104
    %v9447 = vpack.c.b16 %v9107, %v9105
    %v9448 = vpack.c.b16 %v9110, %v9108
    %v9449 = vpack.c.b16 %v9111, %v9109
    %v9450 = vpack.c.b16 %v9114, %v9112
    %v9451 = vpack.c.b16 %v9115, %v9113
    %v9452 = vpack.c.b16 %v9118, %v9116
    %v9453 = vpack.c.b16 %v9119, %v9117
    %v9454 = vpack.c.b16 %v9122, %v9120
    %v9455 = vpack.c.b16 %v9123, %v9121
    %v9456 = vpack.c.b16 %v9126, %v9124
    %v9457 = vpack.c.b16 %v9127, %v9125
    %v9458 = vpack.c.b16 %v9130, %v9128
    %v9459 = vpack.c.b16 %v9131, %v9129
    %v9460 = vpack.c.b16 %v9134, %v9132
    %v9461 = vpack.c.b16 %v9135, %v9133
    %v9462 = vpack.c.b16 %v9138, %v9136
    %v9463 = vpack.c.b16 %v9139, %v9137
    %v9464 = vpack.c.b16 %v9142, %v9140
    %v9465 = vpack.c.b16 %v9143, %v9141
    %v9466 = vpack.c.b16 %v9146, %v9144
    %v9467 = vpack.c.b16 %v9147, %v9145
    %v9468 = vpack.c.b16 %v9150, %v9148
    %v9469 = vpack.c.b16 %v9151, %v9149
    %v9470 = vpack.c.b16 %v9154, %v9152
    %v9471 = vpack.c.b16 %v9155, %v9153
    %v9472 = vpack.c.b16 %v9158, %v9156
    %v9473 = vpack.c.b16 %v9159, %v9157
    %v9474 = vpack.c.b16 %v9162, %v9160
    %v9475 = vpack.c.b16 %v9163, %v9161
    %v9476 = vpack.c.b16 %v9166, %v9164
    %v9477 = vpack.c.b16 %v9167, %v9165
    %v9478 = vpack.c.b16 %v9170, %v9168
    %v9479 = vpack.c.b16 %v9171, %v9169
    %v9480 = vpack.c.b16 %v9174, %v9172
    %v9481 = vpack.c.b16 %v9175, %v9173
    %v9482 = vpack.c.b16 %v9178, %v9176
    %v9483 = vpack.c.b16 %v9179, %v9177
    %v9484 = vpack.c.b16 %v9182, %v9180
    %v9485 = vpack.c.b16 %v9183, %v9181
    %v9486 = vpack.c.b16 %v9186, %v9184
    %v9487 = vpack.c.b16 %v9187, %v9185
    %v9488 = vpack.c.b16 %v9190, %v9188
    %v9489 = vpack.c.b16 %v9191, %v9189
    %v9490 = vpack.c.b16 %v9194, %v9192
    %v9491 = vpack.c.b16 %v9195, %v9193
    %v9492 = vpack.c.b16 %v9198, %v9196
    %v9493 = vpack.c.b16 %v9199, %v9197
    %v9494 = vpack.c.b16 %v9202, %v9200
    %v9495 = vpack.c.b16 %v9203, %v9201
    %v9496 = vpack.c.b16 %v9206, %v9204
    %v9497 = vpack.c.b16 %v9207, %v9205
    %v9498 = vpack.c.b16 %v9210, %v9208
    %v9499 = vpack.c.b16 %v9211, %v9209
    %v9500 = vpack.c.b16 %v9214, %v9212
    %v9501 = vpack.c.b16 %v9215, %v9213
    %v9502 = vpack.c.b16 %v9218, %v9216
    %v9503 = vpack.c.b16 %v9219, %v9217
    %v9504 = vpack.c.b16 %v9222, %v9220
    %v9505 = vpack.c.b16 %v9223, %v9221
    %v9506 = vpack.c.b16 %v9226, %v9224
    %v9507 = vpack.c.b16 %v9227, %v9225
    %v9508 = vpack.c.b16 %v9230, %v9228
    %v9509 = vpack.c.b16 %v9231, %v9229
    %v9510 = vpack.c.b16 %v9234, %v9232
    %v9511 = vpack.c.b16 %v9235, %v9233
    %v9512 = vpack.c.b16 %v9238, %v9236
    %v9513 = vpack.c.b16 %v9239, %v9237
    %v9514 = vpack.c.b16 %v9242, %v9240
    %v9515 = vpack.c.b16 %v9243, %v9241
    %v9516 = vpack.c.b16 %v9246, %v9244
    %v9517 = vpack.c.b16 %v9247, %v9245
    %v9518 = vpack.c.b16 %v9250, %v9248
    %v9519 = vpack.c.b16 %v9251, %v9249
    %v9520 = vpack.c.b16 %v9254, %v9252
    %v9521 = vpack.c.b16 %v9255, %v9253
    %v9522 = vpack.c.b16 %v9258, %v9256
    %v9523 = vpack.c.b16 %v9259, %v9257
    %v9524 = vpack.c.b16 %v9262, %v9260
    %v9525 = vpack.c.b16 %v9263, %v9261
    %v9526 = vpack.c.b16 %v9266, %v9264
    %v9527 = vpack.c.b16 %v9267, %v9265
    %v9528 = vpack.c.b16 %v9270, %v9268
    %v9529 = vpack.c.b16 %v9271, %v9269
    %v9530 = vpack.c.b16 %v9274, %v9272
    %v9531 = vpack.c.b16 %v9275, %v9273
    %9788 = vmatprep.subr.bf16.mxu0 %v9277
    %9789 = vmatpush1.bf16.msra.mxu0 %v9276
    %9790 = vmatprep.subr.bf16.mxu0 %v9279
    %9791 = vmatpush1.bf16.msra.mxu0 %v9278
    %9792 = vmatprep.subr.bf16.mxu0 %v9281
    %9793 = vmatpush1.bf16.msra.mxu0 %v9280
    %9794 = vmatprep.subr.bf16.mxu0 %v9283
    %9795 = vmatpush1.bf16.msra.mxu0 %v9282
    %9796 = vmatprep.subr.bf16.mxu0 %v9285
    %9797 = vmatpush1.bf16.msra.mxu0 %v9284
    %9798 = vmatprep.subr.bf16.mxu0 %v9287
    %9799 = vmatpush1.bf16.msra.mxu0 %v9286
    %9800 = vmatprep.subr.bf16.mxu0 %v9289
    %9801 = vmatpush1.bf16.msra.mxu0 %v9288
    %9802 = vmatprep.subr.bf16.mxu0 %v9291
    %9803 = vmatpush1.bf16.msra.mxu0 %v9290
    %9804 = vmatprep.subr.bf16.mxu0 %v9293
    %9805 = vmatpush1.bf16.msra.mxu0 %v9292
    %9806 = vmatprep.subr.bf16.mxu0 %v9295
    %9807 = vmatpush1.bf16.msra.mxu0 %v9294
    %9808 = vmatprep.subr.bf16.mxu0 %v9297
    %9809 = vmatpush1.bf16.msra.mxu0 %v9296
    %9810 = vmatprep.subr.bf16.mxu0 %v9299
    %9811 = vmatpush1.bf16.msra.mxu0 %v9298
    %9812 = vmatprep.subr.bf16.mxu0 %v9301
    %9813 = vmatpush1.bf16.msra.mxu0 %v9300
    %9814 = vmatprep.subr.bf16.mxu0 %v9303
    %9815 = vmatpush1.bf16.msra.mxu0 %v9302
    %9816 = vmatprep.subr.bf16.mxu0 %v9305
    %9817 = vmatpush1.bf16.msra.mxu0 %v9304
    %9818 = vmatprep.subr.bf16.mxu0 %v9307
    %9819 = vmatpush1.bf16.msra.mxu0 %v9306
    %9820 = vmatprep.mubr.bf16.mxu0 %v8477
    %9821 = vmatmul.mubr.bf16.gmra.mrb[0].mxu0 %v8476
    %v9822 = vpop.f32.mrb[0].mxu0
    %v9823 = vadd.f32 %v8445, %v9822
    %v9824 = vpop.f32.mrb[0].mxu0
    %v9825 = vadd.f32 %v8449, %v9824
    %v9826 = vpop.f32.mrb[0].mxu0
    %v9827 = vpop.f32.mrb[0].mxu0
    %9828 = vdwg.mxu0
    %9829 = vmatprep.subr.bf16.mxu0 %v9309
    %9830 = vmatpush1.bf16.msra.mxu0 %v9308
    %9831 = vmatprep.subr.bf16.mxu0 %v9311
    %9832 = vmatpush1.bf16.msra.mxu0 %v9310
    %9833 = vmatprep.subr.bf16.mxu0 %v9313
    %9834 = vmatpush1.bf16.msra.mxu0 %v9312
    %9835 = vmatprep.subr.bf16.mxu0 %v9315
    %9836 = vmatpush1.bf16.msra.mxu0 %v9314
    %9837 = vmatprep.subr.bf16.mxu0 %v9317
    %9838 = vmatpush1.bf16.msra.mxu0 %v9316
    %9839 = vmatprep.subr.bf16.mxu0 %v9319
    %9840 = vmatpush1.bf16.msra.mxu0 %v9318
    %9841 = vmatprep.subr.bf16.mxu0 %v9321
    %9842 = vmatpush1.bf16.msra.mxu0 %v9320
    %9843 = vmatprep.subr.bf16.mxu0 %v9323
    %9844 = vmatpush1.bf16.msra.mxu0 %v9322
    %9845 = vmatprep.subr.bf16.mxu0 %v9325
    %9846 = vmatpush1.bf16.msra.mxu0 %v9324
    %9847 = vmatprep.subr.bf16.mxu0 %v9327
    %9848 = vmatpush1.bf16.msra.mxu0 %v9326
    %9849 = vmatprep.subr.bf16.mxu0 %v9329
    %9850 = vmatpush1.bf16.msra.mxu0 %v9328
    %9851 = vmatprep.subr.bf16.mxu0 %v9331
    %9852 = vmatpush1.bf16.msra.mxu0 %v9330
    %9853 = vmatprep.subr.bf16.mxu0 %v9333
    %9854 = vmatpush1.bf16.msra.mxu0 %v9332
    %9855 = vmatprep.subr.bf16.mxu0 %v9335
    %9856 = vmatpush1.bf16.msra.mxu0 %v9334
    %9857 = vmatprep.subr.bf16.mxu0 %v9337
    %9858 = vmatpush1.bf16.msra.mxu0 %v9336
    %9859 = vmatprep.subr.bf16.mxu0 %v9339
    %9860 = vmatpush1.bf16.msra.mxu0 %v9338
    %9861 = vmatprep.mubr.bf16.mxu0 %v8479
    %9862 = vmatmul.mubr.bf16.gmra.mrb[0].mxu0 %v8478
    %v9863 = vpop.f32.mrb[0].mxu0
    %v9864 = vadd.f32 %v9823, %v9863
    %v9865 = vpop.f32.mrb[0].mxu0
    %v9866 = vadd.f32 %v9825, %v9865
    %v9867 = vpop.f32.mrb[0].mxu0
    %v9868 = vpop.f32.mrb[0].mxu0
    %9869 = vdwg.mxu0
    %9870 = vmatprep.subr.bf16.mxu0 %v9341
    %9871 = vmatpush1.bf16.msra.mxu0 %v9340
    %9872 = vmatprep.subr.bf16.mxu0 %v9343
    %9873 = vmatpush1.bf16.msra.mxu0 %v9342
    %9874 = vmatprep.subr.bf16.mxu0 %v9345
    %9875 = vmatpush1.bf16.msra.mxu0 %v9344
    %9876 = vmatprep.subr.bf16.mxu0 %v9347
    %9877 = vmatpush1.bf16.msra.mxu0 %v9346
    %9878 = vmatprep.subr.bf16.mxu0 %v9349
    %9879 = vmatpush1.bf16.msra.mxu0 %v9348
    %9880 = vmatprep.subr.bf16.mxu0 %v9351
    %9881 = vmatpush1.bf16.msra.mxu0 %v9350
    %9882 = vmatprep.subr.bf16.mxu0 %v9353
    %9883 = vmatpush1.bf16.msra.mxu0 %v9352
    %9884 = vmatprep.subr.bf16.mxu0 %v9355
    %9885 = vmatpush1.bf16.msra.mxu0 %v9354
    %9886 = vmatprep.subr.bf16.mxu0 %v9357
    %9887 = vmatpush1.bf16.msra.mxu0 %v9356
    %9888 = vmatprep.subr.bf16.mxu0 %v9359
    %9889 = vmatpush1.bf16.msra.mxu0 %v9358
    %9890 = vmatprep.subr.bf16.mxu0 %v9361
    %9891 = vmatpush1.bf16.msra.mxu0 %v9360
    %9892 = vmatprep.subr.bf16.mxu0 %v9363
    %9893 = vmatpush1.bf16.msra.mxu0 %v9362
    %9894 = vmatprep.subr.bf16.mxu0 %v9365
    %9895 = vmatpush1.bf16.msra.mxu0 %v9364
    %9896 = vmatprep.subr.bf16.mxu0 %v9367
    %9897 = vmatpush1.bf16.msra.mxu0 %v9366
    %9898 = vmatprep.subr.bf16.mxu0 %v9369
    %9899 = vmatpush1.bf16.msra.mxu0 %v9368
    %9900 = vmatprep.subr.bf16.mxu0 %v9371
    %9901 = vmatpush1.bf16.msra.mxu0 %v9370
    %9902 = vmatprep.mubr.bf16.mxu0 %v8481
    %9903 = vmatmul.mubr.bf16.gmra.mrb[0].mxu0 %v8480
    %v9904 = vpop.f32.mrb[0].mxu0
    %v9905 = vadd.f32 %v9864, %v9904
    %v9906 = vpop.f32.mrb[0].mxu0
    %v9907 = vadd.f32 %v9866, %v9906
    %v9908 = vpop.f32.mrb[0].mxu0
    %v9909 = vpop.f32.mrb[0].mxu0
    %9910 = vdwg.mxu0
    %9911 = vmatprep.subr.bf16.mxu0 %v9373
    %9912 = vmatpush1.bf16.msra.mxu0 %v9372
    %9913 = vmatprep.subr.bf16.mxu0 %v9375
    %9914 = vmatpush1.bf16.msra.mxu0 %v9374
    %9915 = vmatprep.subr.bf16.mxu0 %v9377
    %9916 = vmatpush1.bf16.msra.mxu0 %v9376
    %9917 = vmatprep.subr.bf16.mxu0 %v9379
    %9918 = vmatpush1.bf16.msra.mxu0 %v9378
    %9919 = vmatprep.subr.bf16.mxu0 %v9381
    %9920 = vmatpush1.bf16.msra.mxu0 %v9380
    %9921 = vmatprep.subr.bf16.mxu0 %v9383
    %9922 = vmatpush1.bf16.msra.mxu0 %v9382
    %9923 = vmatprep.subr.bf16.mxu0 %v9385
    %9924 = vmatpush1.bf16.msra.mxu0 %v9384
    %9925 = vmatprep.subr.bf16.mxu0 %v9387
    %9926 = vmatpush1.bf16.msra.mxu0 %v9386
    %9927 = vmatprep.subr.bf16.mxu0 %v9389
    %9928 = vmatpush1.bf16.msra.mxu0 %v9388
    %9929 = vmatprep.subr.bf16.mxu0 %v9391
    %9930 = vmatpush1.bf16.msra.mxu0 %v9390
    %9931 = vmatprep.subr.bf16.mxu0 %v9393
    %9932 = vmatpush1.bf16.msra.mxu0 %v9392
    %9933 = vmatprep.subr.bf16.mxu0 %v9395
    %9934 = vmatpush1.bf16.msra.mxu0 %v9394
    %9935 = vmatprep.subr.bf16.mxu0 %v9397
    %9936 = vmatpush1.bf16.msra.mxu0 %v9396
    %9937 = vmatprep.subr.bf16.mxu0 %v9399
    %9938 = vmatpush1.bf16.msra.mxu0 %v9398
    %9939 = vmatprep.subr.bf16.mxu0 %v9401
    %9940 = vmatpush1.bf16.msra.mxu0 %v9400
    %9941 = vmatprep.subr.bf16.mxu0 %v9403
    %9942 = vmatpush1.bf16.msra.mxu0 %v9402
    %9943 = vmatprep.mubr.bf16.mxu0 %v8483
    %9944 = vmatmul.mubr.bf16.gmra.mrb[0].mxu0 %v8482
    %v9945 = vpop.f32.mrb[0].mxu0
    %v9946 = vadd.f32 %v9905, %v9945
    %v9947 = vpop.f32.mrb[0].mxu0
    %v9948 = vadd.f32 %v9907, %v9947
    %v9949 = vpop.f32.mrb[0].mxu0
    %v9950 = vpop.f32.mrb[0].mxu0
    %9951 = vdwg.mxu0
    %9952 = vmatprep.subr.bf16.mxu0 %v9405
    %9953 = vmatpush1.bf16.msra.mxu0 %v9404
    %9954 = vmatprep.subr.bf16.mxu0 %v9407
    %9955 = vmatpush1.bf16.msra.mxu0 %v9406
    %9956 = vmatprep.subr.bf16.mxu0 %v9409
    %9957 = vmatpush1.bf16.msra.mxu0 %v9408
    %9958 = vmatprep.subr.bf16.mxu0 %v9411
    %9959 = vmatpush1.bf16.msra.mxu0 %v9410
    %9960 = vmatprep.subr.bf16.mxu0 %v9413
    %9961 = vmatpush1.bf16.msra.mxu0 %v9412
    %9962 = vmatprep.subr.bf16.mxu0 %v9415
    %9963 = vmatpush1.bf16.msra.mxu0 %v9414
    %9964 = vmatprep.subr.bf16.mxu0 %v9417
    %9965 = vmatpush1.bf16.msra.mxu0 %v9416
    %9966 = vmatprep.subr.bf16.mxu0 %v9419
    %9967 = vmatpush1.bf16.msra.mxu0 %v9418
    %9968 = vmatprep.subr.bf16.mxu0 %v9421
    %9969 = vmatpush1.bf16.msra.mxu0 %v9420
    %9970 = vmatprep.subr.bf16.mxu0 %v9423
    %9971 = vmatpush1.bf16.msra.mxu0 %v9422
    %9972 = vmatprep.subr.bf16.mxu0 %v9425
    %9973 = vmatpush1.bf16.msra.mxu0 %v9424
    %9974 = vmatprep.subr.bf16.mxu0 %v9427
    %9975 = vmatpush1.bf16.msra.mxu0 %v9426
    %9976 = vmatprep.subr.bf16.mxu0 %v9429
    %9977 = vmatpush1.bf16.msra.mxu0 %v9428
    %9978 = vmatprep.subr.bf16.mxu0 %v9431
    %9979 = vmatpush1.bf16.msra.mxu0 %v9430
    %9980 = vmatprep.subr.bf16.mxu0 %v9433
    %9981 = vmatpush1.bf16.msra.mxu0 %v9432
    %9982 = vmatprep.subr.bf16.mxu0 %v9435
    %9983 = vmatpush1.bf16.msra.mxu0 %v9434
    %9984 = vmatprep.mubr.bf16.mxu0 %v8485
    %9985 = vmatmul.mubr.bf16.gmra.mrb[0].mxu0 %v8484
    %v9986 = vpop.f32.mrb[0].mxu0
    %v9987 = vadd.f32 %v9946, %v9986
    %v9988 = vpop.f32.mrb[0].mxu0
    %v9989 = vadd.f32 %v9948, %v9988
    %v9990 = vpop.f32.mrb[0].mxu0
    %v9991 = vpop.f32.mrb[0].mxu0
    %9992 = vdwg.mxu0
    %9993 = vmatprep.subr.bf16.mxu0 %v9437
    %9994 = vmatpush1.bf16.msra.mxu0 %v9436
    %9995 = vmatprep.subr.bf16.mxu0 %v9439
    %9996 = vmatpush1.bf16.msra.mxu0 %v9438
    %9997 = vmatprep.subr.bf16.mxu0 %v9441
    %9998 = vmatpush1.bf16.msra.mxu0 %v9440
    %9999 = vmatprep.subr.bf16.mxu0 %v9443
    %10000 = vmatpush1.bf16.msra.mxu0 %v9442
    %10001 = vmatprep.subr.bf16.mxu0 %v9445
    %10002 = vmatpush1.bf16.msra.mxu0 %v9444
    %10003 = vmatprep.subr.bf16.mxu0 %v9447
    %10004 = vmatpush1.bf16.msra.mxu0 %v9446
    %10005 = vmatprep.subr.bf16.mxu0 %v9449
    %10006 = vmatpush1.bf16.msra.mxu0 %v9448
    %10007 = vmatprep.subr.bf16.mxu0 %v9451
    %10008 = vmatpush1.bf16.msra.mxu0 %v9450
    %10009 = vmatprep.subr.bf16.mxu0 %v9453
    %10010 = vmatpush1.bf16.msra.mxu0 %v9452
    %10011 = vmatprep.subr.bf16.mxu0 %v9455
    %10012 = vmatpush1.bf16.msra.mxu0 %v9454
    %10013 = vmatprep.subr.bf16.mxu0 %v9457
    %10014 = vmatpush1.bf16.msra.mxu0 %v9456
    %10015 = vmatprep.subr.bf16.mxu0 %v9459
    %10016 = vmatpush1.bf16.msra.mxu0 %v9458
    %10017 = vmatprep.subr.bf16.mxu0 %v9461
    %10018 = vmatpush1.bf16.msra.mxu0 %v9460
    %10019 = vmatprep.subr.bf16.mxu0 %v9463
    %10020 = vmatpush1.bf16.msra.mxu0 %v9462
    %10021 = vmatprep.subr.bf16.mxu0 %v9465
    %10022 = vmatpush1.bf16.msra.mxu0 %v9464
    %10023 = vmatprep.subr.bf16.mxu0 %v9467
    %10024 = vmatpush1.bf16.msra.mxu0 %v9466
    %10025 = vmatprep.mubr.bf16.mxu0 %v8487
    %10026 = vmatmul.mubr.bf16.gmra.mrb[0].mxu0 %v8486
    %v10027 = vpop.f32.mrb[0].mxu0
    %v10028 = vadd.f32 %v9987, %v10027
    %v10029 = vpop.f32.mrb[0].mxu0
    %v10030 = vadd.f32 %v9989, %v10029
    %v10031 = vpop.f32.mrb[0].mxu0
    %v10032 = vpop.f32.mrb[0].mxu0
    %10033 = vdwg.mxu0
    %10034 = vmatprep.subr.bf16.mxu0 %v9469
    %10035 = vmatpush1.bf16.msra.mxu0 %v9468
    %10036 = vmatprep.subr.bf16.mxu0 %v9471
    %10037 = vmatpush1.bf16.msra.mxu0 %v9470
    %10038 = vmatprep.subr.bf16.mxu0 %v9473
    %10039 = vmatpush1.bf16.msra.mxu0 %v9472
    %10040 = vmatprep.subr.bf16.mxu0 %v9475
    %10041 = vmatpush1.bf16.msra.mxu0 %v9474
    %10042 = vmatprep.subr.bf16.mxu0 %v9477
    %10043 = vmatpush1.bf16.msra.mxu0 %v9476
    %10044 = vmatprep.subr.bf16.mxu0 %v9479
    %10045 = vmatpush1.bf16.msra.mxu0 %v9478
    %10046 = vmatprep.subr.bf16.mxu0 %v9481
    %10047 = vmatpush1.bf16.msra.mxu0 %v9480
    %10048 = vmatprep.subr.bf16.mxu0 %v9483
    %10049 = vmatpush1.bf16.msra.mxu0 %v9482
    %10050 = vmatprep.subr.bf16.mxu0 %v9485
    %10051 = vmatpush1.bf16.msra.mxu0 %v9484
    %10052 = vmatprep.subr.bf16.mxu0 %v9487
    %10053 = vmatpush1.bf16.msra.mxu0 %v9486
    %10054 = vmatprep.subr.bf16.mxu0 %v9489
    %10055 = vmatpush1.bf16.msra.mxu0 %v9488
    %10056 = vmatprep.subr.bf16.mxu0 %v9491
    %10057 = vmatpush1.bf16.msra.mxu0 %v9490
    %10058 = vmatprep.subr.bf16.mxu0 %v9493
    %10059 = vmatpush1.bf16.msra.mxu0 %v9492
    %10060 = vmatprep.subr.bf16.mxu0 %v9495
    %10061 = vmatpush1.bf16.msra.mxu0 %v9494
    %10062 = vmatprep.subr.bf16.mxu0 %v9497
    %10063 = vmatpush1.bf16.msra.mxu0 %v9496
    %10064 = vmatprep.subr.bf16.mxu0 %v9499
    %10065 = vmatpush1.bf16.msra.mxu0 %v9498
    %10066 = vmatprep.mubr.bf16.mxu0 %v8489
    %10067 = vmatmul.mubr.bf16.gmra.mrb[0].mxu0 %v8488
    %v10068 = vpop.f32.mrb[0].mxu0
    %v10069 = vadd.f32 %v10028, %v10068
    %v10070 = vpop.f32.mrb[0].mxu0
    %v10071 = vadd.f32 %v10030, %v10070
    %v10072 = vpop.f32.mrb[0].mxu0
    %v10073 = vpop.f32.mrb[0].mxu0
    %10074 = vdwg.mxu0
    %10075 = vmatprep.subr.bf16.mxu0 %v9501
    %10076 = vmatpush1.bf16.msra.mxu0 %v9500
    %10077 = vmatprep.subr.bf16.mxu0 %v9503
    %10078 = vmatpush1.bf16.msra.mxu0 %v9502
    %10079 = vmatprep.subr.bf16.mxu0 %v9505
    %10080 = vmatpush1.bf16.msra.mxu0 %v9504
    %10081 = vmatprep.subr.bf16.mxu0 %v9507
    %10082 = vmatpush1.bf16.msra.mxu0 %v9506
    %10083 = vmatprep.subr.bf16.mxu0 %v9509
    %10084 = vmatpush1.bf16.msra.mxu0 %v9508
    %10085 = vmatprep.subr.bf16.mxu0 %v9511
    %10086 = vmatpush1.bf16.msra.mxu0 %v9510
    %10087 = vmatprep.subr.bf16.mxu0 %v9513
    %10088 = vmatpush1.bf16.msra.mxu0 %v9512
    %10089 = vmatprep.subr.bf16.mxu0 %v9515
    %10090 = vmatpush1.bf16.msra.mxu0 %v9514
    %10091 = vmatprep.subr.bf16.mxu0 %v9517
    %10092 = vmatpush1.bf16.msra.mxu0 %v9516
    %10093 = vmatprep.subr.bf16.mxu0 %v9519
    %10094 = vmatpush1.bf16.msra.mxu0 %v9518
    %10095 = vmatprep.subr.bf16.mxu0 %v9521
    %10096 = vmatpush1.bf16.msra.mxu0 %v9520
    %10097 = vmatprep.subr.bf16.mxu0 %v9523
    %10098 = vmatpush1.bf16.msra.mxu0 %v9522
    %10099 = vmatprep.subr.bf16.mxu0 %v9525
    %10100 = vmatpush1.bf16.msra.mxu0 %v9524
    %10101 = vmatprep.subr.bf16.mxu0 %v9527
    %10102 = vmatpush1.bf16.msra.mxu0 %v9526
    %10103 = vmatprep.subr.bf16.mxu0 %v9529
    %10104 = vmatpush1.bf16.msra.mxu0 %v9528
    %10105 = vmatprep.subr.bf16.mxu0 %v9531
    %10106 = vmatpush1.bf16.msra.mxu0 %v9530
    %10107 = vmatprep.mubr.bf16.mxu0 %v8491
    %10108 = vmatmul.mubr.bf16.gmra.mrb[0].mxu0 %v8490
    %v10109 = vpop.f32.mrb[0].mxu0
    %v10110 = vadd.f32 %v10069, %v10109
    %v10111 = vpop.f32.mrb[0].mxu0
    %v10112 = vadd.f32 %v10071, %v10111
    %v10113 = vpop.f32.mrb[0].mxu0
    %v10114 = vpop.f32.mrb[0].mxu0
    %10115 = vdwg.mxu0
    %v10116 = vmax.f32 %v10110, 0.0
    %v10117 = vmax.f32 %v10112, 0.0
    %v10118 = vpack.c.bf16 %v10116, %v10116
    %v10119 = vpack.c.bf16 %v10117, %v10117
    %v10120 = vld [vmem:[#allocation3] sm:$0xff]
    %v10121 = vld [vmem:[#allocation12 + $0x180] sm:$0xf]
    %v10122 = vld [vmem:[#allocation12 + $0x184] sm:$0xf]
    %v10123 = vld [vmem:[#allocation12 + $0x188] sm:$0xf]
    %v10124 = vld [vmem:[#allocation12 + $0x18c] sm:$0xf]
    %v10125 = vld [vmem:[#allocation12 + $0x190] sm:$0xf]
    %v10126 = vld [vmem:[#allocation12 + $0x194] sm:$0xf]
    %v10127 = vld [vmem:[#allocation12 + $0x198] sm:$0xf]
    %v10128 = vld [vmem:[#allocation12 + $0x19c] sm:$0xf]
    %v10129 = vld [vmem:[#allocation12 + $0x1a0] sm:$0xf]
    %v10130 = vld [vmem:[#allocation12 + $0x1a4] sm:$0xf]
    %v10131 = vld [vmem:[#allocation12 + $0x1a8] sm:$0xf]
    %v10132 = vld [vmem:[#allocation12 + $0x1ac] sm:$0xf]
    %v10133 = vld [vmem:[#allocation12 + $0x1b0] sm:$0xf]
    %v10134 = vld [vmem:[#allocation12 + $0x1b4] sm:$0xf]
    %v10135 = vld [vmem:[#allocation12 + $0x1b8] sm:$0xf]
    %v10136 = vld [vmem:[#allocation12 + $0x1bc] sm:$0xf]
    %v10137 = vld [vmem:[#allocation12 + $0x1c0] sm:$0xf]
    %v10138 = vld [vmem:[#allocation12 + $0x1c4] sm:$0xf]
    %v10139 = vld [vmem:[#allocation12 + $0x1c8] sm:$0xf]
    %v10140 = vld [vmem:[#allocation12 + $0x1cc] sm:$0xf]
    %v10141 = vld [vmem:[#allocation12 + $0x1d0] sm:$0xf]
    %v10142 = vld [vmem:[#allocation12 + $0x1d4] sm:$0xf]
    %v10143 = vld [vmem:[#allocation12 + $0x1d8] sm:$0xf]
    %v10144 = vld [vmem:[#allocation12 + $0x1dc] sm:$0xf]
    %v10145 = vld [vmem:[#allocation12 + $0x1e0] sm:$0xf]
    %v10146 = vld [vmem:[#allocation12 + $0x1e4] sm:$0xf]
    %v10147 = vld [vmem:[#allocation12 + $0x1e8] sm:$0xf]
    %v10148 = vld [vmem:[#allocation12 + $0x1ec] sm:$0xf]
    %v10149 = vld [vmem:[#allocation12 + $0x1f0] sm:$0xf]
    %v10150 = vld [vmem:[#allocation12 + $0x1f4] sm:$0xf]
    %v10151 = vld [vmem:[#allocation12 + $0x1f8] sm:$0xf]
    %v10152 = vld [vmem:[#allocation12 + $0x1fc] sm:$0xf]
    %v10185 = vunpack.c.l.b16 %v10121
    %v10186 = vunpack.c.l.b16 %v10122
    %v10187 = vunpack.c.l.b16 %v10123
    %v10188 = vunpack.c.l.b16 %v10124
    %v10189 = vunpack.c.l.b16 %v10125
    %v10190 = vunpack.c.l.b16 %v10126
    %v10191 = vunpack.c.l.b16 %v10127
    %v10192 = vunpack.c.l.b16 %v10128
    %v10193 = vunpack.c.l.b16 %v10129
    %v10194 = vunpack.c.l.b16 %v10130
    %v10195 = vunpack.c.l.b16 %v10131
    %v10196 = vunpack.c.l.b16 %v10132
    %v10197 = vunpack.c.l.b16 %v10133
    %v10198 = vunpack.c.l.b16 %v10134
    %v10199 = vunpack.c.l.b16 %v10135
    %v10200 = vunpack.c.l.b16 %v10136
    %v10201 = vunpack.c.l.b16 %v10137
    %v10202 = vunpack.c.l.b16 %v10138
    %v10203 = vunpack.c.l.b16 %v10139
    %v10204 = vunpack.c.l.b16 %v10140
    %v10205 = vunpack.c.l.b16 %v10141
    %v10206 = vunpack.c.l.b16 %v10142
    %v10207 = vunpack.c.l.b16 %v10143
    %v10208 = vunpack.c.l.b16 %v10144
    %v10209 = vunpack.c.l.b16 %v10145
    %v10210 = vunpack.c.l.b16 %v10146
    %v10211 = vunpack.c.l.b16 %v10147
    %v10212 = vunpack.c.l.b16 %v10148
    %v10213 = vunpack.c.l.b16 %v10149
    %v10214 = vunpack.c.l.b16 %v10150
    %v10215 = vunpack.c.l.b16 %v10151
    %v10216 = vunpack.c.l.b16 %v10152
    %v10217 = vpack.c.b16 %v10186, %v10185
    %v10218 = vpack.c.b16 %v10188, %v10187
    %v10219 = vpack.c.b16 %v10190, %v10189
    %v10220 = vpack.c.b16 %v10192, %v10191
    %v10221 = vpack.c.b16 %v10194, %v10193
    %v10222 = vpack.c.b16 %v10196, %v10195
    %v10223 = vpack.c.b16 %v10198, %v10197
    %v10224 = vpack.c.b16 %v10200, %v10199
    %v10225 = vpack.c.b16 %v10202, %v10201
    %v10226 = vpack.c.b16 %v10204, %v10203
    %v10227 = vpack.c.b16 %v10206, %v10205
    %v10228 = vpack.c.b16 %v10208, %v10207
    %v10229 = vpack.c.b16 %v10210, %v10209
    %v10230 = vpack.c.b16 %v10212, %v10211
    %v10231 = vpack.c.b16 %v10214, %v10213
    %v10232 = vpack.c.b16 %v10216, %v10215
    %10249 = vmatprep.subr.bf16.mxu0 0
    %10250 = vmatpush1.bf16.msra.mxu0 %v10217
    %10251 = vmatprep.subr.bf16.mxu0 0
    %10252 = vmatpush1.bf16.msra.mxu0 %v10218
    %10253 = vmatprep.subr.bf16.mxu0 0
    %10254 = vmatpush1.bf16.msra.mxu0 %v10219
    %10255 = vmatprep.subr.bf16.mxu0 0
    %10256 = vmatpush1.bf16.msra.mxu0 %v10220
    %10257 = vmatprep.subr.bf16.mxu0 0
    %10258 = vmatpush1.bf16.msra.mxu0 %v10221
    %10259 = vmatprep.subr.bf16.mxu0 0
    %10260 = vmatpush1.bf16.msra.mxu0 %v10222
    %10261 = vmatprep.subr.bf16.mxu0 0
    %10262 = vmatpush1.bf16.msra.mxu0 %v10223
    %10263 = vmatprep.subr.bf16.mxu0 0
    %10264 = vmatpush1.bf16.msra.mxu0 %v10224
    %10265 = vmatprep.subr.bf16.mxu0 0
    %10266 = vmatpush1.bf16.msra.mxu0 %v10225
    %10267 = vmatprep.subr.bf16.mxu0 0
    %10268 = vmatpush1.bf16.msra.mxu0 %v10226
    %10269 = vmatprep.subr.bf16.mxu0 0
    %10270 = vmatpush1.bf16.msra.mxu0 %v10227
    %10271 = vmatprep.subr.bf16.mxu0 0
    %10272 = vmatpush1.bf16.msra.mxu0 %v10228
    %10273 = vmatprep.subr.bf16.mxu0 0
    %10274 = vmatpush1.bf16.msra.mxu0 %v10229
    %10275 = vmatprep.subr.bf16.mxu0 0
    %10276 = vmatpush1.bf16.msra.mxu0 %v10230
    %10277 = vmatprep.subr.bf16.mxu0 0
    %10278 = vmatpush1.bf16.msra.mxu0 %v10231
    %10279 = vmatprep.subr.bf16.mxu0 0
    %10280 = vmatpush1.bf16.msra.mxu0 %v10232
    %10281 = vmatprep.mubr.bf16.mxu0 %v10119
    %10282 = vmatmul.mubr.bf16.gmra.mrb[0].mxu0 %v10118
    %v10283 = vpop.f32.mrb[0].mxu0
    %v10284 = vadd.f32 0.0, %v10283
    %v10285 = vpop.f32.mrb[0].mxu0
    %v10286 = vpop.f32.mrb[0].mxu0
    %v10287 = vpop.f32.mrb[0].mxu0
    %10288 = vdwg.mxu0
    %v10289 = vadd.f32 %v10120, %v10284
    %10290 = vst [vmem:[#allocation3] sm:$0xff] %v10289
    %v10291 = vld [vmem:[#allocation3] sm:$0xff]
    %v10292 = vld [vmem:[#allocation13] sm:$0x1]
    %v10294 = vlaneseq
    %v10295 = vshrl.u32 %v10294, 7
    %v10296 = vsub.s32 0, %v10295
    %v10297 = vrot.slane %v10292, %v10296
    %v10299 = vadd.f32 %v10291, %v10297
    %v10300 = vpack.c.bf16 %v10299, %v10299
    %10301 = vst [vmem:[#allocation15] sm:$0xf] %v10300
    // Predicated region
    $region50: #{tpu_custom_call.1} parent=1 // pred_check
      _
    $region51: #{tpu_custom_call.1} parent=1 // pred_check_branch
      %10303 = sbr.rel (0) target = $region53
    $region52: #{tpu_custom_call.1} parent=1 // pred_region
      %s10305 = ssub.s32 64, 64
      %10306 = vsyncadd [#allocation6], %s10305
      %s10308 = sshll.u32 [#allocation15], 4
      %s10309 = int_to_ptr.vmem [resolvable:$true] %s10308
      %10311 = dma.vmem_to_hbm [thread:$0]  %s10309, 64, %s6, [#allocation6]
    $region53: #{tpu_custom_call.1} parent=1 // pred_fallthru
      _
    // Predicated region
    $region54: #{tpu_custom_call.1} parent=1 // pred_check
      _
    $region55: #{tpu_custom_call.1} parent=1 // pred_check_branch
      %10313 = sbr.rel (0) target = $region57
    $region56: #{tpu_custom_call.1} parent=1 // pred_region
      %10314 = dma.done [#allocation6], 64
    $region57: #{tpu_custom_call.1} parent=1 // pred_fallthru
      _
    %10315 = vsyncpa [#allocation5], 1
    %10316 = vsyncpa [#allocation8], 1
    %10317 = vsyncpa [#allocation11], 1
    %10318 = vsyncpa [#allocation14], 1
    %10319 = vsyncpa [#allocation6], 1

</llo_original>
